<compile_context>
chip_gen: v6e
topology: v6e:2x2x1
jax: 0.10.0
libtpu: 0.0.40
codegen_flags: <defaults>
</compile_context>

<pallas_src>
import jax
import jax.numpy as jnp
from jax import lax
from jax.experimental import pallas as pl
from jax.experimental.pallas import tpu as pltpu

# ---- scaled-down config (module defaults are n_embd=256, heads=8, block=256) ----
# n_embd kept a multiple of 128 so every matmul / load / store is lane-dense;
# B*T = 256 rows so the MXU sees full-height operands and weights are amortized.
N_EMBD = 128
NUM_HEADS = 4
HEAD_SIZE = N_EMBD // NUM_HEADS        # 32
SEQ_LEN = 128                          # sequence length T (multiple of 8 -> tile-aligned reshapes)
BATCH = 2
FF_HIDDEN = 4 * N_EMBD                 # 512
LN_EPS = 1e-5
NEG_BIG = -1e30                        # finite mask value (no -inf - -inf NaN hazard)


def block_kernel(x_ref,
                 wqkv_ref,                          # (C, 3C) bf16: [Wq*scale | Wk | Wv]
                 wo_ref, bo_ref,                    # (C, C) bf16, (1, C) f32
                 g1_ref, b1_ref, g2_ref, b2_ref,    # LayerNorm params, each (1, C) f32
                 w1_ref, bb1_ref,                   # (C, 4C) bf16, (1, 4C) f32
                 w2_ref, bb2_ref,                   # (4C, C) bf16, (1, C) f32
                 o_ref):                            # (B*T, C) f32
    H, hs, B, T = NUM_HEADS, HEAD_SIZE, BATCH, SEQ_LEN
    x = x_ref[...]                                  # (B*T, C), batch folded into rows
    R, C = x.shape

    def layer_norm(z, g, b):
        mu = jnp.mean(z, axis=-1, keepdims=True)
        zc = z - mu                                 # centered once, reused
        var = jnp.mean(zc * zc, axis=-1, keepdims=True)
        return zc * lax.rsqrt(var + LN_EPS) * g + b

    # ---------------- LayerNorm 1 (f32) ----------------
    h1 = layer_norm(x, g1_ref[...], b1_ref[...])

    # ---------------- Fused Q/K/V projection: one (R,C)@(C,3C) matmul ----------------
    qkv = jnp.dot(h1.astype(jnp.bfloat16), wqkv_ref[...],
                  preferred_element_type=jnp.float32)            # (R, 3C) f32
    qkv = qkv.astype(jnp.bfloat16)

    def split_heads(z):                              # (R, C) bf16 -> (H*B, T, hs) bf16
        zh = jnp.stack([z[:, i * hs:(i + 1) * hs] for i in range(H)], axis=0)   # (H, R, hs)
        return zh.reshape(H * B, T, hs)              # leading-dim split only (T mult. of 8)

    q = split_heads(qkv[:, 0 * C:1 * C])             # scale already folded into Wq
    k = split_heads(qkv[:, 1 * C:2 * C])
    v = split_heads(qkv[:, 2 * C:3 * C])

    # ---------------- Causal attention for all (head, batch) pairs ----------------
    s = jnp.einsum('nqd,nkd->nqk', q, k, preferred_element_type=jnp.float32)   # (H*B, T, T)

    row = lax.broadcasted_iota(jnp.int32, (T, T), 0)
    col = lax.broadcasted_iota(jnp.int32, (T, T), 1)
    s = jnp.where((row >= col)[None], s, NEG_BIG)

    # softmax in f32; normalization reciprocal goes to the EUP
    s_max = jnp.max(s, axis=-1, keepdims=True)
    p = jnp.exp(s - s_max)
    p = p * pl.reciprocal(jnp.sum(p, axis=-1, keepdims=True), approx=True)
    # attention dropout: identity (eval mode)

    o_att = jnp.einsum('nqk,nkd->nqd', p.astype(jnp.bfloat16), v,
                       preferred_element_type=jnp.float32)                      # (H*B, T, hs)

    # ---------------- Output projection: one full-K (R,C)@(C,C) matmul ----------------
    o_h = o_att.astype(jnp.bfloat16).reshape(H, R, hs)                          # (H, B*T, hs)
    att_cat = jnp.concatenate([o_h[i] for i in range(H)], axis=-1)              # (R, C) bf16
    att = jnp.dot(att_cat, wo_ref[...], preferred_element_type=jnp.float32) + bo_ref[...]
    # projection dropout: identity
    x1 = x + att

    # ---------------- LayerNorm 2 (f32) ----------------
    h2 = layer_norm(x1, g2_ref[...], b2_ref[...])

    # ---------------- FeedForward (bf16 matmuls, f32 accumulate) ----------------
    ff = jnp.dot(h2.astype(jnp.bfloat16), w1_ref[...],
                 preferred_element_type=jnp.float32) + bb1_ref[...]
    ff = jnp.maximum(ff, 0.0)                                                   # ReLU
    ff = jnp.dot(ff.astype(jnp.bfloat16), w2_ref[...],
                 preferred_element_type=jnp.float32) + bb2_ref[...]
    # ffwd dropout: identity

    o_ref[...] = (x1 + ff).astype(o_ref.dtype)


@jax.jit
def transformer_block(x, params):
    B, T, C = x.shape
    assert (B, T, C) == (BATCH, SEQ_LEN, N_EMBD)
    hs = HEAD_SIZE
    R = B * T

    # Lane-dense (B*T, C) slab (pure reshape); batch folded into matmul rows.
    x2 = x.reshape(R, C)

    # Fused QKV weight prepared once in the wrapper (free); attention scale folded
    # into the Wq columns so the kernel never multiplies scores/queries by it.
    scale = hs ** (-0.5)
    wqkv = jnp.concatenate(
        [params["wq"] * scale, params["wk"], params["wv"]], axis=1
    ).astype(jnp.bfloat16)                                                       # (C, 3C)

    args = (x2, wqkv, params["wo"].astype(jnp.bfloat16), params["bo"],
            params["g1"], params["b1"], params["g2"], params["b2"],
            params["w1"].astype(jnp.bfloat16), params["bb1"],
            params["w2"].astype(jnp.bfloat16), params["bb2"])

    vmem = pl.BlockSpec(memory_space=pltpu.MemorySpace.VMEM)
    out2 = pl.pallas_call(
        block_kernel,
        out_shape=jax.ShapeDtypeStruct((R, C), x.dtype),
        # Single invocation (no grid): no per-step pipeline overhead and the
        # parameter arrays are simply VMEM-resident (no double buffering).
        in_specs=[vmem] * len(args),
        out_specs=vmem,
    )(*args)
    return out2.reshape(B, T, C)


def init_params(key):
    ks = jax.random.split(key, 13)
    s = 0.02
    return {
        # per-head K/Q/V weights concatenated along the output (column) axis:
        # columns [i*hs:(i+1)*hs] are head i (matches torch.cat of head outputs)
        "wq": jax.random.normal(ks[0], (N_EMBD, N_EMBD), jnp.float32) * s,
        "wk": jax.random.normal(ks[1], (N_EMBD, N_EMBD), jnp.float32) * s,
        "wv": jax.random.normal(ks[2], (N_EMBD, N_EMBD), jnp.float32) * s,
        "wo": jax.random.normal(ks[3], (N_EMBD, N_EMBD), jnp.float32) * s,
        "bo": jax.random.normal(ks[4], (1, N_EMBD), jnp.float32) * s,
        "g1": 1.0 + 0.1 * jax.random.normal(ks[5], (1, N_EMBD), jnp.float32),
        "b1": 0.1 * jax.random.normal(ks[6], (1, N_EMBD), jnp.float32),
        "g2": 1.0 + 0.1 * jax.random.normal(ks[7], (1, N_EMBD), jnp.float32),
        "b2": 0.1 * jax.random.normal(ks[8], (1, N_EMBD), jnp.float32),
        "w1": jax.random.normal(ks[9], (N_EMBD, FF_HIDDEN), jnp.float32) * s,
        "bb1": jax.random.normal(ks[10], (1, FF_HIDDEN), jnp.float32) * s,
        "w2": jax.random.normal(ks[11], (FF_HIDDEN, N_EMBD), jnp.float32) * s,
        "bb2": jax.random.normal(ks[12], (1, N_EMBD), jnp.float32) * s,
    }


def reference_block(x, p):
    """Pure-JAX f32 reference (mirrors the PyTorch module's forward)."""
    def ln(z, g, b):
        mu = jnp.mean(z, axis=-1, keepdims=True)
        var = jnp.mean((z - mu) ** 2, axis=-1, keepdims=True)
        return (z - mu) * lax.rsqrt(var + LN_EPS) * g + b

    h = ln(x, p["g1"], p["b1"])
    q = h @ p["wq"]; k = h @ p["wk"]; v = h @ p["wv"]
    B, T, C = x.shape
    hs = HEAD_SIZE
    q = q.reshape(B, T, NUM_HEADS, hs).transpose(0, 2, 1, 3)
    k = k.reshape(B, T, NUM_HEADS, hs).transpose(0, 2, 1, 3)
    v = v.reshape(B, T, NUM_HEADS, hs).transpose(0, 2, 1, 3)
    wei = jnp.einsum("bhqd,bhkd->bhqk", q, k) * hs ** (-0.5)
    mask = jnp.tril(jnp.ones((T, T), bool))
    wei = jnp.where(mask, wei, -jnp.inf)
    wei = jax.nn.softmax(wei, axis=-1)
    att = jnp.einsum("bhqk,bhkd->bhqd", wei, v).transpose(0, 2, 1, 3).reshape(B, T, C)
    x1 = x + att @ p["wo"] + p["bo"]
    h2 = ln(x1, p["g2"], p["b2"])
    ff = jnp.maximum(h2 @ p["w1"] + p["bb1"], 0.0) @ p["w2"] + p["bb2"]
    return x1 + ff


if __name__ == "__main__":
    key = jax.random.PRNGKey(0)
    kx, kp = jax.random.split(key)
    x = jax.random.normal(kx, (BATCH, SEQ_LEN, N_EMBD), jnp.float32)
    params = init_params(kp)

    out = jax.block_until_ready(transformer_block(x, params))
    ref = reference_block(x, params)

    assert out.shape == (BATCH, SEQ_LEN, N_EMBD)
    # bf16 matmul inputs (f32 accumulation) + approx softmax reciprocal vs f32 reference
    assert jnp.allclose(out, ref, atol=3e-2, rtol=3e-2), "kernel mismatch vs reference"
    print("KERNEL_OK")
</pallas_src>

<mosaic_0001>
module attributes {stable_mosaic.version = 11 : i64} {
  func.func @block_kernel(%arg0: memref<256x128xf32, #tpu.memory_space<vmem>>, %arg1: memref<128x384xbf16, #tpu.memory_space<vmem>>, %arg2: memref<128x128xbf16, #tpu.memory_space<vmem>>, %arg3: memref<1x128xf32, #tpu.memory_space<vmem>>, %arg4: memref<1x128xf32, #tpu.memory_space<vmem>>, %arg5: memref<1x128xf32, #tpu.memory_space<vmem>>, %arg6: memref<1x128xf32, #tpu.memory_space<vmem>>, %arg7: memref<1x128xf32, #tpu.memory_space<vmem>>, %arg8: memref<128x512xbf16, #tpu.memory_space<vmem>>, %arg9: memref<1x512xf32, #tpu.memory_space<vmem>>, %arg10: memref<512x128xbf16, #tpu.memory_space<vmem>>, %arg11: memref<1x128xf32, #tpu.memory_space<vmem>>, %arg12: memref<256x128xf32, #tpu.memory_space<vmem>>) attributes {dimension_semantics = [], scalar_prefetch = 0 : i64, scratch_operands = 0 : i64, tpu.core_type = #tpu.core_type<tc>} {
    %c0 = arith.constant 0 : index
    %c0_0 = arith.constant 0 : index
    %0 = vector.load %arg0[%c0, %c0_0] : memref<256x128xf32, #tpu.memory_space<vmem>>, vector<256x128xf32>
    %c0_1 = arith.constant 0 : index
    %c0_2 = arith.constant 0 : index
    %1 = vector.load %arg4[%c0_1, %c0_2] : memref<1x128xf32, #tpu.memory_space<vmem>>, vector<1x128xf32>
    %c0_3 = arith.constant 0 : index
    %c0_4 = arith.constant 0 : index
    %2 = vector.load %arg5[%c0_3, %c0_4] : memref<1x128xf32, #tpu.memory_space<vmem>>, vector<1x128xf32>
    %cst = arith.constant dense<0.000000e+00> : vector<256xf32>
    %3 = vector.multi_reduction <add>, %0, %cst [1] : vector<256x128xf32> to vector<256xf32>
    %4 = vector.shape_cast %3 : vector<256xf32> to vector<256x1xf32>
    %cst_5 = arith.constant 1.280000e+02 : f32
    %5 = vector.broadcast %cst_5 : f32 to vector<256x1xf32>
    %6 = arith.divf %4, %5 : vector<256x1xf32>
    %7 = vector.broadcast %6 : vector<256x1xf32> to vector<256x128xf32>
    %8 = arith.subf %0, %7 : vector<256x128xf32>
    %9 = arith.mulf %8, %8 : vector<256x128xf32>
    %cst_6 = arith.constant dense<0.000000e+00> : vector<256xf32>
    %10 = vector.multi_reduction <add>, %9, %cst_6 [1] : vector<256x128xf32> to vector<256xf32>
    %11 = vector.shape_cast %10 : vector<256xf32> to vector<256x1xf32>
    %cst_7 = arith.constant 1.280000e+02 : f32
    %12 = vector.broadcast %cst_7 : f32 to vector<256x1xf32>
    %13 = arith.divf %11, %12 : vector<256x1xf32>
    %cst_8 = arith.constant 9.99999974E-6 : f32
    %14 = vector.broadcast %cst_8 : f32 to vector<256x1xf32>
    %15 = arith.addf %13, %14 : vector<256x1xf32>
    %16 = math.rsqrt %15 : vector<256x1xf32>
    %17 = vector.broadcast %16 : vector<256x1xf32> to vector<256x128xf32>
    %18 = arith.mulf %8, %17 : vector<256x128xf32>
    %19 = vector.broadcast %1 : vector<1x128xf32> to vector<256x128xf32>
    %20 = arith.mulf %18, %19 : vector<256x128xf32>
    %21 = vector.broadcast %2 : vector<1x128xf32> to vector<256x128xf32>
    %22 = arith.addf %20, %21 : vector<256x128xf32>
    %23 = arith.truncf %22 : vector<256x128xf32> to vector<256x128xbf16>
    %c0_9 = arith.constant 0 : index
    %c0_10 = arith.constant 0 : index
    %24 = vector.load %arg1[%c0_9, %c0_10] : memref<128x384xbf16, #tpu.memory_space<vmem>>, vector<128x384xbf16>
    %cst_11 = arith.constant dense<0.000000e+00> : vector<256x384xf32>
    %25 = tpu.matmul %23, %24, %cst_11 {dimension_numbers = #tpu.dot_dimension_numbers<[1], [0], [0], [1], [0, 0, 1, 1], [], []>} : vector<256x128xbf16>, vector<128x384xbf16>, vector<256x384xf32> -> vector<256x384xf32>
    %26 = arith.truncf %25 : vector<256x384xf32> to vector<256x384xbf16>
    %27 = vector.extract_strided_slice %26 {offsets = [0, 0], sizes = [256, 128], strides = [1, 1]} : vector<256x384xbf16> to vector<256x128xbf16>
    %28 = vector.extract_strided_slice %27 {offsets = [0, 0], sizes = [256, 32], strides = [1, 1]} : vector<256x128xbf16> to vector<256x32xbf16>
    %29 = vector.extract_strided_slice %27 {offsets = [0, 32], sizes = [256, 32], strides = [1, 1]} : vector<256x128xbf16> to vector<256x32xbf16>
    %30 = vector.extract_strided_slice %27 {offsets = [0, 64], sizes = [256, 32], strides = [1, 1]} : vector<256x128xbf16> to vector<256x32xbf16>
    %31 = vector.extract_strided_slice %27 {offsets = [0, 96], sizes = [256, 32], strides = [1, 1]} : vector<256x128xbf16> to vector<256x32xbf16>
    %32 = vector.shape_cast %28 : vector<256x32xbf16> to vector<1x256x32xbf16>
    %33 = vector.shape_cast %29 : vector<256x32xbf16> to vector<1x256x32xbf16>
    %34 = vector.shape_cast %30 : vector<256x32xbf16> to vector<1x256x32xbf16>
    %35 = vector.shape_cast %31 : vector<256x32xbf16> to vector<1x256x32xbf16>
    %36 = tpu.concatenate %32, %33, %34, %35 in 0 : vector<1x256x32xbf16>, vector<1x256x32xbf16>, vector<1x256x32xbf16>, vector<1x256x32xbf16> -> vector<4x256x32xbf16>
    %37 = vector.shape_cast %36 : vector<4x256x32xbf16> to vector<8x128x32xbf16>
    %38 = vector.extract_strided_slice %26 {offsets = [0, 128], sizes = [256, 128], strides = [1, 1]} : vector<256x384xbf16> to vector<256x128xbf16>
    %39 = vector.extract_strided_slice %38 {offsets = [0, 0], sizes = [256, 32], strides = [1, 1]} : vector<256x128xbf16> to vector<256x32xbf16>
    %40 = vector.extract_strided_slice %38 {offsets = [0, 32], sizes = [256, 32], strides = [1, 1]} : vector<256x128xbf16> to vector<256x32xbf16>
    %41 = vector.extract_strided_slice %38 {offsets = [0, 64], sizes = [256, 32], strides = [1, 1]} : vector<256x128xbf16> to vector<256x32xbf16>
    %42 = vector.extract_strided_slice %38 {offsets = [0, 96], sizes = [256, 32], strides = [1, 1]} : vector<256x128xbf16> to vector<256x32xbf16>
    %43 = vector.shape_cast %39 : vector<256x32xbf16> to vector<1x256x32xbf16>
    %44 = vector.shape_cast %40 : vector<256x32xbf16> to vector<1x256x32xbf16>
    %45 = vector.shape_cast %41 : vector<256x32xbf16> to vector<1x256x32xbf16>
    %46 = vector.shape_cast %42 : vector<256x32xbf16> to vector<1x256x32xbf16>
    %47 = tpu.concatenate %43, %44, %45, %46 in 0 : vector<1x256x32xbf16>, vector<1x256x32xbf16>, vector<1x256x32xbf16>, vector<1x256x32xbf16> -> vector<4x256x32xbf16>
    %48 = vector.shape_cast %47 : vector<4x256x32xbf16> to vector<8x128x32xbf16>
    %49 = vector.extract_strided_slice %26 {offsets = [0, 256], sizes = [256, 128], strides = [1, 1]} : vector<256x384xbf16> to vector<256x128xbf16>
    %50 = vector.extract_strided_slice %49 {offsets = [0, 0], sizes = [256, 32], strides = [1, 1]} : vector<256x128xbf16> to vector<256x32xbf16>
    %51 = vector.extract_strided_slice %49 {offsets = [0, 32], sizes = [256, 32], strides = [1, 1]} : vector<256x128xbf16> to vector<256x32xbf16>
    %52 = vector.extract_strided_slice %49 {offsets = [0, 64], sizes = [256, 32], strides = [1, 1]} : vector<256x128xbf16> to vector<256x32xbf16>
    %53 = vector.extract_strided_slice %49 {offsets = [0, 96], sizes = [256, 32], strides = [1, 1]} : vector<256x128xbf16> to vector<256x32xbf16>
    %54 = vector.shape_cast %50 : vector<256x32xbf16> to vector<1x256x32xbf16>
    %55 = vector.shape_cast %51 : vector<256x32xbf16> to vector<1x256x32xbf16>
    %56 = vector.shape_cast %52 : vector<256x32xbf16> to vector<1x256x32xbf16>
    %57 = vector.shape_cast %53 : vector<256x32xbf16> to vector<1x256x32xbf16>
    %58 = tpu.concatenate %54, %55, %56, %57 in 0 : vector<1x256x32xbf16>, vector<1x256x32xbf16>, vector<1x256x32xbf16>, vector<1x256x32xbf16> -> vector<4x256x32xbf16>
    %59 = vector.shape_cast %58 : vector<4x256x32xbf16> to vector<8x128x32xbf16>
    "tpu.trace_start"() <{level = 10 : i32, message = "nqd,nkd->nqk"}> : () -> ()
    %cst_12 = arith.constant dense<0.000000e+00> : vector<8x128x128xf32>
    %60 = tpu.matmul %37, %48, %cst_12 {dimension_numbers = #tpu.dot_dimension_numbers<[2], [2], [1], [1], [0, 0, 0, 1, 1, 1], [0], [0]>} : vector<8x128x32xbf16>, vector<8x128x32xbf16>, vector<8x128x128xf32> -> vector<8x128x128xf32>
    "tpu.trace_stop"() : () -> ()
    %61 = tpu.iota {dimensions = array<i32: 0>} : vector<128x128xi32>
    %62 = tpu.iota {dimensions = array<i32: 1>} : vector<128x128xi32>
    %63 = arith.cmpi sge, %61, %62 : vector<128x128xi32>
    %64 = vector.shape_cast %63 : vector<128x128xi1> to vector<1x128x128xi1>
    %cst_13 = arith.constant -1.000000e+30 : f32
    %65 = vector.shape_cast %64 : vector<1x128x128xi1> to vector<1x128x128xi1>
    %66 = vector.broadcast %65 : vector<1x128x128xi1> to vector<8x128x128xi1>
    %67 = vector.broadcast %cst_13 : f32 to vector<8x128x128xf32>
    %68 = arith.select %66, %60, %67 : vector<8x128x128xi1>, vector<8x128x128xf32>
    %cst_14 = arith.constant dense<0xFF800000> : vector<8x128xf32>
    %69 = vector.multi_reduction <maximumf>, %68, %cst_14 [2] : vector<8x128x128xf32> to vector<8x128xf32>
    %70 = vector.shape_cast %69 : vector<8x128xf32> to vector<8x128x1xf32>
    %71 = vector.broadcast %70 : vector<8x128x1xf32> to vector<8x128x128xf32>
    %72 = arith.subf %68, %71 : vector<8x128x128xf32>
    %73 = math.exp %72 : vector<8x128x128xf32>
    %cst_15 = arith.constant dense<0.000000e+00> : vector<8x128xf32>
    %74 = vector.multi_reduction <add>, %73, %cst_15 [2] : vector<8x128x128xf32> to vector<8x128xf32>
    %75 = vector.shape_cast %74 : vector<8x128xf32> to vector<8x128x1xf32>
    %76 = tpu.reciprocal %75 {approx = true} : vector<8x128x1xf32> -> vector<8x128x1xf32>
    %77 = vector.broadcast %76 : vector<8x128x1xf32> to vector<8x128x128xf32>
    %78 = arith.mulf %73, %77 : vector<8x128x128xf32>
    %79 = arith.truncf %78 : vector<8x128x128xf32> to vector<8x128x128xbf16>
    "tpu.trace_start"() <{level = 10 : i32, message = "nqk,nkd->nqd"}> : () -> ()
    %cst_16 = arith.constant dense<0.000000e+00> : vector<8x128x32xf32>
    %80 = tpu.matmul %79, %59, %cst_16 {dimension_numbers = #tpu.dot_dimension_numbers<[2], [1], [1], [2], [0, 0, 0, 1, 1, 2], [0], [0]>} : vector<8x128x128xbf16>, vector<8x128x32xbf16>, vector<8x128x32xf32> -> vector<8x128x32xf32>
    "tpu.trace_stop"() : () -> ()
    %81 = arith.truncf %80 : vector<8x128x32xf32> to vector<8x128x32xbf16>
    %82 = vector.shape_cast %81 : vector<8x128x32xbf16> to vector<4x256x32xbf16>
    %83 = vector.extract_strided_slice %82 {offsets = [0, 0, 0], sizes = [1, 256, 32], strides = [1, 1, 1]} : vector<4x256x32xbf16> to vector<1x256x32xbf16>
    %84 = vector.shape_cast %83 : vector<1x256x32xbf16> to vector<256x32xbf16>
    %85 = vector.extract_strided_slice %82 {offsets = [1, 0, 0], sizes = [1, 256, 32], strides = [1, 1, 1]} : vector<4x256x32xbf16> to vector<1x256x32xbf16>
    %86 = vector.shape_cast %85 : vector<1x256x32xbf16> to vector<256x32xbf16>
    %87 = vector.extract_strided_slice %82 {offsets = [2, 0, 0], sizes = [1, 256, 32], strides = [1, 1, 1]} : vector<4x256x32xbf16> to vector<1x256x32xbf16>
    %88 = vector.shape_cast %87 : vector<1x256x32xbf16> to vector<256x32xbf16>
    %89 = vector.extract_strided_slice %82 {offsets = [3, 0, 0], sizes = [1, 256, 32], strides = [1, 1, 1]} : vector<4x256x32xbf16> to vector<1x256x32xbf16>
    %90 = vector.shape_cast %89 : vector<1x256x32xbf16> to vector<256x32xbf16>
    %91 = tpu.concatenate %84, %86, %88, %90 in 1 : vector<256x32xbf16>, vector<256x32xbf16>, vector<256x32xbf16>, vector<256x32xbf16> -> vector<256x128xbf16>
    %c0_17 = arith.constant 0 : index
    %c0_18 = arith.constant 0 : index
    %92 = vector.load %arg2[%c0_17, %c0_18] : memref<128x128xbf16, #tpu.memory_space<vmem>>, vector<128x128xbf16>
    %cst_19 = arith.constant dense<0.000000e+00> : vector<256x128xf32>
    %93 = tpu.matmul %91, %92, %cst_19 {dimension_numbers = #tpu.dot_dimension_numbers<[1], [0], [0], [1], [0, 0, 1, 1], [], []>} : vector<256x128xbf16>, vector<128x128xbf16>, vector<256x128xf32> -> vector<256x128xf32>
    %c0_20 = arith.constant 0 : index
    %c0_21 = arith.constant 0 : index
    %94 = vector.load %arg3[%c0_20, %c0_21] : memref<1x128xf32, #tpu.memory_space<vmem>>, vector<1x128xf32>
    %95 = vector.broadcast %94 : vector<1x128xf32> to vector<256x128xf32>
    %96 = arith.addf %93, %95 : vector<256x128xf32>
    %97 = arith.addf %0, %96 : vector<256x128xf32>
    %c0_22 = arith.constant 0 : index
    %c0_23 = arith.constant 0 : index
    %98 = vector.load %arg6[%c0_22, %c0_23] : memref<1x128xf32, #tpu.memory_space<vmem>>, vector<1x128xf32>
    %c0_24 = arith.constant 0 : index
    %c0_25 = arith.constant 0 : index
    %99 = vector.load %arg7[%c0_24, %c0_25] : memref<1x128xf32, #tpu.memory_space<vmem>>, vector<1x128xf32>
    %cst_26 = arith.constant dense<0.000000e+00> : vector<256xf32>
    %100 = vector.multi_reduction <add>, %97, %cst_26 [1] : vector<256x128xf32> to vector<256xf32>
    %101 = vector.shape_cast %100 : vector<256xf32> to vector<256x1xf32>
    %cst_27 = arith.constant 1.280000e+02 : f32
    %102 = vector.broadcast %cst_27 : f32 to vector<256x1xf32>
    %103 = arith.divf %101, %102 : vector<256x1xf32>
    %104 = vector.broadcast %103 : vector<256x1xf32> to vector<256x128xf32>
    %105 = arith.subf %97, %104 : vector<256x128xf32>
    %106 = arith.mulf %105, %105 : vector<256x128xf32>
    %cst_28 = arith.constant dense<0.000000e+00> : vector<256xf32>
    %107 = vector.multi_reduction <add>, %106, %cst_28 [1] : vector<256x128xf32> to vector<256xf32>
    %108 = vector.shape_cast %107 : vector<256xf32> to vector<256x1xf32>
    %cst_29 = arith.constant 1.280000e+02 : f32
    %109 = vector.broadcast %cst_29 : f32 to vector<256x1xf32>
    %110 = arith.divf %108, %109 : vector<256x1xf32>
    %cst_30 = arith.constant 9.99999974E-6 : f32
    %111 = vector.broadcast %cst_30 : f32 to vector<256x1xf32>
    %112 = arith.addf %110, %111 : vector<256x1xf32>
    %113 = math.rsqrt %112 : vector<256x1xf32>
    %114 = vector.broadcast %113 : vector<256x1xf32> to vector<256x128xf32>
    %115 = arith.mulf %105, %114 : vector<256x128xf32>
    %116 = vector.broadcast %98 : vector<1x128xf32> to vector<256x128xf32>
    %117 = arith.mulf %115, %116 : vector<256x128xf32>
    %118 = vector.broadcast %99 : vector<1x128xf32> to vector<256x128xf32>
    %119 = arith.addf %117, %118 : vector<256x128xf32>
    %120 = arith.truncf %119 : vector<256x128xf32> to vector<256x128xbf16>
    %c0_31 = arith.constant 0 : index
    %c0_32 = arith.constant 0 : index
    %121 = vector.load %arg8[%c0_31, %c0_32] : memref<128x512xbf16, #tpu.memory_space<vmem>>, vector<128x512xbf16>
    %cst_33 = arith.constant dense<0.000000e+00> : vector<256x512xf32>
    %122 = tpu.matmul %120, %121, %cst_33 {dimension_numbers = #tpu.dot_dimension_numbers<[1], [0], [0], [1], [0, 0, 1, 1], [], []>} : vector<256x128xbf16>, vector<128x512xbf16>, vector<256x512xf32> -> vector<256x512xf32>
    %c0_34 = arith.constant 0 : index
    %c0_35 = arith.constant 0 : index
    %123 = vector.load %arg9[%c0_34, %c0_35] : memref<1x512xf32, #tpu.memory_space<vmem>>, vector<1x512xf32>
    %124 = vector.broadcast %123 : vector<1x512xf32> to vector<256x512xf32>
    %125 = arith.addf %122, %124 : vector<256x512xf32>
    %cst_36 = arith.constant 0.000000e+00 : f32
    %126 = vector.broadcast %cst_36 : f32 to vector<256x512xf32>
    %127 = arith.maximumf %125, %126 : vector<256x512xf32>
    %128 = arith.truncf %127 : vector<256x512xf32> to vector<256x512xbf16>
    %c0_37 = arith.constant 0 : index
    %c0_38 = arith.constant 0 : index
    %129 = vector.load %arg10[%c0_37, %c0_38] : memref<512x128xbf16, #tpu.memory_space<vmem>>, vector<512x128xbf16>
    %cst_39 = arith.constant dense<0.000000e+00> : vector<256x128xf32>
    %130 = tpu.matmul %128, %129, %cst_39 {dimension_numbers = #tpu.dot_dimension_numbers<[1], [0], [0], [1], [0, 0, 1, 1], [], []>} : vector<256x512xbf16>, vector<512x128xbf16>, vector<256x128xf32> -> vector<256x128xf32>
    %c0_40 = arith.constant 0 : index
    %c0_41 = arith.constant 0 : index
    %131 = vector.load %arg11[%c0_40, %c0_41] : memref<1x128xf32, #tpu.memory_space<vmem>>, vector<1x128xf32>
    %132 = vector.broadcast %131 : vector<1x128xf32> to vector<256x128xf32>
    %133 = arith.addf %130, %132 : vector<256x128xf32>
    %134 = arith.addf %97, %133 : vector<256x128xf32>
    %c0_42 = arith.constant 0 : index
    %c0_43 = arith.constant 0 : index
    %135 = vector.load %arg12[%c0_42, %c0_43] : memref<256x128xf32, #tpu.memory_space<vmem>>, vector<256x128xf32>
    tpu.vector_store %arg12[%c0_42, %c0_43], %134 {strides = array<i32>} : memref<256x128xf32, #tpu.memory_space<vmem>>, vector<256x128xf32>,
    return
  }
}

</mosaic_0001>

<llo_original>
// kernel: transformer_block.1
$region0: #{transformer_block.1}
  #allocation0 [shape = 'u32[]', space=smem, size = 0x4, offset = 0x4, fixed_abs, tag = 'smem constant byte address 0x4 - core index']
  #allocation1 [shape = 'u32[144,128]{1,0:T(1,128)}', space=vmem, size = 0x12000, scoped, tag = 'internal scratch']
  %s0 = inlined_call_operand.vmem [shape: f32[256,128], index: 0, kind: input, shape index: {}]
  %s1 = inlined_call_operand.vmem [shape: bf16[128,384], index: 1, kind: input, shape index: {}]
  %s2 = inlined_call_operand.vmem [shape: bf16[128,128], index: 2, kind: input, shape index: {}]
  %s3 = inlined_call_operand.vmem [shape: f32[1,128], index: 3, kind: input, shape index: {}]
  %s4 = inlined_call_operand.vmem [shape: f32[1,128], index: 4, kind: input, shape index: {}]
  %s5 = inlined_call_operand.vmem [shape: f32[1,128], index: 5, kind: input, shape index: {}]
  %s6 = inlined_call_operand.vmem [shape: f32[1,128], index: 6, kind: input, shape index: {}]
  %s7 = inlined_call_operand.vmem [shape: f32[1,128], index: 7, kind: input, shape index: {}]
  %s8 = inlined_call_operand.vmem [shape: bf16[128,512], index: 8, kind: input, shape index: {}]
  %s9 = inlined_call_operand.vmem [shape: f32[1,512], index: 9, kind: input, shape index: {}]
  %s10 = inlined_call_operand.vmem [shape: bf16[512,128], index: 10, kind: input, shape index: {}]
  %s11 = inlined_call_operand.vmem [shape: f32[1,128], index: 11, kind: input, shape index: {}]
  %s12 = inlined_call_operand.hbm [shape: f32[256,128], index: 12, kind: output, shape index: {}]
  %s13 = sld [smem:[#allocation0]]
  $region58: #{transformer_block.1} parent=0
    _
  %s15 = ssub.s32 1, %s13
  %s16 = scalar_select 0, %s15, %s13
  $region1: #{transformer_block.1} parent=0
    #allocation2 [shape = 'u8[131072]{0}', space=vmem, size = 0x20000, scoped, tag = 'output window, operand 0, single buffered']
    #allocation3 [shape = 's32[1]{0}', space=sflag, size = 0x4, scoped, tag = 'scoped memory for transformer_block.1']
    %17 = vsyncpa [#allocation3], 0
    // Predicated region
    $region2: #{transformer_block.1} parent=1 // pred_check
      _
    $region3: #{transformer_block.1} parent=1 // pred_check_branch
      %19 = sbr.rel (0) target = $region5
    $region4: #{transformer_block.1} parent=1 // pred_region
      _
    $region5: #{transformer_block.1} parent=1 // pred_fallthru
      _
    // Predicated region
    $region6: #{transformer_block.1} parent=1 // pred_check
      _
    $region7: #{transformer_block.1} parent=1 // pred_check_branch
      %21 = sbr.rel (0) target = $region9
    $region8: #{transformer_block.1} parent=1 // pred_region
      _
    $region9: #{transformer_block.1} parent=1 // pred_fallthru
      _
    // Predicated region
    $region10: #{transformer_block.1} parent=1 // pred_check
      _
    $region11: #{transformer_block.1} parent=1 // pred_check_branch
      %23 = sbr.rel (0) target = $region13
    $region12: #{transformer_block.1} parent=1 // pred_region
      _
    $region13: #{transformer_block.1} parent=1 // pred_fallthru
      _
    // Predicated region
    $region14: #{transformer_block.1} parent=1 // pred_check
      _
    $region15: #{transformer_block.1} parent=1 // pred_check_branch
      %25 = sbr.rel (0) target = $region17
    $region16: #{transformer_block.1} parent=1 // pred_region
      _
    $region17: #{transformer_block.1} parent=1 // pred_fallthru
      _
    // Predicated region
    $region18: #{transformer_block.1} parent=1 // pred_check
      _
    $region19: #{transformer_block.1} parent=1 // pred_check_branch
      %27 = sbr.rel (0) target = $region21
    $region20: #{transformer_block.1} parent=1 // pred_region
      _
    $region21: #{transformer_block.1} parent=1 // pred_fallthru
      _
    // Predicated region
    $region22: #{transformer_block.1} parent=1 // pred_check
      _
    $region23: #{transformer_block.1} parent=1 // pred_check_branch
      %29 = sbr.rel (0) target = $region25
    $region24: #{transformer_block.1} parent=1 // pred_region
      _
    $region25: #{transformer_block.1} parent=1 // pred_fallthru
      _
    // Predicated region
    $region26: #{transformer_block.1} parent=1 // pred_check
      _
    $region27: #{transformer_block.1} parent=1 // pred_check_branch
      %31 = sbr.rel (0) target = $region29
    $region28: #{transformer_block.1} parent=1 // pred_region
      _
    $region29: #{transformer_block.1} parent=1 // pred_fallthru
      _
    // Predicated region
    $region30: #{transformer_block.1} parent=1 // pred_check
      _
    $region31: #{transformer_block.1} parent=1 // pred_check_branch
      %33 = sbr.rel (0) target = $region33
    $region32: #{transformer_block.1} parent=1 // pred_region
      _
    $region33: #{transformer_block.1} parent=1 // pred_fallthru
      _
    // Predicated region
    $region34: #{transformer_block.1} parent=1 // pred_check
      _
    $region35: #{transformer_block.1} parent=1 // pred_check_branch
      %35 = sbr.rel (0) target = $region37
    $region36: #{transformer_block.1} parent=1 // pred_region
      _
    $region37: #{transformer_block.1} parent=1 // pred_fallthru
      _
    // Predicated region
    $region38: #{transformer_block.1} parent=1 // pred_check
      _
    $region39: #{transformer_block.1} parent=1 // pred_check_branch
      %37 = sbr.rel (0) target = $region41
    $region40: #{transformer_block.1} parent=1 // pred_region
      _
    $region41: #{transformer_block.1} parent=1 // pred_fallthru
      _
    // Predicated region
    $region42: #{transformer_block.1} parent=1 // pred_check
      _
    $region43: #{transformer_block.1} parent=1 // pred_check_branch
      %39 = sbr.rel (0) target = $region45
    $region44: #{transformer_block.1} parent=1 // pred_region
      _
    $region45: #{transformer_block.1} parent=1 // pred_fallthru
      _
    // Predicated region
    $region46: #{transformer_block.1} parent=1 // pred_check
      _
    $region47: #{transformer_block.1} parent=1 // pred_check_branch
      %41 = sbr.rel (0) target = $region49
    $region48: #{transformer_block.1} parent=1 // pred_region
      _
    $region49: #{transformer_block.1} parent=1 // pred_fallthru
      _
    %v43 = vld [vmem:[%s0] sm:$0xff]
    %v44 = vld [vmem:[%s0 + $0x8] sm:$0xff]
    %v45 = vld [vmem:[%s0 + $0x10] sm:$0xff]
    %v46 = vld [vmem:[%s0 + $0x18] sm:$0xff]
    %v47 = vld [vmem:[%s0 + $0x20] sm:$0xff]
    %v48 = vld [vmem:[%s0 + $0x28] sm:$0xff]
    %v49 = vld [vmem:[%s0 + $0x30] sm:$0xff]
    %v50 = vld [vmem:[%s0 + $0x38] sm:$0xff]
    %v51 = vld [vmem:[%s0 + $0x40] sm:$0xff]
    %v52 = vld [vmem:[%s0 + $0x48] sm:$0xff]
    %v53 = vld [vmem:[%s0 + $0x50] sm:$0xff]
    %v54 = vld [vmem:[%s0 + $0x58] sm:$0xff]
    %v55 = vld [vmem:[%s0 + $0x60] sm:$0xff]
    %v56 = vld [vmem:[%s0 + $0x68] sm:$0xff]
    %v57 = vld [vmem:[%s0 + $0x70] sm:$0xff]
    %v58 = vld [vmem:[%s0 + $0x78] sm:$0xff]
    %v59 = vld [vmem:[%s0 + $0x80] sm:$0xff]
    %v60 = vld [vmem:[%s0 + $0x88] sm:$0xff]
    %v61 = vld [vmem:[%s0 + $0x90] sm:$0xff]
    %v62 = vld [vmem:[%s0 + $0x98] sm:$0xff]
    %v63 = vld [vmem:[%s0 + $0xa0] sm:$0xff]
    %v64 = vld [vmem:[%s0 + $0xa8] sm:$0xff]
    %v65 = vld [vmem:[%s0 + $0xb0] sm:$0xff]
    %v66 = vld [vmem:[%s0 + $0xb8] sm:$0xff]
    %v67 = vld [vmem:[%s0 + $0xc0] sm:$0xff]
    %v68 = vld [vmem:[%s0 + $0xc8] sm:$0xff]
    %v69 = vld [vmem:[%s0 + $0xd0] sm:$0xff]
    %v70 = vld [vmem:[%s0 + $0xd8] sm:$0xff]
    %v71 = vld [vmem:[%s0 + $0xe0] sm:$0xff]
    %v72 = vld [vmem:[%s0 + $0xe8] sm:$0xff]
    %v73 = vld [vmem:[%s0 + $0xf0] sm:$0xff]
    %v74 = vld [vmem:[%s0 + $0xf8] sm:$0xff]
    %v75 = vld [vmem:[%s4] sm:$0x1]
    %v76 = vld [vmem:[%s5] sm:$0x1]
    %77 = vadd.xlane.f32.xlu0 %v43
    %v78 = vpop.xlane.xlu0 %77
    %79 = vadd.xlane.f32.xlu0 %v44
    %v80 = vpop.xlane.xlu0 %79
    %81 = vadd.xlane.f32.xlu0 %v45
    %v82 = vpop.xlane.xlu0 %81
    %83 = vadd.xlane.f32.xlu0 %v46
    %v84 = vpop.xlane.xlu0 %83
    %85 = vadd.xlane.f32.xlu0 %v47
    %v86 = vpop.xlane.xlu0 %85
    %87 = vadd.xlane.f32.xlu0 %v48
    %v88 = vpop.xlane.xlu0 %87
    %89 = vadd.xlane.f32.xlu0 %v49
    %v90 = vpop.xlane.xlu0 %89
    %91 = vadd.xlane.f32.xlu0 %v50
    %v92 = vpop.xlane.xlu0 %91
    %93 = vadd.xlane.f32.xlu0 %v51
    %v94 = vpop.xlane.xlu0 %93
    %95 = vadd.xlane.f32.xlu0 %v52
    %v96 = vpop.xlane.xlu0 %95
    %97 = vadd.xlane.f32.xlu0 %v53
    %v98 = vpop.xlane.xlu0 %97
    %99 = vadd.xlane.f32.xlu0 %v54
    %v100 = vpop.xlane.xlu0 %99
    %101 = vadd.xlane.f32.xlu0 %v55
    %v102 = vpop.xlane.xlu0 %101
    %103 = vadd.xlane.f32.xlu0 %v56
    %v104 = vpop.xlane.xlu0 %103
    %105 = vadd.xlane.f32.xlu0 %v57
    %v106 = vpop.xlane.xlu0 %105
    %107 = vadd.xlane.f32.xlu0 %v58
    %v108 = vpop.xlane.xlu0 %107
    %109 = vadd.xlane.f32.xlu0 %v59
    %v110 = vpop.xlane.xlu0 %109
    %111 = vadd.xlane.f32.xlu0 %v60
    %v112 = vpop.xlane.xlu0 %111
    %113 = vadd.xlane.f32.xlu0 %v61
    %v114 = vpop.xlane.xlu0 %113
    %115 = vadd.xlane.f32.xlu0 %v62
    %v116 = vpop.xlane.xlu0 %115
    %117 = vadd.xlane.f32.xlu0 %v63
    %v118 = vpop.xlane.xlu0 %117
    %119 = vadd.xlane.f32.xlu0 %v64
    %v120 = vpop.xlane.xlu0 %119
    %121 = vadd.xlane.f32.xlu0 %v65
    %v122 = vpop.xlane.xlu0 %121
    %123 = vadd.xlane.f32.xlu0 %v66
    %v124 = vpop.xlane.xlu0 %123
    %125 = vadd.xlane.f32.xlu0 %v67
    %v126 = vpop.xlane.xlu0 %125
    %127 = vadd.xlane.f32.xlu0 %v68
    %v128 = vpop.xlane.xlu0 %127
    %129 = vadd.xlane.f32.xlu0 %v69
    %v130 = vpop.xlane.xlu0 %129
    %131 = vadd.xlane.f32.xlu0 %v70
    %v132 = vpop.xlane.xlu0 %131
    %133 = vadd.xlane.f32.xlu0 %v71
    %v134 = vpop.xlane.xlu0 %133
    %135 = vadd.xlane.f32.xlu0 %v72
    %v136 = vpop.xlane.xlu0 %135
    %137 = vadd.xlane.f32.xlu0 %v73
    %v138 = vpop.xlane.xlu0 %137
    %139 = vadd.xlane.f32.xlu0 %v74
    %v140 = vpop.xlane.xlu0 %139
    %v141 = vrcp.pop 128.0
    %v142 = vmul.f32 %v78, %v141
    %v143 = vmul.f32 %v80, %v141
    %v144 = vmul.f32 %v82, %v141
    %v145 = vmul.f32 %v84, %v141
    %v146 = vmul.f32 %v86, %v141
    %v147 = vmul.f32 %v88, %v141
    %v148 = vmul.f32 %v90, %v141
    %v149 = vmul.f32 %v92, %v141
    %v150 = vmul.f32 %v94, %v141
    %v151 = vmul.f32 %v96, %v141
    %v152 = vmul.f32 %v98, %v141
    %v153 = vmul.f32 %v100, %v141
    %v154 = vmul.f32 %v102, %v141
    %v155 = vmul.f32 %v104, %v141
    %v156 = vmul.f32 %v106, %v141
    %v157 = vmul.f32 %v108, %v141
    %v158 = vmul.f32 %v110, %v141
    %v159 = vmul.f32 %v112, %v141
    %v160 = vmul.f32 %v114, %v141
    %v161 = vmul.f32 %v116, %v141
    %v162 = vmul.f32 %v118, %v141
    %v163 = vmul.f32 %v120, %v141
    %v164 = vmul.f32 %v122, %v141
    %v165 = vmul.f32 %v124, %v141
    %v166 = vmul.f32 %v126, %v141
    %v167 = vmul.f32 %v128, %v141
    %v168 = vmul.f32 %v130, %v141
    %v169 = vmul.f32 %v132, %v141
    %v170 = vmul.f32 %v134, %v141
    %v171 = vmul.f32 %v136, %v141
    %v172 = vmul.f32 %v138, %v141
    %v173 = vmul.f32 %v140, %v141
    %v174 = vsub.f32 %v43, %v142
    %v175 = vsub.f32 %v44, %v143
    %v176 = vsub.f32 %v45, %v144
    %v177 = vsub.f32 %v46, %v145
    %v178 = vsub.f32 %v47, %v146
    %v179 = vsub.f32 %v48, %v147
    %v180 = vsub.f32 %v49, %v148
    %v181 = vsub.f32 %v50, %v149
    %v182 = vsub.f32 %v51, %v150
    %v183 = vsub.f32 %v52, %v151
    %v184 = vsub.f32 %v53, %v152
    %v185 = vsub.f32 %v54, %v153
    %v186 = vsub.f32 %v55, %v154
    %v187 = vsub.f32 %v56, %v155
    %v188 = vsub.f32 %v57, %v156
    %v189 = vsub.f32 %v58, %v157
    %v190 = vsub.f32 %v59, %v158
    %v191 = vsub.f32 %v60, %v159
    %v192 = vsub.f32 %v61, %v160
    %v193 = vsub.f32 %v62, %v161
    %v194 = vsub.f32 %v63, %v162
    %v195 = vsub.f32 %v64, %v163
    %v196 = vsub.f32 %v65, %v164
    %v197 = vsub.f32 %v66, %v165
    %v198 = vsub.f32 %v67, %v166
    %v199 = vsub.f32 %v68, %v167
    %v200 = vsub.f32 %v69, %v168
    %v201 = vsub.f32 %v70, %v169
    %v202 = vsub.f32 %v71, %v170
    %v203 = vsub.f32 %v72, %v171
    %v204 = vsub.f32 %v73, %v172
    %v205 = vsub.f32 %v74, %v173
    %v206 = vmul.f32 %v174, %v174
    %v207 = vmul.f32 %v175, %v175
    %v208 = vmul.f32 %v176, %v176
    %v209 = vmul.f32 %v177, %v177
    %v210 = vmul.f32 %v178, %v178
    %v211 = vmul.f32 %v179, %v179
    %v212 = vmul.f32 %v180, %v180
    %v213 = vmul.f32 %v181, %v181
    %v214 = vmul.f32 %v182, %v182
    %v215 = vmul.f32 %v183, %v183
    %v216 = vmul.f32 %v184, %v184
    %v217 = vmul.f32 %v185, %v185
    %v218 = vmul.f32 %v186, %v186
    %v219 = vmul.f32 %v187, %v187
    %v220 = vmul.f32 %v188, %v188
    %v221 = vmul.f32 %v189, %v189
    %v222 = vmul.f32 %v190, %v190
    %v223 = vmul.f32 %v191, %v191
    %v224 = vmul.f32 %v192, %v192
    %v225 = vmul.f32 %v193, %v193
    %v226 = vmul.f32 %v194, %v194
    %v227 = vmul.f32 %v195, %v195
    %v228 = vmul.f32 %v196, %v196
    %v229 = vmul.f32 %v197, %v197
    %v230 = vmul.f32 %v198, %v198
    %v231 = vmul.f32 %v199, %v199
    %v232 = vmul.f32 %v200, %v200
    %v233 = vmul.f32 %v201, %v201
    %v234 = vmul.f32 %v202, %v202
    %v235 = vmul.f32 %v203, %v203
    %v236 = vmul.f32 %v204, %v204
    %v237 = vmul.f32 %v205, %v205
    %238 = vadd.xlane.f32.xlu0 %v206
    %v239 = vpop.xlane.xlu0 %238
    %240 = vadd.xlane.f32.xlu0 %v207
    %v241 = vpop.xlane.xlu0 %240
    %242 = vadd.xlane.f32.xlu0 %v208
    %v243 = vpop.xlane.xlu0 %242
    %244 = vadd.xlane.f32.xlu0 %v209
    %v245 = vpop.xlane.xlu0 %244
    %246 = vadd.xlane.f32.xlu0 %v210
    %v247 = vpop.xlane.xlu0 %246
    %248 = vadd.xlane.f32.xlu0 %v211
    %v249 = vpop.xlane.xlu0 %248
    %250 = vadd.xlane.f32.xlu0 %v212
    %v251 = vpop.xlane.xlu0 %250
    %252 = vadd.xlane.f32.xlu0 %v213
    %v253 = vpop.xlane.xlu0 %252
    %254 = vadd.xlane.f32.xlu0 %v214
    %v255 = vpop.xlane.xlu0 %254
    %256 = vadd.xlane.f32.xlu0 %v215
    %v257 = vpop.xlane.xlu0 %256
    %258 = vadd.xlane.f32.xlu0 %v216
    %v259 = vpop.xlane.xlu0 %258
    %260 = vadd.xlane.f32.xlu0 %v217
    %v261 = vpop.xlane.xlu0 %260
    %262 = vadd.xlane.f32.xlu0 %v218
    %v263 = vpop.xlane.xlu0 %262
    %264 = vadd.xlane.f32.xlu0 %v219
    %v265 = vpop.xlane.xlu0 %264
    %266 = vadd.xlane.f32.xlu0 %v220
    %v267 = vpop.xlane.xlu0 %266
    %268 = vadd.xlane.f32.xlu0 %v221
    %v269 = vpop.xlane.xlu0 %268
    %270 = vadd.xlane.f32.xlu0 %v222
    %v271 = vpop.xlane.xlu0 %270
    %272 = vadd.xlane.f32.xlu0 %v223
    %v273 = vpop.xlane.xlu0 %272
    %274 = vadd.xlane.f32.xlu0 %v224
    %v275 = vpop.xlane.xlu0 %274
    %276 = vadd.xlane.f32.xlu0 %v225
    %v277 = vpop.xlane.xlu0 %276
    %278 = vadd.xlane.f32.xlu0 %v226
    %v279 = vpop.xlane.xlu0 %278
    %280 = vadd.xlane.f32.xlu0 %v227
    %v281 = vpop.xlane.xlu0 %280
    %282 = vadd.xlane.f32.xlu0 %v228
    %v283 = vpop.xlane.xlu0 %282
    %284 = vadd.xlane.f32.xlu0 %v229
    %v285 = vpop.xlane.xlu0 %284
    %286 = vadd.xlane.f32.xlu0 %v230
    %v287 = vpop.xlane.xlu0 %286
    %288 = vadd.xlane.f32.xlu0 %v231
    %v289 = vpop.xlane.xlu0 %288
    %290 = vadd.xlane.f32.xlu0 %v232
    %v291 = vpop.xlane.xlu0 %290
    %292 = vadd.xlane.f32.xlu0 %v233
    %v293 = vpop.xlane.xlu0 %292
    %294 = vadd.xlane.f32.xlu0 %v234
    %v295 = vpop.xlane.xlu0 %294
    %296 = vadd.xlane.f32.xlu0 %v235
    %v297 = vpop.xlane.xlu0 %296
    %298 = vadd.xlane.f32.xlu0 %v236
    %v299 = vpop.xlane.xlu0 %298
    %300 = vadd.xlane.f32.xlu0 %v237
    %v301 = vpop.xlane.xlu0 %300
    %v302 = vmul.f32 %v239, %v141
    %v303 = vmul.f32 %v241, %v141
    %v304 = vmul.f32 %v243, %v141
    %v305 = vmul.f32 %v245, %v141
    %v306 = vmul.f32 %v247, %v141
    %v307 = vmul.f32 %v249, %v141
    %v308 = vmul.f32 %v251, %v141
    %v309 = vmul.f32 %v253, %v141
    %v310 = vmul.f32 %v255, %v141
    %v311 = vmul.f32 %v257, %v141
    %v312 = vmul.f32 %v259, %v141
    %v313 = vmul.f32 %v261, %v141
    %v314 = vmul.f32 %v263, %v141
    %v315 = vmul.f32 %v265, %v141
    %v316 = vmul.f32 %v267, %v141
    %v317 = vmul.f32 %v269, %v141
    %v318 = vmul.f32 %v271, %v141
    %v319 = vmul.f32 %v273, %v141
    %v320 = vmul.f32 %v275, %v141
    %v321 = vmul.f32 %v277, %v141
    %v322 = vmul.f32 %v279, %v141
    %v323 = vmul.f32 %v281, %v141
    %v324 = vmul.f32 %v283, %v141
    %v325 = vmul.f32 %v285, %v141
    %v326 = vmul.f32 %v287, %v141
    %v327 = vmul.f32 %v289, %v141
    %v328 = vmul.f32 %v291, %v141
    %v329 = vmul.f32 %v293, %v141
    %v330 = vmul.f32 %v295, %v141
    %v331 = vmul.f32 %v297, %v141
    %v332 = vmul.f32 %v299, %v141
    %v333 = vmul.f32 %v301, %v141
    %v334 = vadd.f32 %v302, 1e-05
    %v335 = vadd.f32 %v303, 1e-05
    %v336 = vadd.f32 %v304, 1e-05
    %v337 = vadd.f32 %v305, 1e-05
    %v338 = vadd.f32 %v306, 1e-05
    %v339 = vadd.f32 %v307, 1e-05
    %v340 = vadd.f32 %v308, 1e-05
    %v341 = vadd.f32 %v309, 1e-05
    %v342 = vadd.f32 %v310, 1e-05
    %v343 = vadd.f32 %v311, 1e-05
    %v344 = vadd.f32 %v312, 1e-05
    %v345 = vadd.f32 %v313, 1e-05
    %v346 = vadd.f32 %v314, 1e-05
    %v347 = vadd.f32 %v315, 1e-05
    %v348 = vadd.f32 %v316, 1e-05
    %v349 = vadd.f32 %v317, 1e-05
    %v350 = vadd.f32 %v318, 1e-05
    %v351 = vadd.f32 %v319, 1e-05
    %v352 = vadd.f32 %v320, 1e-05
    %v353 = vadd.f32 %v321, 1e-05
    %v354 = vadd.f32 %v322, 1e-05
    %v355 = vadd.f32 %v323, 1e-05
    %v356 = vadd.f32 %v324, 1e-05
    %v357 = vadd.f32 %v325, 1e-05
    %v358 = vadd.f32 %v326, 1e-05
    %v359 = vadd.f32 %v327, 1e-05
    %v360 = vadd.f32 %v328, 1e-05
    %v361 = vadd.f32 %v329, 1e-05
    %v362 = vadd.f32 %v330, 1e-05
    %v363 = vadd.f32 %v331, 1e-05
    %v364 = vadd.f32 %v332, 1e-05
    %v365 = vadd.f32 %v333, 1e-05
    %v366 = vrsqrt.pop %v334
    %v367 = vrsqrt.pop %v335
    %v368 = vrsqrt.pop %v336
    %v369 = vrsqrt.pop %v337
    %v370 = vrsqrt.pop %v338
    %v371 = vrsqrt.pop %v339
    %v372 = vrsqrt.pop %v340
    %v373 = vrsqrt.pop %v341
    %v374 = vrsqrt.pop %v342
    %v375 = vrsqrt.pop %v343
    %v376 = vrsqrt.pop %v344
    %v377 = vrsqrt.pop %v345
    %v378 = vrsqrt.pop %v346
    %v379 = vrsqrt.pop %v347
    %v380 = vrsqrt.pop %v348
    %v381 = vrsqrt.pop %v349
    %v382 = vrsqrt.pop %v350
    %v383 = vrsqrt.pop %v351
    %v384 = vrsqrt.pop %v352
    %v385 = vrsqrt.pop %v353
    %v386 = vrsqrt.pop %v354
    %v387 = vrsqrt.pop %v355
    %v388 = vrsqrt.pop %v356
    %v389 = vrsqrt.pop %v357
    %v390 = vrsqrt.pop %v358
    %v391 = vrsqrt.pop %v359
    %v392 = vrsqrt.pop %v360
    %v393 = vrsqrt.pop %v361
    %v394 = vrsqrt.pop %v362
    %v395 = vrsqrt.pop %v363
    %v396 = vrsqrt.pop %v364
    %v397 = vrsqrt.pop %v365
    %v398 = vmul.f32 %v174, %v366
    %v399 = vmul.f32 %v175, %v367
    %v400 = vmul.f32 %v176, %v368
    %v401 = vmul.f32 %v177, %v369
    %v402 = vmul.f32 %v178, %v370
    %v403 = vmul.f32 %v179, %v371
    %v404 = vmul.f32 %v180, %v372
    %v405 = vmul.f32 %v181, %v373
    %v406 = vmul.f32 %v182, %v374
    %v407 = vmul.f32 %v183, %v375
    %v408 = vmul.f32 %v184, %v376
    %v409 = vmul.f32 %v185, %v377
    %v410 = vmul.f32 %v186, %v378
    %v411 = vmul.f32 %v187, %v379
    %v412 = vmul.f32 %v188, %v380
    %v413 = vmul.f32 %v189, %v381
    %v414 = vmul.f32 %v190, %v382
    %v415 = vmul.f32 %v191, %v383
    %v416 = vmul.f32 %v192, %v384
    %v417 = vmul.f32 %v193, %v385
    %v418 = vmul.f32 %v194, %v386
    %v419 = vmul.f32 %v195, %v387
    %v420 = vmul.f32 %v196, %v388
    %v421 = vmul.f32 %v197, %v389
    %v422 = vmul.f32 %v198, %v390
    %v423 = vmul.f32 %v199, %v391
    %v424 = vmul.f32 %v200, %v392
    %v425 = vmul.f32 %v201, %v393
    %v426 = vmul.f32 %v202, %v394
    %v427 = vmul.f32 %v203, %v395
    %v428 = vmul.f32 %v204, %v396
    %v429 = vmul.f32 %v205, %v397
    %v431 = vlaneseq
    %v432 = vshrl.u32 %v431, 7
    %v433 = vsub.s32 0, %v432
    %v434 = vrot.slane %v75, %v433
    %v436 = vmul.f32 %v398, %v434
    %v437 = vmul.f32 %v399, %v434
    %v438 = vmul.f32 %v400, %v434
    %v439 = vmul.f32 %v401, %v434
    %v440 = vmul.f32 %v402, %v434
    %v441 = vmul.f32 %v403, %v434
    %v442 = vmul.f32 %v404, %v434
    %v443 = vmul.f32 %v405, %v434
    %v444 = vmul.f32 %v406, %v434
    %v445 = vmul.f32 %v407, %v434
    %v446 = vmul.f32 %v408, %v434
    %v447 = vmul.f32 %v409, %v434
    %v448 = vmul.f32 %v410, %v434
    %v449 = vmul.f32 %v411, %v434
    %v450 = vmul.f32 %v412, %v434
    %v451 = vmul.f32 %v413, %v434
    %v452 = vmul.f32 %v414, %v434
    %v453 = vmul.f32 %v415, %v434
    %v454 = vmul.f32 %v416, %v434
    %v455 = vmul.f32 %v417, %v434
    %v456 = vmul.f32 %v418, %v434
    %v457 = vmul.f32 %v419, %v434
    %v458 = vmul.f32 %v420, %v434
    %v459 = vmul.f32 %v421, %v434
    %v460 = vmul.f32 %v422, %v434
    %v461 = vmul.f32 %v423, %v434
    %v462 = vmul.f32 %v424, %v434
    %v463 = vmul.f32 %v425, %v434
    %v464 = vmul.f32 %v426, %v434
    %v465 = vmul.f32 %v427, %v434
    %v466 = vmul.f32 %v428, %v434
    %v467 = vmul.f32 %v429, %v434
    %v469 = vlaneseq
    %v470 = vshrl.u32 %v469, 7
    %v471 = vsub.s32 0, %v470
    %v472 = vrot.slane %v76, %v471
    %v474 = vadd.f32 %v436, %v472
    %v475 = vadd.f32 %v437, %v472
    %v476 = vadd.f32 %v438, %v472
    %v477 = vadd.f32 %v439, %v472
    %v478 = vadd.f32 %v440, %v472
    %v479 = vadd.f32 %v441, %v472
    %v480 = vadd.f32 %v442, %v472
    %v481 = vadd.f32 %v443, %v472
    %v482 = vadd.f32 %v444, %v472
    %v483 = vadd.f32 %v445, %v472
    %v484 = vadd.f32 %v446, %v472
    %v485 = vadd.f32 %v447, %v472
    %v486 = vadd.f32 %v448, %v472
    %v487 = vadd.f32 %v449, %v472
    %v488 = vadd.f32 %v450, %v472
    %v489 = vadd.f32 %v451, %v472
    %v490 = vadd.f32 %v452, %v472
    %v491 = vadd.f32 %v453, %v472
    %v492 = vadd.f32 %v454, %v472
    %v493 = vadd.f32 %v455, %v472
    %v494 = vadd.f32 %v456, %v472
    %v495 = vadd.f32 %v457, %v472
    %v496 = vadd.f32 %v458, %v472
    %v497 = vadd.f32 %v459, %v472
    %v498 = vadd.f32 %v460, %v472
    %v499 = vadd.f32 %v461, %v472
    %v500 = vadd.f32 %v462, %v472
    %v501 = vadd.f32 %v463, %v472
    %v502 = vadd.f32 %v464, %v472
    %v503 = vadd.f32 %v465, %v472
    %v504 = vadd.f32 %v466, %v472
    %v505 = vadd.f32 %v467, %v472
    %v506 = vpack.c.bf16 %v475, %v474
    %v507 = vpack.c.bf16 %v477, %v476
    %v508 = vpack.c.bf16 %v479, %v478
    %v509 = vpack.c.bf16 %v481, %v480
    %v510 = vpack.c.bf16 %v483, %v482
    %v511 = vpack.c.bf16 %v485, %v484
    %v512 = vpack.c.bf16 %v487, %v486
    %v513 = vpack.c.bf16 %v489, %v488
    %v514 = vpack.c.bf16 %v491, %v490
    %v515 = vpack.c.bf16 %v493, %v492
    %v516 = vpack.c.bf16 %v495, %v494
    %v517 = vpack.c.bf16 %v497, %v496
    %v518 = vpack.c.bf16 %v499, %v498
    %v519 = vpack.c.bf16 %v501, %v500
    %v520 = vpack.c.bf16 %v503, %v502
    %v521 = vpack.c.bf16 %v505, %v504
    %v522 = vld [vmem:[%s1] sm:$0xff]
    %v523 = vld [vmem:[%s1 + $0x8] sm:$0xf]
    %v524 = vld [vmem:[%s1 + $0xc] sm:$0xff]
    %v525 = vld [vmem:[%s1 + $0x14] sm:$0xf]
    %v526 = vld [vmem:[%s1 + $0x18] sm:$0xff]
    %v527 = vld [vmem:[%s1 + $0x20] sm:$0xf]
    %v528 = vld [vmem:[%s1 + $0x24] sm:$0xff]
    %v529 = vld [vmem:[%s1 + $0x2c] sm:$0xf]
    %v530 = vld [vmem:[%s1 + $0x30] sm:$0xff]
    %v531 = vld [vmem:[%s1 + $0x38] sm:$0xf]
    %v532 = vld [vmem:[%s1 + $0x3c] sm:$0xff]
    %v533 = vld [vmem:[%s1 + $0x44] sm:$0xf]
    %v534 = vld [vmem:[%s1 + $0x48] sm:$0xff]
    %v535 = vld [vmem:[%s1 + $0x50] sm:$0xf]
    %v536 = vld [vmem:[%s1 + $0x54] sm:$0xff]
    %v537 = vld [vmem:[%s1 + $0x5c] sm:$0xf]
    %v538 = vld [vmem:[%s1 + $0x60] sm:$0xff]
    %v539 = vld [vmem:[%s1 + $0x68] sm:$0xf]
    %v540 = vld [vmem:[%s1 + $0x6c] sm:$0xff]
    %v541 = vld [vmem:[%s1 + $0x74] sm:$0xf]
    %v542 = vld [vmem:[%s1 + $0x78] sm:$0xff]
    %v543 = vld [vmem:[%s1 + $0x80] sm:$0xf]
    %v544 = vld [vmem:[%s1 + $0x84] sm:$0xff]
    %v545 = vld [vmem:[%s1 + $0x8c] sm:$0xf]
    %v546 = vld [vmem:[%s1 + $0x90] sm:$0xff]
    %v547 = vld [vmem:[%s1 + $0x98] sm:$0xf]
    %v548 = vld [vmem:[%s1 + $0x9c] sm:$0xff]
    %v549 = vld [vmem:[%s1 + $0xa4] sm:$0xf]
    %v550 = vld [vmem:[%s1 + $0xa8] sm:$0xff]
    %v551 = vld [vmem:[%s1 + $0xb0] sm:$0xf]
    %v552 = vld [vmem:[%s1 + $0xb4] sm:$0xff]
    %v553 = vld [vmem:[%s1 + $0xbc] sm:$0xf]
    %v586 = vunpack.c.l.b16 %v522
    %v587 = vunpack.c.h.b16 %v522
    %v588 = vunpack.c.l.b16 %v523
    %v589 = vunpack.c.l.b16 %v524
    %v590 = vunpack.c.h.b16 %v524
    %v591 = vunpack.c.l.b16 %v525
    %v592 = vunpack.c.l.b16 %v526
    %v593 = vunpack.c.h.b16 %v526
    %v594 = vunpack.c.l.b16 %v527
    %v595 = vunpack.c.l.b16 %v528
    %v596 = vunpack.c.h.b16 %v528
    %v597 = vunpack.c.l.b16 %v529
    %v598 = vunpack.c.l.b16 %v530
    %v599 = vunpack.c.h.b16 %v530
    %v600 = vunpack.c.l.b16 %v531
    %v601 = vunpack.c.l.b16 %v532
    %v602 = vunpack.c.h.b16 %v532
    %v603 = vunpack.c.l.b16 %v533
    %v604 = vunpack.c.l.b16 %v534
    %v605 = vunpack.c.h.b16 %v534
    %v606 = vunpack.c.l.b16 %v535
    %v607 = vunpack.c.l.b16 %v536
    %v608 = vunpack.c.h.b16 %v536
    %v609 = vunpack.c.l.b16 %v537
    %v610 = vunpack.c.l.b16 %v538
    %v611 = vunpack.c.h.b16 %v538
    %v612 = vunpack.c.l.b16 %v539
    %v613 = vunpack.c.l.b16 %v540
    %v614 = vunpack.c.h.b16 %v540
    %v615 = vunpack.c.l.b16 %v541
    %v616 = vunpack.c.l.b16 %v542
    %v617 = vunpack.c.h.b16 %v542
    %v618 = vunpack.c.l.b16 %v543
    %v619 = vunpack.c.l.b16 %v544
    %v620 = vunpack.c.h.b16 %v544
    %v621 = vunpack.c.l.b16 %v545
    %v622 = vunpack.c.l.b16 %v546
    %v623 = vunpack.c.h.b16 %v546
    %v624 = vunpack.c.l.b16 %v547
    %v625 = vunpack.c.l.b16 %v548
    %v626 = vunpack.c.h.b16 %v548
    %v627 = vunpack.c.l.b16 %v549
    %v628 = vunpack.c.l.b16 %v550
    %v629 = vunpack.c.h.b16 %v550
    %v630 = vunpack.c.l.b16 %v551
    %v631 = vunpack.c.l.b16 %v552
    %v632 = vunpack.c.h.b16 %v552
    %v633 = vunpack.c.l.b16 %v553
    %v634 = vpack.c.b16 %v589, %v586
    %v635 = vpack.c.b16 %v590, %v587
    %v636 = vpack.c.b16 %v591, %v588
    %v637 = vpack.c.b16 %v595, %v592
    %v638 = vpack.c.b16 %v596, %v593
    %v639 = vpack.c.b16 %v597, %v594
    %v640 = vpack.c.b16 %v601, %v598
    %v641 = vpack.c.b16 %v602, %v599
    %v642 = vpack.c.b16 %v603, %v600
    %v643 = vpack.c.b16 %v607, %v604
    %v644 = vpack.c.b16 %v608, %v605
    %v645 = vpack.c.b16 %v609, %v606
    %v646 = vpack.c.b16 %v613, %v610
    %v647 = vpack.c.b16 %v614, %v611
    %v648 = vpack.c.b16 %v615, %v612
    %v649 = vpack.c.b16 %v619, %v616
    %v650 = vpack.c.b16 %v620, %v617
    %v651 = vpack.c.b16 %v621, %v618
    %v652 = vpack.c.b16 %v625, %v622
    %v653 = vpack.c.b16 %v626, %v623
    %v654 = vpack.c.b16 %v627, %v624
    %v655 = vpack.c.b16 %v631, %v628
    %v656 = vpack.c.b16 %v632, %v629
    %v657 = vpack.c.b16 %v633, %v630
    %682 = vmatprep.subr.bf16.mxu0 %v656
    %683 = vmatpush1.bf16.msra.mxu0 %v655
    %684 = vmatprep.subr.bf16.mxu0 %v653
    %685 = vmatpush1.bf16.msra.mxu0 %v652
    %686 = vmatprep.subr.bf16.mxu0 %v650
    %687 = vmatpush1.bf16.msra.mxu0 %v649
    %688 = vmatprep.subr.bf16.mxu0 %v647
    %689 = vmatpush1.bf16.msra.mxu0 %v646
    %690 = vmatprep.subr.bf16.mxu0 %v644
    %691 = vmatpush1.bf16.msra.mxu0 %v643
    %692 = vmatprep.subr.bf16.mxu0 %v641
    %693 = vmatpush1.bf16.msra.mxu0 %v640
    %694 = vmatprep.subr.bf16.mxu0 %v638
    %695 = vmatpush1.bf16.msra.mxu0 %v637
    %696 = vmatprep.subr.bf16.mxu0 %v635
    %697 = vmatpush1.bf16.msra.mxu0 %v634
    %698 = vmatprep.subr.bf16.mxu0 0
    %699 = vmatpush2.bf16.msra.mxu0 0
    %700 = vmatprep.subr.bf16.mxu0 0
    %701 = vmatpush2.bf16.msra.mxu0 0
    %702 = vmatprep.subr.bf16.mxu0 0
    %703 = vmatpush2.bf16.msra.mxu0 0
    %704 = vmatprep.subr.bf16.mxu0 0
    %705 = vmatpush2.bf16.msra.mxu0 0
    %706 = vmatprep.subr.bf16.mxu0 0
    %707 = vmatpush2.bf16.msra.mxu0 0
    %708 = vmatprep.subr.bf16.mxu0 0
    %709 = vmatpush2.bf16.msra.mxu0 0
    %710 = vmatprep.subr.bf16.mxu0 0
    %711 = vmatpush2.bf16.msra.mxu0 0
    %712 = vmatprep.subr.bf16.mxu0 0
    %713 = vmatpush2.bf16.msra.mxu0 0
    %714 = vmatprep.mubr.bf16.mxu0 0
    %715 = vmatmul.mubr.bf16.gmra.mxu0 %v506
    %v716 = vpop.f32.mrf.mxu0
    %v717 = vadd.f32 0.0, %v716
    %v718 = vpop.f32.mrf.mxu0
    %v719 = vadd.f32 0.0, %v718
    %v720 = vpop.f32.mrf.mxu0
    %v721 = vadd.f32 0.0, %v720
    %v722 = vpop.f32.mrf.mxu0
    %v723 = vadd.f32 0.0, %v722
    %724 = vmatprep.mubr.bf16.mxu0 0
    %725 = vmatmul.mubr.bf16.gmra.mxu0 %v507
    %v726 = vpop.f32.mrf.mxu0
    %v727 = vadd.f32 0.0, %v726
    %v728 = vpop.f32.mrf.mxu0
    %v729 = vadd.f32 0.0, %v728
    %v730 = vpop.f32.mrf.mxu0
    %v731 = vadd.f32 0.0, %v730
    %v732 = vpop.f32.mrf.mxu0
    %v733 = vadd.f32 0.0, %v732
    %734 = vmatprep.mubr.bf16.mxu0 0
    %735 = vmatmul.mubr.bf16.gmra.mxu0 %v508
    %v736 = vpop.f32.mrf.mxu0
    %v737 = vadd.f32 0.0, %v736
    %v738 = vpop.f32.mrf.mxu0
    %v739 = vadd.f32 0.0, %v738
    %v740 = vpop.f32.mrf.mxu0
    %v741 = vadd.f32 0.0, %v740
    %v742 = vpop.f32.mrf.mxu0
    %v743 = vadd.f32 0.0, %v742
    %744 = vmatprep.mubr.bf16.mxu0 0
    %745 = vmatmul.mubr.bf16.gmra.mxu0 %v509
    %v746 = vpop.f32.mrf.mxu0
    %v747 = vadd.f32 0.0, %v746
    %v748 = vpop.f32.mrf.mxu0
    %v749 = vadd.f32 0.0, %v748
    %v750 = vpop.f32.mrf.mxu0
    %v751 = vadd.f32 0.0, %v750
    %v752 = vpop.f32.mrf.mxu0
    %v753 = vadd.f32 0.0, %v752
    %754 = vmatprep.mubr.bf16.mxu0 0
    %755 = vmatmul.mubr.bf16.gmra.mxu0 %v510
    %v756 = vpop.f32.mrf.mxu0
    %v757 = vadd.f32 0.0, %v756
    %v758 = vpop.f32.mrf.mxu0
    %v759 = vadd.f32 0.0, %v758
    %v760 = vpop.f32.mrf.mxu0
    %v761 = vadd.f32 0.0, %v760
    %v762 = vpop.f32.mrf.mxu0
    %v763 = vadd.f32 0.0, %v762
    %764 = vmatprep.mubr.bf16.mxu0 0
    %765 = vmatmul.mubr.bf16.gmra.mxu0 %v511
    %v766 = vpop.f32.mrf.mxu0
    %v767 = vadd.f32 0.0, %v766
    %v768 = vpop.f32.mrf.mxu0
    %v769 = vadd.f32 0.0, %v768
    %v770 = vpop.f32.mrf.mxu0
    %v771 = vadd.f32 0.0, %v770
    %v772 = vpop.f32.mrf.mxu0
    %v773 = vadd.f32 0.0, %v772
    %774 = vmatprep.mubr.bf16.mxu0 0
    %775 = vmatmul.mubr.bf16.gmra.mxu0 %v512
    %v776 = vpop.f32.mrf.mxu0
    %v777 = vadd.f32 0.0, %v776
    %v778 = vpop.f32.mrf.mxu0
    %v779 = vadd.f32 0.0, %v778
    %v780 = vpop.f32.mrf.mxu0
    %v781 = vadd.f32 0.0, %v780
    %v782 = vpop.f32.mrf.mxu0
    %v783 = vadd.f32 0.0, %v782
    %784 = vmatprep.mubr.bf16.mxu0 0
    %785 = vmatmul.mubr.bf16.gmra.mxu0 %v513
    %v786 = vpop.f32.mrf.mxu0
    %v787 = vadd.f32 0.0, %v786
    %v788 = vpop.f32.mrf.mxu0
    %v789 = vadd.f32 0.0, %v788
    %v790 = vpop.f32.mrf.mxu0
    %v791 = vadd.f32 0.0, %v790
    %v792 = vpop.f32.mrf.mxu0
    %v793 = vadd.f32 0.0, %v792
    %794 = vmatprep.mubr.bf16.mxu0 0
    %795 = vmatmul.mubr.bf16.gmra.mxu0 %v514
    %v796 = vpop.f32.mrf.mxu0
    %v797 = vadd.f32 0.0, %v796
    %v798 = vpop.f32.mrf.mxu0
    %v799 = vadd.f32 0.0, %v798
    %v800 = vpop.f32.mrf.mxu0
    %v801 = vadd.f32 0.0, %v800
    %v802 = vpop.f32.mrf.mxu0
    %v803 = vadd.f32 0.0, %v802
    %804 = vmatprep.mubr.bf16.mxu0 0
    %805 = vmatmul.mubr.bf16.gmra.mxu0 %v515
    %v806 = vpop.f32.mrf.mxu0
    %v807 = vadd.f32 0.0, %v806
    %v808 = vpop.f32.mrf.mxu0
    %v809 = vadd.f32 0.0, %v808
    %v810 = vpop.f32.mrf.mxu0
    %v811 = vadd.f32 0.0, %v810
    %v812 = vpop.f32.mrf.mxu0
    %v813 = vadd.f32 0.0, %v812
    %814 = vmatprep.mubr.bf16.mxu0 0
    %815 = vmatmul.mubr.bf16.gmra.mxu0 %v516
    %v816 = vpop.f32.mrf.mxu0
    %v817 = vadd.f32 0.0, %v816
    %v818 = vpop.f32.mrf.mxu0
    %v819 = vadd.f32 0.0, %v818
    %v820 = vpop.f32.mrf.mxu0
    %v821 = vadd.f32 0.0, %v820
    %v822 = vpop.f32.mrf.mxu0
    %v823 = vadd.f32 0.0, %v822
    %824 = vmatprep.mubr.bf16.mxu0 0
    %825 = vmatmul.mubr.bf16.gmra.mxu0 %v517
    %v826 = vpop.f32.mrf.mxu0
    %v827 = vadd.f32 0.0, %v826
    %v828 = vpop.f32.mrf.mxu0
    %v829 = vadd.f32 0.0, %v828
    %v830 = vpop.f32.mrf.mxu0
    %v831 = vadd.f32 0.0, %v830
    %v832 = vpop.f32.mrf.mxu0
    %v833 = vadd.f32 0.0, %v832
    %834 = vmatprep.mubr.bf16.mxu0 0
    %835 = vmatmul.mubr.bf16.gmra.mxu0 %v518
    %v836 = vpop.f32.mrf.mxu0
    %v837 = vadd.f32 0.0, %v836
    %v838 = vpop.f32.mrf.mxu0
    %v839 = vadd.f32 0.0, %v838
    %v840 = vpop.f32.mrf.mxu0
    %v841 = vadd.f32 0.0, %v840
    %v842 = vpop.f32.mrf.mxu0
    %v843 = vadd.f32 0.0, %v842
    %844 = vmatprep.mubr.bf16.mxu0 0
    %845 = vmatmul.mubr.bf16.gmra.mxu0 %v519
    %v846 = vpop.f32.mrf.mxu0
    %v847 = vadd.f32 0.0, %v846
    %v848 = vpop.f32.mrf.mxu0
    %v849 = vadd.f32 0.0, %v848
    %v850 = vpop.f32.mrf.mxu0
    %v851 = vadd.f32 0.0, %v850
    %v852 = vpop.f32.mrf.mxu0
    %v853 = vadd.f32 0.0, %v852
    %854 = vmatprep.mubr.bf16.mxu0 0
    %855 = vmatmul.mubr.bf16.gmra.mxu0 %v520
    %v856 = vpop.f32.mrf.mxu0
    %v857 = vadd.f32 0.0, %v856
    %v858 = vpop.f32.mrf.mxu0
    %v859 = vadd.f32 0.0, %v858
    %v860 = vpop.f32.mrf.mxu0
    %v861 = vadd.f32 0.0, %v860
    %v862 = vpop.f32.mrf.mxu0
    %v863 = vadd.f32 0.0, %v862
    %864 = vmatprep.mubr.bf16.mxu0 0
    %865 = vmatmul.mubr.bf16.gmra.mxu0 %v521
    %v866 = vpop.f32.mrf.mxu0
    %v867 = vadd.f32 0.0, %v866
    %v868 = vpop.f32.mrf.mxu0
    %v869 = vadd.f32 0.0, %v868
    %v870 = vpop.f32.mrf.mxu0
    %v871 = vadd.f32 0.0, %v870
    %v872 = vpop.f32.mrf.mxu0
    %v873 = vadd.f32 0.0, %v872
    %874 = vdwg.mxu0
    %875 = vmatprep.subr.bf16.mxu0 0
    %876 = vmatpush1.bf16.msra.mxu0 %v657
    %877 = vmatprep.subr.bf16.mxu0 0
    %878 = vmatpush1.bf16.msra.mxu0 %v654
    %879 = vmatprep.subr.bf16.mxu0 0
    %880 = vmatpush1.bf16.msra.mxu0 %v651
    %881 = vmatprep.subr.bf16.mxu0 0
    %882 = vmatpush1.bf16.msra.mxu0 %v648
    %883 = vmatprep.subr.bf16.mxu0 0
    %884 = vmatpush1.bf16.msra.mxu0 %v645
    %885 = vmatprep.subr.bf16.mxu0 0
    %886 = vmatpush1.bf16.msra.mxu0 %v642
    %887 = vmatprep.subr.bf16.mxu0 0
    %888 = vmatpush1.bf16.msra.mxu0 %v639
    %889 = vmatprep.subr.bf16.mxu0 0
    %890 = vmatpush1.bf16.msra.mxu0 %v636
    %891 = vmatprep.subr.bf16.mxu0 0
    %892 = vmatpush2.bf16.msra.mxu0 0
    %893 = vmatprep.subr.bf16.mxu0 0
    %894 = vmatpush2.bf16.msra.mxu0 0
    %895 = vmatprep.subr.bf16.mxu0 0
    %896 = vmatpush2.bf16.msra.mxu0 0
    %897 = vmatprep.subr.bf16.mxu0 0
    %898 = vmatpush2.bf16.msra.mxu0 0
    %899 = vmatprep.subr.bf16.mxu0 0
    %900 = vmatpush2.bf16.msra.mxu0 0
    %901 = vmatprep.subr.bf16.mxu0 0
    %902 = vmatpush2.bf16.msra.mxu0 0
    %903 = vmatprep.subr.bf16.mxu0 0
    %904 = vmatpush2.bf16.msra.mxu0 0
    %905 = vmatprep.subr.bf16.mxu0 0
    %906 = vmatpush2.bf16.msra.mxu0 0
    %907 = vmatprep.mubr.bf16.mxu0 0
    %908 = vmatmul.mubr.bf16.gmra.mxu0 %v506
    %v909 = vpop.f32.mrf.mxu0
    %v910 = vadd.f32 0.0, %v909
    %v911 = vpop.f32.mrf.mxu0
    %v912 = vpop.f32.mrf.mxu0
    %v913 = vadd.f32 0.0, %v912
    %v914 = vpop.f32.mrf.mxu0
    %915 = vmatprep.mubr.bf16.mxu0 0
    %916 = vmatmul.mubr.bf16.gmra.mxu0 %v507
    %v917 = vpop.f32.mrf.mxu0
    %v918 = vadd.f32 0.0, %v917
    %v919 = vpop.f32.mrf.mxu0
    %v920 = vpop.f32.mrf.mxu0
    %v921 = vadd.f32 0.0, %v920
    %v922 = vpop.f32.mrf.mxu0
    %923 = vmatprep.mubr.bf16.mxu0 0
    %924 = vmatmul.mubr.bf16.gmra.mxu0 %v508
    %v925 = vpop.f32.mrf.mxu0
    %v926 = vadd.f32 0.0, %v925
    %v927 = vpop.f32.mrf.mxu0
    %v928 = vpop.f32.mrf.mxu0
    %v929 = vadd.f32 0.0, %v928
    %v930 = vpop.f32.mrf.mxu0
    %931 = vmatprep.mubr.bf16.mxu0 0
    %932 = vmatmul.mubr.bf16.gmra.mxu0 %v509
    %v933 = vpop.f32.mrf.mxu0
    %v934 = vadd.f32 0.0, %v933
    %v935 = vpop.f32.mrf.mxu0
    %v936 = vpop.f32.mrf.mxu0
    %v937 = vadd.f32 0.0, %v936
    %v938 = vpop.f32.mrf.mxu0
    %939 = vmatprep.mubr.bf16.mxu0 0
    %940 = vmatmul.mubr.bf16.gmra.mxu0 %v510
    %v941 = vpop.f32.mrf.mxu0
    %v942 = vadd.f32 0.0, %v941
    %v943 = vpop.f32.mrf.mxu0
    %v944 = vpop.f32.mrf.mxu0
    %v945 = vadd.f32 0.0, %v944
    %v946 = vpop.f32.mrf.mxu0
    %947 = vmatprep.mubr.bf16.mxu0 0
    %948 = vmatmul.mubr.bf16.gmra.mxu0 %v511
    %v949 = vpop.f32.mrf.mxu0
    %v950 = vadd.f32 0.0, %v949
    %v951 = vpop.f32.mrf.mxu0
    %v952 = vpop.f32.mrf.mxu0
    %v953 = vadd.f32 0.0, %v952
    %v954 = vpop.f32.mrf.mxu0
    %955 = vmatprep.mubr.bf16.mxu0 0
    %956 = vmatmul.mubr.bf16.gmra.mxu0 %v512
    %v957 = vpop.f32.mrf.mxu0
    %v958 = vadd.f32 0.0, %v957
    %v959 = vpop.f32.mrf.mxu0
    %v960 = vpop.f32.mrf.mxu0
    %v961 = vadd.f32 0.0, %v960
    %v962 = vpop.f32.mrf.mxu0
    %963 = vmatprep.mubr.bf16.mxu0 0
    %964 = vmatmul.mubr.bf16.gmra.mxu0 %v513
    %v965 = vpop.f32.mrf.mxu0
    %v966 = vadd.f32 0.0, %v965
    %v967 = vpop.f32.mrf.mxu0
    %v968 = vpop.f32.mrf.mxu0
    %v969 = vadd.f32 0.0, %v968
    %v970 = vpop.f32.mrf.mxu0
    %971 = vmatprep.mubr.bf16.mxu0 0
    %972 = vmatmul.mubr.bf16.gmra.mxu0 %v514
    %v973 = vpop.f32.mrf.mxu0
    %v974 = vadd.f32 0.0, %v973
    %v975 = vpop.f32.mrf.mxu0
    %v976 = vpop.f32.mrf.mxu0
    %v977 = vadd.f32 0.0, %v976
    %v978 = vpop.f32.mrf.mxu0
    %979 = vmatprep.mubr.bf16.mxu0 0
    %980 = vmatmul.mubr.bf16.gmra.mxu0 %v515
    %v981 = vpop.f32.mrf.mxu0
    %v982 = vadd.f32 0.0, %v981
    %v983 = vpop.f32.mrf.mxu0
    %v984 = vpop.f32.mrf.mxu0
    %v985 = vadd.f32 0.0, %v984
    %v986 = vpop.f32.mrf.mxu0
    %987 = vmatprep.mubr.bf16.mxu0 0
    %988 = vmatmul.mubr.bf16.gmra.mxu0 %v516
    %v989 = vpop.f32.mrf.mxu0
    %v990 = vadd.f32 0.0, %v989
    %v991 = vpop.f32.mrf.mxu0
    %v992 = vpop.f32.mrf.mxu0
    %v993 = vadd.f32 0.0, %v992
    %v994 = vpop.f32.mrf.mxu0
    %995 = vmatprep.mubr.bf16.mxu0 0
    %996 = vmatmul.mubr.bf16.gmra.mxu0 %v517
    %v997 = vpop.f32.mrf.mxu0
    %v998 = vadd.f32 0.0, %v997
    %v999 = vpop.f32.mrf.mxu0
    %v1000 = vpop.f32.mrf.mxu0
    %v1001 = vadd.f32 0.0, %v1000
    %v1002 = vpop.f32.mrf.mxu0
    %1003 = vmatprep.mubr.bf16.mxu0 0
    %1004 = vmatmul.mubr.bf16.gmra.mxu0 %v518
    %v1005 = vpop.f32.mrf.mxu0
    %v1006 = vadd.f32 0.0, %v1005
    %v1007 = vpop.f32.mrf.mxu0
    %v1008 = vpop.f32.mrf.mxu0
    %v1009 = vadd.f32 0.0, %v1008
    %v1010 = vpop.f32.mrf.mxu0
    %1011 = vmatprep.mubr.bf16.mxu0 0
    %1012 = vmatmul.mubr.bf16.gmra.mxu0 %v519
    %v1013 = vpop.f32.mrf.mxu0
    %v1014 = vadd.f32 0.0, %v1013
    %v1015 = vpop.f32.mrf.mxu0
    %v1016 = vpop.f32.mrf.mxu0
    %v1017 = vadd.f32 0.0, %v1016
    %v1018 = vpop.f32.mrf.mxu0
    %1019 = vmatprep.mubr.bf16.mxu0 0
    %1020 = vmatmul.mubr.bf16.gmra.mxu0 %v520
    %v1021 = vpop.f32.mrf.mxu0
    %v1022 = vadd.f32 0.0, %v1021
    %v1023 = vpop.f32.mrf.mxu0
    %v1024 = vpop.f32.mrf.mxu0
    %v1025 = vadd.f32 0.0, %v1024
    %v1026 = vpop.f32.mrf.mxu0
    %1027 = vmatprep.mubr.bf16.mxu0 0
    %1028 = vmatmul.mubr.bf16.gmra.mxu0 %v521
    %v1029 = vpop.f32.mrf.mxu0
    %v1030 = vadd.f32 0.0, %v1029
    %v1031 = vpop.f32.mrf.mxu0
    %v1032 = vpop.f32.mrf.mxu0
    %v1033 = vadd.f32 0.0, %v1032
    %v1034 = vpop.f32.mrf.mxu0
    %1035 = vdwg.mxu0
    %v1036 = vpack.c.bf16 %v721, %v717
    %v1037 = vpack.c.bf16 %v723, %v719
    %v1038 = vpack.c.bf16 %v913, %v910
    %v1039 = vpack.c.bf16 %v731, %v727
    %v1040 = vpack.c.bf16 %v733, %v729
    %v1041 = vpack.c.bf16 %v921, %v918
    %v1042 = vpack.c.bf16 %v741, %v737
    %v1043 = vpack.c.bf16 %v743, %v739
    %v1044 = vpack.c.bf16 %v929, %v926
    %v1045 = vpack.c.bf16 %v751, %v747
    %v1046 = vpack.c.bf16 %v753, %v749
    %v1047 = vpack.c.bf16 %v937, %v934
    %v1048 = vpack.c.bf16 %v761, %v757
    %v1049 = vpack.c.bf16 %v763, %v759
    %v1050 = vpack.c.bf16 %v945, %v942
    %v1051 = vpack.c.bf16 %v771, %v767
    %v1052 = vpack.c.bf16 %v773, %v769
    %v1053 = vpack.c.bf16 %v953, %v950
    %v1054 = vpack.c.bf16 %v781, %v777
    %v1055 = vpack.c.bf16 %v783, %v779
    %v1056 = vpack.c.bf16 %v961, %v958
    %v1057 = vpack.c.bf16 %v791, %v787
    %v1058 = vpack.c.bf16 %v793, %v789
    %v1059 = vpack.c.bf16 %v969, %v966
    %v1060 = vpack.c.bf16 %v801, %v797
    %v1061 = vpack.c.bf16 %v803, %v799
    %v1062 = vpack.c.bf16 %v977, %v974
    %v1063 = vpack.c.bf16 %v811, %v807
    %v1064 = vpack.c.bf16 %v813, %v809
    %v1065 = vpack.c.bf16 %v985, %v982
    %v1066 = vpack.c.bf16 %v821, %v817
    %v1067 = vpack.c.bf16 %v823, %v819
    %v1068 = vpack.c.bf16 %v993, %v990
    %v1069 = vpack.c.bf16 %v831, %v827
    %v1070 = vpack.c.bf16 %v833, %v829
    %v1071 = vpack.c.bf16 %v1001, %v998
    %v1072 = vpack.c.bf16 %v841, %v837
    %v1073 = vpack.c.bf16 %v843, %v839
    %v1074 = vpack.c.bf16 %v1009, %v1006
    %v1075 = vpack.c.bf16 %v851, %v847
    %v1076 = vpack.c.bf16 %v853, %v849
    %v1077 = vpack.c.bf16 %v1017, %v1014
    %v1078 = vpack.c.bf16 %v861, %v857
    %v1079 = vpack.c.bf16 %v863, %v859
    %v1080 = vpack.c.bf16 %v1025, %v1022
    %v1081 = vpack.c.bf16 %v871, %v867
    %v1082 = vpack.c.bf16 %v873, %v869
    %v1083 = vpack.c.bf16 %v1033, %v1030
    %1100 = vrot.lane.b32.xlu0 %v1036, 96
    %v1101 = vpop.permute.xlu0 %1100
    %1102 = vrot.lane.b32.xlu0 %v1039, 96
    %v1103 = vpop.permute.xlu0 %1102
    %1104 = vrot.lane.b32.xlu0 %v1042, 96
    %v1105 = vpop.permute.xlu0 %1104
    %1106 = vrot.lane.b32.xlu0 %v1045, 96
    %v1107 = vpop.permute.xlu0 %1106
    %1108 = vrot.lane.b32.xlu0 %v1048, 96
    %v1109 = vpop.permute.xlu0 %1108
    %1110 = vrot.lane.b32.xlu0 %v1051, 96
    %v1111 = vpop.permute.xlu0 %1110
    %1112 = vrot.lane.b32.xlu0 %v1054, 96
    %v1113 = vpop.permute.xlu0 %1112
    %1114 = vrot.lane.b32.xlu0 %v1057, 96
    %v1115 = vpop.permute.xlu0 %1114
    %1116 = vrot.lane.b32.xlu0 %v1060, 96
    %v1117 = vpop.permute.xlu0 %1116
    %1118 = vrot.lane.b32.xlu0 %v1063, 96
    %v1119 = vpop.permute.xlu0 %1118
    %1120 = vrot.lane.b32.xlu0 %v1066, 96
    %v1121 = vpop.permute.xlu0 %1120
    %1122 = vrot.lane.b32.xlu0 %v1069, 96
    %v1123 = vpop.permute.xlu0 %1122
    %1124 = vrot.lane.b32.xlu0 %v1072, 96
    %v1125 = vpop.permute.xlu0 %1124
    %1126 = vrot.lane.b32.xlu0 %v1075, 96
    %v1127 = vpop.permute.xlu0 %1126
    %1128 = vrot.lane.b32.xlu0 %v1078, 96
    %v1129 = vpop.permute.xlu0 %1128
    %1130 = vrot.lane.b32.xlu0 %v1081, 96
    %v1131 = vpop.permute.xlu0 %1130
    %1132 = vrot.lane.b32.xlu0 %v1036, 64
    %v1133 = vpop.permute.xlu0 %1132
    %1134 = vrot.lane.b32.xlu0 %v1039, 64
    %v1135 = vpop.permute.xlu0 %1134
    %1136 = vrot.lane.b32.xlu0 %v1042, 64
    %v1137 = vpop.permute.xlu0 %1136
    %1138 = vrot.lane.b32.xlu0 %v1045, 64
    %v1139 = vpop.permute.xlu0 %1138
    %1140 = vrot.lane.b32.xlu0 %v1048, 64
    %v1141 = vpop.permute.xlu0 %1140
    %1142 = vrot.lane.b32.xlu0 %v1051, 64
    %v1143 = vpop.permute.xlu0 %1142
    %1144 = vrot.lane.b32.xlu0 %v1054, 64
    %v1145 = vpop.permute.xlu0 %1144
    %1146 = vrot.lane.b32.xlu0 %v1057, 64
    %v1147 = vpop.permute.xlu0 %1146
    %1148 = vrot.lane.b32.xlu0 %v1060, 64
    %v1149 = vpop.permute.xlu0 %1148
    %1150 = vrot.lane.b32.xlu0 %v1063, 64
    %v1151 = vpop.permute.xlu0 %1150
    %1152 = vrot.lane.b32.xlu0 %v1066, 64
    %v1153 = vpop.permute.xlu0 %1152
    %1154 = vrot.lane.b32.xlu0 %v1069, 64
    %v1155 = vpop.permute.xlu0 %1154
    %1156 = vrot.lane.b32.xlu0 %v1072, 64
    %v1157 = vpop.permute.xlu0 %1156
    %1158 = vrot.lane.b32.xlu0 %v1075, 64
    %v1159 = vpop.permute.xlu0 %1158
    %1160 = vrot.lane.b32.xlu0 %v1078, 64
    %v1161 = vpop.permute.xlu0 %1160
    %1162 = vrot.lane.b32.xlu0 %v1081, 64
    %v1163 = vpop.permute.xlu0 %1162
    %1164 = vrot.lane.b32.xlu0 %v1036, 32
    %v1165 = vpop.permute.xlu0 %1164
    %1166 = vrot.lane.b32.xlu0 %v1039, 32
    %v1167 = vpop.permute.xlu0 %1166
    %1168 = vrot.lane.b32.xlu0 %v1042, 32
    %v1169 = vpop.permute.xlu0 %1168
    %1170 = vrot.lane.b32.xlu0 %v1045, 32
    %v1171 = vpop.permute.xlu0 %1170
    %1172 = vrot.lane.b32.xlu0 %v1048, 32
    %v1173 = vpop.permute.xlu0 %1172
    %1174 = vrot.lane.b32.xlu0 %v1051, 32
    %v1175 = vpop.permute.xlu0 %1174
    %1176 = vrot.lane.b32.xlu0 %v1054, 32
    %v1177 = vpop.permute.xlu0 %1176
    %1178 = vrot.lane.b32.xlu0 %v1057, 32
    %v1179 = vpop.permute.xlu0 %1178
    %1180 = vrot.lane.b32.xlu0 %v1060, 32
    %v1181 = vpop.permute.xlu0 %1180
    %1182 = vrot.lane.b32.xlu0 %v1063, 32
    %v1183 = vpop.permute.xlu0 %1182
    %1184 = vrot.lane.b32.xlu0 %v1066, 32
    %v1185 = vpop.permute.xlu0 %1184
    %1186 = vrot.lane.b32.xlu0 %v1069, 32
    %v1187 = vpop.permute.xlu0 %1186
    %1188 = vrot.lane.b32.xlu0 %v1072, 32
    %v1189 = vpop.permute.xlu0 %1188
    %1190 = vrot.lane.b32.xlu0 %v1075, 32
    %v1191 = vpop.permute.xlu0 %1190
    %1192 = vrot.lane.b32.xlu0 %v1078, 32
    %v1193 = vpop.permute.xlu0 %1192
    %1194 = vrot.lane.b32.xlu0 %v1081, 32
    %v1195 = vpop.permute.xlu0 %1194
    %1212 = vrot.lane.b32.xlu0 %v1037, 96
    %v1213 = vpop.permute.xlu0 %1212
    %1214 = vrot.lane.b32.xlu0 %v1040, 96
    %v1215 = vpop.permute.xlu0 %1214
    %1216 = vrot.lane.b32.xlu0 %v1043, 96
    %v1217 = vpop.permute.xlu0 %1216
    %1218 = vrot.lane.b32.xlu0 %v1046, 96
    %v1219 = vpop.permute.xlu0 %1218
    %1220 = vrot.lane.b32.xlu0 %v1049, 96
    %v1221 = vpop.permute.xlu0 %1220
    %1222 = vrot.lane.b32.xlu0 %v1052, 96
    %v1223 = vpop.permute.xlu0 %1222
    %1224 = vrot.lane.b32.xlu0 %v1055, 96
    %v1225 = vpop.permute.xlu0 %1224
    %1226 = vrot.lane.b32.xlu0 %v1058, 96
    %v1227 = vpop.permute.xlu0 %1226
    %1228 = vrot.lane.b32.xlu0 %v1061, 96
    %v1229 = vpop.permute.xlu0 %1228
    %1230 = vrot.lane.b32.xlu0 %v1064, 96
    %v1231 = vpop.permute.xlu0 %1230
    %1232 = vrot.lane.b32.xlu0 %v1067, 96
    %v1233 = vpop.permute.xlu0 %1232
    %1234 = vrot.lane.b32.xlu0 %v1070, 96
    %v1235 = vpop.permute.xlu0 %1234
    %1236 = vrot.lane.b32.xlu0 %v1073, 96
    %v1237 = vpop.permute.xlu0 %1236
    %1238 = vrot.lane.b32.xlu0 %v1076, 96
    %v1239 = vpop.permute.xlu0 %1238
    %1240 = vrot.lane.b32.xlu0 %v1079, 96
    %v1241 = vpop.permute.xlu0 %1240
    %1242 = vrot.lane.b32.xlu0 %v1082, 96
    %v1243 = vpop.permute.xlu0 %1242
    %1244 = vrot.lane.b32.xlu0 %v1037, 64
    %v1245 = vpop.permute.xlu0 %1244
    %1246 = vrot.lane.b32.xlu0 %v1040, 64
    %v1247 = vpop.permute.xlu0 %1246
    %1248 = vrot.lane.b32.xlu0 %v1043, 64
    %v1249 = vpop.permute.xlu0 %1248
    %1250 = vrot.lane.b32.xlu0 %v1046, 64
    %v1251 = vpop.permute.xlu0 %1250
    %1252 = vrot.lane.b32.xlu0 %v1049, 64
    %v1253 = vpop.permute.xlu0 %1252
    %1254 = vrot.lane.b32.xlu0 %v1052, 64
    %v1255 = vpop.permute.xlu0 %1254
    %1256 = vrot.lane.b32.xlu0 %v1055, 64
    %v1257 = vpop.permute.xlu0 %1256
    %1258 = vrot.lane.b32.xlu0 %v1058, 64
    %v1259 = vpop.permute.xlu0 %1258
    %1260 = vrot.lane.b32.xlu0 %v1061, 64
    %v1261 = vpop.permute.xlu0 %1260
    %1262 = vrot.lane.b32.xlu0 %v1064, 64
    %v1263 = vpop.permute.xlu0 %1262
    %1264 = vrot.lane.b32.xlu0 %v1067, 64
    %v1265 = vpop.permute.xlu0 %1264
    %1266 = vrot.lane.b32.xlu0 %v1070, 64
    %v1267 = vpop.permute.xlu0 %1266
    %1268 = vrot.lane.b32.xlu0 %v1073, 64
    %v1269 = vpop.permute.xlu0 %1268
    %1270 = vrot.lane.b32.xlu0 %v1076, 64
    %v1271 = vpop.permute.xlu0 %1270
    %1272 = vrot.lane.b32.xlu0 %v1079, 64
    %v1273 = vpop.permute.xlu0 %1272
    %1274 = vrot.lane.b32.xlu0 %v1082, 64
    %v1275 = vpop.permute.xlu0 %1274
    %1276 = vrot.lane.b32.xlu0 %v1037, 32
    %v1277 = vpop.permute.xlu0 %1276
    %1278 = vrot.lane.b32.xlu0 %v1040, 32
    %v1279 = vpop.permute.xlu0 %1278
    %1280 = vrot.lane.b32.xlu0 %v1043, 32
    %v1281 = vpop.permute.xlu0 %1280
    %1282 = vrot.lane.b32.xlu0 %v1046, 32
    %v1283 = vpop.permute.xlu0 %1282
    %1284 = vrot.lane.b32.xlu0 %v1049, 32
    %v1285 = vpop.permute.xlu0 %1284
    %1286 = vrot.lane.b32.xlu0 %v1052, 32
    %v1287 = vpop.permute.xlu0 %1286
    %1288 = vrot.lane.b32.xlu0 %v1055, 32
    %v1289 = vpop.permute.xlu0 %1288
    %1290 = vrot.lane.b32.xlu0 %v1058, 32
    %v1291 = vpop.permute.xlu0 %1290
    %1292 = vrot.lane.b32.xlu0 %v1061, 32
    %v1293 = vpop.permute.xlu0 %1292
    %1294 = vrot.lane.b32.xlu0 %v1064, 32
    %v1295 = vpop.permute.xlu0 %1294
    %1296 = vrot.lane.b32.xlu0 %v1067, 32
    %v1297 = vpop.permute.xlu0 %1296
    %1298 = vrot.lane.b32.xlu0 %v1070, 32
    %v1299 = vpop.permute.xlu0 %1298
    %1300 = vrot.lane.b32.xlu0 %v1073, 32
    %v1301 = vpop.permute.xlu0 %1300
    %1302 = vrot.lane.b32.xlu0 %v1076, 32
    %v1303 = vpop.permute.xlu0 %1302
    %1304 = vrot.lane.b32.xlu0 %v1079, 32
    %v1305 = vpop.permute.xlu0 %1304
    %1306 = vrot.lane.b32.xlu0 %v1082, 32
    %v1307 = vpop.permute.xlu0 %1306
    %1324 = vrot.lane.b32.xlu0 %v1038, 96
    %v1325 = vpop.permute.xlu0 %1324
    %1326 = vrot.lane.b32.xlu0 %v1041, 96
    %v1327 = vpop.permute.xlu0 %1326
    %1328 = vrot.lane.b32.xlu0 %v1044, 96
    %v1329 = vpop.permute.xlu0 %1328
    %1330 = vrot.lane.b32.xlu0 %v1047, 96
    %v1331 = vpop.permute.xlu0 %1330
    %1332 = vrot.lane.b32.xlu0 %v1050, 96
    %v1333 = vpop.permute.xlu0 %1332
    %1334 = vrot.lane.b32.xlu0 %v1053, 96
    %v1335 = vpop.permute.xlu0 %1334
    %1336 = vrot.lane.b32.xlu0 %v1056, 96
    %v1337 = vpop.permute.xlu0 %1336
    %1338 = vrot.lane.b32.xlu0 %v1059, 96
    %v1339 = vpop.permute.xlu0 %1338
    %1340 = vrot.lane.b32.xlu0 %v1062, 96
    %v1341 = vpop.permute.xlu0 %1340
    %1342 = vrot.lane.b32.xlu0 %v1065, 96
    %v1343 = vpop.permute.xlu0 %1342
    %1344 = vrot.lane.b32.xlu0 %v1068, 96
    %v1345 = vpop.permute.xlu0 %1344
    %1346 = vrot.lane.b32.xlu0 %v1071, 96
    %v1347 = vpop.permute.xlu0 %1346
    %1348 = vrot.lane.b32.xlu0 %v1074, 96
    %v1349 = vpop.permute.xlu0 %1348
    %1350 = vrot.lane.b32.xlu0 %v1077, 96
    %v1351 = vpop.permute.xlu0 %1350
    %1352 = vrot.lane.b32.xlu0 %v1080, 96
    %v1353 = vpop.permute.xlu0 %1352
    %1354 = vrot.lane.b32.xlu0 %v1083, 96
    %v1355 = vpop.permute.xlu0 %1354
    %1372 = vrot.lane.b32.xlu0 %v1038, 64
    %v1373 = vpop.permute.xlu0 %1372
    %1374 = vrot.lane.b32.xlu0 %v1041, 64
    %v1375 = vpop.permute.xlu0 %1374
    %1376 = vrot.lane.b32.xlu0 %v1044, 64
    %v1377 = vpop.permute.xlu0 %1376
    %1378 = vrot.lane.b32.xlu0 %v1047, 64
    %v1379 = vpop.permute.xlu0 %1378
    %1380 = vrot.lane.b32.xlu0 %v1050, 64
    %v1381 = vpop.permute.xlu0 %1380
    %1382 = vrot.lane.b32.xlu0 %v1053, 64
    %v1383 = vpop.permute.xlu0 %1382
    %1384 = vrot.lane.b32.xlu0 %v1056, 64
    %v1385 = vpop.permute.xlu0 %1384
    %1386 = vrot.lane.b32.xlu0 %v1059, 64
    %v1387 = vpop.permute.xlu0 %1386
    %1388 = vrot.lane.b32.xlu0 %v1062, 64
    %v1389 = vpop.permute.xlu0 %1388
    %1390 = vrot.lane.b32.xlu0 %v1065, 64
    %v1391 = vpop.permute.xlu0 %1390
    %1392 = vrot.lane.b32.xlu0 %v1068, 64
    %v1393 = vpop.permute.xlu0 %1392
    %1394 = vrot.lane.b32.xlu0 %v1071, 64
    %v1395 = vpop.permute.xlu0 %1394
    %1396 = vrot.lane.b32.xlu0 %v1074, 64
    %v1397 = vpop.permute.xlu0 %1396
    %1398 = vrot.lane.b32.xlu0 %v1077, 64
    %v1399 = vpop.permute.xlu0 %1398
    %1400 = vrot.lane.b32.xlu0 %v1080, 64
    %v1401 = vpop.permute.xlu0 %1400
    %1402 = vrot.lane.b32.xlu0 %v1083, 64
    %v1403 = vpop.permute.xlu0 %1402
    %1420 = vrot.lane.b32.xlu0 %v1038, 32
    %v1421 = vpop.permute.xlu0 %1420
    %1422 = vrot.lane.b32.xlu0 %v1041, 32
    %v1423 = vpop.permute.xlu0 %1422
    %1424 = vrot.lane.b32.xlu0 %v1044, 32
    %v1425 = vpop.permute.xlu0 %1424
    %1426 = vrot.lane.b32.xlu0 %v1047, 32
    %v1427 = vpop.permute.xlu0 %1426
    %1428 = vrot.lane.b32.xlu0 %v1050, 32
    %v1429 = vpop.permute.xlu0 %1428
    %1430 = vrot.lane.b32.xlu0 %v1053, 32
    %v1431 = vpop.permute.xlu0 %1430
    %1432 = vrot.lane.b32.xlu0 %v1056, 32
    %v1433 = vpop.permute.xlu0 %1432
    %1434 = vrot.lane.b32.xlu0 %v1059, 32
    %v1435 = vpop.permute.xlu0 %1434
    %1436 = vrot.lane.b32.xlu0 %v1062, 32
    %v1437 = vpop.permute.xlu0 %1436
    %1438 = vrot.lane.b32.xlu0 %v1065, 32
    %v1439 = vpop.permute.xlu0 %1438
    %1440 = vrot.lane.b32.xlu0 %v1068, 32
    %v1441 = vpop.permute.xlu0 %1440
    %1442 = vrot.lane.b32.xlu0 %v1071, 32
    %v1443 = vpop.permute.xlu0 %1442
    %1444 = vrot.lane.b32.xlu0 %v1074, 32
    %v1445 = vpop.permute.xlu0 %1444
    %1446 = vrot.lane.b32.xlu0 %v1077, 32
    %v1447 = vpop.permute.xlu0 %1446
    %1448 = vrot.lane.b32.xlu0 %v1080, 32
    %v1449 = vpop.permute.xlu0 %1448
    %1450 = vrot.lane.b32.xlu0 %v1083, 32
    %v1451 = vpop.permute.xlu0 %1450
    %vm1468 = vcmask 261120
    %v1470 = vsel %vm1468, %v1036, 0
    %v1473 = vsel %vm1468, %v1039, 0
    %v1476 = vsel %vm1468, %v1042, 0
    %v1479 = vsel %vm1468, %v1045, 0
    %v1482 = vsel %vm1468, %v1048, 0
    %v1485 = vsel %vm1468, %v1051, 0
    %v1488 = vsel %vm1468, %v1054, 0
    %v1491 = vsel %vm1468, %v1057, 0
    %v1494 = vsel %vm1468, %v1037, 0
    %v1497 = vsel %vm1468, %v1040, 0
    %v1500 = vsel %vm1468, %v1043, 0
    %v1503 = vsel %vm1468, %v1046, 0
    %v1506 = vsel %vm1468, %v1049, 0
    %v1509 = vsel %vm1468, %v1052, 0
    %v1512 = vsel %vm1468, %v1055, 0
    %v1515 = vsel %vm1468, %v1058, 0
    %1517 = vmatprep.subr.bf16.mxu0 0
    %1518 = vmatpush1.bf16.xpose.msra.mxu0 %v1515
    %1519 = vmatprep.subr.bf16.mxu0 0
    %1520 = vmatpush1.bf16.xpose.msra.mxu0 %v1512
    %1521 = vmatprep.subr.bf16.mxu0 0
    %1522 = vmatpush1.bf16.xpose.msra.mxu0 %v1509
    %1523 = vmatprep.subr.bf16.mxu0 0
    %1524 = vmatpush1.bf16.xpose.msra.mxu0 %v1506
    %1525 = vmatprep.subr.bf16.mxu0 0
    %1526 = vmatpush1.bf16.xpose.msra.mxu0 %v1503
    %1527 = vmatprep.subr.bf16.mxu0 0
    %1528 = vmatpush1.bf16.xpose.msra.mxu0 %v1500
    %1529 = vmatprep.subr.bf16.mxu0 0
    %1530 = vmatpush1.bf16.xpose.msra.mxu0 %v1497
    %1531 = vmatprep.subr.bf16.mxu0 0
    %1532 = vmatpush1.bf16.xpose.msra.mxu0 %v1494
    %1533 = vmatprep.subr.bf16.mxu0 0
    %1534 = vmatpush2.bf16.xpose.msra.mxu0 0
    %1535 = vmatprep.subr.bf16.mxu0 0
    %1536 = vmatpush2.bf16.xpose.msra.mxu0 0
    %1537 = vmatprep.subr.bf16.mxu0 0
    %1538 = vmatpush2.bf16.xpose.msra.mxu0 0
    %1539 = vmatprep.subr.bf16.mxu0 0
    %1540 = vmatpush2.bf16.xpose.msra.mxu0 0
    %1541 = vmatprep.subr.bf16.mxu0 0
    %1542 = vmatpush2.bf16.xpose.msra.mxu0 0
    %1543 = vmatprep.subr.bf16.mxu0 0
    %1544 = vmatpush2.bf16.xpose.msra.mxu0 0
    %1545 = vmatprep.subr.bf16.mxu0 0
    %1546 = vmatpush2.bf16.xpose.msra.mxu0 0
    %1547 = vmatprep.subr.bf16.mxu0 0
    %1548 = vmatpush2.bf16.xpose.msra.mxu0 0
    %1549 = vmatprep.mubr.bf16.mxu0 0
    %1550 = vmatmul.mubr.bf16.gmra.mxu0 %v1470
    %v1551 = vpop.f32.mrf.mxu0
    %v1552 = vadd.f32 0.0, %v1551
    %v1553 = vpop.f32.mrf.mxu0
    %v1554 = vpop.f32.mrf.mxu0
    %v1555 = vadd.f32 0.0, %v1554
    %v1556 = vpop.f32.mrf.mxu0
    %1557 = vmatprep.mubr.bf16.mxu0 0
    %1558 = vmatmul.mubr.bf16.gmra.mxu0 %v1473
    %v1559 = vpop.f32.mrf.mxu0
    %v1560 = vadd.f32 0.0, %v1559
    %v1561 = vpop.f32.mrf.mxu0
    %v1562 = vpop.f32.mrf.mxu0
    %v1563 = vadd.f32 0.0, %v1562
    %v1564 = vpop.f32.mrf.mxu0
    %1565 = vmatprep.mubr.bf16.mxu0 0
    %1566 = vmatmul.mubr.bf16.gmra.mxu0 %v1476
    %v1567 = vpop.f32.mrf.mxu0
    %v1568 = vadd.f32 0.0, %v1567
    %v1569 = vpop.f32.mrf.mxu0
    %v1570 = vpop.f32.mrf.mxu0
    %v1571 = vadd.f32 0.0, %v1570
    %v1572 = vpop.f32.mrf.mxu0
    %1573 = vmatprep.mubr.bf16.mxu0 0
    %1574 = vmatmul.mubr.bf16.gmra.mxu0 %v1479
    %v1575 = vpop.f32.mrf.mxu0
    %v1576 = vadd.f32 0.0, %v1575
    %v1577 = vpop.f32.mrf.mxu0
    %v1578 = vpop.f32.mrf.mxu0
    %v1579 = vadd.f32 0.0, %v1578
    %v1580 = vpop.f32.mrf.mxu0
    %1581 = vmatprep.mubr.bf16.mxu0 0
    %1582 = vmatmul.mubr.bf16.gmra.mxu0 %v1482
    %v1583 = vpop.f32.mrf.mxu0
    %v1584 = vadd.f32 0.0, %v1583
    %v1585 = vpop.f32.mrf.mxu0
    %v1586 = vpop.f32.mrf.mxu0
    %v1587 = vadd.f32 0.0, %v1586
    %v1588 = vpop.f32.mrf.mxu0
    %1589 = vmatprep.mubr.bf16.mxu0 0
    %1590 = vmatmul.mubr.bf16.gmra.mxu0 %v1485
    %v1591 = vpop.f32.mrf.mxu0
    %v1592 = vadd.f32 0.0, %v1591
    %v1593 = vpop.f32.mrf.mxu0
    %v1594 = vpop.f32.mrf.mxu0
    %v1595 = vadd.f32 0.0, %v1594
    %v1596 = vpop.f32.mrf.mxu0
    %1597 = vmatprep.mubr.bf16.mxu0 0
    %1598 = vmatmul.mubr.bf16.gmra.mxu0 %v1488
    %v1599 = vpop.f32.mrf.mxu0
    %v1600 = vadd.f32 0.0, %v1599
    %v1601 = vpop.f32.mrf.mxu0
    %v1602 = vpop.f32.mrf.mxu0
    %v1603 = vadd.f32 0.0, %v1602
    %v1604 = vpop.f32.mrf.mxu0
    %1605 = vmatprep.mubr.bf16.mxu0 0
    %1606 = vmatmul.mubr.bf16.gmra.mxu0 %v1491
    %v1607 = vpop.f32.mrf.mxu0
    %v1608 = vadd.f32 0.0, %v1607
    %v1609 = vpop.f32.mrf.mxu0
    %v1610 = vpop.f32.mrf.mxu0
    %v1611 = vadd.f32 0.0, %v1610
    %v1612 = vpop.f32.mrf.mxu0
    %1613 = vdwg.mxu0
    %v1615 = vsel %vm1468, %v1060, 0
    %v1618 = vsel %vm1468, %v1063, 0
    %v1621 = vsel %vm1468, %v1066, 0
    %v1624 = vsel %vm1468, %v1069, 0
    %v1627 = vsel %vm1468, %v1072, 0
    %v1630 = vsel %vm1468, %v1075, 0
    %v1633 = vsel %vm1468, %v1078, 0
    %v1636 = vsel %vm1468, %v1081, 0
    %v1639 = vsel %vm1468, %v1061, 0
    %v1642 = vsel %vm1468, %v1064, 0
    %v1645 = vsel %vm1468, %v1067, 0
    %v1648 = vsel %vm1468, %v1070, 0
    %v1651 = vsel %vm1468, %v1073, 0
    %v1654 = vsel %vm1468, %v1076, 0
    %v1657 = vsel %vm1468, %v1079, 0
    %v1660 = vsel %vm1468, %v1082, 0
    %1662 = vmatprep.subr.bf16.mxu0 0
    %1663 = vmatpush1.bf16.xpose.msra.mxu0 %v1660
    %1664 = vmatprep.subr.bf16.mxu0 0
    %1665 = vmatpush1.bf16.xpose.msra.mxu0 %v1657
    %1666 = vmatprep.subr.bf16.mxu0 0
    %1667 = vmatpush1.bf16.xpose.msra.mxu0 %v1654
    %1668 = vmatprep.subr.bf16.mxu0 0
    %1669 = vmatpush1.bf16.xpose.msra.mxu0 %v1651
    %1670 = vmatprep.subr.bf16.mxu0 0
    %1671 = vmatpush1.bf16.xpose.msra.mxu0 %v1648
    %1672 = vmatprep.subr.bf16.mxu0 0
    %1673 = vmatpush1.bf16.xpose.msra.mxu0 %v1645
    %1674 = vmatprep.subr.bf16.mxu0 0
    %1675 = vmatpush1.bf16.xpose.msra.mxu0 %v1642
    %1676 = vmatprep.subr.bf16.mxu0 0
    %1677 = vmatpush1.bf16.xpose.msra.mxu0 %v1639
    %1678 = vmatprep.subr.bf16.mxu0 0
    %1679 = vmatpush2.bf16.xpose.msra.mxu0 0
    %1680 = vmatprep.subr.bf16.mxu0 0
    %1681 = vmatpush2.bf16.xpose.msra.mxu0 0
    %1682 = vmatprep.subr.bf16.mxu0 0
    %1683 = vmatpush2.bf16.xpose.msra.mxu0 0
    %1684 = vmatprep.subr.bf16.mxu0 0
    %1685 = vmatpush2.bf16.xpose.msra.mxu0 0
    %1686 = vmatprep.subr.bf16.mxu0 0
    %1687 = vmatpush2.bf16.xpose.msra.mxu0 0
    %1688 = vmatprep.subr.bf16.mxu0 0
    %1689 = vmatpush2.bf16.xpose.msra.mxu0 0
    %1690 = vmatprep.subr.bf16.mxu0 0
    %1691 = vmatpush2.bf16.xpose.msra.mxu0 0
    %1692 = vmatprep.subr.bf16.mxu0 0
    %1693 = vmatpush2.bf16.xpose.msra.mxu0 0
    %1694 = vmatprep.mubr.bf16.mxu0 0
    %1695 = vmatmul.mubr.bf16.gmra.mxu0 %v1615
    %v1696 = vpop.f32.mrf.mxu0
    %v1697 = vadd.f32 0.0, %v1696
    %v1698 = vpop.f32.mrf.mxu0
    %v1699 = vpop.f32.mrf.mxu0
    %v1700 = vadd.f32 0.0, %v1699
    %v1701 = vpop.f32.mrf.mxu0
    %1702 = vmatprep.mubr.bf16.mxu0 0
    %1703 = vmatmul.mubr.bf16.gmra.mxu0 %v1618
    %v1704 = vpop.f32.mrf.mxu0
    %v1705 = vadd.f32 0.0, %v1704
    %v1706 = vpop.f32.mrf.mxu0
    %v1707 = vpop.f32.mrf.mxu0
    %v1708 = vadd.f32 0.0, %v1707
    %v1709 = vpop.f32.mrf.mxu0
    %1710 = vmatprep.mubr.bf16.mxu0 0
    %1711 = vmatmul.mubr.bf16.gmra.mxu0 %v1621
    %v1712 = vpop.f32.mrf.mxu0
    %v1713 = vadd.f32 0.0, %v1712
    %v1714 = vpop.f32.mrf.mxu0
    %v1715 = vpop.f32.mrf.mxu0
    %v1716 = vadd.f32 0.0, %v1715
    %v1717 = vpop.f32.mrf.mxu0
    %1718 = vmatprep.mubr.bf16.mxu0 0
    %1719 = vmatmul.mubr.bf16.gmra.mxu0 %v1624
    %v1720 = vpop.f32.mrf.mxu0
    %v1721 = vadd.f32 0.0, %v1720
    %v1722 = vpop.f32.mrf.mxu0
    %v1723 = vpop.f32.mrf.mxu0
    %v1724 = vadd.f32 0.0, %v1723
    %v1725 = vpop.f32.mrf.mxu0
    %1726 = vmatprep.mubr.bf16.mxu0 0
    %1727 = vmatmul.mubr.bf16.gmra.mxu0 %v1627
    %v1728 = vpop.f32.mrf.mxu0
    %v1729 = vadd.f32 0.0, %v1728
    %v1730 = vpop.f32.mrf.mxu0
    %v1731 = vpop.f32.mrf.mxu0
    %v1732 = vadd.f32 0.0, %v1731
    %v1733 = vpop.f32.mrf.mxu0
    %1734 = vmatprep.mubr.bf16.mxu0 0
    %1735 = vmatmul.mubr.bf16.gmra.mxu0 %v1630
    %v1736 = vpop.f32.mrf.mxu0
    %v1737 = vadd.f32 0.0, %v1736
    %v1738 = vpop.f32.mrf.mxu0
    %v1739 = vpop.f32.mrf.mxu0
    %v1740 = vadd.f32 0.0, %v1739
    %v1741 = vpop.f32.mrf.mxu0
    %1742 = vmatprep.mubr.bf16.mxu0 0
    %1743 = vmatmul.mubr.bf16.gmra.mxu0 %v1633
    %v1744 = vpop.f32.mrf.mxu0
    %v1745 = vadd.f32 0.0, %v1744
    %v1746 = vpop.f32.mrf.mxu0
    %v1747 = vpop.f32.mrf.mxu0
    %v1748 = vadd.f32 0.0, %v1747
    %v1749 = vpop.f32.mrf.mxu0
    %1750 = vmatprep.mubr.bf16.mxu0 0
    %1751 = vmatmul.mubr.bf16.gmra.mxu0 %v1636
    %v1752 = vpop.f32.mrf.mxu0
    %v1753 = vadd.f32 0.0, %v1752
    %v1754 = vpop.f32.mrf.mxu0
    %v1755 = vpop.f32.mrf.mxu0
    %v1756 = vadd.f32 0.0, %v1755
    %v1757 = vpop.f32.mrf.mxu0
    %1758 = vdwg.mxu0
    %v1760 = vsel %vm1468, %v1101, 0
    %v1763 = vsel %vm1468, %v1103, 0
    %v1766 = vsel %vm1468, %v1105, 0
    %v1769 = vsel %vm1468, %v1107, 0
    %v1772 = vsel %vm1468, %v1109, 0
    %v1775 = vsel %vm1468, %v1111, 0
    %v1778 = vsel %vm1468, %v1113, 0
    %v1781 = vsel %vm1468, %v1115, 0
    %v1784 = vsel %vm1468, %v1213, 0
    %v1787 = vsel %vm1468, %v1215, 0
    %v1790 = vsel %vm1468, %v1217, 0
    %v1793 = vsel %vm1468, %v1219, 0
    %v1796 = vsel %vm1468, %v1221, 0
    %v1799 = vsel %vm1468, %v1223, 0
    %v1802 = vsel %vm1468, %v1225, 0
    %v1805 = vsel %vm1468, %v1227, 0
    %1807 = vmatprep.subr.bf16.mxu0 0
    %1808 = vmatpush1.bf16.xpose.msra.mxu0 %v1805
    %1809 = vmatprep.subr.bf16.mxu0 0
    %1810 = vmatpush1.bf16.xpose.msra.mxu0 %v1802
    %1811 = vmatprep.subr.bf16.mxu0 0
    %1812 = vmatpush1.bf16.xpose.msra.mxu0 %v1799
    %1813 = vmatprep.subr.bf16.mxu0 0
    %1814 = vmatpush1.bf16.xpose.msra.mxu0 %v1796
    %1815 = vmatprep.subr.bf16.mxu0 0
    %1816 = vmatpush1.bf16.xpose.msra.mxu0 %v1793
    %1817 = vmatprep.subr.bf16.mxu0 0
    %1818 = vmatpush1.bf16.xpose.msra.mxu0 %v1790
    %1819 = vmatprep.subr.bf16.mxu0 0
    %1820 = vmatpush1.bf16.xpose.msra.mxu0 %v1787
    %1821 = vmatprep.subr.bf16.mxu0 0
    %1822 = vmatpush1.bf16.xpose.msra.mxu0 %v1784
    %1823 = vmatprep.subr.bf16.mxu0 0
    %1824 = vmatpush2.bf16.xpose.msra.mxu0 0
    %1825 = vmatprep.subr.bf16.mxu0 0
    %1826 = vmatpush2.bf16.xpose.msra.mxu0 0
    %1827 = vmatprep.subr.bf16.mxu0 0
    %1828 = vmatpush2.bf16.xpose.msra.mxu0 0
    %1829 = vmatprep.subr.bf16.mxu0 0
    %1830 = vmatpush2.bf16.xpose.msra.mxu0 0
    %1831 = vmatprep.subr.bf16.mxu0 0
    %1832 = vmatpush2.bf16.xpose.msra.mxu0 0
    %1833 = vmatprep.subr.bf16.mxu0 0
    %1834 = vmatpush2.bf16.xpose.msra.mxu0 0
    %1835 = vmatprep.subr.bf16.mxu0 0
    %1836 = vmatpush2.bf16.xpose.msra.mxu0 0
    %1837 = vmatprep.subr.bf16.mxu0 0
    %1838 = vmatpush2.bf16.xpose.msra.mxu0 0
    %1839 = vmatprep.mubr.bf16.mxu0 0
    %1840 = vmatmul.mubr.bf16.gmra.mxu0 %v1760
    %v1841 = vpop.f32.mrf.mxu0
    %v1842 = vadd.f32 0.0, %v1841
    %v1843 = vpop.f32.mrf.mxu0
    %v1844 = vpop.f32.mrf.mxu0
    %v1845 = vadd.f32 0.0, %v1844
    %v1846 = vpop.f32.mrf.mxu0
    %1847 = vmatprep.mubr.bf16.mxu0 0
    %1848 = vmatmul.mubr.bf16.gmra.mxu0 %v1763
    %v1849 = vpop.f32.mrf.mxu0
    %v1850 = vadd.f32 0.0, %v1849
    %v1851 = vpop.f32.mrf.mxu0
    %v1852 = vpop.f32.mrf.mxu0
    %v1853 = vadd.f32 0.0, %v1852
    %v1854 = vpop.f32.mrf.mxu0
    %1855 = vmatprep.mubr.bf16.mxu0 0
    %1856 = vmatmul.mubr.bf16.gmra.mxu0 %v1766
    %v1857 = vpop.f32.mrf.mxu0
    %v1858 = vadd.f32 0.0, %v1857
    %v1859 = vpop.f32.mrf.mxu0
    %v1860 = vpop.f32.mrf.mxu0
    %v1861 = vadd.f32 0.0, %v1860
    %v1862 = vpop.f32.mrf.mxu0
    %1863 = vmatprep.mubr.bf16.mxu0 0
    %1864 = vmatmul.mubr.bf16.gmra.mxu0 %v1769
    %v1865 = vpop.f32.mrf.mxu0
    %v1866 = vadd.f32 0.0, %v1865
    %v1867 = vpop.f32.mrf.mxu0
    %v1868 = vpop.f32.mrf.mxu0
    %v1869 = vadd.f32 0.0, %v1868
    %v1870 = vpop.f32.mrf.mxu0
    %1871 = vmatprep.mubr.bf16.mxu0 0
    %1872 = vmatmul.mubr.bf16.gmra.mxu0 %v1772
    %v1873 = vpop.f32.mrf.mxu0
    %v1874 = vadd.f32 0.0, %v1873
    %v1875 = vpop.f32.mrf.mxu0
    %v1876 = vpop.f32.mrf.mxu0
    %v1877 = vadd.f32 0.0, %v1876
    %v1878 = vpop.f32.mrf.mxu0
    %1879 = vmatprep.mubr.bf16.mxu0 0
    %1880 = vmatmul.mubr.bf16.gmra.mxu0 %v1775
    %v1881 = vpop.f32.mrf.mxu0
    %v1882 = vadd.f32 0.0, %v1881
    %v1883 = vpop.f32.mrf.mxu0
    %v1884 = vpop.f32.mrf.mxu0
    %v1885 = vadd.f32 0.0, %v1884
    %v1886 = vpop.f32.mrf.mxu0
    %1887 = vmatprep.mubr.bf16.mxu0 0
    %1888 = vmatmul.mubr.bf16.gmra.mxu0 %v1778
    %v1889 = vpop.f32.mrf.mxu0
    %v1890 = vadd.f32 0.0, %v1889
    %v1891 = vpop.f32.mrf.mxu0
    %v1892 = vpop.f32.mrf.mxu0
    %v1893 = vadd.f32 0.0, %v1892
    %v1894 = vpop.f32.mrf.mxu0
    %1895 = vmatprep.mubr.bf16.mxu0 0
    %1896 = vmatmul.mubr.bf16.gmra.mxu0 %v1781
    %v1897 = vpop.f32.mrf.mxu0
    %v1898 = vadd.f32 0.0, %v1897
    %v1899 = vpop.f32.mrf.mxu0
    %v1900 = vpop.f32.mrf.mxu0
    %v1901 = vadd.f32 0.0, %v1900
    %v1902 = vpop.f32.mrf.mxu0
    %1903 = vdwg.mxu0
    %v1905 = vsel %vm1468, %v1117, 0
    %v1908 = vsel %vm1468, %v1119, 0
    %v1911 = vsel %vm1468, %v1121, 0
    %v1914 = vsel %vm1468, %v1123, 0
    %v1917 = vsel %vm1468, %v1125, 0
    %v1920 = vsel %vm1468, %v1127, 0
    %v1923 = vsel %vm1468, %v1129, 0
    %v1926 = vsel %vm1468, %v1131, 0
    %v1929 = vsel %vm1468, %v1229, 0
    %v1932 = vsel %vm1468, %v1231, 0
    %v1935 = vsel %vm1468, %v1233, 0
    %v1938 = vsel %vm1468, %v1235, 0
    %v1941 = vsel %vm1468, %v1237, 0
    %v1944 = vsel %vm1468, %v1239, 0
    %v1947 = vsel %vm1468, %v1241, 0
    %v1950 = vsel %vm1468, %v1243, 0
    %1952 = vmatprep.subr.bf16.mxu0 0
    %1953 = vmatpush1.bf16.xpose.msra.mxu0 %v1950
    %1954 = vmatprep.subr.bf16.mxu0 0
    %1955 = vmatpush1.bf16.xpose.msra.mxu0 %v1947
    %1956 = vmatprep.subr.bf16.mxu0 0
    %1957 = vmatpush1.bf16.xpose.msra.mxu0 %v1944
    %1958 = vmatprep.subr.bf16.mxu0 0
    %1959 = vmatpush1.bf16.xpose.msra.mxu0 %v1941
    %1960 = vmatprep.subr.bf16.mxu0 0
    %1961 = vmatpush1.bf16.xpose.msra.mxu0 %v1938
    %1962 = vmatprep.subr.bf16.mxu0 0
    %1963 = vmatpush1.bf16.xpose.msra.mxu0 %v1935
    %1964 = vmatprep.subr.bf16.mxu0 0
    %1965 = vmatpush1.bf16.xpose.msra.mxu0 %v1932
    %1966 = vmatprep.subr.bf16.mxu0 0
    %1967 = vmatpush1.bf16.xpose.msra.mxu0 %v1929
    %1968 = vmatprep.subr.bf16.mxu0 0
    %1969 = vmatpush2.bf16.xpose.msra.mxu0 0
    %1970 = vmatprep.subr.bf16.mxu0 0
    %1971 = vmatpush2.bf16.xpose.msra.mxu0 0
    %1972 = vmatprep.subr.bf16.mxu0 0
    %1973 = vmatpush2.bf16.xpose.msra.mxu0 0
    %1974 = vmatprep.subr.bf16.mxu0 0
    %1975 = vmatpush2.bf16.xpose.msra.mxu0 0
    %1976 = vmatprep.subr.bf16.mxu0 0
    %1977 = vmatpush2.bf16.xpose.msra.mxu0 0
    %1978 = vmatprep.subr.bf16.mxu0 0
    %1979 = vmatpush2.bf16.xpose.msra.mxu0 0
    %1980 = vmatprep.subr.bf16.mxu0 0
    %1981 = vmatpush2.bf16.xpose.msra.mxu0 0
    %1982 = vmatprep.subr.bf16.mxu0 0
    %1983 = vmatpush2.bf16.xpose.msra.mxu0 0
    %1984 = vmatprep.mubr.bf16.mxu0 0
    %1985 = vmatmul.mubr.bf16.gmra.mxu0 %v1905
    %v1986 = vpop.f32.mrf.mxu0
    %v1987 = vadd.f32 0.0, %v1986
    %v1988 = vpop.f32.mrf.mxu0
    %v1989 = vpop.f32.mrf.mxu0
    %v1990 = vadd.f32 0.0, %v1989
    %v1991 = vpop.f32.mrf.mxu0
    %1992 = vmatprep.mubr.bf16.mxu0 0
    %1993 = vmatmul.mubr.bf16.gmra.mxu0 %v1908
    %v1994 = vpop.f32.mrf.mxu0
    %v1995 = vadd.f32 0.0, %v1994
    %v1996 = vpop.f32.mrf.mxu0
    %v1997 = vpop.f32.mrf.mxu0
    %v1998 = vadd.f32 0.0, %v1997
    %v1999 = vpop.f32.mrf.mxu0
    %2000 = vmatprep.mubr.bf16.mxu0 0
    %2001 = vmatmul.mubr.bf16.gmra.mxu0 %v1911
    %v2002 = vpop.f32.mrf.mxu0
    %v2003 = vadd.f32 0.0, %v2002
    %v2004 = vpop.f32.mrf.mxu0
    %v2005 = vpop.f32.mrf.mxu0
    %v2006 = vadd.f32 0.0, %v2005
    %v2007 = vpop.f32.mrf.mxu0
    %2008 = vmatprep.mubr.bf16.mxu0 0
    %2009 = vmatmul.mubr.bf16.gmra.mxu0 %v1914
    %v2010 = vpop.f32.mrf.mxu0
    %v2011 = vadd.f32 0.0, %v2010
    %v2012 = vpop.f32.mrf.mxu0
    %v2013 = vpop.f32.mrf.mxu0
    %v2014 = vadd.f32 0.0, %v2013
    %v2015 = vpop.f32.mrf.mxu0
    %2016 = vmatprep.mubr.bf16.mxu0 0
    %2017 = vmatmul.mubr.bf16.gmra.mxu0 %v1917
    %v2018 = vpop.f32.mrf.mxu0
    %v2019 = vadd.f32 0.0, %v2018
    %v2020 = vpop.f32.mrf.mxu0
    %v2021 = vpop.f32.mrf.mxu0
    %v2022 = vadd.f32 0.0, %v2021
    %v2023 = vpop.f32.mrf.mxu0
    %2024 = vmatprep.mubr.bf16.mxu0 0
    %2025 = vmatmul.mubr.bf16.gmra.mxu0 %v1920
    %v2026 = vpop.f32.mrf.mxu0
    %v2027 = vadd.f32 0.0, %v2026
    %v2028 = vpop.f32.mrf.mxu0
    %v2029 = vpop.f32.mrf.mxu0
    %v2030 = vadd.f32 0.0, %v2029
    %v2031 = vpop.f32.mrf.mxu0
    %2032 = vmatprep.mubr.bf16.mxu0 0
    %2033 = vmatmul.mubr.bf16.gmra.mxu0 %v1923
    %v2034 = vpop.f32.mrf.mxu0
    %v2035 = vadd.f32 0.0, %v2034
    %v2036 = vpop.f32.mrf.mxu0
    %v2037 = vpop.f32.mrf.mxu0
    %v2038 = vadd.f32 0.0, %v2037
    %v2039 = vpop.f32.mrf.mxu0
    %2040 = vmatprep.mubr.bf16.mxu0 0
    %2041 = vmatmul.mubr.bf16.gmra.mxu0 %v1926
    %v2042 = vpop.f32.mrf.mxu0
    %v2043 = vadd.f32 0.0, %v2042
    %v2044 = vpop.f32.mrf.mxu0
    %v2045 = vpop.f32.mrf.mxu0
    %v2046 = vadd.f32 0.0, %v2045
    %v2047 = vpop.f32.mrf.mxu0
    %2048 = vdwg.mxu0
    %v2050 = vsel %vm1468, %v1133, 0
    %v2053 = vsel %vm1468, %v1135, 0
    %v2056 = vsel %vm1468, %v1137, 0
    %v2059 = vsel %vm1468, %v1139, 0
    %v2062 = vsel %vm1468, %v1141, 0
    %v2065 = vsel %vm1468, %v1143, 0
    %v2068 = vsel %vm1468, %v1145, 0
    %v2071 = vsel %vm1468, %v1147, 0
    %v2074 = vsel %vm1468, %v1245, 0
    %v2077 = vsel %vm1468, %v1247, 0
    %v2080 = vsel %vm1468, %v1249, 0
    %v2083 = vsel %vm1468, %v1251, 0
    %v2086 = vsel %vm1468, %v1253, 0
    %v2089 = vsel %vm1468, %v1255, 0
    %v2092 = vsel %vm1468, %v1257, 0
    %v2095 = vsel %vm1468, %v1259, 0
    %2097 = vmatprep.subr.bf16.mxu0 0
    %2098 = vmatpush1.bf16.xpose.msra.mxu0 %v2095
    %2099 = vmatprep.subr.bf16.mxu0 0
    %2100 = vmatpush1.bf16.xpose.msra.mxu0 %v2092
    %2101 = vmatprep.subr.bf16.mxu0 0
    %2102 = vmatpush1.bf16.xpose.msra.mxu0 %v2089
    %2103 = vmatprep.subr.bf16.mxu0 0
    %2104 = vmatpush1.bf16.xpose.msra.mxu0 %v2086
    %2105 = vmatprep.subr.bf16.mxu0 0
    %2106 = vmatpush1.bf16.xpose.msra.mxu0 %v2083
    %2107 = vmatprep.subr.bf16.mxu0 0
    %2108 = vmatpush1.bf16.xpose.msra.mxu0 %v2080
    %2109 = vmatprep.subr.bf16.mxu0 0
    %2110 = vmatpush1.bf16.xpose.msra.mxu0 %v2077
    %2111 = vmatprep.subr.bf16.mxu0 0
    %2112 = vmatpush1.bf16.xpose.msra.mxu0 %v2074
    %2113 = vmatprep.subr.bf16.mxu0 0
    %2114 = vmatpush2.bf16.xpose.msra.mxu0 0
    %2115 = vmatprep.subr.bf16.mxu0 0
    %2116 = vmatpush2.bf16.xpose.msra.mxu0 0
    %2117 = vmatprep.subr.bf16.mxu0 0
    %2118 = vmatpush2.bf16.xpose.msra.mxu0 0
    %2119 = vmatprep.subr.bf16.mxu0 0
    %2120 = vmatpush2.bf16.xpose.msra.mxu0 0
    %2121 = vmatprep.subr.bf16.mxu0 0
    %2122 = vmatpush2.bf16.xpose.msra.mxu0 0
    %2123 = vmatprep.subr.bf16.mxu0 0
    %2124 = vmatpush2.bf16.xpose.msra.mxu0 0
    %2125 = vmatprep.subr.bf16.mxu0 0
    %2126 = vmatpush2.bf16.xpose.msra.mxu0 0
    %2127 = vmatprep.subr.bf16.mxu0 0
    %2128 = vmatpush2.bf16.xpose.msra.mxu0 0
    %2129 = vmatprep.mubr.bf16.mxu0 0
    %2130 = vmatmul.mubr.bf16.gmra.mxu0 %v2050
    %v2131 = vpop.f32.mrf.mxu0
    %v2132 = vadd.f32 0.0, %v2131
    %v2133 = vpop.f32.mrf.mxu0
    %v2134 = vpop.f32.mrf.mxu0
    %v2135 = vadd.f32 0.0, %v2134
    %v2136 = vpop.f32.mrf.mxu0
    %2137 = vmatprep.mubr.bf16.mxu0 0
    %2138 = vmatmul.mubr.bf16.gmra.mxu0 %v2053
    %v2139 = vpop.f32.mrf.mxu0
    %v2140 = vadd.f32 0.0, %v2139
    %v2141 = vpop.f32.mrf.mxu0
    %v2142 = vpop.f32.mrf.mxu0
    %v2143 = vadd.f32 0.0, %v2142
    %v2144 = vpop.f32.mrf.mxu0
    %2145 = vmatprep.mubr.bf16.mxu0 0
    %2146 = vmatmul.mubr.bf16.gmra.mxu0 %v2056
    %v2147 = vpop.f32.mrf.mxu0
    %v2148 = vadd.f32 0.0, %v2147
    %v2149 = vpop.f32.mrf.mxu0
    %v2150 = vpop.f32.mrf.mxu0
    %v2151 = vadd.f32 0.0, %v2150
    %v2152 = vpop.f32.mrf.mxu0
    %2153 = vmatprep.mubr.bf16.mxu0 0
    %2154 = vmatmul.mubr.bf16.gmra.mxu0 %v2059
    %v2155 = vpop.f32.mrf.mxu0
    %v2156 = vadd.f32 0.0, %v2155
    %v2157 = vpop.f32.mrf.mxu0
    %v2158 = vpop.f32.mrf.mxu0
    %v2159 = vadd.f32 0.0, %v2158
    %v2160 = vpop.f32.mrf.mxu0
    %2161 = vmatprep.mubr.bf16.mxu0 0
    %2162 = vmatmul.mubr.bf16.gmra.mxu0 %v2062
    %v2163 = vpop.f32.mrf.mxu0
    %v2164 = vadd.f32 0.0, %v2163
    %v2165 = vpop.f32.mrf.mxu0
    %v2166 = vpop.f32.mrf.mxu0
    %v2167 = vadd.f32 0.0, %v2166
    %v2168 = vpop.f32.mrf.mxu0
    %2169 = vmatprep.mubr.bf16.mxu0 0
    %2170 = vmatmul.mubr.bf16.gmra.mxu0 %v2065
    %v2171 = vpop.f32.mrf.mxu0
    %v2172 = vadd.f32 0.0, %v2171
    %v2173 = vpop.f32.mrf.mxu0
    %v2174 = vpop.f32.mrf.mxu0
    %v2175 = vadd.f32 0.0, %v2174
    %v2176 = vpop.f32.mrf.mxu0
    %2177 = vmatprep.mubr.bf16.mxu0 0
    %2178 = vmatmul.mubr.bf16.gmra.mxu0 %v2068
    %v2179 = vpop.f32.mrf.mxu0
    %v2180 = vadd.f32 0.0, %v2179
    %v2181 = vpop.f32.mrf.mxu0
    %v2182 = vpop.f32.mrf.mxu0
    %v2183 = vadd.f32 0.0, %v2182
    %v2184 = vpop.f32.mrf.mxu0
    %2185 = vmatprep.mubr.bf16.mxu0 0
    %2186 = vmatmul.mubr.bf16.gmra.mxu0 %v2071
    %v2187 = vpop.f32.mrf.mxu0
    %v2188 = vadd.f32 0.0, %v2187
    %v2189 = vpop.f32.mrf.mxu0
    %v2190 = vpop.f32.mrf.mxu0
    %v2191 = vadd.f32 0.0, %v2190
    %v2192 = vpop.f32.mrf.mxu0
    %2193 = vdwg.mxu0
    %v2195 = vsel %vm1468, %v1149, 0
    %v2198 = vsel %vm1468, %v1151, 0
    %v2201 = vsel %vm1468, %v1153, 0
    %v2204 = vsel %vm1468, %v1155, 0
    %v2207 = vsel %vm1468, %v1157, 0
    %v2210 = vsel %vm1468, %v1159, 0
    %v2213 = vsel %vm1468, %v1161, 0
    %v2216 = vsel %vm1468, %v1163, 0
    %v2219 = vsel %vm1468, %v1261, 0
    %v2222 = vsel %vm1468, %v1263, 0
    %v2225 = vsel %vm1468, %v1265, 0
    %v2228 = vsel %vm1468, %v1267, 0
    %v2231 = vsel %vm1468, %v1269, 0
    %v2234 = vsel %vm1468, %v1271, 0
    %v2237 = vsel %vm1468, %v1273, 0
    %v2240 = vsel %vm1468, %v1275, 0
    %2242 = vmatprep.subr.bf16.mxu0 0
    %2243 = vmatpush1.bf16.xpose.msra.mxu0 %v2240
    %2244 = vmatprep.subr.bf16.mxu0 0
    %2245 = vmatpush1.bf16.xpose.msra.mxu0 %v2237
    %2246 = vmatprep.subr.bf16.mxu0 0
    %2247 = vmatpush1.bf16.xpose.msra.mxu0 %v2234
    %2248 = vmatprep.subr.bf16.mxu0 0
    %2249 = vmatpush1.bf16.xpose.msra.mxu0 %v2231
    %2250 = vmatprep.subr.bf16.mxu0 0
    %2251 = vmatpush1.bf16.xpose.msra.mxu0 %v2228
    %2252 = vmatprep.subr.bf16.mxu0 0
    %2253 = vmatpush1.bf16.xpose.msra.mxu0 %v2225
    %2254 = vmatprep.subr.bf16.mxu0 0
    %2255 = vmatpush1.bf16.xpose.msra.mxu0 %v2222
    %2256 = vmatprep.subr.bf16.mxu0 0
    %2257 = vmatpush1.bf16.xpose.msra.mxu0 %v2219
    %2258 = vmatprep.subr.bf16.mxu0 0
    %2259 = vmatpush2.bf16.xpose.msra.mxu0 0
    %2260 = vmatprep.subr.bf16.mxu0 0
    %2261 = vmatpush2.bf16.xpose.msra.mxu0 0
    %2262 = vmatprep.subr.bf16.mxu0 0
    %2263 = vmatpush2.bf16.xpose.msra.mxu0 0
    %2264 = vmatprep.subr.bf16.mxu0 0
    %2265 = vmatpush2.bf16.xpose.msra.mxu0 0
    %2266 = vmatprep.subr.bf16.mxu0 0
    %2267 = vmatpush2.bf16.xpose.msra.mxu0 0
    %2268 = vmatprep.subr.bf16.mxu0 0
    %2269 = vmatpush2.bf16.xpose.msra.mxu0 0
    %2270 = vmatprep.subr.bf16.mxu0 0
    %2271 = vmatpush2.bf16.xpose.msra.mxu0 0
    %2272 = vmatprep.subr.bf16.mxu0 0
    %2273 = vmatpush2.bf16.xpose.msra.mxu0 0
    %2274 = vmatprep.mubr.bf16.mxu0 0
    %2275 = vmatmul.mubr.bf16.gmra.mxu0 %v2195
    %v2276 = vpop.f32.mrf.mxu0
    %v2277 = vadd.f32 0.0, %v2276
    %v2278 = vpop.f32.mrf.mxu0
    %v2279 = vpop.f32.mrf.mxu0
    %v2280 = vadd.f32 0.0, %v2279
    %v2281 = vpop.f32.mrf.mxu0
    %2282 = vmatprep.mubr.bf16.mxu0 0
    %2283 = vmatmul.mubr.bf16.gmra.mxu0 %v2198
    %v2284 = vpop.f32.mrf.mxu0
    %v2285 = vadd.f32 0.0, %v2284
    %v2286 = vpop.f32.mrf.mxu0
    %v2287 = vpop.f32.mrf.mxu0
    %v2288 = vadd.f32 0.0, %v2287
    %v2289 = vpop.f32.mrf.mxu0
    %2290 = vmatprep.mubr.bf16.mxu0 0
    %2291 = vmatmul.mubr.bf16.gmra.mxu0 %v2201
    %v2292 = vpop.f32.mrf.mxu0
    %v2293 = vadd.f32 0.0, %v2292
    %v2294 = vpop.f32.mrf.mxu0
    %v2295 = vpop.f32.mrf.mxu0
    %v2296 = vadd.f32 0.0, %v2295
    %v2297 = vpop.f32.mrf.mxu0
    %2298 = vmatprep.mubr.bf16.mxu0 0
    %2299 = vmatmul.mubr.bf16.gmra.mxu0 %v2204
    %v2300 = vpop.f32.mrf.mxu0
    %v2301 = vadd.f32 0.0, %v2300
    %v2302 = vpop.f32.mrf.mxu0
    %v2303 = vpop.f32.mrf.mxu0
    %v2304 = vadd.f32 0.0, %v2303
    %v2305 = vpop.f32.mrf.mxu0
    %2306 = vmatprep.mubr.bf16.mxu0 0
    %2307 = vmatmul.mubr.bf16.gmra.mxu0 %v2207
    %v2308 = vpop.f32.mrf.mxu0
    %v2309 = vadd.f32 0.0, %v2308
    %v2310 = vpop.f32.mrf.mxu0
    %v2311 = vpop.f32.mrf.mxu0
    %v2312 = vadd.f32 0.0, %v2311
    %v2313 = vpop.f32.mrf.mxu0
    %2314 = vmatprep.mubr.bf16.mxu0 0
    %2315 = vmatmul.mubr.bf16.gmra.mxu0 %v2210
    %v2316 = vpop.f32.mrf.mxu0
    %v2317 = vadd.f32 0.0, %v2316
    %v2318 = vpop.f32.mrf.mxu0
    %v2319 = vpop.f32.mrf.mxu0
    %v2320 = vadd.f32 0.0, %v2319
    %v2321 = vpop.f32.mrf.mxu0
    %2322 = vmatprep.mubr.bf16.mxu0 0
    %2323 = vmatmul.mubr.bf16.gmra.mxu0 %v2213
    %v2324 = vpop.f32.mrf.mxu0
    %v2325 = vadd.f32 0.0, %v2324
    %v2326 = vpop.f32.mrf.mxu0
    %v2327 = vpop.f32.mrf.mxu0
    %v2328 = vadd.f32 0.0, %v2327
    %v2329 = vpop.f32.mrf.mxu0
    %2330 = vmatprep.mubr.bf16.mxu0 0
    %2331 = vmatmul.mubr.bf16.gmra.mxu0 %v2216
    %v2332 = vpop.f32.mrf.mxu0
    %v2333 = vadd.f32 0.0, %v2332
    %v2334 = vpop.f32.mrf.mxu0
    %v2335 = vpop.f32.mrf.mxu0
    %v2336 = vadd.f32 0.0, %v2335
    %v2337 = vpop.f32.mrf.mxu0
    %2338 = vdwg.mxu0
    %v2340 = vsel %vm1468, %v1165, 0
    %v2343 = vsel %vm1468, %v1167, 0
    %v2346 = vsel %vm1468, %v1169, 0
    %v2349 = vsel %vm1468, %v1171, 0
    %v2352 = vsel %vm1468, %v1173, 0
    %v2355 = vsel %vm1468, %v1175, 0
    %v2358 = vsel %vm1468, %v1177, 0
    %v2361 = vsel %vm1468, %v1179, 0
    %v2364 = vsel %vm1468, %v1277, 0
    %v2367 = vsel %vm1468, %v1279, 0
    %v2370 = vsel %vm1468, %v1281, 0
    %v2373 = vsel %vm1468, %v1283, 0
    %v2376 = vsel %vm1468, %v1285, 0
    %v2379 = vsel %vm1468, %v1287, 0
    %v2382 = vsel %vm1468, %v1289, 0
    %v2385 = vsel %vm1468, %v1291, 0
    %2387 = vmatprep.subr.bf16.mxu0 0
    %2388 = vmatpush1.bf16.xpose.msra.mxu0 %v2385
    %2389 = vmatprep.subr.bf16.mxu0 0
    %2390 = vmatpush1.bf16.xpose.msra.mxu0 %v2382
    %2391 = vmatprep.subr.bf16.mxu0 0
    %2392 = vmatpush1.bf16.xpose.msra.mxu0 %v2379
    %2393 = vmatprep.subr.bf16.mxu0 0
    %2394 = vmatpush1.bf16.xpose.msra.mxu0 %v2376
    %2395 = vmatprep.subr.bf16.mxu0 0
    %2396 = vmatpush1.bf16.xpose.msra.mxu0 %v2373
    %2397 = vmatprep.subr.bf16.mxu0 0
    %2398 = vmatpush1.bf16.xpose.msra.mxu0 %v2370
    %2399 = vmatprep.subr.bf16.mxu0 0
    %2400 = vmatpush1.bf16.xpose.msra.mxu0 %v2367
    %2401 = vmatprep.subr.bf16.mxu0 0
    %2402 = vmatpush1.bf16.xpose.msra.mxu0 %v2364
    %2403 = vmatprep.subr.bf16.mxu0 0
    %2404 = vmatpush2.bf16.xpose.msra.mxu0 0
    %2405 = vmatprep.subr.bf16.mxu0 0
    %2406 = vmatpush2.bf16.xpose.msra.mxu0 0
    %2407 = vmatprep.subr.bf16.mxu0 0
    %2408 = vmatpush2.bf16.xpose.msra.mxu0 0
    %2409 = vmatprep.subr.bf16.mxu0 0
    %2410 = vmatpush2.bf16.xpose.msra.mxu0 0
    %2411 = vmatprep.subr.bf16.mxu0 0
    %2412 = vmatpush2.bf16.xpose.msra.mxu0 0
    %2413 = vmatprep.subr.bf16.mxu0 0
    %2414 = vmatpush2.bf16.xpose.msra.mxu0 0
    %2415 = vmatprep.subr.bf16.mxu0 0
    %2416 = vmatpush2.bf16.xpose.msra.mxu0 0
    %2417 = vmatprep.subr.bf16.mxu0 0
    %2418 = vmatpush2.bf16.xpose.msra.mxu0 0
    %2419 = vmatprep.mubr.bf16.mxu0 0
    %2420 = vmatmul.mubr.bf16.gmra.mxu0 %v2340
    %v2421 = vpop.f32.mrf.mxu0
    %v2422 = vadd.f32 0.0, %v2421
    %v2423 = vpop.f32.mrf.mxu0
    %v2424 = vpop.f32.mrf.mxu0
    %v2425 = vadd.f32 0.0, %v2424
    %v2426 = vpop.f32.mrf.mxu0
    %2427 = vmatprep.mubr.bf16.mxu0 0
    %2428 = vmatmul.mubr.bf16.gmra.mxu0 %v2343
    %v2429 = vpop.f32.mrf.mxu0
    %v2430 = vadd.f32 0.0, %v2429
    %v2431 = vpop.f32.mrf.mxu0
    %v2432 = vpop.f32.mrf.mxu0
    %v2433 = vadd.f32 0.0, %v2432
    %v2434 = vpop.f32.mrf.mxu0
    %2435 = vmatprep.mubr.bf16.mxu0 0
    %2436 = vmatmul.mubr.bf16.gmra.mxu0 %v2346
    %v2437 = vpop.f32.mrf.mxu0
    %v2438 = vadd.f32 0.0, %v2437
    %v2439 = vpop.f32.mrf.mxu0
    %v2440 = vpop.f32.mrf.mxu0
    %v2441 = vadd.f32 0.0, %v2440
    %v2442 = vpop.f32.mrf.mxu0
    %2443 = vmatprep.mubr.bf16.mxu0 0
    %2444 = vmatmul.mubr.bf16.gmra.mxu0 %v2349
    %v2445 = vpop.f32.mrf.mxu0
    %v2446 = vadd.f32 0.0, %v2445
    %v2447 = vpop.f32.mrf.mxu0
    %v2448 = vpop.f32.mrf.mxu0
    %v2449 = vadd.f32 0.0, %v2448
    %v2450 = vpop.f32.mrf.mxu0
    %2451 = vmatprep.mubr.bf16.mxu0 0
    %2452 = vmatmul.mubr.bf16.gmra.mxu0 %v2352
    %v2453 = vpop.f32.mrf.mxu0
    %v2454 = vadd.f32 0.0, %v2453
    %v2455 = vpop.f32.mrf.mxu0
    %v2456 = vpop.f32.mrf.mxu0
    %v2457 = vadd.f32 0.0, %v2456
    %v2458 = vpop.f32.mrf.mxu0
    %2459 = vmatprep.mubr.bf16.mxu0 0
    %2460 = vmatmul.mubr.bf16.gmra.mxu0 %v2355
    %v2461 = vpop.f32.mrf.mxu0
    %v2462 = vadd.f32 0.0, %v2461
    %v2463 = vpop.f32.mrf.mxu0
    %v2464 = vpop.f32.mrf.mxu0
    %v2465 = vadd.f32 0.0, %v2464
    %v2466 = vpop.f32.mrf.mxu0
    %2467 = vmatprep.mubr.bf16.mxu0 0
    %2468 = vmatmul.mubr.bf16.gmra.mxu0 %v2358
    %v2469 = vpop.f32.mrf.mxu0
    %v2470 = vadd.f32 0.0, %v2469
    %v2471 = vpop.f32.mrf.mxu0
    %v2472 = vpop.f32.mrf.mxu0
    %v2473 = vadd.f32 0.0, %v2472
    %v2474 = vpop.f32.mrf.mxu0
    %2475 = vmatprep.mubr.bf16.mxu0 0
    %2476 = vmatmul.mubr.bf16.gmra.mxu0 %v2361
    %v2477 = vpop.f32.mrf.mxu0
    %v2478 = vadd.f32 0.0, %v2477
    %v2479 = vpop.f32.mrf.mxu0
    %v2480 = vpop.f32.mrf.mxu0
    %v2481 = vadd.f32 0.0, %v2480
    %v2482 = vpop.f32.mrf.mxu0
    %2483 = vdwg.mxu0
    %v2485 = vsel %vm1468, %v1181, 0
    %v2488 = vsel %vm1468, %v1183, 0
    %v2491 = vsel %vm1468, %v1185, 0
    %v2494 = vsel %vm1468, %v1187, 0
    %v2497 = vsel %vm1468, %v1189, 0
    %v2500 = vsel %vm1468, %v1191, 0
    %v2503 = vsel %vm1468, %v1193, 0
    %v2506 = vsel %vm1468, %v1195, 0
    %v2509 = vsel %vm1468, %v1293, 0
    %v2512 = vsel %vm1468, %v1295, 0
    %v2515 = vsel %vm1468, %v1297, 0
    %v2518 = vsel %vm1468, %v1299, 0
    %v2521 = vsel %vm1468, %v1301, 0
    %v2524 = vsel %vm1468, %v1303, 0
    %v2527 = vsel %vm1468, %v1305, 0
    %v2530 = vsel %vm1468, %v1307, 0
    %2532 = vmatprep.subr.bf16.mxu0 0
    %2533 = vmatpush1.bf16.xpose.msra.mxu0 %v2530
    %2534 = vmatprep.subr.bf16.mxu0 0
    %2535 = vmatpush1.bf16.xpose.msra.mxu0 %v2527
    %2536 = vmatprep.subr.bf16.mxu0 0
    %2537 = vmatpush1.bf16.xpose.msra.mxu0 %v2524
    %2538 = vmatprep.subr.bf16.mxu0 0
    %2539 = vmatpush1.bf16.xpose.msra.mxu0 %v2521
    %2540 = vmatprep.subr.bf16.mxu0 0
    %2541 = vmatpush1.bf16.xpose.msra.mxu0 %v2518
    %2542 = vmatprep.subr.bf16.mxu0 0
    %2543 = vmatpush1.bf16.xpose.msra.mxu0 %v2515
    %2544 = vmatprep.subr.bf16.mxu0 0
    %2545 = vmatpush1.bf16.xpose.msra.mxu0 %v2512
    %2546 = vmatprep.subr.bf16.mxu0 0
    %2547 = vmatpush1.bf16.xpose.msra.mxu0 %v2509
    %2548 = vmatprep.subr.bf16.mxu0 0
    %2549 = vmatpush2.bf16.xpose.msra.mxu0 0
    %2550 = vmatprep.subr.bf16.mxu0 0
    %2551 = vmatpush2.bf16.xpose.msra.mxu0 0
    %2552 = vmatprep.subr.bf16.mxu0 0
    %2553 = vmatpush2.bf16.xpose.msra.mxu0 0
    %2554 = vmatprep.subr.bf16.mxu0 0
    %2555 = vmatpush2.bf16.xpose.msra.mxu0 0
    %2556 = vmatprep.subr.bf16.mxu0 0
    %2557 = vmatpush2.bf16.xpose.msra.mxu0 0
    %2558 = vmatprep.subr.bf16.mxu0 0
    %2559 = vmatpush2.bf16.xpose.msra.mxu0 0
    %2560 = vmatprep.subr.bf16.mxu0 0
    %2561 = vmatpush2.bf16.xpose.msra.mxu0 0
    %2562 = vmatprep.subr.bf16.mxu0 0
    %2563 = vmatpush2.bf16.xpose.msra.mxu0 0
    %2564 = vmatprep.mubr.bf16.mxu0 0
    %2565 = vmatmul.mubr.bf16.gmra.mxu0 %v2485
    %v2566 = vpop.f32.mrf.mxu0
    %v2567 = vadd.f32 0.0, %v2566
    %v2568 = vpop.f32.mrf.mxu0
    %v2569 = vpop.f32.mrf.mxu0
    %v2570 = vadd.f32 0.0, %v2569
    %v2571 = vpop.f32.mrf.mxu0
    %2572 = vmatprep.mubr.bf16.mxu0 0
    %2573 = vmatmul.mubr.bf16.gmra.mxu0 %v2488
    %v2574 = vpop.f32.mrf.mxu0
    %v2575 = vadd.f32 0.0, %v2574
    %v2576 = vpop.f32.mrf.mxu0
    %v2577 = vpop.f32.mrf.mxu0
    %v2578 = vadd.f32 0.0, %v2577
    %v2579 = vpop.f32.mrf.mxu0
    %2580 = vmatprep.mubr.bf16.mxu0 0
    %2581 = vmatmul.mubr.bf16.gmra.mxu0 %v2491
    %v2582 = vpop.f32.mrf.mxu0
    %v2583 = vadd.f32 0.0, %v2582
    %v2584 = vpop.f32.mrf.mxu0
    %v2585 = vpop.f32.mrf.mxu0
    %v2586 = vadd.f32 0.0, %v2585
    %v2587 = vpop.f32.mrf.mxu0
    %2588 = vmatprep.mubr.bf16.mxu0 0
    %2589 = vmatmul.mubr.bf16.gmra.mxu0 %v2494
    %v2590 = vpop.f32.mrf.mxu0
    %v2591 = vadd.f32 0.0, %v2590
    %v2592 = vpop.f32.mrf.mxu0
    %v2593 = vpop.f32.mrf.mxu0
    %v2594 = vadd.f32 0.0, %v2593
    %v2595 = vpop.f32.mrf.mxu0
    %2596 = vmatprep.mubr.bf16.mxu0 0
    %2597 = vmatmul.mubr.bf16.gmra.mxu0 %v2497
    %v2598 = vpop.f32.mrf.mxu0
    %v2599 = vadd.f32 0.0, %v2598
    %v2600 = vpop.f32.mrf.mxu0
    %v2601 = vpop.f32.mrf.mxu0
    %v2602 = vadd.f32 0.0, %v2601
    %v2603 = vpop.f32.mrf.mxu0
    %2604 = vmatprep.mubr.bf16.mxu0 0
    %2605 = vmatmul.mubr.bf16.gmra.mxu0 %v2500
    %v2606 = vpop.f32.mrf.mxu0
    %v2607 = vadd.f32 0.0, %v2606
    %v2608 = vpop.f32.mrf.mxu0
    %v2609 = vpop.f32.mrf.mxu0
    %v2610 = vadd.f32 0.0, %v2609
    %v2611 = vpop.f32.mrf.mxu0
    %2612 = vmatprep.mubr.bf16.mxu0 0
    %2613 = vmatmul.mubr.bf16.gmra.mxu0 %v2503
    %v2614 = vpop.f32.mrf.mxu0
    %v2615 = vadd.f32 0.0, %v2614
    %v2616 = vpop.f32.mrf.mxu0
    %v2617 = vpop.f32.mrf.mxu0
    %v2618 = vadd.f32 0.0, %v2617
    %v2619 = vpop.f32.mrf.mxu0
    %2620 = vmatprep.mubr.bf16.mxu0 0
    %2621 = vmatmul.mubr.bf16.gmra.mxu0 %v2506
    %v2622 = vpop.f32.mrf.mxu0
    %v2623 = vadd.f32 0.0, %v2622
    %v2624 = vpop.f32.mrf.mxu0
    %v2625 = vpop.f32.mrf.mxu0
    %v2626 = vadd.f32 0.0, %v2625
    %v2627 = vpop.f32.mrf.mxu0
    %2628 = vdwg.mxu0
    %v2629 = vlaneseq
    %v2630 = vshrl.u32 %v2629, 7
    %v2631 = vadd.s32 %v2630, 8
    %v2632 = vadd.s32 %v2630, 16
    %v2633 = vadd.s32 %v2630, 24
    %v2634 = vadd.s32 %v2630, 32
    %v2635 = vadd.s32 %v2630, 40
    %v2636 = vadd.s32 %v2630, 48
    %v2637 = vadd.s32 %v2630, 56
    %v2638 = vadd.s32 %v2630, 64
    %v2639 = vadd.s32 %v2630, 72
    %v2640 = vadd.s32 %v2630, 80
    %v2641 = vadd.s32 %v2630, 88
    %v2642 = vadd.s32 %v2630, 96
    %v2643 = vadd.s32 %v2630, 104
    %v2644 = vadd.s32 %v2630, 112
    %v2645 = vadd.s32 %v2630, 120
    %v2646 = vlaneseq
    %v2647 = vand.u32 %v2646, 127
    %vm2648 = vcmp.ge.s32.totalorder %v2630, %v2647
    %vm2649 = vcmp.ge.s32.totalorder %v2631, %v2647
    %vm2650 = vcmp.ge.s32.totalorder %v2632, %v2647
    %vm2651 = vcmp.ge.s32.totalorder %v2633, %v2647
    %vm2652 = vcmp.ge.s32.totalorder %v2634, %v2647
    %vm2653 = vcmp.ge.s32.totalorder %v2635, %v2647
    %vm2654 = vcmp.ge.s32.totalorder %v2636, %v2647
    %vm2655 = vcmp.ge.s32.totalorder %v2637, %v2647
    %vm2656 = vcmp.ge.s32.totalorder %v2638, %v2647
    %vm2657 = vcmp.ge.s32.totalorder %v2639, %v2647
    %vm2658 = vcmp.ge.s32.totalorder %v2640, %v2647
    %vm2659 = vcmp.ge.s32.totalorder %v2641, %v2647
    %vm2660 = vcmp.ge.s32.totalorder %v2642, %v2647
    %vm2661 = vcmp.ge.s32.totalorder %v2643, %v2647
    %vm2662 = vcmp.ge.s32.totalorder %v2644, %v2647
    %vm2663 = vcmp.ge.s32.totalorder %v2645, %v2647
    %v2664 = vsel %vm2648, 1, 0
    %v2665 = vsel %vm2649, 1, 0
    %v2666 = vsel %vm2650, 1, 0
    %v2667 = vsel %vm2651, 1, 0
    %v2668 = vsel %vm2652, 1, 0
    %v2669 = vsel %vm2653, 1, 0
    %v2670 = vsel %vm2654, 1, 0
    %v2671 = vsel %vm2655, 1, 0
    %v2672 = vsel %vm2656, 1, 0
    %v2673 = vsel %vm2657, 1, 0
    %v2674 = vsel %vm2658, 1, 0
    %v2675 = vsel %vm2659, 1, 0
    %v2676 = vsel %vm2660, 1, 0
    %v2677 = vsel %vm2661, 1, 0
    %v2678 = vsel %vm2662, 1, 0
    %v2679 = vsel %vm2663, 1, 0
    %vm2680 = vcmp.eq.s32.totalorder %v2664, 1
    %vm2681 = vcmp.eq.s32.totalorder %v2665, 1
    %vm2682 = vcmp.eq.s32.totalorder %v2666, 1
    %vm2683 = vcmp.eq.s32.totalorder %v2667, 1
    %vm2684 = vcmp.eq.s32.totalorder %v2668, 1
    %vm2685 = vcmp.eq.s32.totalorder %v2669, 1
    %vm2686 = vcmp.eq.s32.totalorder %v2670, 1
    %vm2687 = vcmp.eq.s32.totalorder %v2671, 1
    %vm2688 = vcmp.eq.s32.totalorder %v2672, 1
    %vm2689 = vcmp.eq.s32.totalorder %v2673, 1
    %vm2690 = vcmp.eq.s32.totalorder %v2674, 1
    %vm2691 = vcmp.eq.s32.totalorder %v2675, 1
    %vm2692 = vcmp.eq.s32.totalorder %v2676, 1
    %vm2693 = vcmp.eq.s32.totalorder %v2677, 1
    %vm2694 = vcmp.eq.s32.totalorder %v2678, 1
    %vm2695 = vcmp.eq.s32.totalorder %v2679, 1
    %v2696 = vsel %vm2680, %v1552, -1e+30
    %v2697 = vsel %vm2681, %v1555, -1e+30
    %v2698 = vsel %vm2682, %v1560, -1e+30
    %v2699 = vsel %vm2683, %v1563, -1e+30
    %v2700 = vsel %vm2684, %v1568, -1e+30
    %v2701 = vsel %vm2685, %v1571, -1e+30
    %v2702 = vsel %vm2686, %v1576, -1e+30
    %v2703 = vsel %vm2687, %v1579, -1e+30
    %v2704 = vsel %vm2688, %v1584, -1e+30
    %v2705 = vsel %vm2689, %v1587, -1e+30
    %v2706 = vsel %vm2690, %v1592, -1e+30
    %v2707 = vsel %vm2691, %v1595, -1e+30
    %v2708 = vsel %vm2692, %v1600, -1e+30
    %v2709 = vsel %vm2693, %v1603, -1e+30
    %v2710 = vsel %vm2694, %v1608, -1e+30
    %v2711 = vsel %vm2695, %v1611, -1e+30
    %v2712 = vsel %vm2680, %v1697, -1e+30
    %v2713 = vsel %vm2681, %v1700, -1e+30
    %v2714 = vsel %vm2682, %v1705, -1e+30
    %v2715 = vsel %vm2683, %v1708, -1e+30
    %v2716 = vsel %vm2684, %v1713, -1e+30
    %v2717 = vsel %vm2685, %v1716, -1e+30
    %v2718 = vsel %vm2686, %v1721, -1e+30
    %v2719 = vsel %vm2687, %v1724, -1e+30
    %v2720 = vsel %vm2688, %v1729, -1e+30
    %v2721 = vsel %vm2689, %v1732, -1e+30
    %v2722 = vsel %vm2690, %v1737, -1e+30
    %v2723 = vsel %vm2691, %v1740, -1e+30
    %v2724 = vsel %vm2692, %v1745, -1e+30
    %v2725 = vsel %vm2693, %v1748, -1e+30
    %v2726 = vsel %vm2694, %v1753, -1e+30
    %v2727 = vsel %vm2695, %v1756, -1e+30
    %v2728 = vsel %vm2680, %v1842, -1e+30
    %v2729 = vsel %vm2681, %v1845, -1e+30
    %v2730 = vsel %vm2682, %v1850, -1e+30
    %v2731 = vsel %vm2683, %v1853, -1e+30
    %v2732 = vsel %vm2684, %v1858, -1e+30
    %v2733 = vsel %vm2685, %v1861, -1e+30
    %v2734 = vsel %vm2686, %v1866, -1e+30
    %v2735 = vsel %vm2687, %v1869, -1e+30
    %v2736 = vsel %vm2688, %v1874, -1e+30
    %v2737 = vsel %vm2689, %v1877, -1e+30
    %v2738 = vsel %vm2690, %v1882, -1e+30
    %v2739 = vsel %vm2691, %v1885, -1e+30
    %v2740 = vsel %vm2692, %v1890, -1e+30
    %v2741 = vsel %vm2693, %v1893, -1e+30
    %v2742 = vsel %vm2694, %v1898, -1e+30
    %v2743 = vsel %vm2695, %v1901, -1e+30
    %v2744 = vsel %vm2680, %v1987, -1e+30
    %v2745 = vsel %vm2681, %v1990, -1e+30
    %v2746 = vsel %vm2682, %v1995, -1e+30
    %v2747 = vsel %vm2683, %v1998, -1e+30
    %v2748 = vsel %vm2684, %v2003, -1e+30
    %v2749 = vsel %vm2685, %v2006, -1e+30
    %v2750 = vsel %vm2686, %v2011, -1e+30
    %v2751 = vsel %vm2687, %v2014, -1e+30
    %v2752 = vsel %vm2688, %v2019, -1e+30
    %v2753 = vsel %vm2689, %v2022, -1e+30
    %v2754 = vsel %vm2690, %v2027, -1e+30
    %v2755 = vsel %vm2691, %v2030, -1e+30
    %v2756 = vsel %vm2692, %v2035, -1e+30
    %v2757 = vsel %vm2693, %v2038, -1e+30
    %v2758 = vsel %vm2694, %v2043, -1e+30
    %v2759 = vsel %vm2695, %v2046, -1e+30
    %v2760 = vsel %vm2680, %v2132, -1e+30
    %v2761 = vsel %vm2681, %v2135, -1e+30
    %v2762 = vsel %vm2682, %v2140, -1e+30
    %v2763 = vsel %vm2683, %v2143, -1e+30
    %v2764 = vsel %vm2684, %v2148, -1e+30
    %v2765 = vsel %vm2685, %v2151, -1e+30
    %v2766 = vsel %vm2686, %v2156, -1e+30
    %v2767 = vsel %vm2687, %v2159, -1e+30
    %v2768 = vsel %vm2688, %v2164, -1e+30
    %v2769 = vsel %vm2689, %v2167, -1e+30
    %v2770 = vsel %vm2690, %v2172, -1e+30
    %v2771 = vsel %vm2691, %v2175, -1e+30
    %v2772 = vsel %vm2692, %v2180, -1e+30
    %v2773 = vsel %vm2693, %v2183, -1e+30
    %v2774 = vsel %vm2694, %v2188, -1e+30
    %v2775 = vsel %vm2695, %v2191, -1e+30
    %v2776 = vsel %vm2680, %v2277, -1e+30
    %v2777 = vsel %vm2681, %v2280, -1e+30
    %v2778 = vsel %vm2682, %v2285, -1e+30
    %v2779 = vsel %vm2683, %v2288, -1e+30
    %v2780 = vsel %vm2684, %v2293, -1e+30
    %v2781 = vsel %vm2685, %v2296, -1e+30
    %v2782 = vsel %vm2686, %v2301, -1e+30
    %v2783 = vsel %vm2687, %v2304, -1e+30
    %v2784 = vsel %vm2688, %v2309, -1e+30
    %v2785 = vsel %vm2689, %v2312, -1e+30
    %v2786 = vsel %vm2690, %v2317, -1e+30
    %v2787 = vsel %vm2691, %v2320, -1e+30
    %v2788 = vsel %vm2692, %v2325, -1e+30
    %v2789 = vsel %vm2693, %v2328, -1e+30
    %v2790 = vsel %vm2694, %v2333, -1e+30
    %v2791 = vsel %vm2695, %v2336, -1e+30
    %v2792 = vsel %vm2680, %v2422, -1e+30
    %v2793 = vsel %vm2681, %v2425, -1e+30
    %v2794 = vsel %vm2682, %v2430, -1e+30
    %v2795 = vsel %vm2683, %v2433, -1e+30
    %v2796 = vsel %vm2684, %v2438, -1e+30
    %v2797 = vsel %vm2685, %v2441, -1e+30
    %v2798 = vsel %vm2686, %v2446, -1e+30
    %v2799 = vsel %vm2687, %v2449, -1e+30
    %v2800 = vsel %vm2688, %v2454, -1e+30
    %v2801 = vsel %vm2689, %v2457, -1e+30
    %v2802 = vsel %vm2690, %v2462, -1e+30
    %v2803 = vsel %vm2691, %v2465, -1e+30
    %v2804 = vsel %vm2692, %v2470, -1e+30
    %v2805 = vsel %vm2693, %v2473, -1e+30
    %v2806 = vsel %vm2694, %v2478, -1e+30
    %v2807 = vsel %vm2695, %v2481, -1e+30
    %v2808 = vsel %vm2680, %v2567, -1e+30
    %v2809 = vsel %vm2681, %v2570, -1e+30
    %v2810 = vsel %vm2682, %v2575, -1e+30
    %v2811 = vsel %vm2683, %v2578, -1e+30
    %v2812 = vsel %vm2684, %v2583, -1e+30
    %v2813 = vsel %vm2685, %v2586, -1e+30
    %v2814 = vsel %vm2686, %v2591, -1e+30
    %v2815 = vsel %vm2687, %v2594, -1e+30
    %v2816 = vsel %vm2688, %v2599, -1e+30
    %v2817 = vsel %vm2689, %v2602, -1e+30
    %v2818 = vsel %vm2690, %v2607, -1e+30
    %v2819 = vsel %vm2691, %v2610, -1e+30
    %v2820 = vsel %vm2692, %v2615, -1e+30
    %v2821 = vsel %vm2693, %v2618, -1e+30
    %v2822 = vsel %vm2694, %v2623, -1e+30
    %v2823 = vsel %vm2695, %v2626, -1e+30
    %2824 = vmax.xlane.f32.xlu0 %v2696
    %v2825 = vpop.xlane.xlu0 %2824
    %2826 = vmax.xlane.f32.xlu0 %v2697
    %v2827 = vpop.xlane.xlu0 %2826
    %2828 = vmax.xlane.f32.xlu0 %v2698
    %v2829 = vpop.xlane.xlu0 %2828
    %2830 = vmax.xlane.f32.xlu0 %v2699
    %v2831 = vpop.xlane.xlu0 %2830
    %2832 = vmax.xlane.f32.xlu0 %v2700
    %v2833 = vpop.xlane.xlu0 %2832
    %2834 = vmax.xlane.f32.xlu0 %v2701
    %v2835 = vpop.xlane.xlu0 %2834
    %2836 = vmax.xlane.f32.xlu0 %v2702
    %v2837 = vpop.xlane.xlu0 %2836
    %2838 = vmax.xlane.f32.xlu0 %v2703
    %v2839 = vpop.xlane.xlu0 %2838
    %2840 = vmax.xlane.f32.xlu0 %v2704
    %v2841 = vpop.xlane.xlu0 %2840
    %2842 = vmax.xlane.f32.xlu0 %v2705
    %v2843 = vpop.xlane.xlu0 %2842
    %2844 = vmax.xlane.f32.xlu0 %v2706
    %v2845 = vpop.xlane.xlu0 %2844
    %2846 = vmax.xlane.f32.xlu0 %v2707
    %v2847 = vpop.xlane.xlu0 %2846
    %2848 = vmax.xlane.f32.xlu0 %v2708
    %v2849 = vpop.xlane.xlu0 %2848
    %2850 = vmax.xlane.f32.xlu0 %v2709
    %v2851 = vpop.xlane.xlu0 %2850
    %2852 = vmax.xlane.f32.xlu0 %v2710
    %v2853 = vpop.xlane.xlu0 %2852
    %2854 = vmax.xlane.f32.xlu0 %v2711
    %v2855 = vpop.xlane.xlu0 %2854
    %2856 = vmax.xlane.f32.xlu0 %v2712
    %v2857 = vpop.xlane.xlu0 %2856
    %2858 = vmax.xlane.f32.xlu0 %v2713
    %v2859 = vpop.xlane.xlu0 %2858
    %2860 = vmax.xlane.f32.xlu0 %v2714
    %v2861 = vpop.xlane.xlu0 %2860
    %2862 = vmax.xlane.f32.xlu0 %v2715
    %v2863 = vpop.xlane.xlu0 %2862
    %2864 = vmax.xlane.f32.xlu0 %v2716
    %v2865 = vpop.xlane.xlu0 %2864
    %2866 = vmax.xlane.f32.xlu0 %v2717
    %v2867 = vpop.xlane.xlu0 %2866
    %2868 = vmax.xlane.f32.xlu0 %v2718
    %v2869 = vpop.xlane.xlu0 %2868
    %2870 = vmax.xlane.f32.xlu0 %v2719
    %v2871 = vpop.xlane.xlu0 %2870
    %2872 = vmax.xlane.f32.xlu0 %v2720
    %v2873 = vpop.xlane.xlu0 %2872
    %2874 = vmax.xlane.f32.xlu0 %v2721
    %v2875 = vpop.xlane.xlu0 %2874
    %2876 = vmax.xlane.f32.xlu0 %v2722
    %v2877 = vpop.xlane.xlu0 %2876
    %2878 = vmax.xlane.f32.xlu0 %v2723
    %v2879 = vpop.xlane.xlu0 %2878
    %2880 = vmax.xlane.f32.xlu0 %v2724
    %v2881 = vpop.xlane.xlu0 %2880
    %2882 = vmax.xlane.f32.xlu0 %v2725
    %v2883 = vpop.xlane.xlu0 %2882
    %2884 = vmax.xlane.f32.xlu0 %v2726
    %v2885 = vpop.xlane.xlu0 %2884
    %2886 = vmax.xlane.f32.xlu0 %v2727
    %v2887 = vpop.xlane.xlu0 %2886
    %2888 = vmax.xlane.f32.xlu0 %v2728
    %v2889 = vpop.xlane.xlu0 %2888
    %2890 = vmax.xlane.f32.xlu0 %v2729
    %v2891 = vpop.xlane.xlu0 %2890
    %2892 = vmax.xlane.f32.xlu0 %v2730
    %v2893 = vpop.xlane.xlu0 %2892
    %2894 = vmax.xlane.f32.xlu0 %v2731
    %v2895 = vpop.xlane.xlu0 %2894
    %2896 = vmax.xlane.f32.xlu0 %v2732
    %v2897 = vpop.xlane.xlu0 %2896
    %2898 = vmax.xlane.f32.xlu0 %v2733
    %v2899 = vpop.xlane.xlu0 %2898
    %2900 = vmax.xlane.f32.xlu0 %v2734
    %v2901 = vpop.xlane.xlu0 %2900
    %2902 = vmax.xlane.f32.xlu0 %v2735
    %v2903 = vpop.xlane.xlu0 %2902
    %2904 = vmax.xlane.f32.xlu0 %v2736
    %v2905 = vpop.xlane.xlu0 %2904
    %2906 = vmax.xlane.f32.xlu0 %v2737
    %v2907 = vpop.xlane.xlu0 %2906
    %2908 = vmax.xlane.f32.xlu0 %v2738
    %v2909 = vpop.xlane.xlu0 %2908
    %2910 = vmax.xlane.f32.xlu0 %v2739
    %v2911 = vpop.xlane.xlu0 %2910
    %2912 = vmax.xlane.f32.xlu0 %v2740
    %v2913 = vpop.xlane.xlu0 %2912
    %2914 = vmax.xlane.f32.xlu0 %v2741
    %v2915 = vpop.xlane.xlu0 %2914
    %2916 = vmax.xlane.f32.xlu0 %v2742
    %v2917 = vpop.xlane.xlu0 %2916
    %2918 = vmax.xlane.f32.xlu0 %v2743
    %v2919 = vpop.xlane.xlu0 %2918
    %2920 = vmax.xlane.f32.xlu0 %v2744
    %v2921 = vpop.xlane.xlu0 %2920
    %2922 = vmax.xlane.f32.xlu0 %v2745
    %v2923 = vpop.xlane.xlu0 %2922
    %2924 = vmax.xlane.f32.xlu0 %v2746
    %v2925 = vpop.xlane.xlu0 %2924
    %2926 = vmax.xlane.f32.xlu0 %v2747
    %v2927 = vpop.xlane.xlu0 %2926
    %2928 = vmax.xlane.f32.xlu0 %v2748
    %v2929 = vpop.xlane.xlu0 %2928
    %2930 = vmax.xlane.f32.xlu0 %v2749
    %v2931 = vpop.xlane.xlu0 %2930
    %2932 = vmax.xlane.f32.xlu0 %v2750
    %v2933 = vpop.xlane.xlu0 %2932
    %2934 = vmax.xlane.f32.xlu0 %v2751
    %v2935 = vpop.xlane.xlu0 %2934
    %2936 = vmax.xlane.f32.xlu0 %v2752
    %v2937 = vpop.xlane.xlu0 %2936
    %2938 = vmax.xlane.f32.xlu0 %v2753
    %v2939 = vpop.xlane.xlu0 %2938
    %2940 = vmax.xlane.f32.xlu0 %v2754
    %v2941 = vpop.xlane.xlu0 %2940
    %2942 = vmax.xlane.f32.xlu0 %v2755
    %v2943 = vpop.xlane.xlu0 %2942
    %2944 = vmax.xlane.f32.xlu0 %v2756
    %v2945 = vpop.xlane.xlu0 %2944
    %2946 = vmax.xlane.f32.xlu0 %v2757
    %v2947 = vpop.xlane.xlu0 %2946
    %2948 = vmax.xlane.f32.xlu0 %v2758
    %v2949 = vpop.xlane.xlu0 %2948
    %2950 = vmax.xlane.f32.xlu0 %v2759
    %v2951 = vpop.xlane.xlu0 %2950
    %2952 = vmax.xlane.f32.xlu0 %v2760
    %v2953 = vpop.xlane.xlu0 %2952
    %2954 = vmax.xlane.f32.xlu0 %v2761
    %v2955 = vpop.xlane.xlu0 %2954
    %2956 = vmax.xlane.f32.xlu0 %v2762
    %v2957 = vpop.xlane.xlu0 %2956
    %2958 = vmax.xlane.f32.xlu0 %v2763
    %v2959 = vpop.xlane.xlu0 %2958
    %2960 = vmax.xlane.f32.xlu0 %v2764
    %v2961 = vpop.xlane.xlu0 %2960
    %2962 = vmax.xlane.f32.xlu0 %v2765
    %v2963 = vpop.xlane.xlu0 %2962
    %2964 = vmax.xlane.f32.xlu0 %v2766
    %v2965 = vpop.xlane.xlu0 %2964
    %2966 = vmax.xlane.f32.xlu0 %v2767
    %v2967 = vpop.xlane.xlu0 %2966
    %2968 = vmax.xlane.f32.xlu0 %v2768
    %v2969 = vpop.xlane.xlu0 %2968
    %2970 = vmax.xlane.f32.xlu0 %v2769
    %v2971 = vpop.xlane.xlu0 %2970
    %2972 = vmax.xlane.f32.xlu0 %v2770
    %v2973 = vpop.xlane.xlu0 %2972
    %2974 = vmax.xlane.f32.xlu0 %v2771
    %v2975 = vpop.xlane.xlu0 %2974
    %2976 = vmax.xlane.f32.xlu0 %v2772
    %v2977 = vpop.xlane.xlu0 %2976
    %2978 = vmax.xlane.f32.xlu0 %v2773
    %v2979 = vpop.xlane.xlu0 %2978
    %2980 = vmax.xlane.f32.xlu0 %v2774
    %v2981 = vpop.xlane.xlu0 %2980
    %2982 = vmax.xlane.f32.xlu0 %v2775
    %v2983 = vpop.xlane.xlu0 %2982
    %2984 = vmax.xlane.f32.xlu0 %v2776
    %v2985 = vpop.xlane.xlu0 %2984
    %2986 = vmax.xlane.f32.xlu0 %v2777
    %v2987 = vpop.xlane.xlu0 %2986
    %2988 = vmax.xlane.f32.xlu0 %v2778
    %v2989 = vpop.xlane.xlu0 %2988
    %2990 = vmax.xlane.f32.xlu0 %v2779
    %v2991 = vpop.xlane.xlu0 %2990
    %2992 = vmax.xlane.f32.xlu0 %v2780
    %v2993 = vpop.xlane.xlu0 %2992
    %2994 = vmax.xlane.f32.xlu0 %v2781
    %v2995 = vpop.xlane.xlu0 %2994
    %2996 = vmax.xlane.f32.xlu0 %v2782
    %v2997 = vpop.xlane.xlu0 %2996
    %2998 = vmax.xlane.f32.xlu0 %v2783
    %v2999 = vpop.xlane.xlu0 %2998
    %3000 = vmax.xlane.f32.xlu0 %v2784
    %v3001 = vpop.xlane.xlu0 %3000
    %3002 = vmax.xlane.f32.xlu0 %v2785
    %v3003 = vpop.xlane.xlu0 %3002
    %3004 = vmax.xlane.f32.xlu0 %v2786
    %v3005 = vpop.xlane.xlu0 %3004
    %3006 = vmax.xlane.f32.xlu0 %v2787
    %v3007 = vpop.xlane.xlu0 %3006
    %3008 = vmax.xlane.f32.xlu0 %v2788
    %v3009 = vpop.xlane.xlu0 %3008
    %3010 = vmax.xlane.f32.xlu0 %v2789
    %v3011 = vpop.xlane.xlu0 %3010
    %3012 = vmax.xlane.f32.xlu0 %v2790
    %v3013 = vpop.xlane.xlu0 %3012
    %3014 = vmax.xlane.f32.xlu0 %v2791
    %v3015 = vpop.xlane.xlu0 %3014
    %3016 = vmax.xlane.f32.xlu0 %v2792
    %v3017 = vpop.xlane.xlu0 %3016
    %3018 = vmax.xlane.f32.xlu0 %v2793
    %v3019 = vpop.xlane.xlu0 %3018
    %3020 = vmax.xlane.f32.xlu0 %v2794
    %v3021 = vpop.xlane.xlu0 %3020
    %3022 = vmax.xlane.f32.xlu0 %v2795
    %v3023 = vpop.xlane.xlu0 %3022
    %3024 = vmax.xlane.f32.xlu0 %v2796
    %v3025 = vpop.xlane.xlu0 %3024
    %3026 = vmax.xlane.f32.xlu0 %v2797
    %v3027 = vpop.xlane.xlu0 %3026
    %3028 = vmax.xlane.f32.xlu0 %v2798
    %v3029 = vpop.xlane.xlu0 %3028
    %3030 = vmax.xlane.f32.xlu0 %v2799
    %v3031 = vpop.xlane.xlu0 %3030
    %3032 = vmax.xlane.f32.xlu0 %v2800
    %v3033 = vpop.xlane.xlu0 %3032
    %3034 = vmax.xlane.f32.xlu0 %v2801
    %v3035 = vpop.xlane.xlu0 %3034
    %3036 = vmax.xlane.f32.xlu0 %v2802
    %v3037 = vpop.xlane.xlu0 %3036
    %3038 = vmax.xlane.f32.xlu0 %v2803
    %v3039 = vpop.xlane.xlu0 %3038
    %3040 = vmax.xlane.f32.xlu0 %v2804
    %v3041 = vpop.xlane.xlu0 %3040
    %3042 = vmax.xlane.f32.xlu0 %v2805
    %v3043 = vpop.xlane.xlu0 %3042
    %3044 = vmax.xlane.f32.xlu0 %v2806
    %v3045 = vpop.xlane.xlu0 %3044
    %3046 = vmax.xlane.f32.xlu0 %v2807
    %v3047 = vpop.xlane.xlu0 %3046
    %3048 = vmax.xlane.f32.xlu0 %v2808
    %v3049 = vpop.xlane.xlu0 %3048
    %3050 = vmax.xlane.f32.xlu0 %v2809
    %v3051 = vpop.xlane.xlu0 %3050
    %3052 = vmax.xlane.f32.xlu0 %v2810
    %v3053 = vpop.xlane.xlu0 %3052
    %3054 = vmax.xlane.f32.xlu0 %v2811
    %v3055 = vpop.xlane.xlu0 %3054
    %3056 = vmax.xlane.f32.xlu0 %v2812
    %v3057 = vpop.xlane.xlu0 %3056
    %3058 = vmax.xlane.f32.xlu0 %v2813
    %v3059 = vpop.xlane.xlu0 %3058
    %3060 = vmax.xlane.f32.xlu0 %v2814
    %v3061 = vpop.xlane.xlu0 %3060
    %3062 = vmax.xlane.f32.xlu0 %v2815
    %v3063 = vpop.xlane.xlu0 %3062
    %3064 = vmax.xlane.f32.xlu0 %v2816
    %v3065 = vpop.xlane.xlu0 %3064
    %3066 = vmax.xlane.f32.xlu0 %v2817
    %v3067 = vpop.xlane.xlu0 %3066
    %3068 = vmax.xlane.f32.xlu0 %v2818
    %v3069 = vpop.xlane.xlu0 %3068
    %3070 = vmax.xlane.f32.xlu0 %v2819
    %v3071 = vpop.xlane.xlu0 %3070
    %3072 = vmax.xlane.f32.xlu0 %v2820
    %v3073 = vpop.xlane.xlu0 %3072
    %3074 = vmax.xlane.f32.xlu0 %v2821
    %v3075 = vpop.xlane.xlu0 %3074
    %3076 = vmax.xlane.f32.xlu0 %v2822
    %v3077 = vpop.xlane.xlu0 %3076
    %3078 = vmax.xlane.f32.xlu0 %v2823
    %v3079 = vpop.xlane.xlu0 %3078
    %v3080 = vsub.f32 %v2696, %v2825
    %v3081 = vsub.f32 %v2697, %v2827
    %v3082 = vsub.f32 %v2698, %v2829
    %v3083 = vsub.f32 %v2699, %v2831
    %v3084 = vsub.f32 %v2700, %v2833
    %v3085 = vsub.f32 %v2701, %v2835
    %v3086 = vsub.f32 %v2702, %v2837
    %v3087 = vsub.f32 %v2703, %v2839
    %v3088 = vsub.f32 %v2704, %v2841
    %v3089 = vsub.f32 %v2705, %v2843
    %v3090 = vsub.f32 %v2706, %v2845
    %v3091 = vsub.f32 %v2707, %v2847
    %v3092 = vsub.f32 %v2708, %v2849
    %v3093 = vsub.f32 %v2709, %v2851
    %v3094 = vsub.f32 %v2710, %v2853
    %v3095 = vsub.f32 %v2711, %v2855
    %v3096 = vsub.f32 %v2712, %v2857
    %v3097 = vsub.f32 %v2713, %v2859
    %v3098 = vsub.f32 %v2714, %v2861
    %v3099 = vsub.f32 %v2715, %v2863
    %v3100 = vsub.f32 %v2716, %v2865
    %v3101 = vsub.f32 %v2717, %v2867
    %v3102 = vsub.f32 %v2718, %v2869
    %v3103 = vsub.f32 %v2719, %v2871
    %v3104 = vsub.f32 %v2720, %v2873
    %v3105 = vsub.f32 %v2721, %v2875
    %v3106 = vsub.f32 %v2722, %v2877
    %v3107 = vsub.f32 %v2723, %v2879
    %v3108 = vsub.f32 %v2724, %v2881
    %v3109 = vsub.f32 %v2725, %v2883
    %v3110 = vsub.f32 %v2726, %v2885
    %v3111 = vsub.f32 %v2727, %v2887
    %v3112 = vsub.f32 %v2728, %v2889
    %v3113 = vsub.f32 %v2729, %v2891
    %v3114 = vsub.f32 %v2730, %v2893
    %v3115 = vsub.f32 %v2731, %v2895
    %v3116 = vsub.f32 %v2732, %v2897
    %v3117 = vsub.f32 %v2733, %v2899
    %v3118 = vsub.f32 %v2734, %v2901
    %v3119 = vsub.f32 %v2735, %v2903
    %v3120 = vsub.f32 %v2736, %v2905
    %v3121 = vsub.f32 %v2737, %v2907
    %v3122 = vsub.f32 %v2738, %v2909
    %v3123 = vsub.f32 %v2739, %v2911
    %v3124 = vsub.f32 %v2740, %v2913
    %v3125 = vsub.f32 %v2741, %v2915
    %v3126 = vsub.f32 %v2742, %v2917
    %v3127 = vsub.f32 %v2743, %v2919
    %v3128 = vsub.f32 %v2744, %v2921
    %v3129 = vsub.f32 %v2745, %v2923
    %v3130 = vsub.f32 %v2746, %v2925
    %v3131 = vsub.f32 %v2747, %v2927
    %v3132 = vsub.f32 %v2748, %v2929
    %v3133 = vsub.f32 %v2749, %v2931
    %v3134 = vsub.f32 %v2750, %v2933
    %v3135 = vsub.f32 %v2751, %v2935
    %v3136 = vsub.f32 %v2752, %v2937
    %v3137 = vsub.f32 %v2753, %v2939
    %v3138 = vsub.f32 %v2754, %v2941
    %v3139 = vsub.f32 %v2755, %v2943
    %v3140 = vsub.f32 %v2756, %v2945
    %v3141 = vsub.f32 %v2757, %v2947
    %v3142 = vsub.f32 %v2758, %v2949
    %v3143 = vsub.f32 %v2759, %v2951
    %v3144 = vsub.f32 %v2760, %v2953
    %v3145 = vsub.f32 %v2761, %v2955
    %v3146 = vsub.f32 %v2762, %v2957
    %v3147 = vsub.f32 %v2763, %v2959
    %v3148 = vsub.f32 %v2764, %v2961
    %v3149 = vsub.f32 %v2765, %v2963
    %v3150 = vsub.f32 %v2766, %v2965
    %v3151 = vsub.f32 %v2767, %v2967
    %v3152 = vsub.f32 %v2768, %v2969
    %v3153 = vsub.f32 %v2769, %v2971
    %v3154 = vsub.f32 %v2770, %v2973
    %v3155 = vsub.f32 %v2771, %v2975
    %v3156 = vsub.f32 %v2772, %v2977
    %v3157 = vsub.f32 %v2773, %v2979
    %v3158 = vsub.f32 %v2774, %v2981
    %v3159 = vsub.f32 %v2775, %v2983
    %v3160 = vsub.f32 %v2776, %v2985
    %v3161 = vsub.f32 %v2777, %v2987
    %v3162 = vsub.f32 %v2778, %v2989
    %v3163 = vsub.f32 %v2779, %v2991
    %v3164 = vsub.f32 %v2780, %v2993
    %v3165 = vsub.f32 %v2781, %v2995
    %v3166 = vsub.f32 %v2782, %v2997
    %v3167 = vsub.f32 %v2783, %v2999
    %v3168 = vsub.f32 %v2784, %v3001
    %v3169 = vsub.f32 %v2785, %v3003
    %v3170 = vsub.f32 %v2786, %v3005
    %v3171 = vsub.f32 %v2787, %v3007
    %v3172 = vsub.f32 %v2788, %v3009
    %v3173 = vsub.f32 %v2789, %v3011
    %v3174 = vsub.f32 %v2790, %v3013
    %v3175 = vsub.f32 %v2791, %v3015
    %v3176 = vsub.f32 %v2792, %v3017
    %v3177 = vsub.f32 %v2793, %v3019
    %v3178 = vsub.f32 %v2794, %v3021
    %v3179 = vsub.f32 %v2795, %v3023
    %v3180 = vsub.f32 %v2796, %v3025
    %v3181 = vsub.f32 %v2797, %v3027
    %v3182 = vsub.f32 %v2798, %v3029
    %v3183 = vsub.f32 %v2799, %v3031
    %v3184 = vsub.f32 %v2800, %v3033
    %v3185 = vsub.f32 %v2801, %v3035
    %v3186 = vsub.f32 %v2802, %v3037
    %v3187 = vsub.f32 %v2803, %v3039
    %v3188 = vsub.f32 %v2804, %v3041
    %v3189 = vsub.f32 %v2805, %v3043
    %v3190 = vsub.f32 %v2806, %v3045
    %v3191 = vsub.f32 %v2807, %v3047
    %v3192 = vsub.f32 %v2808, %v3049
    %v3193 = vsub.f32 %v2809, %v3051
    %v3194 = vsub.f32 %v2810, %v3053
    %v3195 = vsub.f32 %v2811, %v3055
    %v3196 = vsub.f32 %v2812, %v3057
    %v3197 = vsub.f32 %v2813, %v3059
    %v3198 = vsub.f32 %v2814, %v3061
    %v3199 = vsub.f32 %v2815, %v3063
    %v3200 = vsub.f32 %v2816, %v3065
    %v3201 = vsub.f32 %v2817, %v3067
    %v3202 = vsub.f32 %v2818, %v3069
    %v3203 = vsub.f32 %v2819, %v3071
    %v3204 = vsub.f32 %v2820, %v3073
    %v3205 = vsub.f32 %v2821, %v3075
    %v3206 = vsub.f32 %v2822, %v3077
    %v3207 = vsub.f32 %v2823, %v3079
    %v3208 = vmul.f32 %v3080, 1.442695
    %v3209 = vpow.pop %v3208
    %v3210 = vmul.f32 %v3081, 1.442695
    %v3211 = vpow.pop %v3210
    %v3212 = vmul.f32 %v3082, 1.442695
    %v3213 = vpow.pop %v3212
    %v3214 = vmul.f32 %v3083, 1.442695
    %v3215 = vpow.pop %v3214
    %v3216 = vmul.f32 %v3084, 1.442695
    %v3217 = vpow.pop %v3216
    %v3218 = vmul.f32 %v3085, 1.442695
    %v3219 = vpow.pop %v3218
    %v3220 = vmul.f32 %v3086, 1.442695
    %v3221 = vpow.pop %v3220
    %v3222 = vmul.f32 %v3087, 1.442695
    %v3223 = vpow.pop %v3222
    %v3224 = vmul.f32 %v3088, 1.442695
    %v3225 = vpow.pop %v3224
    %v3226 = vmul.f32 %v3089, 1.442695
    %v3227 = vpow.pop %v3226
    %v3228 = vmul.f32 %v3090, 1.442695
    %v3229 = vpow.pop %v3228
    %v3230 = vmul.f32 %v3091, 1.442695
    %v3231 = vpow.pop %v3230
    %v3232 = vmul.f32 %v3092, 1.442695
    %v3233 = vpow.pop %v3232
    %v3234 = vmul.f32 %v3093, 1.442695
    %v3235 = vpow.pop %v3234
    %v3236 = vmul.f32 %v3094, 1.442695
    %v3237 = vpow.pop %v3236
    %v3238 = vmul.f32 %v3095, 1.442695
    %v3239 = vpow.pop %v3238
    %v3240 = vmul.f32 %v3096, 1.442695
    %v3241 = vpow.pop %v3240
    %v3242 = vmul.f32 %v3097, 1.442695
    %v3243 = vpow.pop %v3242
    %v3244 = vmul.f32 %v3098, 1.442695
    %v3245 = vpow.pop %v3244
    %v3246 = vmul.f32 %v3099, 1.442695
    %v3247 = vpow.pop %v3246
    %v3248 = vmul.f32 %v3100, 1.442695
    %v3249 = vpow.pop %v3248
    %v3250 = vmul.f32 %v3101, 1.442695
    %v3251 = vpow.pop %v3250
    %v3252 = vmul.f32 %v3102, 1.442695
    %v3253 = vpow.pop %v3252
    %v3254 = vmul.f32 %v3103, 1.442695
    %v3255 = vpow.pop %v3254
    %v3256 = vmul.f32 %v3104, 1.442695
    %v3257 = vpow.pop %v3256
    %v3258 = vmul.f32 %v3105, 1.442695
    %v3259 = vpow.pop %v3258
    %v3260 = vmul.f32 %v3106, 1.442695
    %v3261 = vpow.pop %v3260
    %v3262 = vmul.f32 %v3107, 1.442695
    %v3263 = vpow.pop %v3262
    %v3264 = vmul.f32 %v3108, 1.442695
    %v3265 = vpow.pop %v3264
    %v3266 = vmul.f32 %v3109, 1.442695
    %v3267 = vpow.pop %v3266
    %v3268 = vmul.f32 %v3110, 1.442695
    %v3269 = vpow.pop %v3268
    %v3270 = vmul.f32 %v3111, 1.442695
    %v3271 = vpow.pop %v3270
    %v3272 = vmul.f32 %v3112, 1.442695
    %v3273 = vpow.pop %v3272
    %v3274 = vmul.f32 %v3113, 1.442695
    %v3275 = vpow.pop %v3274
    %v3276 = vmul.f32 %v3114, 1.442695
    %v3277 = vpow.pop %v3276
    %v3278 = vmul.f32 %v3115, 1.442695
    %v3279 = vpow.pop %v3278
    %v3280 = vmul.f32 %v3116, 1.442695
    %v3281 = vpow.pop %v3280
    %v3282 = vmul.f32 %v3117, 1.442695
    %v3283 = vpow.pop %v3282
    %v3284 = vmul.f32 %v3118, 1.442695
    %v3285 = vpow.pop %v3284
    %v3286 = vmul.f32 %v3119, 1.442695
    %v3287 = vpow.pop %v3286
    %v3288 = vmul.f32 %v3120, 1.442695
    %v3289 = vpow.pop %v3288
    %v3290 = vmul.f32 %v3121, 1.442695
    %v3291 = vpow.pop %v3290
    %v3292 = vmul.f32 %v3122, 1.442695
    %v3293 = vpow.pop %v3292
    %v3294 = vmul.f32 %v3123, 1.442695
    %v3295 = vpow.pop %v3294
    %v3296 = vmul.f32 %v3124, 1.442695
    %v3297 = vpow.pop %v3296
    %v3298 = vmul.f32 %v3125, 1.442695
    %v3299 = vpow.pop %v3298
    %v3300 = vmul.f32 %v3126, 1.442695
    %v3301 = vpow.pop %v3300
    %v3302 = vmul.f32 %v3127, 1.442695
    %v3303 = vpow.pop %v3302
    %v3304 = vmul.f32 %v3128, 1.442695
    %v3305 = vpow.pop %v3304
    %v3306 = vmul.f32 %v3129, 1.442695
    %v3307 = vpow.pop %v3306
    %v3308 = vmul.f32 %v3130, 1.442695
    %v3309 = vpow.pop %v3308
    %v3310 = vmul.f32 %v3131, 1.442695
    %v3311 = vpow.pop %v3310
    %v3312 = vmul.f32 %v3132, 1.442695
    %v3313 = vpow.pop %v3312
    %v3314 = vmul.f32 %v3133, 1.442695
    %v3315 = vpow.pop %v3314
    %v3316 = vmul.f32 %v3134, 1.442695
    %v3317 = vpow.pop %v3316
    %v3318 = vmul.f32 %v3135, 1.442695
    %v3319 = vpow.pop %v3318
    %v3320 = vmul.f32 %v3136, 1.442695
    %v3321 = vpow.pop %v3320
    %v3322 = vmul.f32 %v3137, 1.442695
    %v3323 = vpow.pop %v3322
    %v3324 = vmul.f32 %v3138, 1.442695
    %v3325 = vpow.pop %v3324
    %v3326 = vmul.f32 %v3139, 1.442695
    %v3327 = vpow.pop %v3326
    %v3328 = vmul.f32 %v3140, 1.442695
    %v3329 = vpow.pop %v3328
    %v3330 = vmul.f32 %v3141, 1.442695
    %v3331 = vpow.pop %v3330
    %v3332 = vmul.f32 %v3142, 1.442695
    %v3333 = vpow.pop %v3332
    %v3334 = vmul.f32 %v3143, 1.442695
    %v3335 = vpow.pop %v3334
    %v3336 = vmul.f32 %v3144, 1.442695
    %v3337 = vpow.pop %v3336
    %v3338 = vmul.f32 %v3145, 1.442695
    %v3339 = vpow.pop %v3338
    %v3340 = vmul.f32 %v3146, 1.442695
    %v3341 = vpow.pop %v3340
    %v3342 = vmul.f32 %v3147, 1.442695
    %v3343 = vpow.pop %v3342
    %v3344 = vmul.f32 %v3148, 1.442695
    %v3345 = vpow.pop %v3344
    %v3346 = vmul.f32 %v3149, 1.442695
    %v3347 = vpow.pop %v3346
    %v3348 = vmul.f32 %v3150, 1.442695
    %v3349 = vpow.pop %v3348
    %v3350 = vmul.f32 %v3151, 1.442695
    %v3351 = vpow.pop %v3350
    %v3352 = vmul.f32 %v3152, 1.442695
    %v3353 = vpow.pop %v3352
    %v3354 = vmul.f32 %v3153, 1.442695
    %v3355 = vpow.pop %v3354
    %v3356 = vmul.f32 %v3154, 1.442695
    %v3357 = vpow.pop %v3356
    %v3358 = vmul.f32 %v3155, 1.442695
    %v3359 = vpow.pop %v3358
    %v3360 = vmul.f32 %v3156, 1.442695
    %v3361 = vpow.pop %v3360
    %v3362 = vmul.f32 %v3157, 1.442695
    %v3363 = vpow.pop %v3362
    %v3364 = vmul.f32 %v3158, 1.442695
    %v3365 = vpow.pop %v3364
    %v3366 = vmul.f32 %v3159, 1.442695
    %v3367 = vpow.pop %v3366
    %v3368 = vmul.f32 %v3160, 1.442695
    %v3369 = vpow.pop %v3368
    %v3370 = vmul.f32 %v3161, 1.442695
    %v3371 = vpow.pop %v3370
    %v3372 = vmul.f32 %v3162, 1.442695
    %v3373 = vpow.pop %v3372
    %v3374 = vmul.f32 %v3163, 1.442695
    %v3375 = vpow.pop %v3374
    %v3376 = vmul.f32 %v3164, 1.442695
    %v3377 = vpow.pop %v3376
    %v3378 = vmul.f32 %v3165, 1.442695
    %v3379 = vpow.pop %v3378
    %v3380 = vmul.f32 %v3166, 1.442695
    %v3381 = vpow.pop %v3380
    %v3382 = vmul.f32 %v3167, 1.442695
    %v3383 = vpow.pop %v3382
    %v3384 = vmul.f32 %v3168, 1.442695
    %v3385 = vpow.pop %v3384
    %v3386 = vmul.f32 %v3169, 1.442695
    %v3387 = vpow.pop %v3386
    %v3388 = vmul.f32 %v3170, 1.442695
    %v3389 = vpow.pop %v3388
    %v3390 = vmul.f32 %v3171, 1.442695
    %v3391 = vpow.pop %v3390
    %v3392 = vmul.f32 %v3172, 1.442695
    %v3393 = vpow.pop %v3392
    %v3394 = vmul.f32 %v3173, 1.442695
    %v3395 = vpow.pop %v3394
    %v3396 = vmul.f32 %v3174, 1.442695
    %v3397 = vpow.pop %v3396
    %v3398 = vmul.f32 %v3175, 1.442695
    %v3399 = vpow.pop %v3398
    %v3400 = vmul.f32 %v3176, 1.442695
    %v3401 = vpow.pop %v3400
    %v3402 = vmul.f32 %v3177, 1.442695
    %v3403 = vpow.pop %v3402
    %v3404 = vmul.f32 %v3178, 1.442695
    %v3405 = vpow.pop %v3404
    %v3406 = vmul.f32 %v3179, 1.442695
    %v3407 = vpow.pop %v3406
    %v3408 = vmul.f32 %v3180, 1.442695
    %v3409 = vpow.pop %v3408
    %v3410 = vmul.f32 %v3181, 1.442695
    %v3411 = vpow.pop %v3410
    %v3412 = vmul.f32 %v3182, 1.442695
    %v3413 = vpow.pop %v3412
    %v3414 = vmul.f32 %v3183, 1.442695
    %v3415 = vpow.pop %v3414
    %v3416 = vmul.f32 %v3184, 1.442695
    %v3417 = vpow.pop %v3416
    %v3418 = vmul.f32 %v3185, 1.442695
    %v3419 = vpow.pop %v3418
    %v3420 = vmul.f32 %v3186, 1.442695
    %v3421 = vpow.pop %v3420
    %v3422 = vmul.f32 %v3187, 1.442695
    %v3423 = vpow.pop %v3422
    %v3424 = vmul.f32 %v3188, 1.442695
    %v3425 = vpow.pop %v3424
    %v3426 = vmul.f32 %v3189, 1.442695
    %v3427 = vpow.pop %v3426
    %v3428 = vmul.f32 %v3190, 1.442695
    %v3429 = vpow.pop %v3428
    %v3430 = vmul.f32 %v3191, 1.442695
    %v3431 = vpow.pop %v3430
    %v3432 = vmul.f32 %v3192, 1.442695
    %v3433 = vpow.pop %v3432
    %v3434 = vmul.f32 %v3193, 1.442695
    %v3435 = vpow.pop %v3434
    %v3436 = vmul.f32 %v3194, 1.442695
    %v3437 = vpow.pop %v3436
    %v3438 = vmul.f32 %v3195, 1.442695
    %v3439 = vpow.pop %v3438
    %v3440 = vmul.f32 %v3196, 1.442695
    %v3441 = vpow.pop %v3440
    %v3442 = vmul.f32 %v3197, 1.442695
    %v3443 = vpow.pop %v3442
    %v3444 = vmul.f32 %v3198, 1.442695
    %v3445 = vpow.pop %v3444
    %v3446 = vmul.f32 %v3199, 1.442695
    %v3447 = vpow.pop %v3446
    %v3448 = vmul.f32 %v3200, 1.442695
    %v3449 = vpow.pop %v3448
    %v3450 = vmul.f32 %v3201, 1.442695
    %v3451 = vpow.pop %v3450
    %v3452 = vmul.f32 %v3202, 1.442695
    %v3453 = vpow.pop %v3452
    %v3454 = vmul.f32 %v3203, 1.442695
    %v3455 = vpow.pop %v3454
    %v3456 = vmul.f32 %v3204, 1.442695
    %v3457 = vpow.pop %v3456
    %v3458 = vmul.f32 %v3205, 1.442695
    %v3459 = vpow.pop %v3458
    %v3460 = vmul.f32 %v3206, 1.442695
    %v3461 = vpow.pop %v3460
    %v3462 = vmul.f32 %v3207, 1.442695
    %v3463 = vpow.pop %v3462
    %3464 = vadd.xlane.f32.xlu0 %v3209
    %v3465 = vpop.xlane.xlu0 %3464
    %3466 = vadd.xlane.f32.xlu0 %v3211
    %v3467 = vpop.xlane.xlu0 %3466
    %3468 = vadd.xlane.f32.xlu0 %v3213
    %v3469 = vpop.xlane.xlu0 %3468
    %3470 = vadd.xlane.f32.xlu0 %v3215
    %v3471 = vpop.xlane.xlu0 %3470
    %3472 = vadd.xlane.f32.xlu0 %v3217
    %v3473 = vpop.xlane.xlu0 %3472
    %3474 = vadd.xlane.f32.xlu0 %v3219
    %v3475 = vpop.xlane.xlu0 %3474
    %3476 = vadd.xlane.f32.xlu0 %v3221
    %v3477 = vpop.xlane.xlu0 %3476
    %3478 = vadd.xlane.f32.xlu0 %v3223
    %v3479 = vpop.xlane.xlu0 %3478
    %3480 = vadd.xlane.f32.xlu0 %v3225
    %v3481 = vpop.xlane.xlu0 %3480
    %3482 = vadd.xlane.f32.xlu0 %v3227
    %v3483 = vpop.xlane.xlu0 %3482
    %3484 = vadd.xlane.f32.xlu0 %v3229
    %v3485 = vpop.xlane.xlu0 %3484
    %3486 = vadd.xlane.f32.xlu0 %v3231
    %v3487 = vpop.xlane.xlu0 %3486
    %3488 = vadd.xlane.f32.xlu0 %v3233
    %v3489 = vpop.xlane.xlu0 %3488
    %3490 = vadd.xlane.f32.xlu0 %v3235
    %v3491 = vpop.xlane.xlu0 %3490
    %3492 = vadd.xlane.f32.xlu0 %v3237
    %v3493 = vpop.xlane.xlu0 %3492
    %3494 = vadd.xlane.f32.xlu0 %v3239
    %v3495 = vpop.xlane.xlu0 %3494
    %3496 = vadd.xlane.f32.xlu0 %v3241
    %v3497 = vpop.xlane.xlu0 %3496
    %3498 = vadd.xlane.f32.xlu0 %v3243
    %v3499 = vpop.xlane.xlu0 %3498
    %3500 = vadd.xlane.f32.xlu0 %v3245
    %v3501 = vpop.xlane.xlu0 %3500
    %3502 = vadd.xlane.f32.xlu0 %v3247
    %v3503 = vpop.xlane.xlu0 %3502
    %3504 = vadd.xlane.f32.xlu0 %v3249
    %v3505 = vpop.xlane.xlu0 %3504
    %3506 = vadd.xlane.f32.xlu0 %v3251
    %v3507 = vpop.xlane.xlu0 %3506
    %3508 = vadd.xlane.f32.xlu0 %v3253
    %v3509 = vpop.xlane.xlu0 %3508
    %3510 = vadd.xlane.f32.xlu0 %v3255
    %v3511 = vpop.xlane.xlu0 %3510
    %3512 = vadd.xlane.f32.xlu0 %v3257
    %v3513 = vpop.xlane.xlu0 %3512
    %3514 = vadd.xlane.f32.xlu0 %v3259
    %v3515 = vpop.xlane.xlu0 %3514
    %3516 = vadd.xlane.f32.xlu0 %v3261
    %v3517 = vpop.xlane.xlu0 %3516
    %3518 = vadd.xlane.f32.xlu0 %v3263
    %v3519 = vpop.xlane.xlu0 %3518
    %3520 = vadd.xlane.f32.xlu0 %v3265
    %v3521 = vpop.xlane.xlu0 %3520
    %3522 = vadd.xlane.f32.xlu0 %v3267
    %v3523 = vpop.xlane.xlu0 %3522
    %3524 = vadd.xlane.f32.xlu0 %v3269
    %v3525 = vpop.xlane.xlu0 %3524
    %3526 = vadd.xlane.f32.xlu0 %v3271
    %v3527 = vpop.xlane.xlu0 %3526
    %3528 = vadd.xlane.f32.xlu0 %v3273
    %v3529 = vpop.xlane.xlu0 %3528
    %3530 = vadd.xlane.f32.xlu0 %v3275
    %v3531 = vpop.xlane.xlu0 %3530
    %3532 = vadd.xlane.f32.xlu0 %v3277
    %v3533 = vpop.xlane.xlu0 %3532
    %3534 = vadd.xlane.f32.xlu0 %v3279
    %v3535 = vpop.xlane.xlu0 %3534
    %3536 = vadd.xlane.f32.xlu0 %v3281
    %v3537 = vpop.xlane.xlu0 %3536
    %3538 = vadd.xlane.f32.xlu0 %v3283
    %v3539 = vpop.xlane.xlu0 %3538
    %3540 = vadd.xlane.f32.xlu0 %v3285
    %v3541 = vpop.xlane.xlu0 %3540
    %3542 = vadd.xlane.f32.xlu0 %v3287
    %v3543 = vpop.xlane.xlu0 %3542
    %3544 = vadd.xlane.f32.xlu0 %v3289
    %v3545 = vpop.xlane.xlu0 %3544
    %3546 = vadd.xlane.f32.xlu0 %v3291
    %v3547 = vpop.xlane.xlu0 %3546
    %3548 = vadd.xlane.f32.xlu0 %v3293
    %v3549 = vpop.xlane.xlu0 %3548
    %3550 = vadd.xlane.f32.xlu0 %v3295
    %v3551 = vpop.xlane.xlu0 %3550
    %3552 = vadd.xlane.f32.xlu0 %v3297
    %v3553 = vpop.xlane.xlu0 %3552
    %3554 = vadd.xlane.f32.xlu0 %v3299
    %v3555 = vpop.xlane.xlu0 %3554
    %3556 = vadd.xlane.f32.xlu0 %v3301
    %v3557 = vpop.xlane.xlu0 %3556
    %3558 = vadd.xlane.f32.xlu0 %v3303
    %v3559 = vpop.xlane.xlu0 %3558
    %3560 = vadd.xlane.f32.xlu0 %v3305
    %v3561 = vpop.xlane.xlu0 %3560
    %3562 = vadd.xlane.f32.xlu0 %v3307
    %v3563 = vpop.xlane.xlu0 %3562
    %3564 = vadd.xlane.f32.xlu0 %v3309
    %v3565 = vpop.xlane.xlu0 %3564
    %3566 = vadd.xlane.f32.xlu0 %v3311
    %v3567 = vpop.xlane.xlu0 %3566
    %3568 = vadd.xlane.f32.xlu0 %v3313
    %v3569 = vpop.xlane.xlu0 %3568
    %3570 = vadd.xlane.f32.xlu0 %v3315
    %v3571 = vpop.xlane.xlu0 %3570
    %3572 = vadd.xlane.f32.xlu0 %v3317
    %v3573 = vpop.xlane.xlu0 %3572
    %3574 = vadd.xlane.f32.xlu0 %v3319
    %v3575 = vpop.xlane.xlu0 %3574
    %3576 = vadd.xlane.f32.xlu0 %v3321
    %v3577 = vpop.xlane.xlu0 %3576
    %3578 = vadd.xlane.f32.xlu0 %v3323
    %v3579 = vpop.xlane.xlu0 %3578
    %3580 = vadd.xlane.f32.xlu0 %v3325
    %v3581 = vpop.xlane.xlu0 %3580
    %3582 = vadd.xlane.f32.xlu0 %v3327
    %v3583 = vpop.xlane.xlu0 %3582
    %3584 = vadd.xlane.f32.xlu0 %v3329
    %v3585 = vpop.xlane.xlu0 %3584
    %3586 = vadd.xlane.f32.xlu0 %v3331
    %v3587 = vpop.xlane.xlu0 %3586
    %3588 = vadd.xlane.f32.xlu0 %v3333
    %v3589 = vpop.xlane.xlu0 %3588
    %3590 = vadd.xlane.f32.xlu0 %v3335
    %v3591 = vpop.xlane.xlu0 %3590
    %3592 = vadd.xlane.f32.xlu0 %v3337
    %v3593 = vpop.xlane.xlu0 %3592
    %3594 = vadd.xlane.f32.xlu0 %v3339
    %v3595 = vpop.xlane.xlu0 %3594
    %3596 = vadd.xlane.f32.xlu0 %v3341
    %v3597 = vpop.xlane.xlu0 %3596
    %3598 = vadd.xlane.f32.xlu0 %v3343
    %v3599 = vpop.xlane.xlu0 %3598
    %3600 = vadd.xlane.f32.xlu0 %v3345
    %v3601 = vpop.xlane.xlu0 %3600
    %3602 = vadd.xlane.f32.xlu0 %v3347
    %v3603 = vpop.xlane.xlu0 %3602
    %3604 = vadd.xlane.f32.xlu0 %v3349
    %v3605 = vpop.xlane.xlu0 %3604
    %3606 = vadd.xlane.f32.xlu0 %v3351
    %v3607 = vpop.xlane.xlu0 %3606
    %3608 = vadd.xlane.f32.xlu0 %v3353
    %v3609 = vpop.xlane.xlu0 %3608
    %3610 = vadd.xlane.f32.xlu0 %v3355
    %v3611 = vpop.xlane.xlu0 %3610
    %3612 = vadd.xlane.f32.xlu0 %v3357
    %v3613 = vpop.xlane.xlu0 %3612
    %3614 = vadd.xlane.f32.xlu0 %v3359
    %v3615 = vpop.xlane.xlu0 %3614
    %3616 = vadd.xlane.f32.xlu0 %v3361
    %v3617 = vpop.xlane.xlu0 %3616
    %3618 = vadd.xlane.f32.xlu0 %v3363
    %v3619 = vpop.xlane.xlu0 %3618
    %3620 = vadd.xlane.f32.xlu0 %v3365
    %v3621 = vpop.xlane.xlu0 %3620
    %3622 = vadd.xlane.f32.xlu0 %v3367
    %v3623 = vpop.xlane.xlu0 %3622
    %3624 = vadd.xlane.f32.xlu0 %v3369
    %v3625 = vpop.xlane.xlu0 %3624
    %3626 = vadd.xlane.f32.xlu0 %v3371
    %v3627 = vpop.xlane.xlu0 %3626
    %3628 = vadd.xlane.f32.xlu0 %v3373
    %v3629 = vpop.xlane.xlu0 %3628
    %3630 = vadd.xlane.f32.xlu0 %v3375
    %v3631 = vpop.xlane.xlu0 %3630
    %3632 = vadd.xlane.f32.xlu0 %v3377
    %v3633 = vpop.xlane.xlu0 %3632
    %3634 = vadd.xlane.f32.xlu0 %v3379
    %v3635 = vpop.xlane.xlu0 %3634
    %3636 = vadd.xlane.f32.xlu0 %v3381
    %v3637 = vpop.xlane.xlu0 %3636
    %3638 = vadd.xlane.f32.xlu0 %v3383
    %v3639 = vpop.xlane.xlu0 %3638
    %3640 = vadd.xlane.f32.xlu0 %v3385
    %v3641 = vpop.xlane.xlu0 %3640
    %3642 = vadd.xlane.f32.xlu0 %v3387
    %v3643 = vpop.xlane.xlu0 %3642
    %3644 = vadd.xlane.f32.xlu0 %v3389
    %v3645 = vpop.xlane.xlu0 %3644
    %3646 = vadd.xlane.f32.xlu0 %v3391
    %v3647 = vpop.xlane.xlu0 %3646
    %3648 = vadd.xlane.f32.xlu0 %v3393
    %v3649 = vpop.xlane.xlu0 %3648
    %3650 = vadd.xlane.f32.xlu0 %v3395
    %v3651 = vpop.xlane.xlu0 %3650
    %3652 = vadd.xlane.f32.xlu0 %v3397
    %v3653 = vpop.xlane.xlu0 %3652
    %3654 = vadd.xlane.f32.xlu0 %v3399
    %v3655 = vpop.xlane.xlu0 %3654
    %3656 = vadd.xlane.f32.xlu0 %v3401
    %v3657 = vpop.xlane.xlu0 %3656
    %3658 = vadd.xlane.f32.xlu0 %v3403
    %v3659 = vpop.xlane.xlu0 %3658
    %3660 = vadd.xlane.f32.xlu0 %v3405
    %v3661 = vpop.xlane.xlu0 %3660
    %3662 = vadd.xlane.f32.xlu0 %v3407
    %v3663 = vpop.xlane.xlu0 %3662
    %3664 = vadd.xlane.f32.xlu0 %v3409
    %v3665 = vpop.xlane.xlu0 %3664
    %3666 = vadd.xlane.f32.xlu0 %v3411
    %v3667 = vpop.xlane.xlu0 %3666
    %3668 = vadd.xlane.f32.xlu0 %v3413
    %v3669 = vpop.xlane.xlu0 %3668
    %3670 = vadd.xlane.f32.xlu0 %v3415
    %v3671 = vpop.xlane.xlu0 %3670
    %3672 = vadd.xlane.f32.xlu0 %v3417
    %v3673 = vpop.xlane.xlu0 %3672
    %3674 = vadd.xlane.f32.xlu0 %v3419
    %v3675 = vpop.xlane.xlu0 %3674
    %3676 = vadd.xlane.f32.xlu0 %v3421
    %v3677 = vpop.xlane.xlu0 %3676
    %3678 = vadd.xlane.f32.xlu0 %v3423
    %v3679 = vpop.xlane.xlu0 %3678
    %3680 = vadd.xlane.f32.xlu0 %v3425
    %v3681 = vpop.xlane.xlu0 %3680
    %3682 = vadd.xlane.f32.xlu0 %v3427
    %v3683 = vpop.xlane.xlu0 %3682
    %3684 = vadd.xlane.f32.xlu0 %v3429
    %v3685 = vpop.xlane.xlu0 %3684
    %3686 = vadd.xlane.f32.xlu0 %v3431
    %v3687 = vpop.xlane.xlu0 %3686
    %3688 = vadd.xlane.f32.xlu0 %v3433
    %v3689 = vpop.xlane.xlu0 %3688
    %3690 = vadd.xlane.f32.xlu0 %v3435
    %v3691 = vpop.xlane.xlu0 %3690
    %3692 = vadd.xlane.f32.xlu0 %v3437
    %v3693 = vpop.xlane.xlu0 %3692
    %3694 = vadd.xlane.f32.xlu0 %v3439
    %v3695 = vpop.xlane.xlu0 %3694
    %3696 = vadd.xlane.f32.xlu0 %v3441
    %v3697 = vpop.xlane.xlu0 %3696
    %3698 = vadd.xlane.f32.xlu0 %v3443
    %v3699 = vpop.xlane.xlu0 %3698
    %3700 = vadd.xlane.f32.xlu0 %v3445
    %v3701 = vpop.xlane.xlu0 %3700
    %3702 = vadd.xlane.f32.xlu0 %v3447
    %v3703 = vpop.xlane.xlu0 %3702
    %3704 = vadd.xlane.f32.xlu0 %v3449
    %v3705 = vpop.xlane.xlu0 %3704
    %3706 = vadd.xlane.f32.xlu0 %v3451
    %v3707 = vpop.xlane.xlu0 %3706
    %3708 = vadd.xlane.f32.xlu0 %v3453
    %v3709 = vpop.xlane.xlu0 %3708
    %3710 = vadd.xlane.f32.xlu0 %v3455
    %v3711 = vpop.xlane.xlu0 %3710
    %3712 = vadd.xlane.f32.xlu0 %v3457
    %v3713 = vpop.xlane.xlu0 %3712
    %3714 = vadd.xlane.f32.xlu0 %v3459
    %v3715 = vpop.xlane.xlu0 %3714
    %3716 = vadd.xlane.f32.xlu0 %v3461
    %v3717 = vpop.xlane.xlu0 %3716
    %3718 = vadd.xlane.f32.xlu0 %v3463
    %v3719 = vpop.xlane.xlu0 %3718
    %v3720 = vrcp.pop %v3465
    %v3721 = vrcp.pop %v3467
    %v3722 = vrcp.pop %v3469
    %v3723 = vrcp.pop %v3471
    %v3724 = vrcp.pop %v3473
    %v3725 = vrcp.pop %v3475
    %v3726 = vrcp.pop %v3477
    %v3727 = vrcp.pop %v3479
    %v3728 = vrcp.pop %v3481
    %v3729 = vrcp.pop %v3483
    %v3730 = vrcp.pop %v3485
    %v3731 = vrcp.pop %v3487
    %v3732 = vrcp.pop %v3489
    %v3733 = vrcp.pop %v3491
    %v3734 = vrcp.pop %v3493
    %v3735 = vrcp.pop %v3495
    %v3736 = vrcp.pop %v3497
    %v3737 = vrcp.pop %v3499
    %v3738 = vrcp.pop %v3501
    %v3739 = vrcp.pop %v3503
    %v3740 = vrcp.pop %v3505
    %v3741 = vrcp.pop %v3507
    %v3742 = vrcp.pop %v3509
    %v3743 = vrcp.pop %v3511
    %v3744 = vrcp.pop %v3513
    %v3745 = vrcp.pop %v3515
    %v3746 = vrcp.pop %v3517
    %v3747 = vrcp.pop %v3519
    %v3748 = vrcp.pop %v3521
    %v3749 = vrcp.pop %v3523
    %v3750 = vrcp.pop %v3525
    %v3751 = vrcp.pop %v3527
    %v3752 = vrcp.pop %v3529
    %v3753 = vrcp.pop %v3531
    %v3754 = vrcp.pop %v3533
    %v3755 = vrcp.pop %v3535
    %v3756 = vrcp.pop %v3537
    %v3757 = vrcp.pop %v3539
    %v3758 = vrcp.pop %v3541
    %v3759 = vrcp.pop %v3543
    %v3760 = vrcp.pop %v3545
    %v3761 = vrcp.pop %v3547
    %v3762 = vrcp.pop %v3549
    %v3763 = vrcp.pop %v3551
    %v3764 = vrcp.pop %v3553
    %v3765 = vrcp.pop %v3555
    %v3766 = vrcp.pop %v3557
    %v3767 = vrcp.pop %v3559
    %v3768 = vrcp.pop %v3561
    %v3769 = vrcp.pop %v3563
    %v3770 = vrcp.pop %v3565
    %v3771 = vrcp.pop %v3567
    %v3772 = vrcp.pop %v3569
    %v3773 = vrcp.pop %v3571
    %v3774 = vrcp.pop %v3573
    %v3775 = vrcp.pop %v3575
    %v3776 = vrcp.pop %v3577
    %v3777 = vrcp.pop %v3579
    %v3778 = vrcp.pop %v3581
    %v3779 = vrcp.pop %v3583
    %v3780 = vrcp.pop %v3585
    %v3781 = vrcp.pop %v3587
    %v3782 = vrcp.pop %v3589
    %v3783 = vrcp.pop %v3591
    %v3784 = vrcp.pop %v3593
    %v3785 = vrcp.pop %v3595
    %v3786 = vrcp.pop %v3597
    %v3787 = vrcp.pop %v3599
    %v3788 = vrcp.pop %v3601
    %v3789 = vrcp.pop %v3603
    %v3790 = vrcp.pop %v3605
    %v3791 = vrcp.pop %v3607
    %v3792 = vrcp.pop %v3609
    %v3793 = vrcp.pop %v3611
    %v3794 = vrcp.pop %v3613
    %v3795 = vrcp.pop %v3615
    %v3796 = vrcp.pop %v3617
    %v3797 = vrcp.pop %v3619
    %v3798 = vrcp.pop %v3621
    %v3799 = vrcp.pop %v3623
    %v3800 = vrcp.pop %v3625
    %v3801 = vrcp.pop %v3627
    %v3802 = vrcp.pop %v3629
    %v3803 = vrcp.pop %v3631
    %v3804 = vrcp.pop %v3633
    %v3805 = vrcp.pop %v3635
    %v3806 = vrcp.pop %v3637
    %v3807 = vrcp.pop %v3639
    %v3808 = vrcp.pop %v3641
    %v3809 = vrcp.pop %v3643
    %v3810 = vrcp.pop %v3645
    %v3811 = vrcp.pop %v3647
    %v3812 = vrcp.pop %v3649
    %v3813 = vrcp.pop %v3651
    %v3814 = vrcp.pop %v3653
    %v3815 = vrcp.pop %v3655
    %v3816 = vrcp.pop %v3657
    %v3817 = vrcp.pop %v3659
    %v3818 = vrcp.pop %v3661
    %v3819 = vrcp.pop %v3663
    %v3820 = vrcp.pop %v3665
    %v3821 = vrcp.pop %v3667
    %v3822 = vrcp.pop %v3669
    %v3823 = vrcp.pop %v3671
    %v3824 = vrcp.pop %v3673
    %v3825 = vrcp.pop %v3675
    %v3826 = vrcp.pop %v3677
    %v3827 = vrcp.pop %v3679
    %v3828 = vrcp.pop %v3681
    %v3829 = vrcp.pop %v3683
    %v3830 = vrcp.pop %v3685
    %v3831 = vrcp.pop %v3687
    %v3832 = vrcp.pop %v3689
    %v3833 = vrcp.pop %v3691
    %v3834 = vrcp.pop %v3693
    %v3835 = vrcp.pop %v3695
    %v3836 = vrcp.pop %v3697
    %v3837 = vrcp.pop %v3699
    %v3838 = vrcp.pop %v3701
    %v3839 = vrcp.pop %v3703
    %v3840 = vrcp.pop %v3705
    %v3841 = vrcp.pop %v3707
    %v3842 = vrcp.pop %v3709
    %v3843 = vrcp.pop %v3711
    %v3844 = vrcp.pop %v3713
    %v3845 = vrcp.pop %v3715
    %v3846 = vrcp.pop %v3717
    %v3847 = vrcp.pop %v3719
    %v3848 = vmul.f32 %v3209, %v3720
    %v3849 = vmul.f32 %v3211, %v3721
    %v3850 = vmul.f32 %v3213, %v3722
    %v3851 = vmul.f32 %v3215, %v3723
    %v3852 = vmul.f32 %v3217, %v3724
    %v3853 = vmul.f32 %v3219, %v3725
    %v3854 = vmul.f32 %v3221, %v3726
    %v3855 = vmul.f32 %v3223, %v3727
    %v3856 = vmul.f32 %v3225, %v3728
    %v3857 = vmul.f32 %v3227, %v3729
    %v3858 = vmul.f32 %v3229, %v3730
    %v3859 = vmul.f32 %v3231, %v3731
    %v3860 = vmul.f32 %v3233, %v3732
    %v3861 = vmul.f32 %v3235, %v3733
    %v3862 = vmul.f32 %v3237, %v3734
    %v3863 = vmul.f32 %v3239, %v3735
    %v3864 = vmul.f32 %v3241, %v3736
    %v3865 = vmul.f32 %v3243, %v3737
    %v3866 = vmul.f32 %v3245, %v3738
    %v3867 = vmul.f32 %v3247, %v3739
    %v3868 = vmul.f32 %v3249, %v3740
    %v3869 = vmul.f32 %v3251, %v3741
    %v3870 = vmul.f32 %v3253, %v3742
    %v3871 = vmul.f32 %v3255, %v3743
    %v3872 = vmul.f32 %v3257, %v3744
    %v3873 = vmul.f32 %v3259, %v3745
    %v3874 = vmul.f32 %v3261, %v3746
    %v3875 = vmul.f32 %v3263, %v3747
    %v3876 = vmul.f32 %v3265, %v3748
    %v3877 = vmul.f32 %v3267, %v3749
    %v3878 = vmul.f32 %v3269, %v3750
    %v3879 = vmul.f32 %v3271, %v3751
    %v3880 = vmul.f32 %v3273, %v3752
    %v3881 = vmul.f32 %v3275, %v3753
    %v3882 = vmul.f32 %v3277, %v3754
    %v3883 = vmul.f32 %v3279, %v3755
    %v3884 = vmul.f32 %v3281, %v3756
    %v3885 = vmul.f32 %v3283, %v3757
    %v3886 = vmul.f32 %v3285, %v3758
    %v3887 = vmul.f32 %v3287, %v3759
    %v3888 = vmul.f32 %v3289, %v3760
    %v3889 = vmul.f32 %v3291, %v3761
    %v3890 = vmul.f32 %v3293, %v3762
    %v3891 = vmul.f32 %v3295, %v3763
    %v3892 = vmul.f32 %v3297, %v3764
    %v3893 = vmul.f32 %v3299, %v3765
    %v3894 = vmul.f32 %v3301, %v3766
    %v3895 = vmul.f32 %v3303, %v3767
    %v3896 = vmul.f32 %v3305, %v3768
    %v3897 = vmul.f32 %v3307, %v3769
    %v3898 = vmul.f32 %v3309, %v3770
    %v3899 = vmul.f32 %v3311, %v3771
    %v3900 = vmul.f32 %v3313, %v3772
    %v3901 = vmul.f32 %v3315, %v3773
    %v3902 = vmul.f32 %v3317, %v3774
    %v3903 = vmul.f32 %v3319, %v3775
    %v3904 = vmul.f32 %v3321, %v3776
    %v3905 = vmul.f32 %v3323, %v3777
    %v3906 = vmul.f32 %v3325, %v3778
    %v3907 = vmul.f32 %v3327, %v3779
    %v3908 = vmul.f32 %v3329, %v3780
    %v3909 = vmul.f32 %v3331, %v3781
    %v3910 = vmul.f32 %v3333, %v3782
    %v3911 = vmul.f32 %v3335, %v3783
    %v3912 = vmul.f32 %v3337, %v3784
    %v3913 = vmul.f32 %v3339, %v3785
    %v3914 = vmul.f32 %v3341, %v3786
    %v3915 = vmul.f32 %v3343, %v3787
    %v3916 = vmul.f32 %v3345, %v3788
    %v3917 = vmul.f32 %v3347, %v3789
    %v3918 = vmul.f32 %v3349, %v3790
    %v3919 = vmul.f32 %v3351, %v3791
    %v3920 = vmul.f32 %v3353, %v3792
    %v3921 = vmul.f32 %v3355, %v3793
    %v3922 = vmul.f32 %v3357, %v3794
    %v3923 = vmul.f32 %v3359, %v3795
    %v3924 = vmul.f32 %v3361, %v3796
    %v3925 = vmul.f32 %v3363, %v3797
    %v3926 = vmul.f32 %v3365, %v3798
    %v3927 = vmul.f32 %v3367, %v3799
    %v3928 = vmul.f32 %v3369, %v3800
    %v3929 = vmul.f32 %v3371, %v3801
    %v3930 = vmul.f32 %v3373, %v3802
    %v3931 = vmul.f32 %v3375, %v3803
    %v3932 = vmul.f32 %v3377, %v3804
    %v3933 = vmul.f32 %v3379, %v3805
    %v3934 = vmul.f32 %v3381, %v3806
    %v3935 = vmul.f32 %v3383, %v3807
    %v3936 = vmul.f32 %v3385, %v3808
    %v3937 = vmul.f32 %v3387, %v3809
    %v3938 = vmul.f32 %v3389, %v3810
    %v3939 = vmul.f32 %v3391, %v3811
    %v3940 = vmul.f32 %v3393, %v3812
    %v3941 = vmul.f32 %v3395, %v3813
    %v3942 = vmul.f32 %v3397, %v3814
    %v3943 = vmul.f32 %v3399, %v3815
    %v3944 = vmul.f32 %v3401, %v3816
    %v3945 = vmul.f32 %v3403, %v3817
    %v3946 = vmul.f32 %v3405, %v3818
    %v3947 = vmul.f32 %v3407, %v3819
    %v3948 = vmul.f32 %v3409, %v3820
    %v3949 = vmul.f32 %v3411, %v3821
    %v3950 = vmul.f32 %v3413, %v3822
    %v3951 = vmul.f32 %v3415, %v3823
    %v3952 = vmul.f32 %v3417, %v3824
    %v3953 = vmul.f32 %v3419, %v3825
    %v3954 = vmul.f32 %v3421, %v3826
    %v3955 = vmul.f32 %v3423, %v3827
    %v3956 = vmul.f32 %v3425, %v3828
    %v3957 = vmul.f32 %v3427, %v3829
    %v3958 = vmul.f32 %v3429, %v3830
    %v3959 = vmul.f32 %v3431, %v3831
    %v3960 = vmul.f32 %v3433, %v3832
    %v3961 = vmul.f32 %v3435, %v3833
    %v3962 = vmul.f32 %v3437, %v3834
    %v3963 = vmul.f32 %v3439, %v3835
    %v3964 = vmul.f32 %v3441, %v3836
    %v3965 = vmul.f32 %v3443, %v3837
    %v3966 = vmul.f32 %v3445, %v3838
    %v3967 = vmul.f32 %v3447, %v3839
    %v3968 = vmul.f32 %v3449, %v3840
    %v3969 = vmul.f32 %v3451, %v3841
    %v3970 = vmul.f32 %v3453, %v3842
    %v3971 = vmul.f32 %v3455, %v3843
    %v3972 = vmul.f32 %v3457, %v3844
    %v3973 = vmul.f32 %v3459, %v3845
    %v3974 = vmul.f32 %v3461, %v3846
    %v3975 = vmul.f32 %v3463, %v3847
    %v3976 = vpack.c.bf16 %v3849, %v3848
    %v3977 = vpack.c.bf16 %v3851, %v3850
    %v3978 = vpack.c.bf16 %v3853, %v3852
    %v3979 = vpack.c.bf16 %v3855, %v3854
    %v3980 = vpack.c.bf16 %v3857, %v3856
    %v3981 = vpack.c.bf16 %v3859, %v3858
    %v3982 = vpack.c.bf16 %v3861, %v3860
    %v3983 = vpack.c.bf16 %v3863, %v3862
    %v3984 = vpack.c.bf16 %v3865, %v3864
    %v3985 = vpack.c.bf16 %v3867, %v3866
    %v3986 = vpack.c.bf16 %v3869, %v3868
    %v3987 = vpack.c.bf16 %v3871, %v3870
    %v3988 = vpack.c.bf16 %v3873, %v3872
    %v3989 = vpack.c.bf16 %v3875, %v3874
    %v3990 = vpack.c.bf16 %v3877, %v3876
    %v3991 = vpack.c.bf16 %v3879, %v3878
    %v3992 = vpack.c.bf16 %v3881, %v3880
    %v3993 = vpack.c.bf16 %v3883, %v3882
    %v3994 = vpack.c.bf16 %v3885, %v3884
    %v3995 = vpack.c.bf16 %v3887, %v3886
    %v3996 = vpack.c.bf16 %v3889, %v3888
    %v3997 = vpack.c.bf16 %v3891, %v3890
    %v3998 = vpack.c.bf16 %v3893, %v3892
    %v3999 = vpack.c.bf16 %v3895, %v3894
    %v4000 = vpack.c.bf16 %v3897, %v3896
    %v4001 = vpack.c.bf16 %v3899, %v3898
    %v4002 = vpack.c.bf16 %v3901, %v3900
    %v4003 = vpack.c.bf16 %v3903, %v3902
    %v4004 = vpack.c.bf16 %v3905, %v3904
    %v4005 = vpack.c.bf16 %v3907, %v3906
    %v4006 = vpack.c.bf16 %v3909, %v3908
    %v4007 = vpack.c.bf16 %v3911, %v3910
    %v4008 = vpack.c.bf16 %v3913, %v3912
    %v4009 = vpack.c.bf16 %v3915, %v3914
    %v4010 = vpack.c.bf16 %v3917, %v3916
    %v4011 = vpack.c.bf16 %v3919, %v3918
    %v4012 = vpack.c.bf16 %v3921, %v3920
    %v4013 = vpack.c.bf16 %v3923, %v3922
    %v4014 = vpack.c.bf16 %v3925, %v3924
    %v4015 = vpack.c.bf16 %v3927, %v3926
    %v4016 = vpack.c.bf16 %v3929, %v3928
    %v4017 = vpack.c.bf16 %v3931, %v3930
    %v4018 = vpack.c.bf16 %v3933, %v3932
    %v4019 = vpack.c.bf16 %v3935, %v3934
    %v4020 = vpack.c.bf16 %v3937, %v3936
    %v4021 = vpack.c.bf16 %v3939, %v3938
    %v4022 = vpack.c.bf16 %v3941, %v3940
    %v4023 = vpack.c.bf16 %v3943, %v3942
    %v4024 = vpack.c.bf16 %v3945, %v3944
    %v4025 = vpack.c.bf16 %v3947, %v3946
    %v4026 = vpack.c.bf16 %v3949, %v3948
    %v4027 = vpack.c.bf16 %v3951, %v3950
    %v4028 = vpack.c.bf16 %v3953, %v3952
    %v4029 = vpack.c.bf16 %v3955, %v3954
    %v4030 = vpack.c.bf16 %v3957, %v3956
    %v4031 = vpack.c.bf16 %v3959, %v3958
    %v4032 = vpack.c.bf16 %v3961, %v3960
    %v4033 = vpack.c.bf16 %v3963, %v3962
    %v4034 = vpack.c.bf16 %v3965, %v3964
    %v4035 = vpack.c.bf16 %v3967, %v3966
    %v4036 = vpack.c.bf16 %v3969, %v3968
    %v4037 = vpack.c.bf16 %v3971, %v3970
    %v4038 = vpack.c.bf16 %v3973, %v3972
    %v4039 = vpack.c.bf16 %v3975, %v3974
    %4040 = vmatprep.subr.bf16.mxu0 0
    %4041 = vmatpush1.bf16.msra.mxu0 %v1059
    %4042 = vmatprep.subr.bf16.mxu0 0
    %4043 = vmatpush1.bf16.msra.mxu0 %v1056
    %4044 = vmatprep.subr.bf16.mxu0 0
    %4045 = vmatpush1.bf16.msra.mxu0 %v1053
    %4046 = vmatprep.subr.bf16.mxu0 0
    %4047 = vmatpush1.bf16.msra.mxu0 %v1050
    %4048 = vmatprep.subr.bf16.mxu0 0
    %4049 = vmatpush1.bf16.msra.mxu0 %v1047
    %4050 = vmatprep.subr.bf16.mxu0 0
    %4051 = vmatpush1.bf16.msra.mxu0 %v1044
    %4052 = vmatprep.subr.bf16.mxu0 0
    %4053 = vmatpush1.bf16.msra.mxu0 %v1041
    %4054 = vmatprep.subr.bf16.mxu0 0
    %4055 = vmatpush1.bf16.msra.mxu0 %v1038
    %4056 = vmatprep.subr.bf16.mxu0 0
    %4057 = vmatpush2.bf16.msra.mxu0 0
    %4058 = vmatprep.subr.bf16.mxu0 0
    %4059 = vmatpush2.bf16.msra.mxu0 0
    %4060 = vmatprep.subr.bf16.mxu0 0
    %4061 = vmatpush2.bf16.msra.mxu0 0
    %4062 = vmatprep.subr.bf16.mxu0 0
    %4063 = vmatpush2.bf16.msra.mxu0 0
    %4064 = vmatprep.subr.bf16.mxu0 0
    %4065 = vmatpush2.bf16.msra.mxu0 0
    %4066 = vmatprep.subr.bf16.mxu0 0
    %4067 = vmatpush2.bf16.msra.mxu0 0
    %4068 = vmatprep.subr.bf16.mxu0 0
    %4069 = vmatpush2.bf16.msra.mxu0 0
    %4070 = vmatprep.subr.bf16.mxu0 0
    %4071 = vmatpush2.bf16.msra.mxu0 0
    %4072 = vmatprep.mubr.bf16.mxu0 0
    %4073 = vmatmul.mubr.bf16.gmra.mxu0 %v3976
    %v4074 = vpop.f32.mrf.mxu0
    %v4075 = vadd.f32 0.0, %v4074
    %v4076 = vpop.f32.mrf.mxu0
    %v4077 = vpop.f32.mrf.mxu0
    %v4078 = vadd.f32 0.0, %v4077
    %v4079 = vpop.f32.mrf.mxu0
    %4080 = vmatprep.mubr.bf16.mxu0 0
    %4081 = vmatmul.mubr.bf16.gmra.mxu0 %v3977
    %v4082 = vpop.f32.mrf.mxu0
    %v4083 = vadd.f32 0.0, %v4082
    %v4084 = vpop.f32.mrf.mxu0
    %v4085 = vpop.f32.mrf.mxu0
    %v4086 = vadd.f32 0.0, %v4085
    %v4087 = vpop.f32.mrf.mxu0
    %4088 = vmatprep.mubr.bf16.mxu0 0
    %4089 = vmatmul.mubr.bf16.gmra.mxu0 %v3978
    %v4090 = vpop.f32.mrf.mxu0
    %v4091 = vadd.f32 0.0, %v4090
    %v4092 = vpop.f32.mrf.mxu0
    %v4093 = vpop.f32.mrf.mxu0
    %v4094 = vadd.f32 0.0, %v4093
    %v4095 = vpop.f32.mrf.mxu0
    %4096 = vmatprep.mubr.bf16.mxu0 0
    %4097 = vmatmul.mubr.bf16.gmra.mxu0 %v3979
    %v4098 = vpop.f32.mrf.mxu0
    %v4099 = vadd.f32 0.0, %v4098
    %v4100 = vpop.f32.mrf.mxu0
    %v4101 = vpop.f32.mrf.mxu0
    %v4102 = vadd.f32 0.0, %v4101
    %v4103 = vpop.f32.mrf.mxu0
    %4104 = vmatprep.mubr.bf16.mxu0 0
    %4105 = vmatmul.mubr.bf16.gmra.mxu0 %v3980
    %v4106 = vpop.f32.mrf.mxu0
    %v4107 = vadd.f32 0.0, %v4106
    %v4108 = vpop.f32.mrf.mxu0
    %v4109 = vpop.f32.mrf.mxu0
    %v4110 = vadd.f32 0.0, %v4109
    %v4111 = vpop.f32.mrf.mxu0
    %4112 = vmatprep.mubr.bf16.mxu0 0
    %4113 = vmatmul.mubr.bf16.gmra.mxu0 %v3981
    %v4114 = vpop.f32.mrf.mxu0
    %v4115 = vadd.f32 0.0, %v4114
    %v4116 = vpop.f32.mrf.mxu0
    %v4117 = vpop.f32.mrf.mxu0
    %v4118 = vadd.f32 0.0, %v4117
    %v4119 = vpop.f32.mrf.mxu0
    %4120 = vmatprep.mubr.bf16.mxu0 0
    %4121 = vmatmul.mubr.bf16.gmra.mxu0 %v3982
    %v4122 = vpop.f32.mrf.mxu0
    %v4123 = vadd.f32 0.0, %v4122
    %v4124 = vpop.f32.mrf.mxu0
    %v4125 = vpop.f32.mrf.mxu0
    %v4126 = vadd.f32 0.0, %v4125
    %v4127 = vpop.f32.mrf.mxu0
    %4128 = vmatprep.mubr.bf16.mxu0 0
    %4129 = vmatmul.mubr.bf16.gmra.mxu0 %v3983
    %v4130 = vpop.f32.mrf.mxu0
    %v4131 = vadd.f32 0.0, %v4130
    %v4132 = vpop.f32.mrf.mxu0
    %v4133 = vpop.f32.mrf.mxu0
    %v4134 = vadd.f32 0.0, %v4133
    %v4135 = vpop.f32.mrf.mxu0
    %4136 = vdwg.mxu0
    %4137 = vmatprep.subr.bf16.mxu0 0
    %4138 = vmatpush1.bf16.msra.mxu0 %v1083
    %4139 = vmatprep.subr.bf16.mxu0 0
    %4140 = vmatpush1.bf16.msra.mxu0 %v1080
    %4141 = vmatprep.subr.bf16.mxu0 0
    %4142 = vmatpush1.bf16.msra.mxu0 %v1077
    %4143 = vmatprep.subr.bf16.mxu0 0
    %4144 = vmatpush1.bf16.msra.mxu0 %v1074
    %4145 = vmatprep.subr.bf16.mxu0 0
    %4146 = vmatpush1.bf16.msra.mxu0 %v1071
    %4147 = vmatprep.subr.bf16.mxu0 0
    %4148 = vmatpush1.bf16.msra.mxu0 %v1068
    %4149 = vmatprep.subr.bf16.mxu0 0
    %4150 = vmatpush1.bf16.msra.mxu0 %v1065
    %4151 = vmatprep.subr.bf16.mxu0 0
    %4152 = vmatpush1.bf16.msra.mxu0 %v1062
    %4153 = vmatprep.subr.bf16.mxu0 0
    %4154 = vmatpush2.bf16.msra.mxu0 0
    %4155 = vmatprep.subr.bf16.mxu0 0
    %4156 = vmatpush2.bf16.msra.mxu0 0
    %4157 = vmatprep.subr.bf16.mxu0 0
    %4158 = vmatpush2.bf16.msra.mxu0 0
    %4159 = vmatprep.subr.bf16.mxu0 0
    %4160 = vmatpush2.bf16.msra.mxu0 0
    %4161 = vmatprep.subr.bf16.mxu0 0
    %4162 = vmatpush2.bf16.msra.mxu0 0
    %4163 = vmatprep.subr.bf16.mxu0 0
    %4164 = vmatpush2.bf16.msra.mxu0 0
    %4165 = vmatprep.subr.bf16.mxu0 0
    %4166 = vmatpush2.bf16.msra.mxu0 0
    %4167 = vmatprep.subr.bf16.mxu0 0
    %4168 = vmatpush2.bf16.msra.mxu0 0
    %4169 = vmatprep.mubr.bf16.mxu0 0
    %4170 = vmatmul.mubr.bf16.gmra.mxu0 %v3984
    %v4171 = vpop.f32.mrf.mxu0
    %v4172 = vadd.f32 0.0, %v4171
    %v4173 = vpop.f32.mrf.mxu0
    %v4174 = vpop.f32.mrf.mxu0
    %v4175 = vadd.f32 0.0, %v4174
    %v4176 = vpop.f32.mrf.mxu0
    %4177 = vmatprep.mubr.bf16.mxu0 0
    %4178 = vmatmul.mubr.bf16.gmra.mxu0 %v3985
    %v4179 = vpop.f32.mrf.mxu0
    %v4180 = vadd.f32 0.0, %v4179
    %v4181 = vpop.f32.mrf.mxu0
    %v4182 = vpop.f32.mrf.mxu0
    %v4183 = vadd.f32 0.0, %v4182
    %v4184 = vpop.f32.mrf.mxu0
    %4185 = vmatprep.mubr.bf16.mxu0 0
    %4186 = vmatmul.mubr.bf16.gmra.mxu0 %v3986
    %v4187 = vpop.f32.mrf.mxu0
    %v4188 = vadd.f32 0.0, %v4187
    %v4189 = vpop.f32.mrf.mxu0
    %v4190 = vpop.f32.mrf.mxu0
    %v4191 = vadd.f32 0.0, %v4190
    %v4192 = vpop.f32.mrf.mxu0
    %4193 = vmatprep.mubr.bf16.mxu0 0
    %4194 = vmatmul.mubr.bf16.gmra.mxu0 %v3987
    %v4195 = vpop.f32.mrf.mxu0
    %v4196 = vadd.f32 0.0, %v4195
    %v4197 = vpop.f32.mrf.mxu0
    %v4198 = vpop.f32.mrf.mxu0
    %v4199 = vadd.f32 0.0, %v4198
    %v4200 = vpop.f32.mrf.mxu0
    %4201 = vmatprep.mubr.bf16.mxu0 0
    %4202 = vmatmul.mubr.bf16.gmra.mxu0 %v3988
    %v4203 = vpop.f32.mrf.mxu0
    %v4204 = vadd.f32 0.0, %v4203
    %v4205 = vpop.f32.mrf.mxu0
    %v4206 = vpop.f32.mrf.mxu0
    %v4207 = vadd.f32 0.0, %v4206
    %v4208 = vpop.f32.mrf.mxu0
    %4209 = vmatprep.mubr.bf16.mxu0 0
    %4210 = vmatmul.mubr.bf16.gmra.mxu0 %v3989
    %v4211 = vpop.f32.mrf.mxu0
    %v4212 = vadd.f32 0.0, %v4211
    %v4213 = vpop.f32.mrf.mxu0
    %v4214 = vpop.f32.mrf.mxu0
    %v4215 = vadd.f32 0.0, %v4214
    %v4216 = vpop.f32.mrf.mxu0
    %4217 = vmatprep.mubr.bf16.mxu0 0
    %4218 = vmatmul.mubr.bf16.gmra.mxu0 %v3990
    %v4219 = vpop.f32.mrf.mxu0
    %v4220 = vadd.f32 0.0, %v4219
    %v4221 = vpop.f32.mrf.mxu0
    %v4222 = vpop.f32.mrf.mxu0
    %v4223 = vadd.f32 0.0, %v4222
    %v4224 = vpop.f32.mrf.mxu0
    %4225 = vmatprep.mubr.bf16.mxu0 0
    %4226 = vmatmul.mubr.bf16.gmra.mxu0 %v3991
    %v4227 = vpop.f32.mrf.mxu0
    %v4228 = vadd.f32 0.0, %v4227
    %v4229 = vpop.f32.mrf.mxu0
    %v4230 = vpop.f32.mrf.mxu0
    %v4231 = vadd.f32 0.0, %v4230
    %v4232 = vpop.f32.mrf.mxu0
    %4233 = vdwg.mxu0
    %4234 = vmatprep.subr.bf16.mxu0 0
    %4235 = vmatpush1.bf16.msra.mxu0 %v1339
    %4236 = vmatprep.subr.bf16.mxu0 0
    %4237 = vmatpush1.bf16.msra.mxu0 %v1337
    %4238 = vmatprep.subr.bf16.mxu0 0
    %4239 = vmatpush1.bf16.msra.mxu0 %v1335
    %4240 = vmatprep.subr.bf16.mxu0 0
    %4241 = vmatpush1.bf16.msra.mxu0 %v1333
    %4242 = vmatprep.subr.bf16.mxu0 0
    %4243 = vmatpush1.bf16.msra.mxu0 %v1331
    %4244 = vmatprep.subr.bf16.mxu0 0
    %4245 = vmatpush1.bf16.msra.mxu0 %v1329
    %4246 = vmatprep.subr.bf16.mxu0 0
    %4247 = vmatpush1.bf16.msra.mxu0 %v1327
    %4248 = vmatprep.subr.bf16.mxu0 0
    %4249 = vmatpush1.bf16.msra.mxu0 %v1325
    %4250 = vmatprep.subr.bf16.mxu0 0
    %4251 = vmatpush2.bf16.msra.mxu0 0
    %4252 = vmatprep.subr.bf16.mxu0 0
    %4253 = vmatpush2.bf16.msra.mxu0 0
    %4254 = vmatprep.subr.bf16.mxu0 0
    %4255 = vmatpush2.bf16.msra.mxu0 0
    %4256 = vmatprep.subr.bf16.mxu0 0
    %4257 = vmatpush2.bf16.msra.mxu0 0
    %4258 = vmatprep.subr.bf16.mxu0 0
    %4259 = vmatpush2.bf16.msra.mxu0 0
    %4260 = vmatprep.subr.bf16.mxu0 0
    %4261 = vmatpush2.bf16.msra.mxu0 0
    %4262 = vmatprep.subr.bf16.mxu0 0
    %4263 = vmatpush2.bf16.msra.mxu0 0
    %4264 = vmatprep.subr.bf16.mxu0 0
    %4265 = vmatpush2.bf16.msra.mxu0 0
    %4266 = vmatprep.mubr.bf16.mxu0 0
    %4267 = vmatmul.mubr.bf16.gmra.mxu0 %v3992
    %v4268 = vpop.f32.mrf.mxu0
    %v4269 = vadd.f32 0.0, %v4268
    %v4270 = vpop.f32.mrf.mxu0
    %v4271 = vpop.f32.mrf.mxu0
    %v4272 = vadd.f32 0.0, %v4271
    %v4273 = vpop.f32.mrf.mxu0
    %4274 = vmatprep.mubr.bf16.mxu0 0
    %4275 = vmatmul.mubr.bf16.gmra.mxu0 %v3993
    %v4276 = vpop.f32.mrf.mxu0
    %v4277 = vadd.f32 0.0, %v4276
    %v4278 = vpop.f32.mrf.mxu0
    %v4279 = vpop.f32.mrf.mxu0
    %v4280 = vadd.f32 0.0, %v4279
    %v4281 = vpop.f32.mrf.mxu0
    %4282 = vmatprep.mubr.bf16.mxu0 0
    %4283 = vmatmul.mubr.bf16.gmra.mxu0 %v3994
    %v4284 = vpop.f32.mrf.mxu0
    %v4285 = vadd.f32 0.0, %v4284
    %v4286 = vpop.f32.mrf.mxu0
    %v4287 = vpop.f32.mrf.mxu0
    %v4288 = vadd.f32 0.0, %v4287
    %v4289 = vpop.f32.mrf.mxu0
    %4290 = vmatprep.mubr.bf16.mxu0 0
    %4291 = vmatmul.mubr.bf16.gmra.mxu0 %v3995
    %v4292 = vpop.f32.mrf.mxu0
    %v4293 = vadd.f32 0.0, %v4292
    %v4294 = vpop.f32.mrf.mxu0
    %v4295 = vpop.f32.mrf.mxu0
    %v4296 = vadd.f32 0.0, %v4295
    %v4297 = vpop.f32.mrf.mxu0
    %4298 = vmatprep.mubr.bf16.mxu0 0
    %4299 = vmatmul.mubr.bf16.gmra.mxu0 %v3996
    %v4300 = vpop.f32.mrf.mxu0
    %v4301 = vadd.f32 0.0, %v4300
    %v4302 = vpop.f32.mrf.mxu0
    %v4303 = vpop.f32.mrf.mxu0
    %v4304 = vadd.f32 0.0, %v4303
    %v4305 = vpop.f32.mrf.mxu0
    %4306 = vmatprep.mubr.bf16.mxu0 0
    %4307 = vmatmul.mubr.bf16.gmra.mxu0 %v3997
    %v4308 = vpop.f32.mrf.mxu0
    %v4309 = vadd.f32 0.0, %v4308
    %v4310 = vpop.f32.mrf.mxu0
    %v4311 = vpop.f32.mrf.mxu0
    %v4312 = vadd.f32 0.0, %v4311
    %v4313 = vpop.f32.mrf.mxu0
    %4314 = vmatprep.mubr.bf16.mxu0 0
    %4315 = vmatmul.mubr.bf16.gmra.mxu0 %v3998
    %v4316 = vpop.f32.mrf.mxu0
    %v4317 = vadd.f32 0.0, %v4316
    %v4318 = vpop.f32.mrf.mxu0
    %v4319 = vpop.f32.mrf.mxu0
    %v4320 = vadd.f32 0.0, %v4319
    %v4321 = vpop.f32.mrf.mxu0
    %4322 = vmatprep.mubr.bf16.mxu0 0
    %4323 = vmatmul.mubr.bf16.gmra.mxu0 %v3999
    %v4324 = vpop.f32.mrf.mxu0
    %v4325 = vadd.f32 0.0, %v4324
    %v4326 = vpop.f32.mrf.mxu0
    %v4327 = vpop.f32.mrf.mxu0
    %v4328 = vadd.f32 0.0, %v4327
    %v4329 = vpop.f32.mrf.mxu0
    %4330 = vdwg.mxu0
    %4331 = vmatprep.subr.bf16.mxu0 0
    %4332 = vmatpush1.bf16.msra.mxu0 %v1355
    %4333 = vmatprep.subr.bf16.mxu0 0
    %4334 = vmatpush1.bf16.msra.mxu0 %v1353
    %4335 = vmatprep.subr.bf16.mxu0 0
    %4336 = vmatpush1.bf16.msra.mxu0 %v1351
    %4337 = vmatprep.subr.bf16.mxu0 0
    %4338 = vmatpush1.bf16.msra.mxu0 %v1349
    %4339 = vmatprep.subr.bf16.mxu0 0
    %4340 = vmatpush1.bf16.msra.mxu0 %v1347
    %4341 = vmatprep.subr.bf16.mxu0 0
    %4342 = vmatpush1.bf16.msra.mxu0 %v1345
    %4343 = vmatprep.subr.bf16.mxu0 0
    %4344 = vmatpush1.bf16.msra.mxu0 %v1343
    %4345 = vmatprep.subr.bf16.mxu0 0
    %4346 = vmatpush1.bf16.msra.mxu0 %v1341
    %4347 = vmatprep.subr.bf16.mxu0 0
    %4348 = vmatpush2.bf16.msra.mxu0 0
    %4349 = vmatprep.subr.bf16.mxu0 0
    %4350 = vmatpush2.bf16.msra.mxu0 0
    %4351 = vmatprep.subr.bf16.mxu0 0
    %4352 = vmatpush2.bf16.msra.mxu0 0
    %4353 = vmatprep.subr.bf16.mxu0 0
    %4354 = vmatpush2.bf16.msra.mxu0 0
    %4355 = vmatprep.subr.bf16.mxu0 0
    %4356 = vmatpush2.bf16.msra.mxu0 0
    %4357 = vmatprep.subr.bf16.mxu0 0
    %4358 = vmatpush2.bf16.msra.mxu0 0
    %4359 = vmatprep.subr.bf16.mxu0 0
    %4360 = vmatpush2.bf16.msra.mxu0 0
    %4361 = vmatprep.subr.bf16.mxu0 0
    %4362 = vmatpush2.bf16.msra.mxu0 0
    %4363 = vmatprep.mubr.bf16.mxu0 0
    %4364 = vmatmul.mubr.bf16.gmra.mxu0 %v4000
    %v4365 = vpop.f32.mrf.mxu0
    %v4366 = vadd.f32 0.0, %v4365
    %v4367 = vpop.f32.mrf.mxu0
    %v4368 = vpop.f32.mrf.mxu0
    %v4369 = vadd.f32 0.0, %v4368
    %v4370 = vpop.f32.mrf.mxu0
    %4371 = vmatprep.mubr.bf16.mxu0 0
    %4372 = vmatmul.mubr.bf16.gmra.mxu0 %v4001
    %v4373 = vpop.f32.mrf.mxu0
    %v4374 = vadd.f32 0.0, %v4373
    %v4375 = vpop.f32.mrf.mxu0
    %v4376 = vpop.f32.mrf.mxu0
    %v4377 = vadd.f32 0.0, %v4376
    %v4378 = vpop.f32.mrf.mxu0
    %4379 = vmatprep.mubr.bf16.mxu0 0
    %4380 = vmatmul.mubr.bf16.gmra.mxu0 %v4002
    %v4381 = vpop.f32.mrf.mxu0
    %v4382 = vadd.f32 0.0, %v4381
    %v4383 = vpop.f32.mrf.mxu0
    %v4384 = vpop.f32.mrf.mxu0
    %v4385 = vadd.f32 0.0, %v4384
    %v4386 = vpop.f32.mrf.mxu0
    %4387 = vmatprep.mubr.bf16.mxu0 0
    %4388 = vmatmul.mubr.bf16.gmra.mxu0 %v4003
    %v4389 = vpop.f32.mrf.mxu0
    %v4390 = vadd.f32 0.0, %v4389
    %v4391 = vpop.f32.mrf.mxu0
    %v4392 = vpop.f32.mrf.mxu0
    %v4393 = vadd.f32 0.0, %v4392
    %v4394 = vpop.f32.mrf.mxu0
    %4395 = vmatprep.mubr.bf16.mxu0 0
    %4396 = vmatmul.mubr.bf16.gmra.mxu0 %v4004
    %v4397 = vpop.f32.mrf.mxu0
    %v4398 = vadd.f32 0.0, %v4397
    %v4399 = vpop.f32.mrf.mxu0
    %v4400 = vpop.f32.mrf.mxu0
    %v4401 = vadd.f32 0.0, %v4400
    %v4402 = vpop.f32.mrf.mxu0
    %4403 = vmatprep.mubr.bf16.mxu0 0
    %4404 = vmatmul.mubr.bf16.gmra.mxu0 %v4005
    %v4405 = vpop.f32.mrf.mxu0
    %v4406 = vadd.f32 0.0, %v4405
    %v4407 = vpop.f32.mrf.mxu0
    %v4408 = vpop.f32.mrf.mxu0
    %v4409 = vadd.f32 0.0, %v4408
    %v4410 = vpop.f32.mrf.mxu0
    %4411 = vmatprep.mubr.bf16.mxu0 0
    %4412 = vmatmul.mubr.bf16.gmra.mxu0 %v4006
    %v4413 = vpop.f32.mrf.mxu0
    %v4414 = vadd.f32 0.0, %v4413
    %v4415 = vpop.f32.mrf.mxu0
    %v4416 = vpop.f32.mrf.mxu0
    %v4417 = vadd.f32 0.0, %v4416
    %v4418 = vpop.f32.mrf.mxu0
    %4419 = vmatprep.mubr.bf16.mxu0 0
    %4420 = vmatmul.mubr.bf16.gmra.mxu0 %v4007
    %v4421 = vpop.f32.mrf.mxu0
    %v4422 = vadd.f32 0.0, %v4421
    %v4423 = vpop.f32.mrf.mxu0
    %v4424 = vpop.f32.mrf.mxu0
    %v4425 = vadd.f32 0.0, %v4424
    %v4426 = vpop.f32.mrf.mxu0
    %4427 = vdwg.mxu0
    %4428 = vmatprep.subr.bf16.mxu0 0
    %4429 = vmatpush1.bf16.msra.mxu0 %v1387
    %4430 = vmatprep.subr.bf16.mxu0 0
    %4431 = vmatpush1.bf16.msra.mxu0 %v1385
    %4432 = vmatprep.subr.bf16.mxu0 0
    %4433 = vmatpush1.bf16.msra.mxu0 %v1383
    %4434 = vmatprep.subr.bf16.mxu0 0
    %4435 = vmatpush1.bf16.msra.mxu0 %v1381
    %4436 = vmatprep.subr.bf16.mxu0 0
    %4437 = vmatpush1.bf16.msra.mxu0 %v1379
    %4438 = vmatprep.subr.bf16.mxu0 0
    %4439 = vmatpush1.bf16.msra.mxu0 %v1377
    %4440 = vmatprep.subr.bf16.mxu0 0
    %4441 = vmatpush1.bf16.msra.mxu0 %v1375
    %4442 = vmatprep.subr.bf16.mxu0 0
    %4443 = vmatpush1.bf16.msra.mxu0 %v1373
    %4444 = vmatprep.subr.bf16.mxu0 0
    %4445 = vmatpush2.bf16.msra.mxu0 0
    %4446 = vmatprep.subr.bf16.mxu0 0
    %4447 = vmatpush2.bf16.msra.mxu0 0
    %4448 = vmatprep.subr.bf16.mxu0 0
    %4449 = vmatpush2.bf16.msra.mxu0 0
    %4450 = vmatprep.subr.bf16.mxu0 0
    %4451 = vmatpush2.bf16.msra.mxu0 0
    %4452 = vmatprep.subr.bf16.mxu0 0
    %4453 = vmatpush2.bf16.msra.mxu0 0
    %4454 = vmatprep.subr.bf16.mxu0 0
    %4455 = vmatpush2.bf16.msra.mxu0 0
    %4456 = vmatprep.subr.bf16.mxu0 0
    %4457 = vmatpush2.bf16.msra.mxu0 0
    %4458 = vmatprep.subr.bf16.mxu0 0
    %4459 = vmatpush2.bf16.msra.mxu0 0
    %4460 = vmatprep.mubr.bf16.mxu0 0
    %4461 = vmatmul.mubr.bf16.gmra.mxu0 %v4008
    %v4462 = vpop.f32.mrf.mxu0
    %v4463 = vadd.f32 0.0, %v4462
    %v4464 = vpop.f32.mrf.mxu0
    %v4465 = vpop.f32.mrf.mxu0
    %v4466 = vadd.f32 0.0, %v4465
    %v4467 = vpop.f32.mrf.mxu0
    %4468 = vmatprep.mubr.bf16.mxu0 0
    %4469 = vmatmul.mubr.bf16.gmra.mxu0 %v4009
    %v4470 = vpop.f32.mrf.mxu0
    %v4471 = vadd.f32 0.0, %v4470
    %v4472 = vpop.f32.mrf.mxu0
    %v4473 = vpop.f32.mrf.mxu0
    %v4474 = vadd.f32 0.0, %v4473
    %v4475 = vpop.f32.mrf.mxu0
    %4476 = vmatprep.mubr.bf16.mxu0 0
    %4477 = vmatmul.mubr.bf16.gmra.mxu0 %v4010
    %v4478 = vpop.f32.mrf.mxu0
    %v4479 = vadd.f32 0.0, %v4478
    %v4480 = vpop.f32.mrf.mxu0
    %v4481 = vpop.f32.mrf.mxu0
    %v4482 = vadd.f32 0.0, %v4481
    %v4483 = vpop.f32.mrf.mxu0
    %4484 = vmatprep.mubr.bf16.mxu0 0
    %4485 = vmatmul.mubr.bf16.gmra.mxu0 %v4011
    %v4486 = vpop.f32.mrf.mxu0
    %v4487 = vadd.f32 0.0, %v4486
    %v4488 = vpop.f32.mrf.mxu0
    %v4489 = vpop.f32.mrf.mxu0
    %v4490 = vadd.f32 0.0, %v4489
    %v4491 = vpop.f32.mrf.mxu0
    %4492 = vmatprep.mubr.bf16.mxu0 0
    %4493 = vmatmul.mubr.bf16.gmra.mxu0 %v4012
    %v4494 = vpop.f32.mrf.mxu0
    %v4495 = vadd.f32 0.0, %v4494
    %v4496 = vpop.f32.mrf.mxu0
    %v4497 = vpop.f32.mrf.mxu0
    %v4498 = vadd.f32 0.0, %v4497
    %v4499 = vpop.f32.mrf.mxu0
    %4500 = vmatprep.mubr.bf16.mxu0 0
    %4501 = vmatmul.mubr.bf16.gmra.mxu0 %v4013
    %v4502 = vpop.f32.mrf.mxu0
    %v4503 = vadd.f32 0.0, %v4502
    %v4504 = vpop.f32.mrf.mxu0
    %v4505 = vpop.f32.mrf.mxu0
    %v4506 = vadd.f32 0.0, %v4505
    %v4507 = vpop.f32.mrf.mxu0
    %4508 = vmatprep.mubr.bf16.mxu0 0
    %4509 = vmatmul.mubr.bf16.gmra.mxu0 %v4014
    %v4510 = vpop.f32.mrf.mxu0
    %v4511 = vadd.f32 0.0, %v4510
    %v4512 = vpop.f32.mrf.mxu0
    %v4513 = vpop.f32.mrf.mxu0
    %v4514 = vadd.f32 0.0, %v4513
    %v4515 = vpop.f32.mrf.mxu0
    %4516 = vmatprep.mubr.bf16.mxu0 0
    %4517 = vmatmul.mubr.bf16.gmra.mxu0 %v4015
    %v4518 = vpop.f32.mrf.mxu0
    %v4519 = vadd.f32 0.0, %v4518
    %v4520 = vpop.f32.mrf.mxu0
    %v4521 = vpop.f32.mrf.mxu0
    %v4522 = vadd.f32 0.0, %v4521
    %v4523 = vpop.f32.mrf.mxu0
    %4524 = vdwg.mxu0
    %4525 = vmatprep.subr.bf16.mxu0 0
    %4526 = vmatpush1.bf16.msra.mxu0 %v1403
    %4527 = vmatprep.subr.bf16.mxu0 0
    %4528 = vmatpush1.bf16.msra.mxu0 %v1401
    %4529 = vmatprep.subr.bf16.mxu0 0
    %4530 = vmatpush1.bf16.msra.mxu0 %v1399
    %4531 = vmatprep.subr.bf16.mxu0 0
    %4532 = vmatpush1.bf16.msra.mxu0 %v1397
    %4533 = vmatprep.subr.bf16.mxu0 0
    %4534 = vmatpush1.bf16.msra.mxu0 %v1395
    %4535 = vmatprep.subr.bf16.mxu0 0
    %4536 = vmatpush1.bf16.msra.mxu0 %v1393
    %4537 = vmatprep.subr.bf16.mxu0 0
    %4538 = vmatpush1.bf16.msra.mxu0 %v1391
    %4539 = vmatprep.subr.bf16.mxu0 0
    %4540 = vmatpush1.bf16.msra.mxu0 %v1389
    %4541 = vmatprep.subr.bf16.mxu0 0
    %4542 = vmatpush2.bf16.msra.mxu0 0
    %4543 = vmatprep.subr.bf16.mxu0 0
    %4544 = vmatpush2.bf16.msra.mxu0 0
    %4545 = vmatprep.subr.bf16.mxu0 0
    %4546 = vmatpush2.bf16.msra.mxu0 0
    %4547 = vmatprep.subr.bf16.mxu0 0
    %4548 = vmatpush2.bf16.msra.mxu0 0
    %4549 = vmatprep.subr.bf16.mxu0 0
    %4550 = vmatpush2.bf16.msra.mxu0 0
    %4551 = vmatprep.subr.bf16.mxu0 0
    %4552 = vmatpush2.bf16.msra.mxu0 0
    %4553 = vmatprep.subr.bf16.mxu0 0
    %4554 = vmatpush2.bf16.msra.mxu0 0
    %4555 = vmatprep.subr.bf16.mxu0 0
    %4556 = vmatpush2.bf16.msra.mxu0 0
    %4557 = vmatprep.mubr.bf16.mxu0 0
    %4558 = vmatmul.mubr.bf16.gmra.mxu0 %v4016
    %v4559 = vpop.f32.mrf.mxu0
    %v4560 = vadd.f32 0.0, %v4559
    %v4561 = vpop.f32.mrf.mxu0
    %v4562 = vpop.f32.mrf.mxu0
    %v4563 = vadd.f32 0.0, %v4562
    %v4564 = vpop.f32.mrf.mxu0
    %4565 = vmatprep.mubr.bf16.mxu0 0
    %4566 = vmatmul.mubr.bf16.gmra.mxu0 %v4017
    %v4567 = vpop.f32.mrf.mxu0
    %v4568 = vadd.f32 0.0, %v4567
    %v4569 = vpop.f32.mrf.mxu0
    %v4570 = vpop.f32.mrf.mxu0
    %v4571 = vadd.f32 0.0, %v4570
    %v4572 = vpop.f32.mrf.mxu0
    %4573 = vmatprep.mubr.bf16.mxu0 0
    %4574 = vmatmul.mubr.bf16.gmra.mxu0 %v4018
    %v4575 = vpop.f32.mrf.mxu0
    %v4576 = vadd.f32 0.0, %v4575
    %v4577 = vpop.f32.mrf.mxu0
    %v4578 = vpop.f32.mrf.mxu0
    %v4579 = vadd.f32 0.0, %v4578
    %v4580 = vpop.f32.mrf.mxu0
    %4581 = vmatprep.mubr.bf16.mxu0 0
    %4582 = vmatmul.mubr.bf16.gmra.mxu0 %v4019
    %v4583 = vpop.f32.mrf.mxu0
    %v4584 = vadd.f32 0.0, %v4583
    %v4585 = vpop.f32.mrf.mxu0
    %v4586 = vpop.f32.mrf.mxu0
    %v4587 = vadd.f32 0.0, %v4586
    %v4588 = vpop.f32.mrf.mxu0
    %4589 = vmatprep.mubr.bf16.mxu0 0
    %4590 = vmatmul.mubr.bf16.gmra.mxu0 %v4020
    %v4591 = vpop.f32.mrf.mxu0
    %v4592 = vadd.f32 0.0, %v4591
    %v4593 = vpop.f32.mrf.mxu0
    %v4594 = vpop.f32.mrf.mxu0
    %v4595 = vadd.f32 0.0, %v4594
    %v4596 = vpop.f32.mrf.mxu0
    %4597 = vmatprep.mubr.bf16.mxu0 0
    %4598 = vmatmul.mubr.bf16.gmra.mxu0 %v4021
    %v4599 = vpop.f32.mrf.mxu0
    %v4600 = vadd.f32 0.0, %v4599
    %v4601 = vpop.f32.mrf.mxu0
    %v4602 = vpop.f32.mrf.mxu0
    %v4603 = vadd.f32 0.0, %v4602
    %v4604 = vpop.f32.mrf.mxu0
    %4605 = vmatprep.mubr.bf16.mxu0 0
    %4606 = vmatmul.mubr.bf16.gmra.mxu0 %v4022
    %v4607 = vpop.f32.mrf.mxu0
    %v4608 = vadd.f32 0.0, %v4607
    %v4609 = vpop.f32.mrf.mxu0
    %v4610 = vpop.f32.mrf.mxu0
    %v4611 = vadd.f32 0.0, %v4610
    %v4612 = vpop.f32.mrf.mxu0
    %4613 = vmatprep.mubr.bf16.mxu0 0
    %4614 = vmatmul.mubr.bf16.gmra.mxu0 %v4023
    %v4615 = vpop.f32.mrf.mxu0
    %v4616 = vadd.f32 0.0, %v4615
    %v4617 = vpop.f32.mrf.mxu0
    %v4618 = vpop.f32.mrf.mxu0
    %v4619 = vadd.f32 0.0, %v4618
    %v4620 = vpop.f32.mrf.mxu0
    %4621 = vdwg.mxu0
    %4622 = vmatprep.subr.bf16.mxu0 0
    %4623 = vmatpush1.bf16.msra.mxu0 %v1435
    %4624 = vmatprep.subr.bf16.mxu0 0
    %4625 = vmatpush1.bf16.msra.mxu0 %v1433
    %4626 = vmatprep.subr.bf16.mxu0 0
    %4627 = vmatpush1.bf16.msra.mxu0 %v1431
    %4628 = vmatprep.subr.bf16.mxu0 0
    %4629 = vmatpush1.bf16.msra.mxu0 %v1429
    %4630 = vmatprep.subr.bf16.mxu0 0
    %4631 = vmatpush1.bf16.msra.mxu0 %v1427
    %4632 = vmatprep.subr.bf16.mxu0 0
    %4633 = vmatpush1.bf16.msra.mxu0 %v1425
    %4634 = vmatprep.subr.bf16.mxu0 0
    %4635 = vmatpush1.bf16.msra.mxu0 %v1423
    %4636 = vmatprep.subr.bf16.mxu0 0
    %4637 = vmatpush1.bf16.msra.mxu0 %v1421
    %4638 = vmatprep.subr.bf16.mxu0 0
    %4639 = vmatpush2.bf16.msra.mxu0 0
    %4640 = vmatprep.subr.bf16.mxu0 0
    %4641 = vmatpush2.bf16.msra.mxu0 0
    %4642 = vmatprep.subr.bf16.mxu0 0
    %4643 = vmatpush2.bf16.msra.mxu0 0
    %4644 = vmatprep.subr.bf16.mxu0 0
    %4645 = vmatpush2.bf16.msra.mxu0 0
    %4646 = vmatprep.subr.bf16.mxu0 0
    %4647 = vmatpush2.bf16.msra.mxu0 0
    %4648 = vmatprep.subr.bf16.mxu0 0
    %4649 = vmatpush2.bf16.msra.mxu0 0
    %4650 = vmatprep.subr.bf16.mxu0 0
    %4651 = vmatpush2.bf16.msra.mxu0 0
    %4652 = vmatprep.subr.bf16.mxu0 0
    %4653 = vmatpush2.bf16.msra.mxu0 0
    %4654 = vmatprep.mubr.bf16.mxu0 0
    %4655 = vmatmul.mubr.bf16.gmra.mxu0 %v4024
    %v4656 = vpop.f32.mrf.mxu0
    %v4657 = vadd.f32 0.0, %v4656
    %v4658 = vpop.f32.mrf.mxu0
    %v4659 = vpop.f32.mrf.mxu0
    %v4660 = vadd.f32 0.0, %v4659
    %v4661 = vpop.f32.mrf.mxu0
    %4662 = vmatprep.mubr.bf16.mxu0 0
    %4663 = vmatmul.mubr.bf16.gmra.mxu0 %v4025
    %v4664 = vpop.f32.mrf.mxu0
    %v4665 = vadd.f32 0.0, %v4664
    %v4666 = vpop.f32.mrf.mxu0
    %v4667 = vpop.f32.mrf.mxu0
    %v4668 = vadd.f32 0.0, %v4667
    %v4669 = vpop.f32.mrf.mxu0
    %4670 = vmatprep.mubr.bf16.mxu0 0
    %4671 = vmatmul.mubr.bf16.gmra.mxu0 %v4026
    %v4672 = vpop.f32.mrf.mxu0
    %v4673 = vadd.f32 0.0, %v4672
    %v4674 = vpop.f32.mrf.mxu0
    %v4675 = vpop.f32.mrf.mxu0
    %v4676 = vadd.f32 0.0, %v4675
    %v4677 = vpop.f32.mrf.mxu0
    %4678 = vmatprep.mubr.bf16.mxu0 0
    %4679 = vmatmul.mubr.bf16.gmra.mxu0 %v4027
    %v4680 = vpop.f32.mrf.mxu0
    %v4681 = vadd.f32 0.0, %v4680
    %v4682 = vpop.f32.mrf.mxu0
    %v4683 = vpop.f32.mrf.mxu0
    %v4684 = vadd.f32 0.0, %v4683
    %v4685 = vpop.f32.mrf.mxu0
    %4686 = vmatprep.mubr.bf16.mxu0 0
    %4687 = vmatmul.mubr.bf16.gmra.mxu0 %v4028
    %v4688 = vpop.f32.mrf.mxu0
    %v4689 = vadd.f32 0.0, %v4688
    %v4690 = vpop.f32.mrf.mxu0
    %v4691 = vpop.f32.mrf.mxu0
    %v4692 = vadd.f32 0.0, %v4691
    %v4693 = vpop.f32.mrf.mxu0
    %4694 = vmatprep.mubr.bf16.mxu0 0
    %4695 = vmatmul.mubr.bf16.gmra.mxu0 %v4029
    %v4696 = vpop.f32.mrf.mxu0
    %v4697 = vadd.f32 0.0, %v4696
    %v4698 = vpop.f32.mrf.mxu0
    %v4699 = vpop.f32.mrf.mxu0
    %v4700 = vadd.f32 0.0, %v4699
    %v4701 = vpop.f32.mrf.mxu0
    %4702 = vmatprep.mubr.bf16.mxu0 0
    %4703 = vmatmul.mubr.bf16.gmra.mxu0 %v4030
    %v4704 = vpop.f32.mrf.mxu0
    %v4705 = vadd.f32 0.0, %v4704
    %v4706 = vpop.f32.mrf.mxu0
    %v4707 = vpop.f32.mrf.mxu0
    %v4708 = vadd.f32 0.0, %v4707
    %v4709 = vpop.f32.mrf.mxu0
    %4710 = vmatprep.mubr.bf16.mxu0 0
    %4711 = vmatmul.mubr.bf16.gmra.mxu0 %v4031
    %v4712 = vpop.f32.mrf.mxu0
    %v4713 = vadd.f32 0.0, %v4712
    %v4714 = vpop.f32.mrf.mxu0
    %v4715 = vpop.f32.mrf.mxu0
    %v4716 = vadd.f32 0.0, %v4715
    %v4717 = vpop.f32.mrf.mxu0
    %4718 = vdwg.mxu0
    %4719 = vmatprep.subr.bf16.mxu0 0
    %4720 = vmatpush1.bf16.msra.mxu0 %v1451
    %4721 = vmatprep.subr.bf16.mxu0 0
    %4722 = vmatpush1.bf16.msra.mxu0 %v1449
    %4723 = vmatprep.subr.bf16.mxu0 0
    %4724 = vmatpush1.bf16.msra.mxu0 %v1447
    %4725 = vmatprep.subr.bf16.mxu0 0
    %4726 = vmatpush1.bf16.msra.mxu0 %v1445
    %4727 = vmatprep.subr.bf16.mxu0 0
    %4728 = vmatpush1.bf16.msra.mxu0 %v1443
    %4729 = vmatprep.subr.bf16.mxu0 0
    %4730 = vmatpush1.bf16.msra.mxu0 %v1441
    %4731 = vmatprep.subr.bf16.mxu0 0
    %4732 = vmatpush1.bf16.msra.mxu0 %v1439
    %4733 = vmatprep.subr.bf16.mxu0 0
    %4734 = vmatpush1.bf16.msra.mxu0 %v1437
    %4735 = vmatprep.subr.bf16.mxu0 0
    %4736 = vmatpush2.bf16.msra.mxu0 0
    %4737 = vmatprep.subr.bf16.mxu0 0
    %4738 = vmatpush2.bf16.msra.mxu0 0
    %4739 = vmatprep.subr.bf16.mxu0 0
    %4740 = vmatpush2.bf16.msra.mxu0 0
    %4741 = vmatprep.subr.bf16.mxu0 0
    %4742 = vmatpush2.bf16.msra.mxu0 0
    %4743 = vmatprep.subr.bf16.mxu0 0
    %4744 = vmatpush2.bf16.msra.mxu0 0
    %4745 = vmatprep.subr.bf16.mxu0 0
    %4746 = vmatpush2.bf16.msra.mxu0 0
    %4747 = vmatprep.subr.bf16.mxu0 0
    %4748 = vmatpush2.bf16.msra.mxu0 0
    %4749 = vmatprep.subr.bf16.mxu0 0
    %4750 = vmatpush2.bf16.msra.mxu0 0
    %4751 = vmatprep.mubr.bf16.mxu0 0
    %4752 = vmatmul.mubr.bf16.gmra.mxu0 %v4032
    %v4753 = vpop.f32.mrf.mxu0
    %v4754 = vadd.f32 0.0, %v4753
    %v4755 = vpop.f32.mrf.mxu0
    %v4756 = vpop.f32.mrf.mxu0
    %v4757 = vadd.f32 0.0, %v4756
    %v4758 = vpop.f32.mrf.mxu0
    %4759 = vmatprep.mubr.bf16.mxu0 0
    %4760 = vmatmul.mubr.bf16.gmra.mxu0 %v4033
    %v4761 = vpop.f32.mrf.mxu0
    %v4762 = vadd.f32 0.0, %v4761
    %v4763 = vpop.f32.mrf.mxu0
    %v4764 = vpop.f32.mrf.mxu0
    %v4765 = vadd.f32 0.0, %v4764
    %v4766 = vpop.f32.mrf.mxu0
    %4767 = vmatprep.mubr.bf16.mxu0 0
    %4768 = vmatmul.mubr.bf16.gmra.mxu0 %v4034
    %v4769 = vpop.f32.mrf.mxu0
    %v4770 = vadd.f32 0.0, %v4769
    %v4771 = vpop.f32.mrf.mxu0
    %v4772 = vpop.f32.mrf.mxu0
    %v4773 = vadd.f32 0.0, %v4772
    %v4774 = vpop.f32.mrf.mxu0
    %4775 = vmatprep.mubr.bf16.mxu0 0
    %4776 = vmatmul.mubr.bf16.gmra.mxu0 %v4035
    %v4777 = vpop.f32.mrf.mxu0
    %v4778 = vadd.f32 0.0, %v4777
    %v4779 = vpop.f32.mrf.mxu0
    %v4780 = vpop.f32.mrf.mxu0
    %v4781 = vadd.f32 0.0, %v4780
    %v4782 = vpop.f32.mrf.mxu0
    %4783 = vmatprep.mubr.bf16.mxu0 0
    %4784 = vmatmul.mubr.bf16.gmra.mxu0 %v4036
    %v4785 = vpop.f32.mrf.mxu0
    %v4786 = vadd.f32 0.0, %v4785
    %v4787 = vpop.f32.mrf.mxu0
    %v4788 = vpop.f32.mrf.mxu0
    %v4789 = vadd.f32 0.0, %v4788
    %v4790 = vpop.f32.mrf.mxu0
    %4791 = vmatprep.mubr.bf16.mxu0 0
    %4792 = vmatmul.mubr.bf16.gmra.mxu0 %v4037
    %v4793 = vpop.f32.mrf.mxu0
    %v4794 = vadd.f32 0.0, %v4793
    %v4795 = vpop.f32.mrf.mxu0
    %v4796 = vpop.f32.mrf.mxu0
    %v4797 = vadd.f32 0.0, %v4796
    %v4798 = vpop.f32.mrf.mxu0
    %4799 = vmatprep.mubr.bf16.mxu0 0
    %4800 = vmatmul.mubr.bf16.gmra.mxu0 %v4038
    %v4801 = vpop.f32.mrf.mxu0
    %v4802 = vadd.f32 0.0, %v4801
    %v4803 = vpop.f32.mrf.mxu0
    %v4804 = vpop.f32.mrf.mxu0
    %v4805 = vadd.f32 0.0, %v4804
    %v4806 = vpop.f32.mrf.mxu0
    %4807 = vmatprep.mubr.bf16.mxu0 0
    %4808 = vmatmul.mubr.bf16.gmra.mxu0 %v4039
    %v4809 = vpop.f32.mrf.mxu0
    %v4810 = vadd.f32 0.0, %v4809
    %v4811 = vpop.f32.mrf.mxu0
    %v4812 = vpop.f32.mrf.mxu0
    %v4813 = vadd.f32 0.0, %v4812
    %v4814 = vpop.f32.mrf.mxu0
    %4815 = vdwg.mxu0
    %v4816 = vpack.c.bf16 %v4078, %v4075
    %v4817 = vpack.c.bf16 %v4086, %v4083
    %v4818 = vpack.c.bf16 %v4094, %v4091
    %v4819 = vpack.c.bf16 %v4102, %v4099
    %v4820 = vpack.c.bf16 %v4110, %v4107
    %v4821 = vpack.c.bf16 %v4118, %v4115
    %v4822 = vpack.c.bf16 %v4126, %v4123
    %v4823 = vpack.c.bf16 %v4134, %v4131
    %v4824 = vpack.c.bf16 %v4175, %v4172
    %v4825 = vpack.c.bf16 %v4183, %v4180
    %v4826 = vpack.c.bf16 %v4191, %v4188
    %v4827 = vpack.c.bf16 %v4199, %v4196
    %v4828 = vpack.c.bf16 %v4207, %v4204
    %v4829 = vpack.c.bf16 %v4215, %v4212
    %v4830 = vpack.c.bf16 %v4223, %v4220
    %v4831 = vpack.c.bf16 %v4231, %v4228
    %v4832 = vpack.c.bf16 %v4272, %v4269
    %v4833 = vpack.c.bf16 %v4280, %v4277
    %v4834 = vpack.c.bf16 %v4288, %v4285
    %v4835 = vpack.c.bf16 %v4296, %v4293
    %v4836 = vpack.c.bf16 %v4304, %v4301
    %v4837 = vpack.c.bf16 %v4312, %v4309
    %v4838 = vpack.c.bf16 %v4320, %v4317
    %v4839 = vpack.c.bf16 %v4328, %v4325
    %v4840 = vpack.c.bf16 %v4369, %v4366
    %v4841 = vpack.c.bf16 %v4377, %v4374
    %v4842 = vpack.c.bf16 %v4385, %v4382
    %v4843 = vpack.c.bf16 %v4393, %v4390
    %v4844 = vpack.c.bf16 %v4401, %v4398
    %v4845 = vpack.c.bf16 %v4409, %v4406
    %v4846 = vpack.c.bf16 %v4417, %v4414
    %v4847 = vpack.c.bf16 %v4425, %v4422
    %v4848 = vpack.c.bf16 %v4466, %v4463
    %v4849 = vpack.c.bf16 %v4474, %v4471
    %v4850 = vpack.c.bf16 %v4482, %v4479
    %v4851 = vpack.c.bf16 %v4490, %v4487
    %v4852 = vpack.c.bf16 %v4498, %v4495
    %v4853 = vpack.c.bf16 %v4506, %v4503
    %v4854 = vpack.c.bf16 %v4514, %v4511
    %v4855 = vpack.c.bf16 %v4522, %v4519
    %v4856 = vpack.c.bf16 %v4563, %v4560
    %v4857 = vpack.c.bf16 %v4571, %v4568
    %v4858 = vpack.c.bf16 %v4579, %v4576
    %v4859 = vpack.c.bf16 %v4587, %v4584
    %v4860 = vpack.c.bf16 %v4595, %v4592
    %v4861 = vpack.c.bf16 %v4603, %v4600
    %v4862 = vpack.c.bf16 %v4611, %v4608
    %v4863 = vpack.c.bf16 %v4619, %v4616
    %v4864 = vpack.c.bf16 %v4660, %v4657
    %v4865 = vpack.c.bf16 %v4668, %v4665
    %v4866 = vpack.c.bf16 %v4676, %v4673
    %v4867 = vpack.c.bf16 %v4684, %v4681
    %v4868 = vpack.c.bf16 %v4692, %v4689
    %v4869 = vpack.c.bf16 %v4700, %v4697
    %v4870 = vpack.c.bf16 %v4708, %v4705
    %v4871 = vpack.c.bf16 %v4716, %v4713
    %v4872 = vpack.c.bf16 %v4757, %v4754
    %v4873 = vpack.c.bf16 %v4765, %v4762
    %v4874 = vpack.c.bf16 %v4773, %v4770
    %v4875 = vpack.c.bf16 %v4781, %v4778
    %v4876 = vpack.c.bf16 %v4789, %v4786
    %v4877 = vpack.c.bf16 %v4797, %v4794
    %v4878 = vpack.c.bf16 %v4805, %v4802
    %v4879 = vpack.c.bf16 %v4813, %v4810
    %4896 = vrot.lane.b32.xlu0 %v4832, 32
    %v4897 = vpop.permute.xlu0 %4896
    %4898 = vrot.lane.b32.xlu0 %v4833, 32
    %v4899 = vpop.permute.xlu0 %4898
    %4900 = vrot.lane.b32.xlu0 %v4834, 32
    %v4901 = vpop.permute.xlu0 %4900
    %4902 = vrot.lane.b32.xlu0 %v4835, 32
    %v4903 = vpop.permute.xlu0 %4902
    %4904 = vrot.lane.b32.xlu0 %v4836, 32
    %v4905 = vpop.permute.xlu0 %4904
    %4906 = vrot.lane.b32.xlu0 %v4837, 32
    %v4907 = vpop.permute.xlu0 %4906
    %4908 = vrot.lane.b32.xlu0 %v4838, 32
    %v4909 = vpop.permute.xlu0 %4908
    %4910 = vrot.lane.b32.xlu0 %v4839, 32
    %v4911 = vpop.permute.xlu0 %4910
    %4912 = vrot.lane.b32.xlu0 %v4840, 32
    %v4913 = vpop.permute.xlu0 %4912
    %4914 = vrot.lane.b32.xlu0 %v4841, 32
    %v4915 = vpop.permute.xlu0 %4914
    %4916 = vrot.lane.b32.xlu0 %v4842, 32
    %v4917 = vpop.permute.xlu0 %4916
    %4918 = vrot.lane.b32.xlu0 %v4843, 32
    %v4919 = vpop.permute.xlu0 %4918
    %4920 = vrot.lane.b32.xlu0 %v4844, 32
    %v4921 = vpop.permute.xlu0 %4920
    %4922 = vrot.lane.b32.xlu0 %v4845, 32
    %v4923 = vpop.permute.xlu0 %4922
    %4924 = vrot.lane.b32.xlu0 %v4846, 32
    %v4925 = vpop.permute.xlu0 %4924
    %4926 = vrot.lane.b32.xlu0 %v4847, 32
    %v4927 = vpop.permute.xlu0 %4926
    %4944 = vrot.lane.b32.xlu0 %v4848, 64
    %v4945 = vpop.permute.xlu0 %4944
    %4946 = vrot.lane.b32.xlu0 %v4849, 64
    %v4947 = vpop.permute.xlu0 %4946
    %4948 = vrot.lane.b32.xlu0 %v4850, 64
    %v4949 = vpop.permute.xlu0 %4948
    %4950 = vrot.lane.b32.xlu0 %v4851, 64
    %v4951 = vpop.permute.xlu0 %4950
    %4952 = vrot.lane.b32.xlu0 %v4852, 64
    %v4953 = vpop.permute.xlu0 %4952
    %4954 = vrot.lane.b32.xlu0 %v4853, 64
    %v4955 = vpop.permute.xlu0 %4954
    %4956 = vrot.lane.b32.xlu0 %v4854, 64
    %v4957 = vpop.permute.xlu0 %4956
    %4958 = vrot.lane.b32.xlu0 %v4855, 64
    %v4959 = vpop.permute.xlu0 %4958
    %4960 = vrot.lane.b32.xlu0 %v4856, 64
    %v4961 = vpop.permute.xlu0 %4960
    %4962 = vrot.lane.b32.xlu0 %v4857, 64
    %v4963 = vpop.permute.xlu0 %4962
    %4964 = vrot.lane.b32.xlu0 %v4858, 64
    %v4965 = vpop.permute.xlu0 %4964
    %4966 = vrot.lane.b32.xlu0 %v4859, 64
    %v4967 = vpop.permute.xlu0 %4966
    %4968 = vrot.lane.b32.xlu0 %v4860, 64
    %v4969 = vpop.permute.xlu0 %4968
    %4970 = vrot.lane.b32.xlu0 %v4861, 64
    %v4971 = vpop.permute.xlu0 %4970
    %4972 = vrot.lane.b32.xlu0 %v4862, 64
    %v4973 = vpop.permute.xlu0 %4972
    %4974 = vrot.lane.b32.xlu0 %v4863, 64
    %v4975 = vpop.permute.xlu0 %4974
    %4992 = vrot.lane.b32.xlu0 %v4864, 96
    %v4993 = vpop.permute.xlu0 %4992
    %4994 = vrot.lane.b32.xlu0 %v4865, 96
    %v4995 = vpop.permute.xlu0 %4994
    %4996 = vrot.lane.b32.xlu0 %v4866, 96
    %v4997 = vpop.permute.xlu0 %4996
    %4998 = vrot.lane.b32.xlu0 %v4867, 96
    %v4999 = vpop.permute.xlu0 %4998
    %5000 = vrot.lane.b32.xlu0 %v4868, 96
    %v5001 = vpop.permute.xlu0 %5000
    %5002 = vrot.lane.b32.xlu0 %v4869, 96
    %v5003 = vpop.permute.xlu0 %5002
    %5004 = vrot.lane.b32.xlu0 %v4870, 96
    %v5005 = vpop.permute.xlu0 %5004
    %5006 = vrot.lane.b32.xlu0 %v4871, 96
    %v5007 = vpop.permute.xlu0 %5006
    %5008 = vrot.lane.b32.xlu0 %v4872, 96
    %v5009 = vpop.permute.xlu0 %5008
    %5010 = vrot.lane.b32.xlu0 %v4873, 96
    %v5011 = vpop.permute.xlu0 %5010
    %5012 = vrot.lane.b32.xlu0 %v4874, 96
    %v5013 = vpop.permute.xlu0 %5012
    %5014 = vrot.lane.b32.xlu0 %v4875, 96
    %v5015 = vpop.permute.xlu0 %5014
    %5016 = vrot.lane.b32.xlu0 %v4876, 96
    %v5017 = vpop.permute.xlu0 %5016
    %5018 = vrot.lane.b32.xlu0 %v4877, 96
    %v5019 = vpop.permute.xlu0 %5018
    %5020 = vrot.lane.b32.xlu0 %v4878, 96
    %v5021 = vpop.permute.xlu0 %5020
    %5022 = vrot.lane.b32.xlu0 %v4879, 96
    %v5023 = vpop.permute.xlu0 %5022
    %v5026 = vsel %vm1468, %v4816, %v4897
    %v5029 = vsel %vm1468, %v4817, %v4899
    %v5032 = vsel %vm1468, %v4818, %v4901
    %v5035 = vsel %vm1468, %v4819, %v4903
    %v5038 = vsel %vm1468, %v4820, %v4905
    %v5041 = vsel %vm1468, %v4821, %v4907
    %v5044 = vsel %vm1468, %v4822, %v4909
    %v5047 = vsel %vm1468, %v4823, %v4911
    %v5050 = vsel %vm1468, %v4824, %v4913
    %v5053 = vsel %vm1468, %v4825, %v4915
    %v5056 = vsel %vm1468, %v4826, %v4917
    %v5059 = vsel %vm1468, %v4827, %v4919
    %v5062 = vsel %vm1468, %v4828, %v4921
    %v5065 = vsel %vm1468, %v4829, %v4923
    %v5068 = vsel %vm1468, %v4830, %v4925
    %v5071 = vsel %vm1468, %v4831, %v4927
    %vm5072 = vcmask 523264
    %v5074 = vsel %vm5072, %v5026, %v4945
    %v5076 = vsel %vm5072, %v5029, %v4947
    %v5078 = vsel %vm5072, %v5032, %v4949
    %v5080 = vsel %vm5072, %v5035, %v4951
    %v5082 = vsel %vm5072, %v5038, %v4953
    %v5084 = vsel %vm5072, %v5041, %v4955
    %v5086 = vsel %vm5072, %v5044, %v4957
    %v5088 = vsel %vm5072, %v5047, %v4959
    %v5090 = vsel %vm5072, %v5050, %v4961
    %v5092 = vsel %vm5072, %v5053, %v4963
    %v5094 = vsel %vm5072, %v5056, %v4965
    %v5096 = vsel %vm5072, %v5059, %v4967
    %v5098 = vsel %vm5072, %v5062, %v4969
    %v5100 = vsel %vm5072, %v5065, %v4971
    %v5102 = vsel %vm5072, %v5068, %v4973
    %v5104 = vsel %vm5072, %v5071, %v4975
    %vm5105 = vcmask 785408
    %v5107 = vsel %vm5105, %v5074, %v4993
    %v5110 = vsel %vm5105, %v5076, %v4995
    %v5113 = vsel %vm5105, %v5078, %v4997
    %v5116 = vsel %vm5105, %v5080, %v4999
    %v5119 = vsel %vm5105, %v5082, %v5001
    %v5122 = vsel %vm5105, %v5084, %v5003
    %v5125 = vsel %vm5105, %v5086, %v5005
    %v5128 = vsel %vm5105, %v5088, %v5007
    %v5131 = vsel %vm5105, %v5090, %v5009
    %v5134 = vsel %vm5105, %v5092, %v5011
    %v5137 = vsel %vm5105, %v5094, %v5013
    %v5140 = vsel %vm5105, %v5096, %v5015
    %v5143 = vsel %vm5105, %v5098, %v5017
    %v5146 = vsel %vm5105, %v5100, %v5019
    %v5149 = vsel %vm5105, %v5102, %v5021
    %v5152 = vsel %vm5105, %v5104, %v5023
    %v5154 = vld [vmem:[%s2] sm:$0xf]
    %v5155 = vld [vmem:[%s2 + $0x4] sm:$0xf]
    %v5156 = vld [vmem:[%s2 + $0x8] sm:$0xf]
    %v5157 = vld [vmem:[%s2 + $0xc] sm:$0xf]
    %v5158 = vld [vmem:[%s2 + $0x10] sm:$0xf]
    %v5159 = vld [vmem:[%s2 + $0x14] sm:$0xf]
    %v5160 = vld [vmem:[%s2 + $0x18] sm:$0xf]
    %v5161 = vld [vmem:[%s2 + $0x1c] sm:$0xf]
    %v5162 = vld [vmem:[%s2 + $0x20] sm:$0xf]
    %v5163 = vld [vmem:[%s2 + $0x24] sm:$0xf]
    %v5164 = vld [vmem:[%s2 + $0x28] sm:$0xf]
    %v5165 = vld [vmem:[%s2 + $0x2c] sm:$0xf]
    %v5166 = vld [vmem:[%s2 + $0x30] sm:$0xf]
    %v5167 = vld [vmem:[%s2 + $0x34] sm:$0xf]
    %v5168 = vld [vmem:[%s2 + $0x38] sm:$0xf]
    %v5169 = vld [vmem:[%s2 + $0x3c] sm:$0xf]
    %v5170 = vld [vmem:[%s3] sm:$0x1]
    %v5172 = vlaneseq
    %v5173 = vshrl.u32 %v5172, 7
    %v5174 = vsub.s32 0, %v5173
    %v5175 = vrot.slane %v5170, %v5174
    %v5193 = vunpack.c.l.b16 %v5154
    %v5194 = vunpack.c.l.b16 %v5155
    %v5195 = vunpack.c.l.b16 %v5156
    %v5196 = vunpack.c.l.b16 %v5157
    %v5197 = vunpack.c.l.b16 %v5158
    %v5198 = vunpack.c.l.b16 %v5159
    %v5199 = vunpack.c.l.b16 %v5160
    %v5200 = vunpack.c.l.b16 %v5161
    %v5201 = vunpack.c.l.b16 %v5162
    %v5202 = vunpack.c.l.b16 %v5163
    %v5203 = vunpack.c.l.b16 %v5164
    %v5204 = vunpack.c.l.b16 %v5165
    %v5205 = vunpack.c.l.b16 %v5166
    %v5206 = vunpack.c.l.b16 %v5167
    %v5207 = vunpack.c.l.b16 %v5168
    %v5208 = vunpack.c.l.b16 %v5169
    %v5209 = vpack.c.b16 %v5194, %v5193
    %v5210 = vpack.c.b16 %v5196, %v5195
    %v5211 = vpack.c.b16 %v5198, %v5197
    %v5212 = vpack.c.b16 %v5200, %v5199
    %v5213 = vpack.c.b16 %v5202, %v5201
    %v5214 = vpack.c.b16 %v5204, %v5203
    %v5215 = vpack.c.b16 %v5206, %v5205
    %v5216 = vpack.c.b16 %v5208, %v5207
    %5225 = vmatprep.subr.bf16.mxu0 0
    %5226 = vmatpush1.bf16.msra.mxu0 %v5216
    %5227 = vmatprep.subr.bf16.mxu0 0
    %5228 = vmatpush1.bf16.msra.mxu0 %v5215
    %5229 = vmatprep.subr.bf16.mxu0 0
    %5230 = vmatpush1.bf16.msra.mxu0 %v5214
    %5231 = vmatprep.subr.bf16.mxu0 0
    %5232 = vmatpush1.bf16.msra.mxu0 %v5213
    %5233 = vmatprep.subr.bf16.mxu0 0
    %5234 = vmatpush1.bf16.msra.mxu0 %v5212
    %5235 = vmatprep.subr.bf16.mxu0 0
    %5236 = vmatpush1.bf16.msra.mxu0 %v5211
    %5237 = vmatprep.subr.bf16.mxu0 0
    %5238 = vmatpush1.bf16.msra.mxu0 %v5210
    %5239 = vmatprep.subr.bf16.mxu0 0
    %5240 = vmatpush1.bf16.msra.mxu0 %v5209
    %5241 = vmatprep.subr.bf16.mxu0 0
    %5242 = vmatpush2.bf16.msra.mxu0 0
    %5243 = vmatprep.subr.bf16.mxu0 0
    %5244 = vmatpush2.bf16.msra.mxu0 0
    %5245 = vmatprep.subr.bf16.mxu0 0
    %5246 = vmatpush2.bf16.msra.mxu0 0
    %5247 = vmatprep.subr.bf16.mxu0 0
    %5248 = vmatpush2.bf16.msra.mxu0 0
    %5249 = vmatprep.subr.bf16.mxu0 0
    %5250 = vmatpush2.bf16.msra.mxu0 0
    %5251 = vmatprep.subr.bf16.mxu0 0
    %5252 = vmatpush2.bf16.msra.mxu0 0
    %5253 = vmatprep.subr.bf16.mxu0 0
    %5254 = vmatpush2.bf16.msra.mxu0 0
    %5255 = vmatprep.subr.bf16.mxu0 0
    %5256 = vmatpush2.bf16.msra.mxu0 0
    %5257 = vmatprep.mubr.bf16.mxu0 0
    %5258 = vmatmul.mubr.bf16.gmra.mxu0 %v5107
    %v5259 = vpop.f32.mrf.mxu0
    %v5260 = vadd.f32 %v5175, %v5259
    %v5261 = vpop.f32.mrf.mxu0
    %v5262 = vpop.f32.mrf.mxu0
    %v5263 = vadd.f32 %v5175, %v5262
    %v5264 = vpop.f32.mrf.mxu0
    %5265 = vmatprep.mubr.bf16.mxu0 0
    %5266 = vmatmul.mubr.bf16.gmra.mxu0 %v5110
    %v5267 = vpop.f32.mrf.mxu0
    %v5268 = vadd.f32 %v5175, %v5267
    %v5269 = vpop.f32.mrf.mxu0
    %v5270 = vpop.f32.mrf.mxu0
    %v5271 = vadd.f32 %v5175, %v5270
    %v5272 = vpop.f32.mrf.mxu0
    %5273 = vmatprep.mubr.bf16.mxu0 0
    %5274 = vmatmul.mubr.bf16.gmra.mxu0 %v5113
    %v5275 = vpop.f32.mrf.mxu0
    %v5276 = vadd.f32 %v5175, %v5275
    %v5277 = vpop.f32.mrf.mxu0
    %v5278 = vpop.f32.mrf.mxu0
    %v5279 = vadd.f32 %v5175, %v5278
    %v5280 = vpop.f32.mrf.mxu0
    %5281 = vmatprep.mubr.bf16.mxu0 0
    %5282 = vmatmul.mubr.bf16.gmra.mxu0 %v5116
    %v5283 = vpop.f32.mrf.mxu0
    %v5284 = vadd.f32 %v5175, %v5283
    %v5285 = vpop.f32.mrf.mxu0
    %v5286 = vpop.f32.mrf.mxu0
    %v5287 = vadd.f32 %v5175, %v5286
    %v5288 = vpop.f32.mrf.mxu0
    %5289 = vmatprep.mubr.bf16.mxu0 0
    %5290 = vmatmul.mubr.bf16.gmra.mxu0 %v5119
    %v5291 = vpop.f32.mrf.mxu0
    %v5292 = vadd.f32 %v5175, %v5291
    %v5293 = vpop.f32.mrf.mxu0
    %v5294 = vpop.f32.mrf.mxu0
    %v5295 = vadd.f32 %v5175, %v5294
    %v5296 = vpop.f32.mrf.mxu0
    %5297 = vmatprep.mubr.bf16.mxu0 0
    %5298 = vmatmul.mubr.bf16.gmra.mxu0 %v5122
    %v5299 = vpop.f32.mrf.mxu0
    %v5300 = vadd.f32 %v5175, %v5299
    %v5301 = vpop.f32.mrf.mxu0
    %v5302 = vpop.f32.mrf.mxu0
    %v5303 = vadd.f32 %v5175, %v5302
    %v5304 = vpop.f32.mrf.mxu0
    %5305 = vmatprep.mubr.bf16.mxu0 0
    %5306 = vmatmul.mubr.bf16.gmra.mxu0 %v5125
    %v5307 = vpop.f32.mrf.mxu0
    %v5308 = vadd.f32 %v5175, %v5307
    %v5309 = vpop.f32.mrf.mxu0
    %v5310 = vpop.f32.mrf.mxu0
    %v5311 = vadd.f32 %v5175, %v5310
    %v5312 = vpop.f32.mrf.mxu0
    %5313 = vmatprep.mubr.bf16.mxu0 0
    %5314 = vmatmul.mubr.bf16.gmra.mxu0 %v5128
    %v5315 = vpop.f32.mrf.mxu0
    %v5316 = vadd.f32 %v5175, %v5315
    %v5317 = vpop.f32.mrf.mxu0
    %v5318 = vpop.f32.mrf.mxu0
    %v5319 = vadd.f32 %v5175, %v5318
    %v5320 = vpop.f32.mrf.mxu0
    %5321 = vmatprep.mubr.bf16.mxu0 0
    %5322 = vmatmul.mubr.bf16.gmra.mxu0 %v5131
    %v5323 = vpop.f32.mrf.mxu0
    %v5324 = vadd.f32 %v5175, %v5323
    %v5325 = vpop.f32.mrf.mxu0
    %v5326 = vpop.f32.mrf.mxu0
    %v5327 = vadd.f32 %v5175, %v5326
    %v5328 = vpop.f32.mrf.mxu0
    %5329 = vmatprep.mubr.bf16.mxu0 0
    %5330 = vmatmul.mubr.bf16.gmra.mxu0 %v5134
    %v5331 = vpop.f32.mrf.mxu0
    %v5332 = vadd.f32 %v5175, %v5331
    %v5333 = vpop.f32.mrf.mxu0
    %v5334 = vpop.f32.mrf.mxu0
    %v5335 = vadd.f32 %v5175, %v5334
    %v5336 = vpop.f32.mrf.mxu0
    %5337 = vmatprep.mubr.bf16.mxu0 0
    %5338 = vmatmul.mubr.bf16.gmra.mxu0 %v5137
    %v5339 = vpop.f32.mrf.mxu0
    %v5340 = vadd.f32 %v5175, %v5339
    %v5341 = vpop.f32.mrf.mxu0
    %v5342 = vpop.f32.mrf.mxu0
    %v5343 = vadd.f32 %v5175, %v5342
    %v5344 = vpop.f32.mrf.mxu0
    %5345 = vmatprep.mubr.bf16.mxu0 0
    %5346 = vmatmul.mubr.bf16.gmra.mxu0 %v5140
    %v5347 = vpop.f32.mrf.mxu0
    %v5348 = vadd.f32 %v5175, %v5347
    %v5349 = vpop.f32.mrf.mxu0
    %v5350 = vpop.f32.mrf.mxu0
    %v5351 = vadd.f32 %v5175, %v5350
    %v5352 = vpop.f32.mrf.mxu0
    %5353 = vmatprep.mubr.bf16.mxu0 0
    %5354 = vmatmul.mubr.bf16.gmra.mxu0 %v5143
    %v5355 = vpop.f32.mrf.mxu0
    %v5356 = vadd.f32 %v5175, %v5355
    %v5357 = vpop.f32.mrf.mxu0
    %v5358 = vpop.f32.mrf.mxu0
    %v5359 = vadd.f32 %v5175, %v5358
    %v5360 = vpop.f32.mrf.mxu0
    %5361 = vmatprep.mubr.bf16.mxu0 0
    %5362 = vmatmul.mubr.bf16.gmra.mxu0 %v5146
    %v5363 = vpop.f32.mrf.mxu0
    %v5364 = vadd.f32 %v5175, %v5363
    %v5365 = vpop.f32.mrf.mxu0
    %v5366 = vpop.f32.mrf.mxu0
    %v5367 = vadd.f32 %v5175, %v5366
    %v5368 = vpop.f32.mrf.mxu0
    %5369 = vmatprep.mubr.bf16.mxu0 0
    %5370 = vmatmul.mubr.bf16.gmra.mxu0 %v5149
    %v5371 = vpop.f32.mrf.mxu0
    %v5372 = vadd.f32 %v5175, %v5371
    %v5373 = vpop.f32.mrf.mxu0
    %v5374 = vpop.f32.mrf.mxu0
    %v5375 = vadd.f32 %v5175, %v5374
    %v5376 = vpop.f32.mrf.mxu0
    %5377 = vmatprep.mubr.bf16.mxu0 0
    %5378 = vmatmul.mubr.bf16.gmra.mxu0 %v5152
    %v5379 = vpop.f32.mrf.mxu0
    %v5380 = vadd.f32 %v5175, %v5379
    %v5381 = vpop.f32.mrf.mxu0
    %v5382 = vpop.f32.mrf.mxu0
    %v5383 = vadd.f32 %v5175, %v5382
    %v5384 = vpop.f32.mrf.mxu0
    %5385 = vdwg.mxu0
    %v5386 = vadd.f32 %v43, %v5260
    %v5387 = vadd.f32 %v44, %v5263
    %v5388 = vadd.f32 %v45, %v5268
    %v5389 = vadd.f32 %v46, %v5271
    %v5390 = vadd.f32 %v47, %v5276
    %v5391 = vadd.f32 %v48, %v5279
    %v5392 = vadd.f32 %v49, %v5284
    %v5393 = vadd.f32 %v50, %v5287
    %v5394 = vadd.f32 %v51, %v5292
    %v5395 = vadd.f32 %v52, %v5295
    %v5396 = vadd.f32 %v53, %v5300
    %v5397 = vadd.f32 %v54, %v5303
    %v5398 = vadd.f32 %v55, %v5308
    %v5399 = vadd.f32 %v56, %v5311
    %v5400 = vadd.f32 %v57, %v5316
    %v5401 = vadd.f32 %v58, %v5319
    %v5402 = vadd.f32 %v59, %v5324
    %v5403 = vadd.f32 %v60, %v5327
    %v5404 = vadd.f32 %v61, %v5332
    %v5405 = vadd.f32 %v62, %v5335
    %v5406 = vadd.f32 %v63, %v5340
    %v5407 = vadd.f32 %v64, %v5343
    %v5408 = vadd.f32 %v65, %v5348
    %v5409 = vadd.f32 %v66, %v5351
    %v5410 = vadd.f32 %v67, %v5356
    %v5411 = vadd.f32 %v68, %v5359
    %v5412 = vadd.f32 %v69, %v5364
    %v5413 = vadd.f32 %v70, %v5367
    %v5414 = vadd.f32 %v71, %v5372
    %v5415 = vadd.f32 %v72, %v5375
    %v5416 = vadd.f32 %v73, %v5380
    %v5417 = vadd.f32 %v74, %v5383
    %v5418 = vld [vmem:[%s6] sm:$0x1]
    %v5419 = vld [vmem:[%s7] sm:$0x1]
    %5420 = vadd.xlane.f32.xlu0 %v5386
    %v5421 = vpop.xlane.xlu0 %5420
    %5422 = vadd.xlane.f32.xlu0 %v5387
    %v5423 = vpop.xlane.xlu0 %5422
    %5424 = vadd.xlane.f32.xlu0 %v5388
    %v5425 = vpop.xlane.xlu0 %5424
    %5426 = vadd.xlane.f32.xlu0 %v5389
    %v5427 = vpop.xlane.xlu0 %5426
    %5428 = vadd.xlane.f32.xlu0 %v5390
    %v5429 = vpop.xlane.xlu0 %5428
    %5430 = vadd.xlane.f32.xlu0 %v5391
    %v5431 = vpop.xlane.xlu0 %5430
    %5432 = vadd.xlane.f32.xlu0 %v5392
    %v5433 = vpop.xlane.xlu0 %5432
    %5434 = vadd.xlane.f32.xlu0 %v5393
    %v5435 = vpop.xlane.xlu0 %5434
    %5436 = vadd.xlane.f32.xlu0 %v5394
    %v5437 = vpop.xlane.xlu0 %5436
    %5438 = vadd.xlane.f32.xlu0 %v5395
    %v5439 = vpop.xlane.xlu0 %5438
    %5440 = vadd.xlane.f32.xlu0 %v5396
    %v5441 = vpop.xlane.xlu0 %5440
    %5442 = vadd.xlane.f32.xlu0 %v5397
    %v5443 = vpop.xlane.xlu0 %5442
    %5444 = vadd.xlane.f32.xlu0 %v5398
    %v5445 = vpop.xlane.xlu0 %5444
    %5446 = vadd.xlane.f32.xlu0 %v5399
    %v5447 = vpop.xlane.xlu0 %5446
    %5448 = vadd.xlane.f32.xlu0 %v5400
    %v5449 = vpop.xlane.xlu0 %5448
    %5450 = vadd.xlane.f32.xlu0 %v5401
    %v5451 = vpop.xlane.xlu0 %5450
    %5452 = vadd.xlane.f32.xlu0 %v5402
    %v5453 = vpop.xlane.xlu0 %5452
    %5454 = vadd.xlane.f32.xlu0 %v5403
    %v5455 = vpop.xlane.xlu0 %5454
    %5456 = vadd.xlane.f32.xlu0 %v5404
    %v5457 = vpop.xlane.xlu0 %5456
    %5458 = vadd.xlane.f32.xlu0 %v5405
    %v5459 = vpop.xlane.xlu0 %5458
    %5460 = vadd.xlane.f32.xlu0 %v5406
    %v5461 = vpop.xlane.xlu0 %5460
    %5462 = vadd.xlane.f32.xlu0 %v5407
    %v5463 = vpop.xlane.xlu0 %5462
    %5464 = vadd.xlane.f32.xlu0 %v5408
    %v5465 = vpop.xlane.xlu0 %5464
    %5466 = vadd.xlane.f32.xlu0 %v5409
    %v5467 = vpop.xlane.xlu0 %5466
    %5468 = vadd.xlane.f32.xlu0 %v5410
    %v5469 = vpop.xlane.xlu0 %5468
    %5470 = vadd.xlane.f32.xlu0 %v5411
    %v5471 = vpop.xlane.xlu0 %5470
    %5472 = vadd.xlane.f32.xlu0 %v5412
    %v5473 = vpop.xlane.xlu0 %5472
    %5474 = vadd.xlane.f32.xlu0 %v5413
    %v5475 = vpop.xlane.xlu0 %5474
    %5476 = vadd.xlane.f32.xlu0 %v5414
    %v5477 = vpop.xlane.xlu0 %5476
    %5478 = vadd.xlane.f32.xlu0 %v5415
    %v5479 = vpop.xlane.xlu0 %5478
    %5480 = vadd.xlane.f32.xlu0 %v5416
    %v5481 = vpop.xlane.xlu0 %5480
    %5482 = vadd.xlane.f32.xlu0 %v5417
    %v5483 = vpop.xlane.xlu0 %5482
    %v5484 = vmul.f32 %v5421, %v141
    %v5485 = vmul.f32 %v5423, %v141
    %v5486 = vmul.f32 %v5425, %v141
    %v5487 = vmul.f32 %v5427, %v141
    %v5488 = vmul.f32 %v5429, %v141
    %v5489 = vmul.f32 %v5431, %v141
    %v5490 = vmul.f32 %v5433, %v141
    %v5491 = vmul.f32 %v5435, %v141
    %v5492 = vmul.f32 %v5437, %v141
    %v5493 = vmul.f32 %v5439, %v141
    %v5494 = vmul.f32 %v5441, %v141
    %v5495 = vmul.f32 %v5443, %v141
    %v5496 = vmul.f32 %v5445, %v141
    %v5497 = vmul.f32 %v5447, %v141
    %v5498 = vmul.f32 %v5449, %v141
    %v5499 = vmul.f32 %v5451, %v141
    %v5500 = vmul.f32 %v5453, %v141
    %v5501 = vmul.f32 %v5455, %v141
    %v5502 = vmul.f32 %v5457, %v141
    %v5503 = vmul.f32 %v5459, %v141
    %v5504 = vmul.f32 %v5461, %v141
    %v5505 = vmul.f32 %v5463, %v141
    %v5506 = vmul.f32 %v5465, %v141
    %v5507 = vmul.f32 %v5467, %v141
    %v5508 = vmul.f32 %v5469, %v141
    %v5509 = vmul.f32 %v5471, %v141
    %v5510 = vmul.f32 %v5473, %v141
    %v5511 = vmul.f32 %v5475, %v141
    %v5512 = vmul.f32 %v5477, %v141
    %v5513 = vmul.f32 %v5479, %v141
    %v5514 = vmul.f32 %v5481, %v141
    %v5515 = vmul.f32 %v5483, %v141
    %v5516 = vsub.f32 %v5386, %v5484
    %v5517 = vsub.f32 %v5387, %v5485
    %v5518 = vsub.f32 %v5388, %v5486
    %v5519 = vsub.f32 %v5389, %v5487
    %v5520 = vsub.f32 %v5390, %v5488
    %v5521 = vsub.f32 %v5391, %v5489
    %v5522 = vsub.f32 %v5392, %v5490
    %v5523 = vsub.f32 %v5393, %v5491
    %v5524 = vsub.f32 %v5394, %v5492
    %v5525 = vsub.f32 %v5395, %v5493
    %v5526 = vsub.f32 %v5396, %v5494
    %v5527 = vsub.f32 %v5397, %v5495
    %v5528 = vsub.f32 %v5398, %v5496
    %v5529 = vsub.f32 %v5399, %v5497
    %v5530 = vsub.f32 %v5400, %v5498
    %v5531 = vsub.f32 %v5401, %v5499
    %v5532 = vsub.f32 %v5402, %v5500
    %v5533 = vsub.f32 %v5403, %v5501
    %v5534 = vsub.f32 %v5404, %v5502
    %v5535 = vsub.f32 %v5405, %v5503
    %v5536 = vsub.f32 %v5406, %v5504
    %v5537 = vsub.f32 %v5407, %v5505
    %v5538 = vsub.f32 %v5408, %v5506
    %v5539 = vsub.f32 %v5409, %v5507
    %v5540 = vsub.f32 %v5410, %v5508
    %v5541 = vsub.f32 %v5411, %v5509
    %v5542 = vsub.f32 %v5412, %v5510
    %v5543 = vsub.f32 %v5413, %v5511
    %v5544 = vsub.f32 %v5414, %v5512
    %v5545 = vsub.f32 %v5415, %v5513
    %v5546 = vsub.f32 %v5416, %v5514
    %v5547 = vsub.f32 %v5417, %v5515
    %v5548 = vmul.f32 %v5516, %v5516
    %v5549 = vmul.f32 %v5517, %v5517
    %v5550 = vmul.f32 %v5518, %v5518
    %v5551 = vmul.f32 %v5519, %v5519
    %v5552 = vmul.f32 %v5520, %v5520
    %v5553 = vmul.f32 %v5521, %v5521
    %v5554 = vmul.f32 %v5522, %v5522
    %v5555 = vmul.f32 %v5523, %v5523
    %v5556 = vmul.f32 %v5524, %v5524
    %v5557 = vmul.f32 %v5525, %v5525
    %v5558 = vmul.f32 %v5526, %v5526
    %v5559 = vmul.f32 %v5527, %v5527
    %v5560 = vmul.f32 %v5528, %v5528
    %v5561 = vmul.f32 %v5529, %v5529
    %v5562 = vmul.f32 %v5530, %v5530
    %v5563 = vmul.f32 %v5531, %v5531
    %v5564 = vmul.f32 %v5532, %v5532
    %v5565 = vmul.f32 %v5533, %v5533
    %v5566 = vmul.f32 %v5534, %v5534
    %v5567 = vmul.f32 %v5535, %v5535
    %v5568 = vmul.f32 %v5536, %v5536
    %v5569 = vmul.f32 %v5537, %v5537
    %v5570 = vmul.f32 %v5538, %v5538
    %v5571 = vmul.f32 %v5539, %v5539
    %v5572 = vmul.f32 %v5540, %v5540
    %v5573 = vmul.f32 %v5541, %v5541
    %v5574 = vmul.f32 %v5542, %v5542
    %v5575 = vmul.f32 %v5543, %v5543
    %v5576 = vmul.f32 %v5544, %v5544
    %v5577 = vmul.f32 %v5545, %v5545
    %v5578 = vmul.f32 %v5546, %v5546
    %v5579 = vmul.f32 %v5547, %v5547
    %5580 = vadd.xlane.f32.xlu0 %v5548
    %v5581 = vpop.xlane.xlu0 %5580
    %5582 = vadd.xlane.f32.xlu0 %v5549
    %v5583 = vpop.xlane.xlu0 %5582
    %5584 = vadd.xlane.f32.xlu0 %v5550
    %v5585 = vpop.xlane.xlu0 %5584
    %5586 = vadd.xlane.f32.xlu0 %v5551
    %v5587 = vpop.xlane.xlu0 %5586
    %5588 = vadd.xlane.f32.xlu0 %v5552
    %v5589 = vpop.xlane.xlu0 %5588
    %5590 = vadd.xlane.f32.xlu0 %v5553
    %v5591 = vpop.xlane.xlu0 %5590
    %5592 = vadd.xlane.f32.xlu0 %v5554
    %v5593 = vpop.xlane.xlu0 %5592
    %5594 = vadd.xlane.f32.xlu0 %v5555
    %v5595 = vpop.xlane.xlu0 %5594
    %5596 = vadd.xlane.f32.xlu0 %v5556
    %v5597 = vpop.xlane.xlu0 %5596
    %5598 = vadd.xlane.f32.xlu0 %v5557
    %v5599 = vpop.xlane.xlu0 %5598
    %5600 = vadd.xlane.f32.xlu0 %v5558
    %v5601 = vpop.xlane.xlu0 %5600
    %5602 = vadd.xlane.f32.xlu0 %v5559
    %v5603 = vpop.xlane.xlu0 %5602
    %5604 = vadd.xlane.f32.xlu0 %v5560
    %v5605 = vpop.xlane.xlu0 %5604
    %5606 = vadd.xlane.f32.xlu0 %v5561
    %v5607 = vpop.xlane.xlu0 %5606
    %5608 = vadd.xlane.f32.xlu0 %v5562
    %v5609 = vpop.xlane.xlu0 %5608
    %5610 = vadd.xlane.f32.xlu0 %v5563
    %v5611 = vpop.xlane.xlu0 %5610
    %5612 = vadd.xlane.f32.xlu0 %v5564
    %v5613 = vpop.xlane.xlu0 %5612
    %5614 = vadd.xlane.f32.xlu0 %v5565
    %v5615 = vpop.xlane.xlu0 %5614
    %5616 = vadd.xlane.f32.xlu0 %v5566
    %v5617 = vpop.xlane.xlu0 %5616
    %5618 = vadd.xlane.f32.xlu0 %v5567
    %v5619 = vpop.xlane.xlu0 %5618
    %5620 = vadd.xlane.f32.xlu0 %v5568
    %v5621 = vpop.xlane.xlu0 %5620
    %5622 = vadd.xlane.f32.xlu0 %v5569
    %v5623 = vpop.xlane.xlu0 %5622
    %5624 = vadd.xlane.f32.xlu0 %v5570
    %v5625 = vpop.xlane.xlu0 %5624
    %5626 = vadd.xlane.f32.xlu0 %v5571
    %v5627 = vpop.xlane.xlu0 %5626
    %5628 = vadd.xlane.f32.xlu0 %v5572
    %v5629 = vpop.xlane.xlu0 %5628
    %5630 = vadd.xlane.f32.xlu0 %v5573
    %v5631 = vpop.xlane.xlu0 %5630
    %5632 = vadd.xlane.f32.xlu0 %v5574
    %v5633 = vpop.xlane.xlu0 %5632
    %5634 = vadd.xlane.f32.xlu0 %v5575
    %v5635 = vpop.xlane.xlu0 %5634
    %5636 = vadd.xlane.f32.xlu0 %v5576
    %v5637 = vpop.xlane.xlu0 %5636
    %5638 = vadd.xlane.f32.xlu0 %v5577
    %v5639 = vpop.xlane.xlu0 %5638
    %5640 = vadd.xlane.f32.xlu0 %v5578
    %v5641 = vpop.xlane.xlu0 %5640
    %5642 = vadd.xlane.f32.xlu0 %v5579
    %v5643 = vpop.xlane.xlu0 %5642
    %v5644 = vmul.f32 %v5581, %v141
    %v5645 = vmul.f32 %v5583, %v141
    %v5646 = vmul.f32 %v5585, %v141
    %v5647 = vmul.f32 %v5587, %v141
    %v5648 = vmul.f32 %v5589, %v141
    %v5649 = vmul.f32 %v5591, %v141
    %v5650 = vmul.f32 %v5593, %v141
    %v5651 = vmul.f32 %v5595, %v141
    %v5652 = vmul.f32 %v5597, %v141
    %v5653 = vmul.f32 %v5599, %v141
    %v5654 = vmul.f32 %v5601, %v141
    %v5655 = vmul.f32 %v5603, %v141
    %v5656 = vmul.f32 %v5605, %v141
    %v5657 = vmul.f32 %v5607, %v141
    %v5658 = vmul.f32 %v5609, %v141
    %v5659 = vmul.f32 %v5611, %v141
    %v5660 = vmul.f32 %v5613, %v141
    %v5661 = vmul.f32 %v5615, %v141
    %v5662 = vmul.f32 %v5617, %v141
    %v5663 = vmul.f32 %v5619, %v141
    %v5664 = vmul.f32 %v5621, %v141
    %v5665 = vmul.f32 %v5623, %v141
    %v5666 = vmul.f32 %v5625, %v141
    %v5667 = vmul.f32 %v5627, %v141
    %v5668 = vmul.f32 %v5629, %v141
    %v5669 = vmul.f32 %v5631, %v141
    %v5670 = vmul.f32 %v5633, %v141
    %v5671 = vmul.f32 %v5635, %v141
    %v5672 = vmul.f32 %v5637, %v141
    %v5673 = vmul.f32 %v5639, %v141
    %v5674 = vmul.f32 %v5641, %v141
    %v5675 = vmul.f32 %v5643, %v141
    %v5676 = vadd.f32 %v5644, 1e-05
    %v5677 = vadd.f32 %v5645, 1e-05
    %v5678 = vadd.f32 %v5646, 1e-05
    %v5679 = vadd.f32 %v5647, 1e-05
    %v5680 = vadd.f32 %v5648, 1e-05
    %v5681 = vadd.f32 %v5649, 1e-05
    %v5682 = vadd.f32 %v5650, 1e-05
    %v5683 = vadd.f32 %v5651, 1e-05
    %v5684 = vadd.f32 %v5652, 1e-05
    %v5685 = vadd.f32 %v5653, 1e-05
    %v5686 = vadd.f32 %v5654, 1e-05
    %v5687 = vadd.f32 %v5655, 1e-05
    %v5688 = vadd.f32 %v5656, 1e-05
    %v5689 = vadd.f32 %v5657, 1e-05
    %v5690 = vadd.f32 %v5658, 1e-05
    %v5691 = vadd.f32 %v5659, 1e-05
    %v5692 = vadd.f32 %v5660, 1e-05
    %v5693 = vadd.f32 %v5661, 1e-05
    %v5694 = vadd.f32 %v5662, 1e-05
    %v5695 = vadd.f32 %v5663, 1e-05
    %v5696 = vadd.f32 %v5664, 1e-05
    %v5697 = vadd.f32 %v5665, 1e-05
    %v5698 = vadd.f32 %v5666, 1e-05
    %v5699 = vadd.f32 %v5667, 1e-05
    %v5700 = vadd.f32 %v5668, 1e-05
    %v5701 = vadd.f32 %v5669, 1e-05
    %v5702 = vadd.f32 %v5670, 1e-05
    %v5703 = vadd.f32 %v5671, 1e-05
    %v5704 = vadd.f32 %v5672, 1e-05
    %v5705 = vadd.f32 %v5673, 1e-05
    %v5706 = vadd.f32 %v5674, 1e-05
    %v5707 = vadd.f32 %v5675, 1e-05
    %v5708 = vrsqrt.pop %v5676
    %v5709 = vrsqrt.pop %v5677
    %v5710 = vrsqrt.pop %v5678
    %v5711 = vrsqrt.pop %v5679
    %v5712 = vrsqrt.pop %v5680
    %v5713 = vrsqrt.pop %v5681
    %v5714 = vrsqrt.pop %v5682
    %v5715 = vrsqrt.pop %v5683
    %v5716 = vrsqrt.pop %v5684
    %v5717 = vrsqrt.pop %v5685
    %v5718 = vrsqrt.pop %v5686
    %v5719 = vrsqrt.pop %v5687
    %v5720 = vrsqrt.pop %v5688
    %v5721 = vrsqrt.pop %v5689
    %v5722 = vrsqrt.pop %v5690
    %v5723 = vrsqrt.pop %v5691
    %v5724 = vrsqrt.pop %v5692
    %v5725 = vrsqrt.pop %v5693
    %v5726 = vrsqrt.pop %v5694
    %v5727 = vrsqrt.pop %v5695
    %v5728 = vrsqrt.pop %v5696
    %v5729 = vrsqrt.pop %v5697
    %v5730 = vrsqrt.pop %v5698
    %v5731 = vrsqrt.pop %v5699
    %v5732 = vrsqrt.pop %v5700
    %v5733 = vrsqrt.pop %v5701
    %v5734 = vrsqrt.pop %v5702
    %v5735 = vrsqrt.pop %v5703
    %v5736 = vrsqrt.pop %v5704
    %v5737 = vrsqrt.pop %v5705
    %v5738 = vrsqrt.pop %v5706
    %v5739 = vrsqrt.pop %v5707
    %v5740 = vmul.f32 %v5516, %v5708
    %v5741 = vmul.f32 %v5517, %v5709
    %v5742 = vmul.f32 %v5518, %v5710
    %v5743 = vmul.f32 %v5519, %v5711
    %v5744 = vmul.f32 %v5520, %v5712
    %v5745 = vmul.f32 %v5521, %v5713
    %v5746 = vmul.f32 %v5522, %v5714
    %v5747 = vmul.f32 %v5523, %v5715
    %v5748 = vmul.f32 %v5524, %v5716
    %v5749 = vmul.f32 %v5525, %v5717
    %v5750 = vmul.f32 %v5526, %v5718
    %v5751 = vmul.f32 %v5527, %v5719
    %v5752 = vmul.f32 %v5528, %v5720
    %v5753 = vmul.f32 %v5529, %v5721
    %v5754 = vmul.f32 %v5530, %v5722
    %v5755 = vmul.f32 %v5531, %v5723
    %v5756 = vmul.f32 %v5532, %v5724
    %v5757 = vmul.f32 %v5533, %v5725
    %v5758 = vmul.f32 %v5534, %v5726
    %v5759 = vmul.f32 %v5535, %v5727
    %v5760 = vmul.f32 %v5536, %v5728
    %v5761 = vmul.f32 %v5537, %v5729
    %v5762 = vmul.f32 %v5538, %v5730
    %v5763 = vmul.f32 %v5539, %v5731
    %v5764 = vmul.f32 %v5540, %v5732
    %v5765 = vmul.f32 %v5541, %v5733
    %v5766 = vmul.f32 %v5542, %v5734
    %v5767 = vmul.f32 %v5543, %v5735
    %v5768 = vmul.f32 %v5544, %v5736
    %v5769 = vmul.f32 %v5545, %v5737
    %v5770 = vmul.f32 %v5546, %v5738
    %v5771 = vmul.f32 %v5547, %v5739
    %v5773 = vlaneseq
    %v5774 = vshrl.u32 %v5773, 7
    %v5775 = vsub.s32 0, %v5774
    %v5776 = vrot.slane %v5418, %v5775
    %v5778 = vmul.f32 %v5740, %v5776
    %v5779 = vmul.f32 %v5741, %v5776
    %v5780 = vmul.f32 %v5742, %v5776
    %v5781 = vmul.f32 %v5743, %v5776
    %v5782 = vmul.f32 %v5744, %v5776
    %v5783 = vmul.f32 %v5745, %v5776
    %v5784 = vmul.f32 %v5746, %v5776
    %v5785 = vmul.f32 %v5747, %v5776
    %v5786 = vmul.f32 %v5748, %v5776
    %v5787 = vmul.f32 %v5749, %v5776
    %v5788 = vmul.f32 %v5750, %v5776
    %v5789 = vmul.f32 %v5751, %v5776
    %v5790 = vmul.f32 %v5752, %v5776
    %v5791 = vmul.f32 %v5753, %v5776
    %v5792 = vmul.f32 %v5754, %v5776
    %v5793 = vmul.f32 %v5755, %v5776
    %v5794 = vmul.f32 %v5756, %v5776
    %v5795 = vmul.f32 %v5757, %v5776
    %v5796 = vmul.f32 %v5758, %v5776
    %v5797 = vmul.f32 %v5759, %v5776
    %v5798 = vmul.f32 %v5760, %v5776
    %v5799 = vmul.f32 %v5761, %v5776
    %v5800 = vmul.f32 %v5762, %v5776
    %v5801 = vmul.f32 %v5763, %v5776
    %v5802 = vmul.f32 %v5764, %v5776
    %v5803 = vmul.f32 %v5765, %v5776
    %v5804 = vmul.f32 %v5766, %v5776
    %v5805 = vmul.f32 %v5767, %v5776
    %v5806 = vmul.f32 %v5768, %v5776
    %v5807 = vmul.f32 %v5769, %v5776
    %v5808 = vmul.f32 %v5770, %v5776
    %v5809 = vmul.f32 %v5771, %v5776
    %v5811 = vlaneseq
    %v5812 = vshrl.u32 %v5811, 7
    %v5813 = vsub.s32 0, %v5812
    %v5814 = vrot.slane %v5419, %v5813
    %v5816 = vadd.f32 %v5778, %v5814
    %v5817 = vadd.f32 %v5779, %v5814
    %v5818 = vadd.f32 %v5780, %v5814
    %v5819 = vadd.f32 %v5781, %v5814
    %v5820 = vadd.f32 %v5782, %v5814
    %v5821 = vadd.f32 %v5783, %v5814
    %v5822 = vadd.f32 %v5784, %v5814
    %v5823 = vadd.f32 %v5785, %v5814
    %v5824 = vadd.f32 %v5786, %v5814
    %v5825 = vadd.f32 %v5787, %v5814
    %v5826 = vadd.f32 %v5788, %v5814
    %v5827 = vadd.f32 %v5789, %v5814
    %v5828 = vadd.f32 %v5790, %v5814
    %v5829 = vadd.f32 %v5791, %v5814
    %v5830 = vadd.f32 %v5792, %v5814
    %v5831 = vadd.f32 %v5793, %v5814
    %v5832 = vadd.f32 %v5794, %v5814
    %v5833 = vadd.f32 %v5795, %v5814
    %v5834 = vadd.f32 %v5796, %v5814
    %v5835 = vadd.f32 %v5797, %v5814
    %v5836 = vadd.f32 %v5798, %v5814
    %v5837 = vadd.f32 %v5799, %v5814
    %v5838 = vadd.f32 %v5800, %v5814
    %v5839 = vadd.f32 %v5801, %v5814
    %v5840 = vadd.f32 %v5802, %v5814
    %v5841 = vadd.f32 %v5803, %v5814
    %v5842 = vadd.f32 %v5804, %v5814
    %v5843 = vadd.f32 %v5805, %v5814
    %v5844 = vadd.f32 %v5806, %v5814
    %v5845 = vadd.f32 %v5807, %v5814
    %v5846 = vadd.f32 %v5808, %v5814
    %v5847 = vadd.f32 %v5809, %v5814
    %v5848 = vpack.c.bf16 %v5817, %v5816
    %v5849 = vpack.c.bf16 %v5819, %v5818
    %v5850 = vpack.c.bf16 %v5821, %v5820
    %v5851 = vpack.c.bf16 %v5823, %v5822
    %v5852 = vpack.c.bf16 %v5825, %v5824
    %v5853 = vpack.c.bf16 %v5827, %v5826
    %v5854 = vpack.c.bf16 %v5829, %v5828
    %v5855 = vpack.c.bf16 %v5831, %v5830
    %v5856 = vpack.c.bf16 %v5833, %v5832
    %v5857 = vpack.c.bf16 %v5835, %v5834
    %v5858 = vpack.c.bf16 %v5837, %v5836
    %v5859 = vpack.c.bf16 %v5839, %v5838
    %v5860 = vpack.c.bf16 %v5841, %v5840
    %v5861 = vpack.c.bf16 %v5843, %v5842
    %v5862 = vpack.c.bf16 %v5845, %v5844
    %v5863 = vpack.c.bf16 %v5847, %v5846
    %v5864 = vld [vmem:[%s8] sm:$0xff]
    %v5865 = vld [vmem:[%s8 + $0x8] sm:$0xff]
    %v5866 = vld [vmem:[%s8 + $0x10] sm:$0xff]
    %v5867 = vld [vmem:[%s8 + $0x18] sm:$0xff]
    %v5868 = vld [vmem:[%s8 + $0x20] sm:$0xff]
    %v5869 = vld [vmem:[%s8 + $0x28] sm:$0xff]
    %v5870 = vld [vmem:[%s8 + $0x30] sm:$0xff]
    %v5871 = vld [vmem:[%s8 + $0x38] sm:$0xff]
    %v5872 = vld [vmem:[%s8 + $0x40] sm:$0xff]
    %v5873 = vld [vmem:[%s8 + $0x48] sm:$0xff]
    %v5874 = vld [vmem:[%s8 + $0x50] sm:$0xff]
    %v5875 = vld [vmem:[%s8 + $0x58] sm:$0xff]
    %v5876 = vld [vmem:[%s8 + $0x60] sm:$0xff]
    %v5877 = vld [vmem:[%s8 + $0x68] sm:$0xff]
    %v5878 = vld [vmem:[%s8 + $0x70] sm:$0xff]
    %v5879 = vld [vmem:[%s8 + $0x78] sm:$0xff]
    %v5880 = vld [vmem:[%s8 + $0x80] sm:$0xff]
    %v5881 = vld [vmem:[%s8 + $0x88] sm:$0xff]
    %v5882 = vld [vmem:[%s8 + $0x90] sm:$0xff]
    %v5883 = vld [vmem:[%s8 + $0x98] sm:$0xff]
    %v5884 = vld [vmem:[%s8 + $0xa0] sm:$0xff]
    %v5885 = vld [vmem:[%s8 + $0xa8] sm:$0xff]
    %v5886 = vld [vmem:[%s8 + $0xb0] sm:$0xff]
    %v5887 = vld [vmem:[%s8 + $0xb8] sm:$0xff]
    %v5888 = vld [vmem:[%s8 + $0xc0] sm:$0xff]
    %v5889 = vld [vmem:[%s8 + $0xc8] sm:$0xff]
    %v5890 = vld [vmem:[%s8 + $0xd0] sm:$0xff]
    %v5891 = vld [vmem:[%s8 + $0xd8] sm:$0xff]
    %v5892 = vld [vmem:[%s8 + $0xe0] sm:$0xff]
    %v5893 = vld [vmem:[%s8 + $0xe8] sm:$0xff]
    %v5894 = vld [vmem:[%s8 + $0xf0] sm:$0xff]
    %v5895 = vld [vmem:[%s8 + $0xf8] sm:$0xff]
    %v5896 = vld [vmem:[%s9] sm:$0xf]
    %v5898 = vlaneseq
    %v5899 = vshrl.u32 %v5898, 7
    %v5900 = vsub.s32 0, %v5899
    %v5901 = vrot.slane %v5896, %v5900
    %v5902 = vlaneseq
    %v5903 = vshrl.u32 %v5902, 7
    %v5904 = vsub.s32 1, %v5903
    %v5905 = vrot.slane %v5896, %v5904
    %v5906 = vlaneseq
    %v5907 = vshrl.u32 %v5906, 7
    %v5908 = vsub.s32 2, %v5907
    %v5909 = vrot.slane %v5896, %v5908
    %v5910 = vlaneseq
    %v5911 = vshrl.u32 %v5910, 7
    %v5912 = vsub.s32 3, %v5911
    %v5913 = vrot.slane %v5896, %v5912
    %v5950 = vunpack.c.l.b16 %v5864
    %v5951 = vunpack.c.h.b16 %v5864
    %v5952 = vunpack.c.l.b16 %v5865
    %v5953 = vunpack.c.h.b16 %v5865
    %v5954 = vunpack.c.l.b16 %v5866
    %v5955 = vunpack.c.h.b16 %v5866
    %v5956 = vunpack.c.l.b16 %v5867
    %v5957 = vunpack.c.h.b16 %v5867
    %v5958 = vunpack.c.l.b16 %v5868
    %v5959 = vunpack.c.h.b16 %v5868
    %v5960 = vunpack.c.l.b16 %v5869
    %v5961 = vunpack.c.h.b16 %v5869
    %v5962 = vunpack.c.l.b16 %v5870
    %v5963 = vunpack.c.h.b16 %v5870
    %v5964 = vunpack.c.l.b16 %v5871
    %v5965 = vunpack.c.h.b16 %v5871
    %v5966 = vunpack.c.l.b16 %v5872
    %v5967 = vunpack.c.h.b16 %v5872
    %v5968 = vunpack.c.l.b16 %v5873
    %v5969 = vunpack.c.h.b16 %v5873
    %v5970 = vunpack.c.l.b16 %v5874
    %v5971 = vunpack.c.h.b16 %v5874
    %v5972 = vunpack.c.l.b16 %v5875
    %v5973 = vunpack.c.h.b16 %v5875
    %v5974 = vunpack.c.l.b16 %v5876
    %v5975 = vunpack.c.h.b16 %v5876
    %v5976 = vunpack.c.l.b16 %v5877
    %v5977 = vunpack.c.h.b16 %v5877
    %v5978 = vunpack.c.l.b16 %v5878
    %v5979 = vunpack.c.h.b16 %v5878
    %v5980 = vunpack.c.l.b16 %v5879
    %v5981 = vunpack.c.h.b16 %v5879
    %v5982 = vunpack.c.l.b16 %v5880
    %v5983 = vunpack.c.h.b16 %v5880
    %v5984 = vunpack.c.l.b16 %v5881
    %v5985 = vunpack.c.h.b16 %v5881
    %v5986 = vunpack.c.l.b16 %v5882
    %v5987 = vunpack.c.h.b16 %v5882
    %v5988 = vunpack.c.l.b16 %v5883
    %v5989 = vunpack.c.h.b16 %v5883
    %v5990 = vunpack.c.l.b16 %v5884
    %v5991 = vunpack.c.h.b16 %v5884
    %v5992 = vunpack.c.l.b16 %v5885
    %v5993 = vunpack.c.h.b16 %v5885
    %v5994 = vunpack.c.l.b16 %v5886
    %v5995 = vunpack.c.h.b16 %v5886
    %v5996 = vunpack.c.l.b16 %v5887
    %v5997 = vunpack.c.h.b16 %v5887
    %v5998 = vunpack.c.l.b16 %v5888
    %v5999 = vunpack.c.h.b16 %v5888
    %v6000 = vunpack.c.l.b16 %v5889
    %v6001 = vunpack.c.h.b16 %v5889
    %v6002 = vunpack.c.l.b16 %v5890
    %v6003 = vunpack.c.h.b16 %v5890
    %v6004 = vunpack.c.l.b16 %v5891
    %v6005 = vunpack.c.h.b16 %v5891
    %v6006 = vunpack.c.l.b16 %v5892
    %v6007 = vunpack.c.h.b16 %v5892
    %v6008 = vunpack.c.l.b16 %v5893
    %v6009 = vunpack.c.h.b16 %v5893
    %v6010 = vunpack.c.l.b16 %v5894
    %v6011 = vunpack.c.h.b16 %v5894
    %v6012 = vunpack.c.l.b16 %v5895
    %v6013 = vunpack.c.h.b16 %v5895
    %v6014 = vpack.c.b16 %v5954, %v5950
    %v6015 = vpack.c.b16 %v5955, %v5951
    %v6016 = vpack.c.b16 %v5956, %v5952
    %v6017 = vpack.c.b16 %v5957, %v5953
    %v6018 = vpack.c.b16 %v5962, %v5958
    %v6019 = vpack.c.b16 %v5963, %v5959
    %v6020 = vpack.c.b16 %v5964, %v5960
    %v6021 = vpack.c.b16 %v5965, %v5961
    %v6022 = vpack.c.b16 %v5970, %v5966
    %v6023 = vpack.c.b16 %v5971, %v5967
    %v6024 = vpack.c.b16 %v5972, %v5968
    %v6025 = vpack.c.b16 %v5973, %v5969
    %v6026 = vpack.c.b16 %v5978, %v5974
    %v6027 = vpack.c.b16 %v5979, %v5975
    %v6028 = vpack.c.b16 %v5980, %v5976
    %v6029 = vpack.c.b16 %v5981, %v5977
    %v6030 = vpack.c.b16 %v5986, %v5982
    %v6031 = vpack.c.b16 %v5987, %v5983
    %v6032 = vpack.c.b16 %v5988, %v5984
    %v6033 = vpack.c.b16 %v5989, %v5985
    %v6034 = vpack.c.b16 %v5994, %v5990
    %v6035 = vpack.c.b16 %v5995, %v5991
    %v6036 = vpack.c.b16 %v5996, %v5992
    %v6037 = vpack.c.b16 %v5997, %v5993
    %v6038 = vpack.c.b16 %v6002, %v5998
    %v6039 = vpack.c.b16 %v6003, %v5999
    %v6040 = vpack.c.b16 %v6004, %v6000
    %v6041 = vpack.c.b16 %v6005, %v6001
    %v6042 = vpack.c.b16 %v6010, %v6006
    %v6043 = vpack.c.b16 %v6011, %v6007
    %v6044 = vpack.c.b16 %v6012, %v6008
    %v6045 = vpack.c.b16 %v6013, %v6009
    %6078 = vmatprep.subr.bf16.mxu0 %v6043
    %6079 = vmatpush1.bf16.msra.mxu0 %v6042
    %6080 = vmatprep.subr.bf16.mxu0 %v6039
    %6081 = vmatpush1.bf16.msra.mxu0 %v6038
    %6082 = vmatprep.subr.bf16.mxu0 %v6035
    %6083 = vmatpush1.bf16.msra.mxu0 %v6034
    %6084 = vmatprep.subr.bf16.mxu0 %v6031
    %6085 = vmatpush1.bf16.msra.mxu0 %v6030
    %6086 = vmatprep.subr.bf16.mxu0 %v6027
    %6087 = vmatpush1.bf16.msra.mxu0 %v6026
    %6088 = vmatprep.subr.bf16.mxu0 %v6023
    %6089 = vmatpush1.bf16.msra.mxu0 %v6022
    %6090 = vmatprep.subr.bf16.mxu0 %v6019
    %6091 = vmatpush1.bf16.msra.mxu0 %v6018
    %6092 = vmatprep.subr.bf16.mxu0 %v6015
    %6093 = vmatpush1.bf16.msra.mxu0 %v6014
    %6094 = vmatprep.subr.bf16.mxu0 0
    %6095 = vmatpush2.bf16.msra.mxu0 0
    %6096 = vmatprep.subr.bf16.mxu0 0
    %6097 = vmatpush2.bf16.msra.mxu0 0
    %6098 = vmatprep.subr.bf16.mxu0 0
    %6099 = vmatpush2.bf16.msra.mxu0 0
    %6100 = vmatprep.subr.bf16.mxu0 0
    %6101 = vmatpush2.bf16.msra.mxu0 0
    %6102 = vmatprep.subr.bf16.mxu0 0
    %6103 = vmatpush2.bf16.msra.mxu0 0
    %6104 = vmatprep.subr.bf16.mxu0 0
    %6105 = vmatpush2.bf16.msra.mxu0 0
    %6106 = vmatprep.subr.bf16.mxu0 0
    %6107 = vmatpush2.bf16.msra.mxu0 0
    %6108 = vmatprep.subr.bf16.mxu0 0
    %6109 = vmatpush2.bf16.msra.mxu0 0
    %6110 = vmatprep.mubr.bf16.mxu0 0
    %6111 = vmatmul.mubr.bf16.gmra.mxu0 %v5848
    %v6112 = vpop.f32.mrf.mxu0
    %v6113 = vadd.f32 %v5901, %v6112
    %v6114 = vpop.f32.mrf.mxu0
    %v6115 = vadd.f32 %v5905, %v6114
    %v6116 = vpop.f32.mrf.mxu0
    %v6117 = vadd.f32 %v5901, %v6116
    %v6118 = vpop.f32.mrf.mxu0
    %v6119 = vadd.f32 %v5905, %v6118
    %6120 = vmatprep.mubr.bf16.mxu0 0
    %6121 = vmatmul.mubr.bf16.gmra.mxu0 %v5849
    %v6122 = vpop.f32.mrf.mxu0
    %v6123 = vadd.f32 %v5901, %v6122
    %v6124 = vpop.f32.mrf.mxu0
    %v6125 = vadd.f32 %v5905, %v6124
    %v6126 = vpop.f32.mrf.mxu0
    %v6127 = vadd.f32 %v5901, %v6126
    %v6128 = vpop.f32.mrf.mxu0
    %v6129 = vadd.f32 %v5905, %v6128
    %6130 = vmatprep.mubr.bf16.mxu0 0
    %6131 = vmatmul.mubr.bf16.gmra.mxu0 %v5850
    %v6132 = vpop.f32.mrf.mxu0
    %v6133 = vadd.f32 %v5901, %v6132
    %v6134 = vpop.f32.mrf.mxu0
    %v6135 = vadd.f32 %v5905, %v6134
    %v6136 = vpop.f32.mrf.mxu0
    %v6137 = vadd.f32 %v5901, %v6136
    %v6138 = vpop.f32.mrf.mxu0
    %v6139 = vadd.f32 %v5905, %v6138
    %6140 = vmatprep.mubr.bf16.mxu0 0
    %6141 = vmatmul.mubr.bf16.gmra.mxu0 %v5851
    %v6142 = vpop.f32.mrf.mxu0
    %v6143 = vadd.f32 %v5901, %v6142
    %v6144 = vpop.f32.mrf.mxu0
    %v6145 = vadd.f32 %v5905, %v6144
    %v6146 = vpop.f32.mrf.mxu0
    %v6147 = vadd.f32 %v5901, %v6146
    %v6148 = vpop.f32.mrf.mxu0
    %v6149 = vadd.f32 %v5905, %v6148
    %6150 = vmatprep.mubr.bf16.mxu0 0
    %6151 = vmatmul.mubr.bf16.gmra.mxu0 %v5852
    %v6152 = vpop.f32.mrf.mxu0
    %v6153 = vadd.f32 %v5901, %v6152
    %v6154 = vpop.f32.mrf.mxu0
    %v6155 = vadd.f32 %v5905, %v6154
    %v6156 = vpop.f32.mrf.mxu0
    %v6157 = vadd.f32 %v5901, %v6156
    %v6158 = vpop.f32.mrf.mxu0
    %v6159 = vadd.f32 %v5905, %v6158
    %6160 = vmatprep.mubr.bf16.mxu0 0
    %6161 = vmatmul.mubr.bf16.gmra.mxu0 %v5853
    %v6162 = vpop.f32.mrf.mxu0
    %v6163 = vadd.f32 %v5901, %v6162
    %v6164 = vpop.f32.mrf.mxu0
    %v6165 = vadd.f32 %v5905, %v6164
    %v6166 = vpop.f32.mrf.mxu0
    %v6167 = vadd.f32 %v5901, %v6166
    %v6168 = vpop.f32.mrf.mxu0
    %v6169 = vadd.f32 %v5905, %v6168
    %6170 = vmatprep.mubr.bf16.mxu0 0
    %6171 = vmatmul.mubr.bf16.gmra.mxu0 %v5854
    %v6172 = vpop.f32.mrf.mxu0
    %v6173 = vadd.f32 %v5901, %v6172
    %v6174 = vpop.f32.mrf.mxu0
    %v6175 = vadd.f32 %v5905, %v6174
    %v6176 = vpop.f32.mrf.mxu0
    %v6177 = vadd.f32 %v5901, %v6176
    %v6178 = vpop.f32.mrf.mxu0
    %v6179 = vadd.f32 %v5905, %v6178
    %6180 = vmatprep.mubr.bf16.mxu0 0
    %6181 = vmatmul.mubr.bf16.gmra.mxu0 %v5855
    %v6182 = vpop.f32.mrf.mxu0
    %v6183 = vadd.f32 %v5901, %v6182
    %v6184 = vpop.f32.mrf.mxu0
    %v6185 = vadd.f32 %v5905, %v6184
    %v6186 = vpop.f32.mrf.mxu0
    %v6187 = vadd.f32 %v5901, %v6186
    %v6188 = vpop.f32.mrf.mxu0
    %v6189 = vadd.f32 %v5905, %v6188
    %6190 = vmatprep.mubr.bf16.mxu0 0
    %6191 = vmatmul.mubr.bf16.gmra.mxu0 %v5856
    %v6192 = vpop.f32.mrf.mxu0
    %v6193 = vadd.f32 %v5901, %v6192
    %v6194 = vpop.f32.mrf.mxu0
    %v6195 = vadd.f32 %v5905, %v6194
    %v6196 = vpop.f32.mrf.mxu0
    %v6197 = vadd.f32 %v5901, %v6196
    %v6198 = vpop.f32.mrf.mxu0
    %v6199 = vadd.f32 %v5905, %v6198
    %6200 = vmatprep.mubr.bf16.mxu0 0
    %6201 = vmatmul.mubr.bf16.gmra.mxu0 %v5857
    %v6202 = vpop.f32.mrf.mxu0
    %v6203 = vadd.f32 %v5901, %v6202
    %v6204 = vpop.f32.mrf.mxu0
    %v6205 = vadd.f32 %v5905, %v6204
    %v6206 = vpop.f32.mrf.mxu0
    %v6207 = vadd.f32 %v5901, %v6206
    %v6208 = vpop.f32.mrf.mxu0
    %v6209 = vadd.f32 %v5905, %v6208
    %6210 = vmatprep.mubr.bf16.mxu0 0
    %6211 = vmatmul.mubr.bf16.gmra.mxu0 %v5858
    %v6212 = vpop.f32.mrf.mxu0
    %v6213 = vadd.f32 %v5901, %v6212
    %v6214 = vpop.f32.mrf.mxu0
    %v6215 = vadd.f32 %v5905, %v6214
    %v6216 = vpop.f32.mrf.mxu0
    %v6217 = vadd.f32 %v5901, %v6216
    %v6218 = vpop.f32.mrf.mxu0
    %v6219 = vadd.f32 %v5905, %v6218
    %6220 = vmatprep.mubr.bf16.mxu0 0
    %6221 = vmatmul.mubr.bf16.gmra.mxu0 %v5859
    %v6222 = vpop.f32.mrf.mxu0
    %v6223 = vadd.f32 %v5901, %v6222
    %v6224 = vpop.f32.mrf.mxu0
    %v6225 = vadd.f32 %v5905, %v6224
    %v6226 = vpop.f32.mrf.mxu0
    %v6227 = vadd.f32 %v5901, %v6226
    %v6228 = vpop.f32.mrf.mxu0
    %v6229 = vadd.f32 %v5905, %v6228
    %6230 = vmatprep.mubr.bf16.mxu0 0
    %6231 = vmatmul.mubr.bf16.gmra.mxu0 %v5860
    %v6232 = vpop.f32.mrf.mxu0
    %v6233 = vadd.f32 %v5901, %v6232
    %v6234 = vpop.f32.mrf.mxu0
    %v6235 = vadd.f32 %v5905, %v6234
    %v6236 = vpop.f32.mrf.mxu0
    %v6237 = vadd.f32 %v5901, %v6236
    %v6238 = vpop.f32.mrf.mxu0
    %v6239 = vadd.f32 %v5905, %v6238
    %6240 = vmatprep.mubr.bf16.mxu0 0
    %6241 = vmatmul.mubr.bf16.gmra.mxu0 %v5861
    %v6242 = vpop.f32.mrf.mxu0
    %v6243 = vadd.f32 %v5901, %v6242
    %v6244 = vpop.f32.mrf.mxu0
    %v6245 = vadd.f32 %v5905, %v6244
    %v6246 = vpop.f32.mrf.mxu0
    %v6247 = vadd.f32 %v5901, %v6246
    %v6248 = vpop.f32.mrf.mxu0
    %v6249 = vadd.f32 %v5905, %v6248
    %6250 = vmatprep.mubr.bf16.mxu0 0
    %6251 = vmatmul.mubr.bf16.gmra.mxu0 %v5862
    %v6252 = vpop.f32.mrf.mxu0
    %v6253 = vadd.f32 %v5901, %v6252
    %v6254 = vpop.f32.mrf.mxu0
    %v6255 = vadd.f32 %v5905, %v6254
    %v6256 = vpop.f32.mrf.mxu0
    %v6257 = vadd.f32 %v5901, %v6256
    %v6258 = vpop.f32.mrf.mxu0
    %v6259 = vadd.f32 %v5905, %v6258
    %6260 = vmatprep.mubr.bf16.mxu0 0
    %6261 = vmatmul.mubr.bf16.gmra.mxu0 %v5863
    %v6262 = vpop.f32.mrf.mxu0
    %v6263 = vadd.f32 %v5901, %v6262
    %v6264 = vpop.f32.mrf.mxu0
    %v6265 = vadd.f32 %v5905, %v6264
    %v6266 = vpop.f32.mrf.mxu0
    %v6267 = vadd.f32 %v5901, %v6266
    %v6268 = vpop.f32.mrf.mxu0
    %v6269 = vadd.f32 %v5905, %v6268
    %6270 = vdwg.mxu0
    %6271 = vmatprep.subr.bf16.mxu0 %v6045
    %6272 = vmatpush1.bf16.msra.mxu0 %v6044
    %6273 = vmatprep.subr.bf16.mxu0 %v6041
    %6274 = vmatpush1.bf16.msra.mxu0 %v6040
    %6275 = vmatprep.subr.bf16.mxu0 %v6037
    %6276 = vmatpush1.bf16.msra.mxu0 %v6036
    %6277 = vmatprep.subr.bf16.mxu0 %v6033
    %6278 = vmatpush1.bf16.msra.mxu0 %v6032
    %6279 = vmatprep.subr.bf16.mxu0 %v6029
    %6280 = vmatpush1.bf16.msra.mxu0 %v6028
    %6281 = vmatprep.subr.bf16.mxu0 %v6025
    %6282 = vmatpush1.bf16.msra.mxu0 %v6024
    %6283 = vmatprep.subr.bf16.mxu0 %v6021
    %6284 = vmatpush1.bf16.msra.mxu0 %v6020
    %6285 = vmatprep.subr.bf16.mxu0 %v6017
    %6286 = vmatpush1.bf16.msra.mxu0 %v6016
    %6287 = vmatprep.subr.bf16.mxu0 0
    %6288 = vmatpush2.bf16.msra.mxu0 0
    %6289 = vmatprep.subr.bf16.mxu0 0
    %6290 = vmatpush2.bf16.msra.mxu0 0
    %6291 = vmatprep.subr.bf16.mxu0 0
    %6292 = vmatpush2.bf16.msra.mxu0 0
    %6293 = vmatprep.subr.bf16.mxu0 0
    %6294 = vmatpush2.bf16.msra.mxu0 0
    %6295 = vmatprep.subr.bf16.mxu0 0
    %6296 = vmatpush2.bf16.msra.mxu0 0
    %6297 = vmatprep.subr.bf16.mxu0 0
    %6298 = vmatpush2.bf16.msra.mxu0 0
    %6299 = vmatprep.subr.bf16.mxu0 0
    %6300 = vmatpush2.bf16.msra.mxu0 0
    %6301 = vmatprep.subr.bf16.mxu0 0
    %6302 = vmatpush2.bf16.msra.mxu0 0
    %6303 = vmatprep.mubr.bf16.mxu0 0
    %6304 = vmatmul.mubr.bf16.gmra.mxu0 %v5848
    %v6305 = vpop.f32.mrf.mxu0
    %v6306 = vadd.f32 %v5909, %v6305
    %v6307 = vpop.f32.mrf.mxu0
    %v6308 = vadd.f32 %v5913, %v6307
    %v6309 = vpop.f32.mrf.mxu0
    %v6310 = vadd.f32 %v5909, %v6309
    %v6311 = vpop.f32.mrf.mxu0
    %v6312 = vadd.f32 %v5913, %v6311
    %6313 = vmatprep.mubr.bf16.mxu0 0
    %6314 = vmatmul.mubr.bf16.gmra.mxu0 %v5849
    %v6315 = vpop.f32.mrf.mxu0
    %v6316 = vadd.f32 %v5909, %v6315
    %v6317 = vpop.f32.mrf.mxu0
    %v6318 = vadd.f32 %v5913, %v6317
    %v6319 = vpop.f32.mrf.mxu0
    %v6320 = vadd.f32 %v5909, %v6319
    %v6321 = vpop.f32.mrf.mxu0
    %v6322 = vadd.f32 %v5913, %v6321
    %6323 = vmatprep.mubr.bf16.mxu0 0
    %6324 = vmatmul.mubr.bf16.gmra.mxu0 %v5850
    %v6325 = vpop.f32.mrf.mxu0
    %v6326 = vadd.f32 %v5909, %v6325
    %v6327 = vpop.f32.mrf.mxu0
    %v6328 = vadd.f32 %v5913, %v6327
    %v6329 = vpop.f32.mrf.mxu0
    %v6330 = vadd.f32 %v5909, %v6329
    %v6331 = vpop.f32.mrf.mxu0
    %v6332 = vadd.f32 %v5913, %v6331
    %6333 = vmatprep.mubr.bf16.mxu0 0
    %6334 = vmatmul.mubr.bf16.gmra.mxu0 %v5851
    %v6335 = vpop.f32.mrf.mxu0
    %v6336 = vadd.f32 %v5909, %v6335
    %v6337 = vpop.f32.mrf.mxu0
    %v6338 = vadd.f32 %v5913, %v6337
    %v6339 = vpop.f32.mrf.mxu0
    %v6340 = vadd.f32 %v5909, %v6339
    %v6341 = vpop.f32.mrf.mxu0
    %v6342 = vadd.f32 %v5913, %v6341
    %6343 = vmatprep.mubr.bf16.mxu0 0
    %6344 = vmatmul.mubr.bf16.gmra.mxu0 %v5852
    %v6345 = vpop.f32.mrf.mxu0
    %v6346 = vadd.f32 %v5909, %v6345
    %v6347 = vpop.f32.mrf.mxu0
    %v6348 = vadd.f32 %v5913, %v6347
    %v6349 = vpop.f32.mrf.mxu0
    %v6350 = vadd.f32 %v5909, %v6349
    %v6351 = vpop.f32.mrf.mxu0
    %v6352 = vadd.f32 %v5913, %v6351
    %6353 = vmatprep.mubr.bf16.mxu0 0
    %6354 = vmatmul.mubr.bf16.gmra.mxu0 %v5853
    %v6355 = vpop.f32.mrf.mxu0
    %v6356 = vadd.f32 %v5909, %v6355
    %v6357 = vpop.f32.mrf.mxu0
    %v6358 = vadd.f32 %v5913, %v6357
    %v6359 = vpop.f32.mrf.mxu0
    %v6360 = vadd.f32 %v5909, %v6359
    %v6361 = vpop.f32.mrf.mxu0
    %v6362 = vadd.f32 %v5913, %v6361
    %6363 = vmatprep.mubr.bf16.mxu0 0
    %6364 = vmatmul.mubr.bf16.gmra.mxu0 %v5854
    %v6365 = vpop.f32.mrf.mxu0
    %v6366 = vadd.f32 %v5909, %v6365
    %v6367 = vpop.f32.mrf.mxu0
    %v6368 = vadd.f32 %v5913, %v6367
    %v6369 = vpop.f32.mrf.mxu0
    %v6370 = vadd.f32 %v5909, %v6369
    %v6371 = vpop.f32.mrf.mxu0
    %v6372 = vadd.f32 %v5913, %v6371
    %6373 = vmatprep.mubr.bf16.mxu0 0
    %6374 = vmatmul.mubr.bf16.gmra.mxu0 %v5855
    %v6375 = vpop.f32.mrf.mxu0
    %v6376 = vadd.f32 %v5909, %v6375
    %v6377 = vpop.f32.mrf.mxu0
    %v6378 = vadd.f32 %v5913, %v6377
    %v6379 = vpop.f32.mrf.mxu0
    %v6380 = vadd.f32 %v5909, %v6379
    %v6381 = vpop.f32.mrf.mxu0
    %v6382 = vadd.f32 %v5913, %v6381
    %6383 = vmatprep.mubr.bf16.mxu0 0
    %6384 = vmatmul.mubr.bf16.gmra.mxu0 %v5856
    %v6385 = vpop.f32.mrf.mxu0
    %v6386 = vadd.f32 %v5909, %v6385
    %v6387 = vpop.f32.mrf.mxu0
    %v6388 = vadd.f32 %v5913, %v6387
    %v6389 = vpop.f32.mrf.mxu0
    %v6390 = vadd.f32 %v5909, %v6389
    %v6391 = vpop.f32.mrf.mxu0
    %v6392 = vadd.f32 %v5913, %v6391
    %6393 = vmatprep.mubr.bf16.mxu0 0
    %6394 = vmatmul.mubr.bf16.gmra.mxu0 %v5857
    %v6395 = vpop.f32.mrf.mxu0
    %v6396 = vadd.f32 %v5909, %v6395
    %v6397 = vpop.f32.mrf.mxu0
    %v6398 = vadd.f32 %v5913, %v6397
    %v6399 = vpop.f32.mrf.mxu0
    %v6400 = vadd.f32 %v5909, %v6399
    %v6401 = vpop.f32.mrf.mxu0
    %v6402 = vadd.f32 %v5913, %v6401
    %6403 = vmatprep.mubr.bf16.mxu0 0
    %6404 = vmatmul.mubr.bf16.gmra.mxu0 %v5858
    %v6405 = vpop.f32.mrf.mxu0
    %v6406 = vadd.f32 %v5909, %v6405
    %v6407 = vpop.f32.mrf.mxu0
    %v6408 = vadd.f32 %v5913, %v6407
    %v6409 = vpop.f32.mrf.mxu0
    %v6410 = vadd.f32 %v5909, %v6409
    %v6411 = vpop.f32.mrf.mxu0
    %v6412 = vadd.f32 %v5913, %v6411
    %6413 = vmatprep.mubr.bf16.mxu0 0
    %6414 = vmatmul.mubr.bf16.gmra.mxu0 %v5859
    %v6415 = vpop.f32.mrf.mxu0
    %v6416 = vadd.f32 %v5909, %v6415
    %v6417 = vpop.f32.mrf.mxu0
    %v6418 = vadd.f32 %v5913, %v6417
    %v6419 = vpop.f32.mrf.mxu0
    %v6420 = vadd.f32 %v5909, %v6419
    %v6421 = vpop.f32.mrf.mxu0
    %v6422 = vadd.f32 %v5913, %v6421
    %6423 = vmatprep.mubr.bf16.mxu0 0
    %6424 = vmatmul.mubr.bf16.gmra.mxu0 %v5860
    %v6425 = vpop.f32.mrf.mxu0
    %v6426 = vadd.f32 %v5909, %v6425
    %v6427 = vpop.f32.mrf.mxu0
    %v6428 = vadd.f32 %v5913, %v6427
    %v6429 = vpop.f32.mrf.mxu0
    %v6430 = vadd.f32 %v5909, %v6429
    %v6431 = vpop.f32.mrf.mxu0
    %v6432 = vadd.f32 %v5913, %v6431
    %6433 = vmatprep.mubr.bf16.mxu0 0
    %6434 = vmatmul.mubr.bf16.gmra.mxu0 %v5861
    %v6435 = vpop.f32.mrf.mxu0
    %v6436 = vadd.f32 %v5909, %v6435
    %v6437 = vpop.f32.mrf.mxu0
    %v6438 = vadd.f32 %v5913, %v6437
    %v6439 = vpop.f32.mrf.mxu0
    %v6440 = vadd.f32 %v5909, %v6439
    %v6441 = vpop.f32.mrf.mxu0
    %v6442 = vadd.f32 %v5913, %v6441
    %6443 = vmatprep.mubr.bf16.mxu0 0
    %6444 = vmatmul.mubr.bf16.gmra.mxu0 %v5862
    %v6445 = vpop.f32.mrf.mxu0
    %v6446 = vadd.f32 %v5909, %v6445
    %v6447 = vpop.f32.mrf.mxu0
    %v6448 = vadd.f32 %v5913, %v6447
    %v6449 = vpop.f32.mrf.mxu0
    %v6450 = vadd.f32 %v5909, %v6449
    %v6451 = vpop.f32.mrf.mxu0
    %v6452 = vadd.f32 %v5913, %v6451
    %6453 = vmatprep.mubr.bf16.mxu0 0
    %6454 = vmatmul.mubr.bf16.gmra.mxu0 %v5863
    %v6455 = vpop.f32.mrf.mxu0
    %v6456 = vadd.f32 %v5909, %v6455
    %v6457 = vpop.f32.mrf.mxu0
    %v6458 = vadd.f32 %v5913, %v6457
    %v6459 = vpop.f32.mrf.mxu0
    %v6460 = vadd.f32 %v5909, %v6459
    %v6461 = vpop.f32.mrf.mxu0
    %v6462 = vadd.f32 %v5913, %v6461
    %6463 = vdwg.mxu0
    %v6464 = vmax.f32 %v6113, 0.0
    %v6465 = vmax.f32 %v6115, 0.0
    %v6466 = vmax.f32 %v6306, 0.0
    %v6467 = vmax.f32 %v6308, 0.0
    %v6468 = vmax.f32 %v6117, 0.0
    %v6469 = vmax.f32 %v6119, 0.0
    %v6470 = vmax.f32 %v6310, 0.0
    %v6471 = vmax.f32 %v6312, 0.0
    %v6472 = vmax.f32 %v6123, 0.0
    %v6473 = vmax.f32 %v6125, 0.0
    %v6474 = vmax.f32 %v6316, 0.0
    %v6475 = vmax.f32 %v6318, 0.0
    %v6476 = vmax.f32 %v6127, 0.0
    %v6477 = vmax.f32 %v6129, 0.0
    %v6478 = vmax.f32 %v6320, 0.0
    %v6479 = vmax.f32 %v6322, 0.0
    %v6480 = vmax.f32 %v6133, 0.0
    %v6481 = vmax.f32 %v6135, 0.0
    %v6482 = vmax.f32 %v6326, 0.0
    %v6483 = vmax.f32 %v6328, 0.0
    %v6484 = vmax.f32 %v6137, 0.0
    %v6485 = vmax.f32 %v6139, 0.0
    %v6486 = vmax.f32 %v6330, 0.0
    %v6487 = vmax.f32 %v6332, 0.0
    %v6488 = vmax.f32 %v6143, 0.0
    %v6489 = vmax.f32 %v6145, 0.0
    %v6490 = vmax.f32 %v6336, 0.0
    %v6491 = vmax.f32 %v6338, 0.0
    %v6492 = vmax.f32 %v6147, 0.0
    %v6493 = vmax.f32 %v6149, 0.0
    %v6494 = vmax.f32 %v6340, 0.0
    %v6495 = vmax.f32 %v6342, 0.0
    %v6496 = vmax.f32 %v6153, 0.0
    %v6497 = vmax.f32 %v6155, 0.0
    %v6498 = vmax.f32 %v6346, 0.0
    %v6499 = vmax.f32 %v6348, 0.0
    %v6500 = vmax.f32 %v6157, 0.0
    %v6501 = vmax.f32 %v6159, 0.0
    %v6502 = vmax.f32 %v6350, 0.0
    %v6503 = vmax.f32 %v6352, 0.0
    %v6504 = vmax.f32 %v6163, 0.0
    %v6505 = vmax.f32 %v6165, 0.0
    %v6506 = vmax.f32 %v6356, 0.0
    %v6507 = vmax.f32 %v6358, 0.0
    %v6508 = vmax.f32 %v6167, 0.0
    %v6509 = vmax.f32 %v6169, 0.0
    %v6510 = vmax.f32 %v6360, 0.0
    %v6511 = vmax.f32 %v6362, 0.0
    %v6512 = vmax.f32 %v6173, 0.0
    %v6513 = vmax.f32 %v6175, 0.0
    %v6514 = vmax.f32 %v6366, 0.0
    %v6515 = vmax.f32 %v6368, 0.0
    %v6516 = vmax.f32 %v6177, 0.0
    %v6517 = vmax.f32 %v6179, 0.0
    %v6518 = vmax.f32 %v6370, 0.0
    %v6519 = vmax.f32 %v6372, 0.0
    %v6520 = vmax.f32 %v6183, 0.0
    %v6521 = vmax.f32 %v6185, 0.0
    %v6522 = vmax.f32 %v6376, 0.0
    %v6523 = vmax.f32 %v6378, 0.0
    %v6524 = vmax.f32 %v6187, 0.0
    %v6525 = vmax.f32 %v6189, 0.0
    %v6526 = vmax.f32 %v6380, 0.0
    %v6527 = vmax.f32 %v6382, 0.0
    %v6528 = vmax.f32 %v6193, 0.0
    %v6529 = vmax.f32 %v6195, 0.0
    %v6530 = vmax.f32 %v6386, 0.0
    %v6531 = vmax.f32 %v6388, 0.0
    %v6532 = vmax.f32 %v6197, 0.0
    %v6533 = vmax.f32 %v6199, 0.0
    %v6534 = vmax.f32 %v6390, 0.0
    %v6535 = vmax.f32 %v6392, 0.0
    %v6536 = vmax.f32 %v6203, 0.0
    %v6537 = vmax.f32 %v6205, 0.0
    %v6538 = vmax.f32 %v6396, 0.0
    %v6539 = vmax.f32 %v6398, 0.0
    %v6540 = vmax.f32 %v6207, 0.0
    %v6541 = vmax.f32 %v6209, 0.0
    %v6542 = vmax.f32 %v6400, 0.0
    %v6543 = vmax.f32 %v6402, 0.0
    %v6544 = vmax.f32 %v6213, 0.0
    %v6545 = vmax.f32 %v6215, 0.0
    %v6546 = vmax.f32 %v6406, 0.0
    %v6547 = vmax.f32 %v6408, 0.0
    %v6548 = vmax.f32 %v6217, 0.0
    %v6549 = vmax.f32 %v6219, 0.0
    %v6550 = vmax.f32 %v6410, 0.0
    %v6551 = vmax.f32 %v6412, 0.0
    %v6552 = vmax.f32 %v6223, 0.0
    %v6553 = vmax.f32 %v6225, 0.0
    %v6554 = vmax.f32 %v6416, 0.0
    %v6555 = vmax.f32 %v6418, 0.0
    %v6556 = vmax.f32 %v6227, 0.0
    %v6557 = vmax.f32 %v6229, 0.0
    %v6558 = vmax.f32 %v6420, 0.0
    %v6559 = vmax.f32 %v6422, 0.0
    %v6560 = vmax.f32 %v6233, 0.0
    %v6561 = vmax.f32 %v6235, 0.0
    %v6562 = vmax.f32 %v6426, 0.0
    %v6563 = vmax.f32 %v6428, 0.0
    %v6564 = vmax.f32 %v6237, 0.0
    %v6565 = vmax.f32 %v6239, 0.0
    %v6566 = vmax.f32 %v6430, 0.0
    %v6567 = vmax.f32 %v6432, 0.0
    %v6568 = vmax.f32 %v6243, 0.0
    %v6569 = vmax.f32 %v6245, 0.0
    %v6570 = vmax.f32 %v6436, 0.0
    %v6571 = vmax.f32 %v6438, 0.0
    %v6572 = vmax.f32 %v6247, 0.0
    %v6573 = vmax.f32 %v6249, 0.0
    %v6574 = vmax.f32 %v6440, 0.0
    %v6575 = vmax.f32 %v6442, 0.0
    %v6576 = vmax.f32 %v6253, 0.0
    %v6577 = vmax.f32 %v6255, 0.0
    %v6578 = vmax.f32 %v6446, 0.0
    %v6579 = vmax.f32 %v6448, 0.0
    %v6580 = vmax.f32 %v6257, 0.0
    %v6581 = vmax.f32 %v6259, 0.0
    %v6582 = vmax.f32 %v6450, 0.0
    %v6583 = vmax.f32 %v6452, 0.0
    %v6584 = vmax.f32 %v6263, 0.0
    %v6585 = vmax.f32 %v6265, 0.0
    %v6586 = vmax.f32 %v6456, 0.0
    %v6587 = vmax.f32 %v6458, 0.0
    %v6588 = vmax.f32 %v6267, 0.0
    %v6589 = vmax.f32 %v6269, 0.0
    %v6590 = vmax.f32 %v6460, 0.0
    %v6591 = vmax.f32 %v6462, 0.0
    %v6592 = vpack.c.bf16 %v6468, %v6464
    %v6593 = vpack.c.bf16 %v6469, %v6465
    %v6594 = vpack.c.bf16 %v6470, %v6466
    %v6595 = vpack.c.bf16 %v6471, %v6467
    %v6596 = vpack.c.bf16 %v6476, %v6472
    %v6597 = vpack.c.bf16 %v6477, %v6473
    %v6598 = vpack.c.bf16 %v6478, %v6474
    %v6599 = vpack.c.bf16 %v6479, %v6475
    %v6600 = vpack.c.bf16 %v6484, %v6480
    %v6601 = vpack.c.bf16 %v6485, %v6481
    %v6602 = vpack.c.bf16 %v6486, %v6482
    %v6603 = vpack.c.bf16 %v6487, %v6483
    %v6604 = vpack.c.bf16 %v6492, %v6488
    %v6605 = vpack.c.bf16 %v6493, %v6489
    %v6606 = vpack.c.bf16 %v6494, %v6490
    %v6607 = vpack.c.bf16 %v6495, %v6491
    %v6608 = vpack.c.bf16 %v6500, %v6496
    %v6609 = vpack.c.bf16 %v6501, %v6497
    %v6610 = vpack.c.bf16 %v6502, %v6498
    %v6611 = vpack.c.bf16 %v6503, %v6499
    %v6612 = vpack.c.bf16 %v6508, %v6504
    %v6613 = vpack.c.bf16 %v6509, %v6505
    %v6614 = vpack.c.bf16 %v6510, %v6506
    %v6615 = vpack.c.bf16 %v6511, %v6507
    %v6616 = vpack.c.bf16 %v6516, %v6512
    %v6617 = vpack.c.bf16 %v6517, %v6513
    %v6618 = vpack.c.bf16 %v6518, %v6514
    %v6619 = vpack.c.bf16 %v6519, %v6515
    %v6620 = vpack.c.bf16 %v6524, %v6520
    %v6621 = vpack.c.bf16 %v6525, %v6521
    %v6622 = vpack.c.bf16 %v6526, %v6522
    %v6623 = vpack.c.bf16 %v6527, %v6523
    %v6624 = vpack.c.bf16 %v6532, %v6528
    %v6625 = vpack.c.bf16 %v6533, %v6529
    %v6626 = vpack.c.bf16 %v6534, %v6530
    %v6627 = vpack.c.bf16 %v6535, %v6531
    %v6628 = vpack.c.bf16 %v6540, %v6536
    %v6629 = vpack.c.bf16 %v6541, %v6537
    %v6630 = vpack.c.bf16 %v6542, %v6538
    %v6631 = vpack.c.bf16 %v6543, %v6539
    %v6632 = vpack.c.bf16 %v6548, %v6544
    %v6633 = vpack.c.bf16 %v6549, %v6545
    %v6634 = vpack.c.bf16 %v6550, %v6546
    %v6635 = vpack.c.bf16 %v6551, %v6547
    %v6636 = vpack.c.bf16 %v6556, %v6552
    %v6637 = vpack.c.bf16 %v6557, %v6553
    %v6638 = vpack.c.bf16 %v6558, %v6554
    %v6639 = vpack.c.bf16 %v6559, %v6555
    %v6640 = vpack.c.bf16 %v6564, %v6560
    %v6641 = vpack.c.bf16 %v6565, %v6561
    %v6642 = vpack.c.bf16 %v6566, %v6562
    %v6643 = vpack.c.bf16 %v6567, %v6563
    %v6644 = vpack.c.bf16 %v6572, %v6568
    %v6645 = vpack.c.bf16 %v6573, %v6569
    %v6646 = vpack.c.bf16 %v6574, %v6570
    %v6647 = vpack.c.bf16 %v6575, %v6571
    %v6648 = vpack.c.bf16 %v6580, %v6576
    %v6649 = vpack.c.bf16 %v6581, %v6577
    %v6650 = vpack.c.bf16 %v6582, %v6578
    %v6651 = vpack.c.bf16 %v6583, %v6579
    %v6652 = vpack.c.bf16 %v6588, %v6584
    %v6653 = vpack.c.bf16 %v6589, %v6585
    %v6654 = vpack.c.bf16 %v6590, %v6586
    %v6655 = vpack.c.bf16 %v6591, %v6587
    %v6656 = vld [vmem:[%s10] sm:$0xf]
    %v6657 = vld [vmem:[%s10 + $0x4] sm:$0xf]
    %v6658 = vld [vmem:[%s10 + $0x8] sm:$0xf]
    %v6659 = vld [vmem:[%s10 + $0xc] sm:$0xf]
    %v6660 = vld [vmem:[%s10 + $0x10] sm:$0xf]
    %v6661 = vld [vmem:[%s10 + $0x14] sm:$0xf]
    %v6662 = vld [vmem:[%s10 + $0x18] sm:$0xf]
    %v6663 = vld [vmem:[%s10 + $0x1c] sm:$0xf]
    %v6664 = vld [vmem:[%s10 + $0x20] sm:$0xf]
    %v6665 = vld [vmem:[%s10 + $0x24] sm:$0xf]
    %v6666 = vld [vmem:[%s10 + $0x28] sm:$0xf]
    %v6667 = vld [vmem:[%s10 + $0x2c] sm:$0xf]
    %v6668 = vld [vmem:[%s10 + $0x30] sm:$0xf]
    %v6669 = vld [vmem:[%s10 + $0x34] sm:$0xf]
    %v6670 = vld [vmem:[%s10 + $0x38] sm:$0xf]
    %v6671 = vld [vmem:[%s10 + $0x3c] sm:$0xf]
    %v6672 = vld [vmem:[%s10 + $0x40] sm:$0xf]
    %v6673 = vld [vmem:[%s10 + $0x44] sm:$0xf]
    %v6674 = vld [vmem:[%s10 + $0x48] sm:$0xf]
    %v6675 = vld [vmem:[%s10 + $0x4c] sm:$0xf]
    %v6676 = vld [vmem:[%s10 + $0x50] sm:$0xf]
    %v6677 = vld [vmem:[%s10 + $0x54] sm:$0xf]
    %v6678 = vld [vmem:[%s10 + $0x58] sm:$0xf]
    %v6679 = vld [vmem:[%s10 + $0x5c] sm:$0xf]
    %v6680 = vld [vmem:[%s10 + $0x60] sm:$0xf]
    %v6681 = vld [vmem:[%s10 + $0x64] sm:$0xf]
    %v6682 = vld [vmem:[%s10 + $0x68] sm:$0xf]
    %v6683 = vld [vmem:[%s10 + $0x6c] sm:$0xf]
    %v6684 = vld [vmem:[%s10 + $0x70] sm:$0xf]
    %v6685 = vld [vmem:[%s10 + $0x74] sm:$0xf]
    %v6686 = vld [vmem:[%s10 + $0x78] sm:$0xf]
    %v6687 = vld [vmem:[%s10 + $0x7c] sm:$0xf]
    %v6688 = vld [vmem:[%s10 + $0x80] sm:$0xf]
    %v6689 = vld [vmem:[%s10 + $0x84] sm:$0xf]
    %v6690 = vld [vmem:[%s10 + $0x88] sm:$0xf]
    %v6691 = vld [vmem:[%s10 + $0x8c] sm:$0xf]
    %v6692 = vld [vmem:[%s10 + $0x90] sm:$0xf]
    %v6693 = vld [vmem:[%s10 + $0x94] sm:$0xf]
    %v6694 = vld [vmem:[%s10 + $0x98] sm:$0xf]
    %v6695 = vld [vmem:[%s10 + $0x9c] sm:$0xf]
    %v6696 = vld [vmem:[%s10 + $0xa0] sm:$0xf]
    %v6697 = vld [vmem:[%s10 + $0xa4] sm:$0xf]
    %v6698 = vld [vmem:[%s10 + $0xa8] sm:$0xf]
    %v6699 = vld [vmem:[%s10 + $0xac] sm:$0xf]
    %v6700 = vld [vmem:[%s10 + $0xb0] sm:$0xf]
    %v6701 = vld [vmem:[%s10 + $0xb4] sm:$0xf]
    %v6702 = vld [vmem:[%s10 + $0xb8] sm:$0xf]
    %v6703 = vld [vmem:[%s10 + $0xbc] sm:$0xf]
    %v6704 = vld [vmem:[%s10 + $0xc0] sm:$0xf]
    %v6705 = vld [vmem:[%s10 + $0xc4] sm:$0xf]
    %v6706 = vld [vmem:[%s10 + $0xc8] sm:$0xf]
    %v6707 = vld [vmem:[%s10 + $0xcc] sm:$0xf]
    %v6708 = vld [vmem:[%s10 + $0xd0] sm:$0xf]
    %v6709 = vld [vmem:[%s10 + $0xd4] sm:$0xf]
    %v6710 = vld [vmem:[%s10 + $0xd8] sm:$0xf]
    %v6711 = vld [vmem:[%s10 + $0xdc] sm:$0xf]
    %v6712 = vld [vmem:[%s10 + $0xe0] sm:$0xf]
    %v6713 = vld [vmem:[%s10 + $0xe4] sm:$0xf]
    %v6714 = vld [vmem:[%s10 + $0xe8] sm:$0xf]
    %v6715 = vld [vmem:[%s10 + $0xec] sm:$0xf]
    %v6716 = vld [vmem:[%s10 + $0xf0] sm:$0xf]
    %v6717 = vld [vmem:[%s10 + $0xf4] sm:$0xf]
    %v6718 = vld [vmem:[%s10 + $0xf8] sm:$0xf]
    %v6719 = vld [vmem:[%s10 + $0xfc] sm:$0xf]
    %v6720 = vld [vmem:[%s11] sm:$0x1]
    %v6722 = vlaneseq
    %v6723 = vshrl.u32 %v6722, 7
    %v6724 = vsub.s32 0, %v6723
    %v6725 = vrot.slane %v6720, %v6724
    %v6791 = vunpack.c.l.b16 %v6656
    %v6792 = vunpack.c.l.b16 %v6657
    %v6793 = vunpack.c.l.b16 %v6658
    %v6794 = vunpack.c.l.b16 %v6659
    %v6795 = vunpack.c.l.b16 %v6660
    %v6796 = vunpack.c.l.b16 %v6661
    %v6797 = vunpack.c.l.b16 %v6662
    %v6798 = vunpack.c.l.b16 %v6663
    %v6799 = vunpack.c.l.b16 %v6664
    %v6800 = vunpack.c.l.b16 %v6665
    %v6801 = vunpack.c.l.b16 %v6666
    %v6802 = vunpack.c.l.b16 %v6667
    %v6803 = vunpack.c.l.b16 %v6668
    %v6804 = vunpack.c.l.b16 %v6669
    %v6805 = vunpack.c.l.b16 %v6670
    %v6806 = vunpack.c.l.b16 %v6671
    %v6807 = vunpack.c.l.b16 %v6672
    %v6808 = vunpack.c.l.b16 %v6673
    %v6809 = vunpack.c.l.b16 %v6674
    %v6810 = vunpack.c.l.b16 %v6675
    %v6811 = vunpack.c.l.b16 %v6676
    %v6812 = vunpack.c.l.b16 %v6677
    %v6813 = vunpack.c.l.b16 %v6678
    %v6814 = vunpack.c.l.b16 %v6679
    %v6815 = vunpack.c.l.b16 %v6680
    %v6816 = vunpack.c.l.b16 %v6681
    %v6817 = vunpack.c.l.b16 %v6682
    %v6818 = vunpack.c.l.b16 %v6683
    %v6819 = vunpack.c.l.b16 %v6684
    %v6820 = vunpack.c.l.b16 %v6685
    %v6821 = vunpack.c.l.b16 %v6686
    %v6822 = vunpack.c.l.b16 %v6687
    %v6823 = vunpack.c.l.b16 %v6688
    %v6824 = vunpack.c.l.b16 %v6689
    %v6825 = vunpack.c.l.b16 %v6690
    %v6826 = vunpack.c.l.b16 %v6691
    %v6827 = vunpack.c.l.b16 %v6692
    %v6828 = vunpack.c.l.b16 %v6693
    %v6829 = vunpack.c.l.b16 %v6694
    %v6830 = vunpack.c.l.b16 %v6695
    %v6831 = vunpack.c.l.b16 %v6696
    %v6832 = vunpack.c.l.b16 %v6697
    %v6833 = vunpack.c.l.b16 %v6698
    %v6834 = vunpack.c.l.b16 %v6699
    %v6835 = vunpack.c.l.b16 %v6700
    %v6836 = vunpack.c.l.b16 %v6701
    %v6837 = vunpack.c.l.b16 %v6702
    %v6838 = vunpack.c.l.b16 %v6703
    %v6839 = vunpack.c.l.b16 %v6704
    %v6840 = vunpack.c.l.b16 %v6705
    %v6841 = vunpack.c.l.b16 %v6706
    %v6842 = vunpack.c.l.b16 %v6707
    %v6843 = vunpack.c.l.b16 %v6708
    %v6844 = vunpack.c.l.b16 %v6709
    %v6845 = vunpack.c.l.b16 %v6710
    %v6846 = vunpack.c.l.b16 %v6711
    %v6847 = vunpack.c.l.b16 %v6712
    %v6848 = vunpack.c.l.b16 %v6713
    %v6849 = vunpack.c.l.b16 %v6714
    %v6850 = vunpack.c.l.b16 %v6715
    %v6851 = vunpack.c.l.b16 %v6716
    %v6852 = vunpack.c.l.b16 %v6717
    %v6853 = vunpack.c.l.b16 %v6718
    %v6854 = vunpack.c.l.b16 %v6719
    %v6855 = vpack.c.b16 %v6792, %v6791
    %v6856 = vpack.c.b16 %v6794, %v6793
    %v6857 = vpack.c.b16 %v6796, %v6795
    %v6858 = vpack.c.b16 %v6798, %v6797
    %v6859 = vpack.c.b16 %v6800, %v6799
    %v6860 = vpack.c.b16 %v6802, %v6801
    %v6861 = vpack.c.b16 %v6804, %v6803
    %v6862 = vpack.c.b16 %v6806, %v6805
    %v6863 = vpack.c.b16 %v6808, %v6807
    %v6864 = vpack.c.b16 %v6810, %v6809
    %v6865 = vpack.c.b16 %v6812, %v6811
    %v6866 = vpack.c.b16 %v6814, %v6813
    %v6867 = vpack.c.b16 %v6816, %v6815
    %v6868 = vpack.c.b16 %v6818, %v6817
    %v6869 = vpack.c.b16 %v6820, %v6819
    %v6870 = vpack.c.b16 %v6822, %v6821
    %v6871 = vpack.c.b16 %v6824, %v6823
    %v6872 = vpack.c.b16 %v6826, %v6825
    %v6873 = vpack.c.b16 %v6828, %v6827
    %v6874 = vpack.c.b16 %v6830, %v6829
    %v6875 = vpack.c.b16 %v6832, %v6831
    %v6876 = vpack.c.b16 %v6834, %v6833
    %v6877 = vpack.c.b16 %v6836, %v6835
    %v6878 = vpack.c.b16 %v6838, %v6837
    %v6879 = vpack.c.b16 %v6840, %v6839
    %v6880 = vpack.c.b16 %v6842, %v6841
    %v6881 = vpack.c.b16 %v6844, %v6843
    %v6882 = vpack.c.b16 %v6846, %v6845
    %v6883 = vpack.c.b16 %v6848, %v6847
    %v6884 = vpack.c.b16 %v6850, %v6849
    %v6885 = vpack.c.b16 %v6852, %v6851
    %v6886 = vpack.c.b16 %v6854, %v6853
    %6919 = vmatprep.subr.bf16.mxu0 0
    %6920 = vmatpush1.bf16.msra.mxu0 %v6862
    %6921 = vmatprep.subr.bf16.mxu0 0
    %6922 = vmatpush1.bf16.msra.mxu0 %v6861
    %6923 = vmatprep.subr.bf16.mxu0 0
    %6924 = vmatpush1.bf16.msra.mxu0 %v6860
    %6925 = vmatprep.subr.bf16.mxu0 0
    %6926 = vmatpush1.bf16.msra.mxu0 %v6859
    %6927 = vmatprep.subr.bf16.mxu0 0
    %6928 = vmatpush1.bf16.msra.mxu0 %v6858
    %6929 = vmatprep.subr.bf16.mxu0 0
    %6930 = vmatpush1.bf16.msra.mxu0 %v6857
    %6931 = vmatprep.subr.bf16.mxu0 0
    %6932 = vmatpush1.bf16.msra.mxu0 %v6856
    %6933 = vmatprep.subr.bf16.mxu0 0
    %6934 = vmatpush1.bf16.msra.mxu0 %v6855
    %6935 = vmatprep.subr.bf16.mxu0 0
    %6936 = vmatpush2.bf16.msra.mxu0 %v6870
    %6937 = vmatprep.subr.bf16.mxu0 0
    %6938 = vmatpush2.bf16.msra.mxu0 %v6869
    %6939 = vmatprep.subr.bf16.mxu0 0
    %6940 = vmatpush2.bf16.msra.mxu0 %v6868
    %6941 = vmatprep.subr.bf16.mxu0 0
    %6942 = vmatpush2.bf16.msra.mxu0 %v6867
    %6943 = vmatprep.subr.bf16.mxu0 0
    %6944 = vmatpush2.bf16.msra.mxu0 %v6866
    %6945 = vmatprep.subr.bf16.mxu0 0
    %6946 = vmatpush2.bf16.msra.mxu0 %v6865
    %6947 = vmatprep.subr.bf16.mxu0 0
    %6948 = vmatpush2.bf16.msra.mxu0 %v6864
    %6949 = vmatprep.subr.bf16.mxu0 0
    %6950 = vmatpush2.bf16.msra.mxu0 %v6863
    %6951 = vmatprep.mubr.bf16.mxu0 %v6593
    %6952 = vmatmul.mubr.bf16.gmra.mxu0 %v6592
    %v6953 = vpop.f32.mrf.mxu0
    %v6954 = vadd.f32 %v6725, %v6953
    %v6955 = vpop.f32.mrf.mxu0
    %v6956 = vpop.f32.mrf.mxu0
    %v6957 = vadd.f32 %v6725, %v6956
    %v6958 = vpop.f32.mrf.mxu0
    %6959 = vmatprep.mubr.bf16.mxu0 %v6597
    %6960 = vmatmul.mubr.bf16.gmra.mxu0 %v6596
    %v6961 = vpop.f32.mrf.mxu0
    %v6962 = vadd.f32 %v6725, %v6961
    %v6963 = vpop.f32.mrf.mxu0
    %v6964 = vpop.f32.mrf.mxu0
    %v6965 = vadd.f32 %v6725, %v6964
    %v6966 = vpop.f32.mrf.mxu0
    %6967 = vmatprep.mubr.bf16.mxu0 %v6601
    %6968 = vmatmul.mubr.bf16.gmra.mxu0 %v6600
    %v6969 = vpop.f32.mrf.mxu0
    %v6970 = vadd.f32 %v6725, %v6969
    %v6971 = vpop.f32.mrf.mxu0
    %v6972 = vpop.f32.mrf.mxu0
    %v6973 = vadd.f32 %v6725, %v6972
    %v6974 = vpop.f32.mrf.mxu0
    %6975 = vmatprep.mubr.bf16.mxu0 %v6605
    %6976 = vmatmul.mubr.bf16.gmra.mxu0 %v6604
    %v6977 = vpop.f32.mrf.mxu0
    %v6978 = vadd.f32 %v6725, %v6977
    %v6979 = vpop.f32.mrf.mxu0
    %v6980 = vpop.f32.mrf.mxu0
    %v6981 = vadd.f32 %v6725, %v6980
    %v6982 = vpop.f32.mrf.mxu0
    %6983 = vmatprep.mubr.bf16.mxu0 %v6609
    %6984 = vmatmul.mubr.bf16.gmra.mxu0 %v6608
    %v6985 = vpop.f32.mrf.mxu0
    %v6986 = vadd.f32 %v6725, %v6985
    %v6987 = vpop.f32.mrf.mxu0
    %v6988 = vpop.f32.mrf.mxu0
    %v6989 = vadd.f32 %v6725, %v6988
    %v6990 = vpop.f32.mrf.mxu0
    %6991 = vmatprep.mubr.bf16.mxu0 %v6613
    %6992 = vmatmul.mubr.bf16.gmra.mxu0 %v6612
    %v6993 = vpop.f32.mrf.mxu0
    %v6994 = vadd.f32 %v6725, %v6993
    %v6995 = vpop.f32.mrf.mxu0
    %v6996 = vpop.f32.mrf.mxu0
    %v6997 = vadd.f32 %v6725, %v6996
    %v6998 = vpop.f32.mrf.mxu0
    %6999 = vmatprep.mubr.bf16.mxu0 %v6617
    %7000 = vmatmul.mubr.bf16.gmra.mxu0 %v6616
    %v7001 = vpop.f32.mrf.mxu0
    %v7002 = vadd.f32 %v6725, %v7001
    %v7003 = vpop.f32.mrf.mxu0
    %v7004 = vpop.f32.mrf.mxu0
    %v7005 = vadd.f32 %v6725, %v7004
    %v7006 = vpop.f32.mrf.mxu0
    %7007 = vmatprep.mubr.bf16.mxu0 %v6621
    %7008 = vmatmul.mubr.bf16.gmra.mxu0 %v6620
    %v7009 = vpop.f32.mrf.mxu0
    %v7010 = vadd.f32 %v6725, %v7009
    %v7011 = vpop.f32.mrf.mxu0
    %v7012 = vpop.f32.mrf.mxu0
    %v7013 = vadd.f32 %v6725, %v7012
    %v7014 = vpop.f32.mrf.mxu0
    %7015 = vmatprep.mubr.bf16.mxu0 %v6625
    %7016 = vmatmul.mubr.bf16.gmra.mxu0 %v6624
    %v7017 = vpop.f32.mrf.mxu0
    %v7018 = vadd.f32 %v6725, %v7017
    %v7019 = vpop.f32.mrf.mxu0
    %v7020 = vpop.f32.mrf.mxu0
    %v7021 = vadd.f32 %v6725, %v7020
    %v7022 = vpop.f32.mrf.mxu0
    %7023 = vmatprep.mubr.bf16.mxu0 %v6629
    %7024 = vmatmul.mubr.bf16.gmra.mxu0 %v6628
    %v7025 = vpop.f32.mrf.mxu0
    %v7026 = vadd.f32 %v6725, %v7025
    %v7027 = vpop.f32.mrf.mxu0
    %v7028 = vpop.f32.mrf.mxu0
    %v7029 = vadd.f32 %v6725, %v7028
    %v7030 = vpop.f32.mrf.mxu0
    %7031 = vmatprep.mubr.bf16.mxu0 %v6633
    %7032 = vmatmul.mubr.bf16.gmra.mxu0 %v6632
    %v7033 = vpop.f32.mrf.mxu0
    %v7034 = vadd.f32 %v6725, %v7033
    %v7035 = vpop.f32.mrf.mxu0
    %v7036 = vpop.f32.mrf.mxu0
    %v7037 = vadd.f32 %v6725, %v7036
    %v7038 = vpop.f32.mrf.mxu0
    %7039 = vmatprep.mubr.bf16.mxu0 %v6637
    %7040 = vmatmul.mubr.bf16.gmra.mxu0 %v6636
    %v7041 = vpop.f32.mrf.mxu0
    %v7042 = vadd.f32 %v6725, %v7041
    %v7043 = vpop.f32.mrf.mxu0
    %v7044 = vpop.f32.mrf.mxu0
    %v7045 = vadd.f32 %v6725, %v7044
    %v7046 = vpop.f32.mrf.mxu0
    %7047 = vmatprep.mubr.bf16.mxu0 %v6641
    %7048 = vmatmul.mubr.bf16.gmra.mxu0 %v6640
    %v7049 = vpop.f32.mrf.mxu0
    %v7050 = vadd.f32 %v6725, %v7049
    %v7051 = vpop.f32.mrf.mxu0
    %v7052 = vpop.f32.mrf.mxu0
    %v7053 = vadd.f32 %v6725, %v7052
    %v7054 = vpop.f32.mrf.mxu0
    %7055 = vmatprep.mubr.bf16.mxu0 %v6645
    %7056 = vmatmul.mubr.bf16.gmra.mxu0 %v6644
    %v7057 = vpop.f32.mrf.mxu0
    %v7058 = vadd.f32 %v6725, %v7057
    %v7059 = vpop.f32.mrf.mxu0
    %v7060 = vpop.f32.mrf.mxu0
    %v7061 = vadd.f32 %v6725, %v7060
    %v7062 = vpop.f32.mrf.mxu0
    %7063 = vmatprep.mubr.bf16.mxu0 %v6649
    %7064 = vmatmul.mubr.bf16.gmra.mxu0 %v6648
    %v7065 = vpop.f32.mrf.mxu0
    %v7066 = vadd.f32 %v6725, %v7065
    %v7067 = vpop.f32.mrf.mxu0
    %v7068 = vpop.f32.mrf.mxu0
    %v7069 = vadd.f32 %v6725, %v7068
    %v7070 = vpop.f32.mrf.mxu0
    %7071 = vmatprep.mubr.bf16.mxu0 %v6653
    %7072 = vmatmul.mubr.bf16.gmra.mxu0 %v6652
    %v7073 = vpop.f32.mrf.mxu0
    %v7074 = vadd.f32 %v6725, %v7073
    %v7075 = vpop.f32.mrf.mxu0
    %v7076 = vpop.f32.mrf.mxu0
    %v7077 = vadd.f32 %v6725, %v7076
    %v7078 = vpop.f32.mrf.mxu0
    %7079 = vdwg.mxu0
    %7080 = vmatprep.subr.bf16.mxu0 0
    %7081 = vmatpush1.bf16.msra.mxu0 %v6878
    %7082 = vmatprep.subr.bf16.mxu0 0
    %7083 = vmatpush1.bf16.msra.mxu0 %v6877
    %7084 = vmatprep.subr.bf16.mxu0 0
    %7085 = vmatpush1.bf16.msra.mxu0 %v6876
    %7086 = vmatprep.subr.bf16.mxu0 0
    %7087 = vmatpush1.bf16.msra.mxu0 %v6875
    %7088 = vmatprep.subr.bf16.mxu0 0
    %7089 = vmatpush1.bf16.msra.mxu0 %v6874
    %7090 = vmatprep.subr.bf16.mxu0 0
    %7091 = vmatpush1.bf16.msra.mxu0 %v6873
    %7092 = vmatprep.subr.bf16.mxu0 0
    %7093 = vmatpush1.bf16.msra.mxu0 %v6872
    %7094 = vmatprep.subr.bf16.mxu0 0
    %7095 = vmatpush1.bf16.msra.mxu0 %v6871
    %7096 = vmatprep.subr.bf16.mxu0 0
    %7097 = vmatpush2.bf16.msra.mxu0 %v6886
    %7098 = vmatprep.subr.bf16.mxu0 0
    %7099 = vmatpush2.bf16.msra.mxu0 %v6885
    %7100 = vmatprep.subr.bf16.mxu0 0
    %7101 = vmatpush2.bf16.msra.mxu0 %v6884
    %7102 = vmatprep.subr.bf16.mxu0 0
    %7103 = vmatpush2.bf16.msra.mxu0 %v6883
    %7104 = vmatprep.subr.bf16.mxu0 0
    %7105 = vmatpush2.bf16.msra.mxu0 %v6882
    %7106 = vmatprep.subr.bf16.mxu0 0
    %7107 = vmatpush2.bf16.msra.mxu0 %v6881
    %7108 = vmatprep.subr.bf16.mxu0 0
    %7109 = vmatpush2.bf16.msra.mxu0 %v6880
    %7110 = vmatprep.subr.bf16.mxu0 0
    %7111 = vmatpush2.bf16.msra.mxu0 %v6879
    %7112 = vmatprep.mubr.bf16.mxu0 %v6595
    %7113 = vmatmul.mubr.bf16.gmra.mxu0 %v6594
    %v7114 = vpop.f32.mrf.mxu0
    %v7115 = vadd.f32 %v6954, %v7114
    %v7116 = vpop.f32.mrf.mxu0
    %v7117 = vpop.f32.mrf.mxu0
    %v7118 = vadd.f32 %v6957, %v7117
    %v7119 = vpop.f32.mrf.mxu0
    %7120 = vmatprep.mubr.bf16.mxu0 %v6599
    %7121 = vmatmul.mubr.bf16.gmra.mxu0 %v6598
    %v7122 = vpop.f32.mrf.mxu0
    %v7123 = vadd.f32 %v6962, %v7122
    %v7124 = vpop.f32.mrf.mxu0
    %v7125 = vpop.f32.mrf.mxu0
    %v7126 = vadd.f32 %v6965, %v7125
    %v7127 = vpop.f32.mrf.mxu0
    %7128 = vmatprep.mubr.bf16.mxu0 %v6603
    %7129 = vmatmul.mubr.bf16.gmra.mxu0 %v6602
    %v7130 = vpop.f32.mrf.mxu0
    %v7131 = vadd.f32 %v6970, %v7130
    %v7132 = vpop.f32.mrf.mxu0
    %v7133 = vpop.f32.mrf.mxu0
    %v7134 = vadd.f32 %v6973, %v7133
    %v7135 = vpop.f32.mrf.mxu0
    %7136 = vmatprep.mubr.bf16.mxu0 %v6607
    %7137 = vmatmul.mubr.bf16.gmra.mxu0 %v6606
    %v7138 = vpop.f32.mrf.mxu0
    %v7139 = vadd.f32 %v6978, %v7138
    %v7140 = vpop.f32.mrf.mxu0
    %v7141 = vpop.f32.mrf.mxu0
    %v7142 = vadd.f32 %v6981, %v7141
    %v7143 = vpop.f32.mrf.mxu0
    %7144 = vmatprep.mubr.bf16.mxu0 %v6611
    %7145 = vmatmul.mubr.bf16.gmra.mxu0 %v6610
    %v7146 = vpop.f32.mrf.mxu0
    %v7147 = vadd.f32 %v6986, %v7146
    %v7148 = vpop.f32.mrf.mxu0
    %v7149 = vpop.f32.mrf.mxu0
    %v7150 = vadd.f32 %v6989, %v7149
    %v7151 = vpop.f32.mrf.mxu0
    %7152 = vmatprep.mubr.bf16.mxu0 %v6615
    %7153 = vmatmul.mubr.bf16.gmra.mxu0 %v6614
    %v7154 = vpop.f32.mrf.mxu0
    %v7155 = vadd.f32 %v6994, %v7154
    %v7156 = vpop.f32.mrf.mxu0
    %v7157 = vpop.f32.mrf.mxu0
    %v7158 = vadd.f32 %v6997, %v7157
    %v7159 = vpop.f32.mrf.mxu0
    %7160 = vmatprep.mubr.bf16.mxu0 %v6619
    %7161 = vmatmul.mubr.bf16.gmra.mxu0 %v6618
    %v7162 = vpop.f32.mrf.mxu0
    %v7163 = vadd.f32 %v7002, %v7162
    %v7164 = vpop.f32.mrf.mxu0
    %v7165 = vpop.f32.mrf.mxu0
    %v7166 = vadd.f32 %v7005, %v7165
    %v7167 = vpop.f32.mrf.mxu0
    %7168 = vmatprep.mubr.bf16.mxu0 %v6623
    %7169 = vmatmul.mubr.bf16.gmra.mxu0 %v6622
    %v7170 = vpop.f32.mrf.mxu0
    %v7171 = vadd.f32 %v7010, %v7170
    %v7172 = vpop.f32.mrf.mxu0
    %v7173 = vpop.f32.mrf.mxu0
    %v7174 = vadd.f32 %v7013, %v7173
    %v7175 = vpop.f32.mrf.mxu0
    %7176 = vmatprep.mubr.bf16.mxu0 %v6627
    %7177 = vmatmul.mubr.bf16.gmra.mxu0 %v6626
    %v7178 = vpop.f32.mrf.mxu0
    %v7179 = vadd.f32 %v7018, %v7178
    %v7180 = vpop.f32.mrf.mxu0
    %v7181 = vpop.f32.mrf.mxu0
    %v7182 = vadd.f32 %v7021, %v7181
    %v7183 = vpop.f32.mrf.mxu0
    %7184 = vmatprep.mubr.bf16.mxu0 %v6631
    %7185 = vmatmul.mubr.bf16.gmra.mxu0 %v6630
    %v7186 = vpop.f32.mrf.mxu0
    %v7187 = vadd.f32 %v7026, %v7186
    %v7188 = vpop.f32.mrf.mxu0
    %v7189 = vpop.f32.mrf.mxu0
    %v7190 = vadd.f32 %v7029, %v7189
    %v7191 = vpop.f32.mrf.mxu0
    %7192 = vmatprep.mubr.bf16.mxu0 %v6635
    %7193 = vmatmul.mubr.bf16.gmra.mxu0 %v6634
    %v7194 = vpop.f32.mrf.mxu0
    %v7195 = vadd.f32 %v7034, %v7194
    %v7196 = vpop.f32.mrf.mxu0
    %v7197 = vpop.f32.mrf.mxu0
    %v7198 = vadd.f32 %v7037, %v7197
    %v7199 = vpop.f32.mrf.mxu0
    %7200 = vmatprep.mubr.bf16.mxu0 %v6639
    %7201 = vmatmul.mubr.bf16.gmra.mxu0 %v6638
    %v7202 = vpop.f32.mrf.mxu0
    %v7203 = vadd.f32 %v7042, %v7202
    %v7204 = vpop.f32.mrf.mxu0
    %v7205 = vpop.f32.mrf.mxu0
    %v7206 = vadd.f32 %v7045, %v7205
    %v7207 = vpop.f32.mrf.mxu0
    %7208 = vmatprep.mubr.bf16.mxu0 %v6643
    %7209 = vmatmul.mubr.bf16.gmra.mxu0 %v6642
    %v7210 = vpop.f32.mrf.mxu0
    %v7211 = vadd.f32 %v7050, %v7210
    %v7212 = vpop.f32.mrf.mxu0
    %v7213 = vpop.f32.mrf.mxu0
    %v7214 = vadd.f32 %v7053, %v7213
    %v7215 = vpop.f32.mrf.mxu0
    %7216 = vmatprep.mubr.bf16.mxu0 %v6647
    %7217 = vmatmul.mubr.bf16.gmra.mxu0 %v6646
    %v7218 = vpop.f32.mrf.mxu0
    %v7219 = vadd.f32 %v7058, %v7218
    %v7220 = vpop.f32.mrf.mxu0
    %v7221 = vpop.f32.mrf.mxu0
    %v7222 = vadd.f32 %v7061, %v7221
    %v7223 = vpop.f32.mrf.mxu0
    %7224 = vmatprep.mubr.bf16.mxu0 %v6651
    %7225 = vmatmul.mubr.bf16.gmra.mxu0 %v6650
    %v7226 = vpop.f32.mrf.mxu0
    %v7227 = vadd.f32 %v7066, %v7226
    %v7228 = vpop.f32.mrf.mxu0
    %v7229 = vpop.f32.mrf.mxu0
    %v7230 = vadd.f32 %v7069, %v7229
    %v7231 = vpop.f32.mrf.mxu0
    %7232 = vmatprep.mubr.bf16.mxu0 %v6655
    %7233 = vmatmul.mubr.bf16.gmra.mxu0 %v6654
    %v7234 = vpop.f32.mrf.mxu0
    %v7235 = vadd.f32 %v7074, %v7234
    %v7236 = vpop.f32.mrf.mxu0
    %v7237 = vpop.f32.mrf.mxu0
    %v7238 = vadd.f32 %v7077, %v7237
    %v7239 = vpop.f32.mrf.mxu0
    %7240 = vdwg.mxu0
    %v7241 = vadd.f32 %v5386, %v7115
    %v7242 = vadd.f32 %v5387, %v7118
    %v7243 = vadd.f32 %v5388, %v7123
    %v7244 = vadd.f32 %v5389, %v7126
    %v7245 = vadd.f32 %v5390, %v7131
    %v7246 = vadd.f32 %v5391, %v7134
    %v7247 = vadd.f32 %v5392, %v7139
    %v7248 = vadd.f32 %v5393, %v7142
    %v7249 = vadd.f32 %v5394, %v7147
    %v7250 = vadd.f32 %v5395, %v7150
    %v7251 = vadd.f32 %v5396, %v7155
    %v7252 = vadd.f32 %v5397, %v7158
    %v7253 = vadd.f32 %v5398, %v7163
    %v7254 = vadd.f32 %v5399, %v7166
    %v7255 = vadd.f32 %v5400, %v7171
    %v7256 = vadd.f32 %v5401, %v7174
    %v7257 = vadd.f32 %v5402, %v7179
    %v7258 = vadd.f32 %v5403, %v7182
    %v7259 = vadd.f32 %v5404, %v7187
    %v7260 = vadd.f32 %v5405, %v7190
    %v7261 = vadd.f32 %v5406, %v7195
    %v7262 = vadd.f32 %v5407, %v7198
    %v7263 = vadd.f32 %v5408, %v7203
    %v7264 = vadd.f32 %v5409, %v7206
    %v7265 = vadd.f32 %v5410, %v7211
    %v7266 = vadd.f32 %v5411, %v7214
    %v7267 = vadd.f32 %v5412, %v7219
    %v7268 = vadd.f32 %v5413, %v7222
    %v7269 = vadd.f32 %v5414, %v7227
    %v7270 = vadd.f32 %v5415, %v7230
    %v7271 = vadd.f32 %v5416, %v7235
    %v7272 = vadd.f32 %v5417, %v7238
    %7273 = vst [vmem:[#allocation2] sm:$0xff] %v7241
    %7274 = vst [vmem:[#allocation2 + $0x8] sm:$0xff] %v7242
    %7275 = vst [vmem:[#allocation2 + $0x10] sm:$0xff] %v7243
    %7276 = vst [vmem:[#allocation2 + $0x18] sm:$0xff] %v7244
    %7277 = vst [vmem:[#allocation2 + $0x20] sm:$0xff] %v7245
    %7278 = vst [vmem:[#allocation2 + $0x28] sm:$0xff] %v7246
    %7279 = vst [vmem:[#allocation2 + $0x30] sm:$0xff] %v7247
    %7280 = vst [vmem:[#allocation2 + $0x38] sm:$0xff] %v7248
    %7281 = vst [vmem:[#allocation2 + $0x40] sm:$0xff] %v7249
    %7282 = vst [vmem:[#allocation2 + $0x48] sm:$0xff] %v7250
    %7283 = vst [vmem:[#allocation2 + $0x50] sm:$0xff] %v7251
    %7284 = vst [vmem:[#allocation2 + $0x58] sm:$0xff] %v7252
    %7285 = vst [vmem:[#allocation2 + $0x60] sm:$0xff] %v7253
    %7286 = vst [vmem:[#allocation2 + $0x68] sm:$0xff] %v7254
    %7287 = vst [vmem:[#allocation2 + $0x70] sm:$0xff] %v7255
    %7288 = vst [vmem:[#allocation2 + $0x78] sm:$0xff] %v7256
    %7289 = vst [vmem:[#allocation2 + $0x80] sm:$0xff] %v7257
    %7290 = vst [vmem:[#allocation2 + $0x88] sm:$0xff] %v7258
    %7291 = vst [vmem:[#allocation2 + $0x90] sm:$0xff] %v7259
    %7292 = vst [vmem:[#allocation2 + $0x98] sm:$0xff] %v7260
    %7293 = vst [vmem:[#allocation2 + $0xa0] sm:$0xff] %v7261
    %7294 = vst [vmem:[#allocation2 + $0xa8] sm:$0xff] %v7262
    %7295 = vst [vmem:[#allocation2 + $0xb0] sm:$0xff] %v7263
    %7296 = vst [vmem:[#allocation2 + $0xb8] sm:$0xff] %v7264
    %7297 = vst [vmem:[#allocation2 + $0xc0] sm:$0xff] %v7265
    %7298 = vst [vmem:[#allocation2 + $0xc8] sm:$0xff] %v7266
    %7299 = vst [vmem:[#allocation2 + $0xd0] sm:$0xff] %v7267
    %7300 = vst [vmem:[#allocation2 + $0xd8] sm:$0xff] %v7268
    %7301 = vst [vmem:[#allocation2 + $0xe0] sm:$0xff] %v7269
    %7302 = vst [vmem:[#allocation2 + $0xe8] sm:$0xff] %v7270
    %7303 = vst [vmem:[#allocation2 + $0xf0] sm:$0xff] %v7271
    %7304 = vst [vmem:[#allocation2 + $0xf8] sm:$0xff] %v7272
    // Predicated region
    $region50: #{transformer_block.1} parent=1 // pred_check
      _
    $region51: #{transformer_block.1} parent=1 // pred_check_branch
      %7306 = sbr.rel (0) target = $region53
    $region52: #{transformer_block.1} parent=1 // pred_region
      %s7308 = ssub.s32 4096, 4096
      %7309 = vsyncadd [#allocation3], %s7308
      %s7310 = sshll.u32 [#allocation2], 4
      %s7311 = int_to_ptr.vmem [resolvable:$true] %s7310
      %7316 = dma.vmem_to_hbm [thread:$0]  %s7311, 4096, %s12, [#allocation3], 128, 128, 8
    $region53: #{transformer_block.1} parent=1 // pred_fallthru
      _
    // Predicated region
    $region54: #{transformer_block.1} parent=1 // pred_check
      _
    $region55: #{transformer_block.1} parent=1 // pred_check_branch
      %7318 = sbr.rel (0) target = $region57
    $region56: #{transformer_block.1} parent=1 // pred_region
      %7319 = dma.done [#allocation3], 4096
    $region57: #{transformer_block.1} parent=1 // pred_fallthru
      _
    %7320 = vsyncpa [#allocation3], 1

</llo_original>
